<compile_context>
chip_gen: v7x
topology: tpu7x:2x2x1
jax: 0.10.0
libtpu: 0.0.40
codegen_flags: <defaults>
</compile_context>

<pallas_src>
import functools

import jax
import jax.numpy as jnp
from jax import lax
from jax.experimental import pallas as pl
from jax.experimental.pallas import tpu as pltpu


_EPS = 1e-3  # nn.BatchNorm2d(outc, eps=0.001)


# ----------------------------------------------------------------------------
# Fused Pallas kernel: whole InceptionBlock for one image per grid step.
# ----------------------------------------------------------------------------
def _inception_kernel(xpad_ref, wred_ref, sred_ref, bred_ref,
                      w3_ref, s3_ref, b3_ref,
                      w5_ref, s5_ref, b5_ref,
                      out_ref, pad3_ref, pad5_ref,
                      *, H, W, Cin, c1x1, cr3, c3, cr5, c5, cpool):
    """One batch image:  x (-inf padded, NHWC) -> all 4 branches -> concat.

    xpad_ref : (1, H+2, W+2, Cin)   input with -inf halo of 1 (pool padding)
    wred_ref : (2*Cin, Cred)        block-diag fused 1x1 weights
                                    rows [0:Cin]  act on x,
                                    rows [Cin:]   act on pooled x
    sred/bred: (1, Cred)            folded BN scale/bias for the 1x1 outputs
    w3_ref   : (9*cr3, c3)          3x3 conv weights, im2col-flattened (HWIO)
    w5_ref   : (25*cr5, c5)         5x5 conv weights, im2col-flattened (HWIO)
    out_ref  : (1, H*W, Ctot)       Ctot = c1x1 + c3 + c5 + cpool
    pad3_ref : (H+2, W+2, cr3)      VMEM scratch, zero-padded b2a
    pad5_ref : (H+4, W+4, cr5)      VMEM scratch, zero-padded b3a
    """
    HW = H * W
    xp = xpad_ref[0]                                  # (H+2, W+2, Cin)
    x_sp = xp[1:H + 1, 1:W + 1, :]                    # interior, (H, W, Cin)

    # ---- 3x3 / stride 1 / pad 1 max pool (halo is -inf) -------------------
    pooled = x_sp
    for kh in range(3):                               # static 3x3 window
        for kw in range(3):
            pooled = jnp.maximum(pooled, xp[kh:kh + H, kw:kw + W, :])

    # ---- all four 1x1 reduce convs as ONE matmul ---------------------------
    red_in = jnp.concatenate([x_sp, pooled], axis=-1).reshape(HW, 2 * Cin)
    red = jnp.dot(red_in, wred_ref[...], preferred_element_type=jnp.float32)
    red = jnp.maximum(red * sred_ref[0] + bred_ref[0], 0.0)   # fused BN + ReLU

    o1 = c1x1
    o2 = o1 + cr3
    o3 = o2 + cr5
    o4 = o3 + cpool
    br1 = red[:, 0:o1]                                # branch1 output
    b2a = red[:, o1:o2]                               # branch2 reduce
    b3a = red[:, o2:o3]                               # branch3 reduce
    br4 = red[:, o3:o4]                               # branch4 output

    out_ref[0, :, 0:c1x1] = br1
    out_ref[0, :, c1x1 + c3 + c5:c1x1 + c3 + c5 + cpool] = br4

    # ---- branch2: 3x3 conv, pad 1, on b2a (im2col -> single dot) -----------
    pad3_ref[...] = jnp.zeros_like(pad3_ref)
    pad3_ref[1:H + 1, 1:W + 1, :] = b2a.reshape(H, W, cr3)
    p3 = pad3_ref[...]
    taps3 = [p3[kh:kh + H, kw:kw + W, :]
             for kh in range(3) for kw in range(3)]
    patch3 = jnp.concatenate(taps3, axis=-1).reshape(HW, 9 * cr3)
    br2 = jnp.dot(patch3, w3_ref[...], preferred_element_type=jnp.float32)
    br2 = jnp.maximum(br2 * s3_ref[0] + b3_ref[0], 0.0)
    out_ref[0, :, c1x1:c1x1 + c3] = br2

    # ---- branch3: 5x5 conv, pad 2, on b3a (im2col -> single dot) -----------
    pad5_ref[...] = jnp.zeros_like(pad5_ref)
    pad5_ref[2:H + 2, 2:W + 2, :] = b3a.reshape(H, W, cr5)
    p5 = pad5_ref[...]
    taps5 = [p5[kh:kh + H, kw:kw + W, :]
             for kh in range(5) for kw in range(5)]
    patch5 = jnp.concatenate(taps5, axis=-1).reshape(HW, 25 * cr5)
    br3 = jnp.dot(patch5, w5_ref[...], preferred_element_type=jnp.float32)
    br3 = jnp.maximum(br3 * s5_ref[0] + b5_ref[0], 0.0)
    out_ref[0, :, c1x1 + c3:c1x1 + c3 + c5] = br3


# ----------------------------------------------------------------------------
# Wrapper: BN folding, weight packing, one pad, one pallas_call.
# ----------------------------------------------------------------------------
def _fold_bn(p):
    scale = p["gamma"] / jnp.sqrt(p["var"] + _EPS)
    bias = p["beta"] - p["mean"] * scale
    return scale.astype(jnp.float32), bias.astype(jnp.float32)


def inception_block(x_nchw, params):
    """InceptionBlock forward. NCHW in, NCHW out (matches the PyTorch module)."""
    N, Cin, H, W = x_nchw.shape
    c1x1 = params["b1"]["w"].shape[-1]
    cr3 = params["b2a"]["w"].shape[-1]
    c3 = params["b2b"]["w"].shape[-1]
    cr5 = params["b3a"]["w"].shape[-1]
    c5 = params["b3b"]["w"].shape[-1]
    cpool = params["b4"]["w"].shape[-1]
    Cred = c1x1 + cr3 + cr5 + cpool
    Ctot = c1x1 + c3 + c5 + cpool
    HW = H * W

    # NCHW -> NHWC once, and one shared -inf halo (max-pool padding; the 1x1
    # convs read the interior slice inside the kernel).
    x = jnp.transpose(x_nchw, (0, 2, 3, 1)).astype(jnp.float32)
    xpad = jnp.pad(x, ((0, 0), (1, 1), (1, 1), (0, 0)),
                   constant_values=-jnp.inf)

    s1, bi1 = _fold_bn(params["b1"])
    s2a, bi2a = _fold_bn(params["b2a"])
    s2b, bi2b = _fold_bn(params["b2b"])
    s3a, bi3a = _fold_bn(params["b3a"])
    s3b, bi3b = _fold_bn(params["b3b"])
    s4, bi4 = _fold_bn(params["b4"])

    # Block-diagonal fused 1x1 weights: rows 0:Cin apply to x, rows Cin:2*Cin
    # apply to the max-pooled x (zeros elsewhere -> exact).
    w_red = jnp.zeros((2 * Cin, Cred), jnp.float32)
    w_red = w_red.at[:Cin, 0:c1x1].set(params["b1"]["w"][0, 0])
    w_red = w_red.at[:Cin, c1x1:c1x1 + cr3].set(params["b2a"]["w"][0, 0])
    w_red = w_red.at[:Cin, c1x1 + cr3:c1x1 + cr3 + cr5].set(
        params["b3a"]["w"][0, 0])
    w_red = w_red.at[Cin:, c1x1 + cr3 + cr5:].set(params["b4"]["w"][0, 0])
    s_red = jnp.concatenate([s1, s2a, s3a, s4]).reshape(1, Cred)
    b_red = jnp.concatenate([bi1, bi2a, bi3a, bi4]).reshape(1, Cred)

    # im2col-flattened KxK weights (HWIO row-major matches tap concat order).
    w3_flat = params["b2b"]["w"].reshape(9 * cr3, c3).astype(jnp.float32)
    w5_flat = params["b3b"]["w"].reshape(25 * cr5, c5).astype(jnp.float32)
    s3v, b3v = s2b.reshape(1, c3), bi2b.reshape(1, c3)
    s5v, b5v = s3b.reshape(1, c5), bi3b.reshape(1, c5)

    kernel = functools.partial(
        _inception_kernel, H=H, W=W, Cin=Cin,
        c1x1=c1x1, cr3=cr3, c3=c3, cr5=cr5, c5=c5, cpool=cpool)

    out = pl.pallas_call(
        kernel,
        out_shape=jax.ShapeDtypeStruct((N, HW, Ctot), jnp.float32),
        grid=(N,),
        in_specs=[
            pl.BlockSpec((1, H + 2, W + 2, Cin), lambda n: (n, 0, 0, 0)),
            pl.BlockSpec((2 * Cin, Cred), lambda n: (0, 0)),
            pl.BlockSpec((1, Cred), lambda n: (0, 0)),
            pl.BlockSpec((1, Cred), lambda n: (0, 0)),
            pl.BlockSpec((9 * cr3, c3), lambda n: (0, 0)),
            pl.BlockSpec((1, c3), lambda n: (0, 0)),
            pl.BlockSpec((1, c3), lambda n: (0, 0)),
            pl.BlockSpec((25 * cr5, c5), lambda n: (0, 0)),
            pl.BlockSpec((1, c5), lambda n: (0, 0)),
            pl.BlockSpec((1, c5), lambda n: (0, 0)),
        ],
        out_specs=pl.BlockSpec((1, HW, Ctot), lambda n: (n, 0, 0)),
        scratch_shapes=[
            pltpu.VMEM((H + 2, W + 2, cr3), jnp.float32),
            pltpu.VMEM((H + 4, W + 4, cr5), jnp.float32),
        ],
        compiler_params=pltpu.CompilerParams(
            dimension_semantics=("parallel",)),
    )(xpad, w_red, s_red, b_red, w3_flat, s3v, b3v, w5_flat, s5v, b5v)

    # (N, H*W, Ctot) -> NCHW (single tiny transpose; concat already fused).
    return jnp.transpose(out.reshape(N, H, W, Ctot), (0, 3, 1, 2))


# ----------------------------------------------------------------------------
# Parameter construction (deterministic, per the module __init__ shapes)
# ----------------------------------------------------------------------------
def make_conv_block_params(key, inc, outc, ksize):
    kw_, kbn = jax.random.split(key)
    fan_in = inc * ksize * ksize
    w = jax.random.normal(kw_, (ksize, ksize, inc, outc),
                          jnp.float32) * (1.0 / jnp.sqrt(fan_in))
    k1, k2, k3, k4 = jax.random.split(kbn, 4)
    gamma = 1.0 + 0.1 * jax.random.normal(k1, (outc,), jnp.float32)
    beta = 0.1 * jax.random.normal(k2, (outc,), jnp.float32)
    mean = 0.1 * jax.random.normal(k3, (outc,), jnp.float32)
    var = 1.0 + 0.1 * jax.random.uniform(k4, (outc,), jnp.float32)
    return dict(w=w, gamma=gamma, beta=beta, mean=mean, var=var)


def make_inception_params(key, inc, c1x1, cr3x3, c3x3, cr5x5, c5x5, pool):
    keys = jax.random.split(key, 6)
    return dict(
        b1=make_conv_block_params(keys[0], inc, c1x1, 1),
        b2a=make_conv_block_params(keys[1], inc, cr3x3, 1),
        b2b=make_conv_block_params(keys[2], cr3x3, c3x3, 3),
        b3a=make_conv_block_params(keys[3], inc, cr5x5, 1),
        b3b=make_conv_block_params(keys[4], cr5x5, c5x5, 5),
        b4=make_conv_block_params(keys[5], inc, pool, 1),
    )


# ----------------------------------------------------------------------------
# Pure-JAX reference (correctness check)
# ----------------------------------------------------------------------------
def _ref_conv_block(x, p, pad):
    y = lax.conv_general_dilated(
        x, p["w"], window_strides=(1, 1),
        padding=((pad, pad), (pad, pad)),
        dimension_numbers=("NHWC", "HWIO", "NHWC"))
    y = (y - p["mean"]) / jnp.sqrt(p["var"] + _EPS) * p["gamma"] + p["beta"]
    return jnp.maximum(y, 0.0)


def inception_block_ref(x_nchw, params):
    x = jnp.transpose(x_nchw, (0, 2, 3, 1)).astype(jnp.float32)
    br1 = _ref_conv_block(x, params["b1"], 0)
    br2 = _ref_conv_block(_ref_conv_block(x, params["b2a"], 0),
                          params["b2b"], 1)
    br3 = _ref_conv_block(_ref_conv_block(x, params["b3a"], 0),
                          params["b3b"], 2)
    pooled = lax.reduce_window(x, -jnp.inf, lax.max, (1, 3, 3, 1),
                               (1, 1, 1, 1),
                               ((0, 0), (1, 1), (1, 1), (0, 0)))
    br4 = _ref_conv_block(pooled, params["b4"], 0)
    cat = jnp.concatenate([br1, br2, br3, br4], axis=-1)
    return jnp.transpose(cat, (0, 3, 1, 2))


# ----------------------------------------------------------------------------
if __name__ == "__main__":
    key = jax.random.PRNGKey(0)
    kx, kp = jax.random.split(key)

    # InceptionBlock(inc=4, c1x1=8, cr3x3=4, c3x3=8, cr5x5=4, c5x5=8, pool=8)
    inc, c1x1, cr3x3, c3x3, cr5x5, c5x5, pool = 4, 8, 4, 8, 4, 8, 8
    N, H, W = 2, 16, 16

    x = jax.random.normal(kx, (N, inc, H, W), jnp.float32)        # NCHW
    params = make_inception_params(kp, inc, c1x1, cr3x3, c3x3, cr5x5,
                                   c5x5, pool)

    out = inception_block(x, params)
    out = jax.block_until_ready(out)

    assert out.shape == (N, c1x1 + c3x3 + c5x5 + pool, H, W), out.shape

    ref = jax.block_until_ready(inception_block_ref(x, params))
    assert jnp.allclose(out, ref, atol=1e-4, rtol=1e-4), \
        float(jnp.max(jnp.abs(out - ref)))

    print("KERNEL_OK")
</pallas_src>

<mosaic_0001>
module attributes {stable_mosaic.version = 11 : i64} {
  func.func @_inception_kernel(%arg0: i32, %arg1: memref<1x18x18x4xf32, #tpu.memory_space<vmem>>, %arg2: memref<8x24xf32, #tpu.memory_space<vmem>>, %arg3: memref<1x24xf32, #tpu.memory_space<vmem>>, %arg4: memref<1x24xf32, #tpu.memory_space<vmem>>, %arg5: memref<36x8xf32, #tpu.memory_space<vmem>>, %arg6: memref<1x8xf32, #tpu.memory_space<vmem>>, %arg7: memref<1x8xf32, #tpu.memory_space<vmem>>, %arg8: memref<100x8xf32, #tpu.memory_space<vmem>>, %arg9: memref<1x8xf32, #tpu.memory_space<vmem>>, %arg10: memref<1x8xf32, #tpu.memory_space<vmem>>, %arg11: memref<1x256x32xf32, #tpu.memory_space<vmem>>, %arg12: memref<18x18x4xf32, #tpu.memory_space<vmem>>, %arg13: memref<20x20x4xf32, #tpu.memory_space<vmem>>) attributes {dimension_semantics = [#tpu.dimension_semantics<parallel>], iteration_bounds = array<i64: 2>, scalar_prefetch = 0 : i64, scratch_operands = 2 : i64, tpu.core_type = #tpu.core_type<tc>, window_params = [{transform_indices = @transform_0, window_bounds = array<i64: 1, 18, 18, 4>}, {pipeline_mode = #tpu.pipeline_mode<synchronous>, transform_indices = @transform_1, window_bounds = array<i64: 8, 24>}, {pipeline_mode = #tpu.pipeline_mode<synchronous>, transform_indices = @transform_2, window_bounds = array<i64: 1, 24>}, {pipeline_mode = #tpu.pipeline_mode<synchronous>, transform_indices = @transform_3, window_bounds = array<i64: 1, 24>}, {pipeline_mode = #tpu.pipeline_mode<synchronous>, transform_indices = @transform_4, window_bounds = array<i64: 36, 8>}, {pipeline_mode = #tpu.pipeline_mode<synchronous>, transform_indices = @transform_5, window_bounds = array<i64: 1, 8>}, {pipeline_mode = #tpu.pipeline_mode<synchronous>, transform_indices = @transform_6, window_bounds = array<i64: 1, 8>}, {pipeline_mode = #tpu.pipeline_mode<synchronous>, transform_indices = @transform_7, window_bounds = array<i64: 100, 8>}, {pipeline_mode = #tpu.pipeline_mode<synchronous>, transform_indices = @transform_8, window_bounds = array<i64: 1, 8>}, {pipeline_mode = #tpu.pipeline_mode<synchronous>, transform_indices = @transform_9, window_bounds = array<i64: 1, 8>}, {transform_indices = @transform_10, window_bounds = array<i64: 1, 256, 32>}]} {
    %c0 = arith.constant 0 : index
    %c0_0 = arith.constant 0 : index
    %c0_1 = arith.constant 0 : index
    %c0_2 = arith.constant 0 : index
    %0 = vector.load %arg1[%c0, %c0_0, %c0_1, %c0_2] : memref<1x18x18x4xf32, #tpu.memory_space<vmem>>, vector<1x18x18x4xf32>
    %1 = vector.shape_cast %0 : vector<1x18x18x4xf32> to vector<18x18x4xf32>
    %2 = vector.extract_strided_slice %1 {offsets = [1, 1, 0], sizes = [16, 16, 4], strides = [1, 1, 1]} : vector<18x18x4xf32> to vector<16x16x4xf32>
    %3 = vector.extract_strided_slice %1 {offsets = [0, 0, 0], sizes = [16, 16, 4], strides = [1, 1, 1]} : vector<18x18x4xf32> to vector<16x16x4xf32>
    %4 = arith.maximumf %2, %3 : vector<16x16x4xf32>
    %5 = vector.extract_strided_slice %1 {offsets = [0, 1, 0], sizes = [16, 16, 4], strides = [1, 1, 1]} : vector<18x18x4xf32> to vector<16x16x4xf32>
    %6 = arith.maximumf %4, %5 : vector<16x16x4xf32>
    %7 = vector.extract_strided_slice %1 {offsets = [0, 2, 0], sizes = [16, 16, 4], strides = [1, 1, 1]} : vector<18x18x4xf32> to vector<16x16x4xf32>
    %8 = arith.maximumf %6, %7 : vector<16x16x4xf32>
    %9 = vector.extract_strided_slice %1 {offsets = [1, 0, 0], sizes = [16, 16, 4], strides = [1, 1, 1]} : vector<18x18x4xf32> to vector<16x16x4xf32>
    %10 = arith.maximumf %8, %9 : vector<16x16x4xf32>
    %11 = vector.extract_strided_slice %1 {offsets = [1, 1, 0], sizes = [16, 16, 4], strides = [1, 1, 1]} : vector<18x18x4xf32> to vector<16x16x4xf32>
    %12 = arith.maximumf %10, %11 : vector<16x16x4xf32>
    %13 = vector.extract_strided_slice %1 {offsets = [1, 2, 0], sizes = [16, 16, 4], strides = [1, 1, 1]} : vector<18x18x4xf32> to vector<16x16x4xf32>
    %14 = arith.maximumf %12, %13 : vector<16x16x4xf32>
    %15 = vector.extract_strided_slice %1 {offsets = [2, 0, 0], sizes = [16, 16, 4], strides = [1, 1, 1]} : vector<18x18x4xf32> to vector<16x16x4xf32>
    %16 = arith.maximumf %14, %15 : vector<16x16x4xf32>
    %17 = vector.extract_strided_slice %1 {offsets = [2, 1, 0], sizes = [16, 16, 4], strides = [1, 1, 1]} : vector<18x18x4xf32> to vector<16x16x4xf32>
    %18 = arith.maximumf %16, %17 : vector<16x16x4xf32>
    %19 = vector.extract_strided_slice %1 {offsets = [2, 2, 0], sizes = [16, 16, 4], strides = [1, 1, 1]} : vector<18x18x4xf32> to vector<16x16x4xf32>
    %20 = arith.maximumf %18, %19 : vector<16x16x4xf32>
    %21 = tpu.concatenate %2, %20 in 2 : vector<16x16x4xf32>, vector<16x16x4xf32> -> vector<16x16x8xf32>
    %22 = vector.shape_cast %21 : vector<16x16x8xf32> to vector<256x8xf32>
    %c0_3 = arith.constant 0 : index
    %c0_4 = arith.constant 0 : index
    %23 = vector.load %arg2[%c0_3, %c0_4] : memref<8x24xf32, #tpu.memory_space<vmem>>, vector<8x24xf32>
    %cst = arith.constant dense<0.000000e+00> : vector<256x24xf32>
    %24 = tpu.matmul %22, %23, %cst {dimension_numbers = #tpu.dot_dimension_numbers<[1], [0], [0], [1], [0, 0, 1, 1], [], []>} : vector<256x8xf32>, vector<8x24xf32>, vector<256x24xf32> -> vector<256x24xf32>
    %c0_5 = arith.constant 0 : index
    %c0_6 = arith.constant 0 : index
    %25 = vector.load %arg3[%c0_5, %c0_6] : memref<1x24xf32, #tpu.memory_space<vmem>>, vector<1x24xf32>
    %26 = vector.shape_cast %25 : vector<1x24xf32> to vector<24xf32>
    %27 = vector.shape_cast %26 : vector<24xf32> to vector<1x24xf32>
    %28 = vector.broadcast %27 : vector<1x24xf32> to vector<256x24xf32>
    %29 = arith.mulf %24, %28 : vector<256x24xf32>
    %c0_7 = arith.constant 0 : index
    %c0_8 = arith.constant 0 : index
    %30 = vector.load %arg4[%c0_7, %c0_8] : memref<1x24xf32, #tpu.memory_space<vmem>>, vector<1x24xf32>
    %31 = vector.shape_cast %30 : vector<1x24xf32> to vector<24xf32>
    %32 = vector.shape_cast %31 : vector<24xf32> to vector<1x24xf32>
    %33 = vector.broadcast %32 : vector<1x24xf32> to vector<256x24xf32>
    %34 = arith.addf %29, %33 : vector<256x24xf32>
    %cst_9 = arith.constant 0.000000e+00 : f32
    %35 = vector.broadcast %cst_9 : f32 to vector<256x24xf32>
    %36 = arith.maximumf %34, %35 : vector<256x24xf32>
    %37 = vector.extract_strided_slice %36 {offsets = [0, 0], sizes = [256, 8], strides = [1, 1]} : vector<256x24xf32> to vector<256x8xf32>
    %38 = vector.extract_strided_slice %36 {offsets = [0, 8], sizes = [256, 4], strides = [1, 1]} : vector<256x24xf32> to vector<256x4xf32>
    %39 = vector.extract_strided_slice %36 {offsets = [0, 12], sizes = [256, 4], strides = [1, 1]} : vector<256x24xf32> to vector<256x4xf32>
    %40 = vector.extract_strided_slice %36 {offsets = [0, 16], sizes = [256, 8], strides = [1, 1]} : vector<256x24xf32> to vector<256x8xf32>
    %c0_10 = arith.constant 0 : index
    %c0_11 = arith.constant 0 : index
    %c0_12 = arith.constant 0 : index
    %41 = vector.load %arg11[%c0_10, %c0_11, %c0_12] : memref<1x256x32xf32, #tpu.memory_space<vmem>>, vector<1x256x8xf32>
    %42 = vector.shape_cast %41 : vector<1x256x8xf32> to vector<256x8xf32>
    %43 = vector.shape_cast %37 : vector<256x8xf32> to vector<1x256x8xf32>
    tpu.vector_store %arg11[%c0_10, %c0_11, %c0_12], %43 {strides = array<i32>} : memref<1x256x32xf32, #tpu.memory_space<vmem>>, vector<1x256x8xf32>,
    %c0_13 = arith.constant 0 : index
    %c0_14 = arith.constant 0 : index
    %c24 = arith.constant 24 : index
    %44 = vector.load %arg11[%c0_13, %c0_14, %c24] : memref<1x256x32xf32, #tpu.memory_space<vmem>>, vector<1x256x8xf32>
    %45 = vector.shape_cast %44 : vector<1x256x8xf32> to vector<256x8xf32>
    %46 = vector.shape_cast %40 : vector<256x8xf32> to vector<1x256x8xf32>
    tpu.vector_store %arg11[%c0_13, %c0_14, %c24], %46 {strides = array<i32>} : memref<1x256x32xf32, #tpu.memory_space<vmem>>, vector<1x256x8xf32>,
    %cst_15 = arith.constant 0.000000e+00 : f32
    %47 = vector.broadcast %cst_15 : f32 to vector<18x18x4xf32>
    %c0_16 = arith.constant 0 : index
    %c0_17 = arith.constant 0 : index
    %c0_18 = arith.constant 0 : index
    %48 = vector.load %arg12[%c0_16, %c0_17, %c0_18] : memref<18x18x4xf32, #tpu.memory_space<vmem>>, vector<18x18x4xf32>
    tpu.vector_store %arg12[%c0_16, %c0_17, %c0_18], %47 {strides = array<i32>} : memref<18x18x4xf32, #tpu.memory_space<vmem>>, vector<18x18x4xf32>,
    %49 = vector.shape_cast %38 : vector<256x4xf32> to vector<16x16x4xf32>
    %c1 = arith.constant 1 : index
    %c1_19 = arith.constant 1 : index
    %c0_20 = arith.constant 0 : index
    %50 = vector.load %arg12[%c1, %c1_19, %c0_20] : memref<18x18x4xf32, #tpu.memory_space<vmem>>, vector<16x16x4xf32>
    tpu.vector_store %arg12[%c1, %c1_19, %c0_20], %49 {strides = array<i32>} : memref<18x18x4xf32, #tpu.memory_space<vmem>>, vector<16x16x4xf32>,
    %c0_21 = arith.constant 0 : index
    %c0_22 = arith.constant 0 : index
    %c0_23 = arith.constant 0 : index
    %51 = vector.load %arg12[%c0_21, %c0_22, %c0_23] : memref<18x18x4xf32, #tpu.memory_space<vmem>>, vector<18x18x4xf32>
    %52 = vector.extract_strided_slice %51 {offsets = [0, 0, 0], sizes = [16, 16, 4], strides = [1, 1, 1]} : vector<18x18x4xf32> to vector<16x16x4xf32>
    %53 = vector.extract_strided_slice %51 {offsets = [0, 1, 0], sizes = [16, 16, 4], strides = [1, 1, 1]} : vector<18x18x4xf32> to vector<16x16x4xf32>
    %54 = vector.extract_strided_slice %51 {offsets = [0, 2, 0], sizes = [16, 16, 4], strides = [1, 1, 1]} : vector<18x18x4xf32> to vector<16x16x4xf32>
    %55 = vector.extract_strided_slice %51 {offsets = [1, 0, 0], sizes = [16, 16, 4], strides = [1, 1, 1]} : vector<18x18x4xf32> to vector<16x16x4xf32>
    %56 = vector.extract_strided_slice %51 {offsets = [1, 1, 0], sizes = [16, 16, 4], strides = [1, 1, 1]} : vector<18x18x4xf32> to vector<16x16x4xf32>
    %57 = vector.extract_strided_slice %51 {offsets = [1, 2, 0], sizes = [16, 16, 4], strides = [1, 1, 1]} : vector<18x18x4xf32> to vector<16x16x4xf32>
    %58 = vector.extract_strided_slice %51 {offsets = [2, 0, 0], sizes = [16, 16, 4], strides = [1, 1, 1]} : vector<18x18x4xf32> to vector<16x16x4xf32>
    %59 = vector.extract_strided_slice %51 {offsets = [2, 1, 0], sizes = [16, 16, 4], strides = [1, 1, 1]} : vector<18x18x4xf32> to vector<16x16x4xf32>
    %60 = vector.extract_strided_slice %51 {offsets = [2, 2, 0], sizes = [16, 16, 4], strides = [1, 1, 1]} : vector<18x18x4xf32> to vector<16x16x4xf32>
    %61 = tpu.concatenate %52, %53, %54, %55, %56, %57, %58, %59, %60 in 2 : vector<16x16x4xf32>, vector<16x16x4xf32>, vector<16x16x4xf32>, vector<16x16x4xf32>, vector<16x16x4xf32>, vector<16x16x4xf32>, vector<16x16x4xf32>, vector<16x16x4xf32>, vector<16x16x4xf32> -> vector<16x16x36xf32>
    %62 = vector.shape_cast %61 : vector<16x16x36xf32> to vector<256x36xf32>
    %c0_24 = arith.constant 0 : index
    %c0_25 = arith.constant 0 : index
    %63 = vector.load %arg5[%c0_24, %c0_25] : memref<36x8xf32, #tpu.memory_space<vmem>>, vector<36x8xf32>
    %cst_26 = arith.constant dense<0.000000e+00> : vector<256x8xf32>
    %64 = tpu.matmul %62, %63, %cst_26 {dimension_numbers = #tpu.dot_dimension_numbers<[1], [0], [0], [1], [0, 0, 1, 1], [], []>} : vector<256x36xf32>, vector<36x8xf32>, vector<256x8xf32> -> vector<256x8xf32>
    %c0_27 = arith.constant 0 : index
    %c0_28 = arith.constant 0 : index
    %65 = vector.load %arg6[%c0_27, %c0_28] : memref<1x8xf32, #tpu.memory_space<vmem>>, vector<1x8xf32>
    %66 = vector.shape_cast %65 : vector<1x8xf32> to vector<8xf32>
    %67 = vector.shape_cast %66 : vector<8xf32> to vector<1x8xf32>
    %68 = vector.broadcast %67 : vector<1x8xf32> to vector<256x8xf32>
    %69 = arith.mulf %64, %68 : vector<256x8xf32>
    %c0_29 = arith.constant 0 : index
    %c0_30 = arith.constant 0 : index
    %70 = vector.load %arg7[%c0_29, %c0_30] : memref<1x8xf32, #tpu.memory_space<vmem>>, vector<1x8xf32>
    %71 = vector.shape_cast %70 : vector<1x8xf32> to vector<8xf32>
    %72 = vector.shape_cast %71 : vector<8xf32> to vector<1x8xf32>
    %73 = vector.broadcast %72 : vector<1x8xf32> to vector<256x8xf32>
    %74 = arith.addf %69, %73 : vector<256x8xf32>
    %cst_31 = arith.constant 0.000000e+00 : f32
    %75 = vector.broadcast %cst_31 : f32 to vector<256x8xf32>
    %76 = arith.maximumf %74, %75 : vector<256x8xf32>
    %c0_32 = arith.constant 0 : index
    %c0_33 = arith.constant 0 : index
    %c8 = arith.constant 8 : index
    %77 = vector.load %arg11[%c0_32, %c0_33, %c8] : memref<1x256x32xf32, #tpu.memory_space<vmem>>, vector<1x256x8xf32>
    %78 = vector.shape_cast %77 : vector<1x256x8xf32> to vector<256x8xf32>
    %79 = vector.shape_cast %76 : vector<256x8xf32> to vector<1x256x8xf32>
    tpu.vector_store %arg11[%c0_32, %c0_33, %c8], %79 {strides = array<i32>} : memref<1x256x32xf32, #tpu.memory_space<vmem>>, vector<1x256x8xf32>,
    %cst_34 = arith.constant 0.000000e+00 : f32
    %80 = vector.broadcast %cst_34 : f32 to vector<20x20x4xf32>
    %c0_35 = arith.constant 0 : index
    %c0_36 = arith.constant 0 : index
    %c0_37 = arith.constant 0 : index
    %81 = vector.load %arg13[%c0_35, %c0_36, %c0_37] : memref<20x20x4xf32, #tpu.memory_space<vmem>>, vector<20x20x4xf32>
    tpu.vector_store %arg13[%c0_35, %c0_36, %c0_37], %80 {strides = array<i32>} : memref<20x20x4xf32, #tpu.memory_space<vmem>>, vector<20x20x4xf32>,
    %82 = vector.shape_cast %39 : vector<256x4xf32> to vector<16x16x4xf32>
    %c2 = arith.constant 2 : index
    %c2_38 = arith.constant 2 : index
    %c0_39 = arith.constant 0 : index
    %83 = vector.load %arg13[%c2, %c2_38, %c0_39] : memref<20x20x4xf32, #tpu.memory_space<vmem>>, vector<16x16x4xf32>
    tpu.vector_store %arg13[%c2, %c2_38, %c0_39], %82 {strides = array<i32>} : memref<20x20x4xf32, #tpu.memory_space<vmem>>, vector<16x16x4xf32>,
    %c0_40 = arith.constant 0 : index
    %c0_41 = arith.constant 0 : index
    %c0_42 = arith.constant 0 : index
    %84 = vector.load %arg13[%c0_40, %c0_41, %c0_42] : memref<20x20x4xf32, #tpu.memory_space<vmem>>, vector<20x20x4xf32>
    %85 = vector.extract_strided_slice %84 {offsets = [0, 0, 0], sizes = [16, 16, 4], strides = [1, 1, 1]} : vector<20x20x4xf32> to vector<16x16x4xf32>
    %86 = vector.extract_strided_slice %84 {offsets = [0, 1, 0], sizes = [16, 16, 4], strides = [1, 1, 1]} : vector<20x20x4xf32> to vector<16x16x4xf32>
    %87 = vector.extract_strided_slice %84 {offsets = [0, 2, 0], sizes = [16, 16, 4], strides = [1, 1, 1]} : vector<20x20x4xf32> to vector<16x16x4xf32>
    %88 = vector.extract_strided_slice %84 {offsets = [0, 3, 0], sizes = [16, 16, 4], strides = [1, 1, 1]} : vector<20x20x4xf32> to vector<16x16x4xf32>
    %89 = vector.extract_strided_slice %84 {offsets = [0, 4, 0], sizes = [16, 16, 4], strides = [1, 1, 1]} : vector<20x20x4xf32> to vector<16x16x4xf32>
    %90 = vector.extract_strided_slice %84 {offsets = [1, 0, 0], sizes = [16, 16, 4], strides = [1, 1, 1]} : vector<20x20x4xf32> to vector<16x16x4xf32>
    %91 = vector.extract_strided_slice %84 {offsets = [1, 1, 0], sizes = [16, 16, 4], strides = [1, 1, 1]} : vector<20x20x4xf32> to vector<16x16x4xf32>
    %92 = vector.extract_strided_slice %84 {offsets = [1, 2, 0], sizes = [16, 16, 4], strides = [1, 1, 1]} : vector<20x20x4xf32> to vector<16x16x4xf32>
    %93 = vector.extract_strided_slice %84 {offsets = [1, 3, 0], sizes = [16, 16, 4], strides = [1, 1, 1]} : vector<20x20x4xf32> to vector<16x16x4xf32>
    %94 = vector.extract_strided_slice %84 {offsets = [1, 4, 0], sizes = [16, 16, 4], strides = [1, 1, 1]} : vector<20x20x4xf32> to vector<16x16x4xf32>
    %95 = vector.extract_strided_slice %84 {offsets = [2, 0, 0], sizes = [16, 16, 4], strides = [1, 1, 1]} : vector<20x20x4xf32> to vector<16x16x4xf32>
    %96 = vector.extract_strided_slice %84 {offsets = [2, 1, 0], sizes = [16, 16, 4], strides = [1, 1, 1]} : vector<20x20x4xf32> to vector<16x16x4xf32>
    %97 = vector.extract_strided_slice %84 {offsets = [2, 2, 0], sizes = [16, 16, 4], strides = [1, 1, 1]} : vector<20x20x4xf32> to vector<16x16x4xf32>
    %98 = vector.extract_strided_slice %84 {offsets = [2, 3, 0], sizes = [16, 16, 4], strides = [1, 1, 1]} : vector<20x20x4xf32> to vector<16x16x4xf32>
    %99 = vector.extract_strided_slice %84 {offsets = [2, 4, 0], sizes = [16, 16, 4], strides = [1, 1, 1]} : vector<20x20x4xf32> to vector<16x16x4xf32>
    %100 = vector.extract_strided_slice %84 {offsets = [3, 0, 0], sizes = [16, 16, 4], strides = [1, 1, 1]} : vector<20x20x4xf32> to vector<16x16x4xf32>
    %101 = vector.extract_strided_slice %84 {offsets = [3, 1, 0], sizes = [16, 16, 4], strides = [1, 1, 1]} : vector<20x20x4xf32> to vector<16x16x4xf32>
    %102 = vector.extract_strided_slice %84 {offsets = [3, 2, 0], sizes = [16, 16, 4], strides = [1, 1, 1]} : vector<20x20x4xf32> to vector<16x16x4xf32>
    %103 = vector.extract_strided_slice %84 {offsets = [3, 3, 0], sizes = [16, 16, 4], strides = [1, 1, 1]} : vector<20x20x4xf32> to vector<16x16x4xf32>
    %104 = vector.extract_strided_slice %84 {offsets = [3, 4, 0], sizes = [16, 16, 4], strides = [1, 1, 1]} : vector<20x20x4xf32> to vector<16x16x4xf32>
    %105 = vector.extract_strided_slice %84 {offsets = [4, 0, 0], sizes = [16, 16, 4], strides = [1, 1, 1]} : vector<20x20x4xf32> to vector<16x16x4xf32>
    %106 = vector.extract_strided_slice %84 {offsets = [4, 1, 0], sizes = [16, 16, 4], strides = [1, 1, 1]} : vector<20x20x4xf32> to vector<16x16x4xf32>
    %107 = vector.extract_strided_slice %84 {offsets = [4, 2, 0], sizes = [16, 16, 4], strides = [1, 1, 1]} : vector<20x20x4xf32> to vector<16x16x4xf32>
    %108 = vector.extract_strided_slice %84 {offsets = [4, 3, 0], sizes = [16, 16, 4], strides = [1, 1, 1]} : vector<20x20x4xf32> to vector<16x16x4xf32>
    %109 = vector.extract_strided_slice %84 {offsets = [4, 4, 0], sizes = [16, 16, 4], strides = [1, 1, 1]} : vector<20x20x4xf32> to vector<16x16x4xf32>
    %110 = tpu.concatenate %85, %86, %87, %88, %89, %90, %91, %92, %93, %94, %95, %96, %97, %98, %99, %100 in 2 : vector<16x16x4xf32>, vector<16x16x4xf32>, vector<16x16x4xf32>, vector<16x16x4xf32>, vector<16x16x4xf32>, vector<16x16x4xf32>, vector<16x16x4xf32>, vector<16x16x4xf32>, vector<16x16x4xf32>, vector<16x16x4xf32>, vector<16x16x4xf32>, vector<16x16x4xf32>, vector<16x16x4xf32>, vector<16x16x4xf32>, vector<16x16x4xf32>, vector<16x16x4xf32> -> vector<16x16x64xf32>
    %111 = tpu.concatenate %101, %102, %103, %104, %105, %106, %107, %108, %109 in 2 : vector<16x16x4xf32>, vector<16x16x4xf32>, vector<16x16x4xf32>, vector<16x16x4xf32>, vector<16x16x4xf32>, vector<16x16x4xf32>, vector<16x16x4xf32>, vector<16x16x4xf32>, vector<16x16x4xf32> -> vector<16x16x36xf32>
    %112 = tpu.concatenate %110, %111 in 2 : vector<16x16x64xf32>, vector<16x16x36xf32> -> vector<16x16x100xf32>
    %113 = vector.shape_cast %112 : vector<16x16x100xf32> to vector<256x100xf32>
    %c0_43 = arith.constant 0 : index
    %c0_44 = arith.constant 0 : index
    %114 = vector.load %arg8[%c0_43, %c0_44] : memref<100x8xf32, #tpu.memory_space<vmem>>, vector<100x8xf32>
    %cst_45 = arith.constant dense<0.000000e+00> : vector<256x8xf32>
    %115 = tpu.matmul %113, %114, %cst_45 {dimension_numbers = #tpu.dot_dimension_numbers<[1], [0], [0], [1], [0, 0, 1, 1], [], []>} : vector<256x100xf32>, vector<100x8xf32>, vector<256x8xf32> -> vector<256x8xf32>
    %c0_46 = arith.constant 0 : index
    %c0_47 = arith.constant 0 : index
    %116 = vector.load %arg9[%c0_46, %c0_47] : memref<1x8xf32, #tpu.memory_space<vmem>>, vector<1x8xf32>
    %117 = vector.shape_cast %116 : vector<1x8xf32> to vector<8xf32>
    %118 = vector.shape_cast %117 : vector<8xf32> to vector<1x8xf32>
    %119 = vector.broadcast %118 : vector<1x8xf32> to vector<256x8xf32>
    %120 = arith.mulf %115, %119 : vector<256x8xf32>
    %c0_48 = arith.constant 0 : index
    %c0_49 = arith.constant 0 : index
    %121 = vector.load %arg10[%c0_48, %c0_49] : memref<1x8xf32, #tpu.memory_space<vmem>>, vector<1x8xf32>
    %122 = vector.shape_cast %121 : vector<1x8xf32> to vector<8xf32>
    %123 = vector.shape_cast %122 : vector<8xf32> to vector<1x8xf32>
    %124 = vector.broadcast %123 : vector<1x8xf32> to vector<256x8xf32>
    %125 = arith.addf %120, %124 : vector<256x8xf32>
    %cst_50 = arith.constant 0.000000e+00 : f32
    %126 = vector.broadcast %cst_50 : f32 to vector<256x8xf32>
    %127 = arith.maximumf %125, %126 : vector<256x8xf32>
    %c0_51 = arith.constant 0 : index
    %c0_52 = arith.constant 0 : index
    %c16 = arith.constant 16 : index
    %128 = vector.load %arg11[%c0_51, %c0_52, %c16] : memref<1x256x32xf32, #tpu.memory_space<vmem>>, vector<1x256x8xf32>
    %129 = vector.shape_cast %128 : vector<1x256x8xf32> to vector<256x8xf32>
    %130 = vector.shape_cast %127 : vector<256x8xf32> to vector<1x256x8xf32>
    tpu.vector_store %arg11[%c0_51, %c0_52, %c16], %130 {strides = array<i32>} : memref<1x256x32xf32, #tpu.memory_space<vmem>>, vector<1x256x8xf32>,
    return
  }
  func.func @transform_0(%arg0: i32) -> (i32, i32, i32, i32) {
    %c0_i32 = arith.constant 0 : i32
    %c0_i32_0 = arith.constant 0 : i32
    %c0_i32_1 = arith.constant 0 : i32
    %c0_i32_2 = arith.constant 0 : i32
    return %arg0, %c0_i32, %c0_i32_0, %c0_i32_1 : i32, i32, i32, i32
  }
  func.func @transform_1(%arg0: i32) -> (i32, i32) {
    %c0_i32 = arith.constant 0 : i32
    %c0_i32_0 = arith.constant 0 : i32
    %c0_i32_1 = arith.constant 0 : i32
    return %c0_i32, %c0_i32_0 : i32, i32
  }
  func.func @transform_2(%arg0: i32) -> (i32, i32) {
    %c0_i32 = arith.constant 0 : i32
    %c0_i32_0 = arith.constant 0 : i32
    %c0_i32_1 = arith.constant 0 : i32
    return %c0_i32, %c0_i32_0 : i32, i32
  }
  func.func @transform_3(%arg0: i32) -> (i32, i32) {
    %c0_i32 = arith.constant 0 : i32
    %c0_i32_0 = arith.constant 0 : i32
    %c0_i32_1 = arith.constant 0 : i32
    return %c0_i32, %c0_i32_0 : i32, i32
  }
  func.func @transform_4(%arg0: i32) -> (i32, i32) {
    %c0_i32 = arith.constant 0 : i32
    %c0_i32_0 = arith.constant 0 : i32
    %c0_i32_1 = arith.constant 0 : i32
    return %c0_i32, %c0_i32_0 : i32, i32
  }
  func.func @transform_5(%arg0: i32) -> (i32, i32) {
    %c0_i32 = arith.constant 0 : i32
    %c0_i32_0 = arith.constant 0 : i32
    %c0_i32_1 = arith.constant 0 : i32
    return %c0_i32, %c0_i32_0 : i32, i32
  }
  func.func @transform_6(%arg0: i32) -> (i32, i32) {
    %c0_i32 = arith.constant 0 : i32
    %c0_i32_0 = arith.constant 0 : i32
    %c0_i32_1 = arith.constant 0 : i32
    return %c0_i32, %c0_i32_0 : i32, i32
  }
  func.func @transform_7(%arg0: i32) -> (i32, i32) {
    %c0_i32 = arith.constant 0 : i32
    %c0_i32_0 = arith.constant 0 : i32
    %c0_i32_1 = arith.constant 0 : i32
    return %c0_i32, %c0_i32_0 : i32, i32
  }
  func.func @transform_8(%arg0: i32) -> (i32, i32) {
    %c0_i32 = arith.constant 0 : i32
    %c0_i32_0 = arith.constant 0 : i32
    %c0_i32_1 = arith.constant 0 : i32
    return %c0_i32, %c0_i32_0 : i32, i32
  }
  func.func @transform_9(%arg0: i32) -> (i32, i32) {
    %c0_i32 = arith.constant 0 : i32
    %c0_i32_0 = arith.constant 0 : i32
    %c0_i32_1 = arith.constant 0 : i32
    return %c0_i32, %c0_i32_0 : i32, i32
  }
  func.func @transform_10(%arg0: i32) -> (i32, i32, i32) {
    %c0_i32 = arith.constant 0 : i32
    %c0_i32_0 = arith.constant 0 : i32
    %c0_i32_1 = arith.constant 0 : i32
    return %arg0, %c0_i32, %c0_i32_0 : i32, i32, i32
  }
}

</mosaic_0001>

<llo_original>
// kernel: tpu_custom_call.1
$region0: #{tpu_custom_call.1}
  #allocation0 [shape = 'u32[]', space=smem, size = 0x4, offset = 0x4, fixed_abs, tag = 'smem constant byte address 0x4 - core index']
  #allocation1 [shape = 'u32[144,128]{1,0:T(1,128)}', space=vmem, size = 0x12000, scoped, tag = 'internal scratch']
  #allocation2 [shape = 'f32[18,18,4]{2,1,0:T(8,128)}', space=vmem, size = 0x36000, scoped, tag = 'scratch operand']
  #allocation3 [shape = 'f32[20,20,4]{2,1,0:T(8,128)}', space=vmem, size = 0x3c000, scoped, tag = 'scratch operand']
  %s0 = inlined_call_operand.vmem [shape: f32[2,18,18,4], index: 0, kind: input, shape index: {}]
  %s1 = inlined_call_operand.vmem [shape: f32[8,24], index: 1, kind: input, shape index: {}]
  %s2 = inlined_call_operand.vmem [shape: f32[1,24], index: 2, kind: input, shape index: {}]
  %s3 = inlined_call_operand.vmem [shape: f32[1,24], index: 3, kind: input, shape index: {}]
  %s4 = inlined_call_operand.vmem [shape: f32[36,8], index: 4, kind: input, shape index: {}]
  %s5 = inlined_call_operand.vmem [shape: f32[1,8], index: 5, kind: input, shape index: {}]
  %s6 = inlined_call_operand.vmem [shape: f32[1,8], index: 6, kind: input, shape index: {}]
  %s7 = inlined_call_operand.vmem [shape: f32[100,8], index: 7, kind: input, shape index: {}]
  %s8 = inlined_call_operand.vmem [shape: f32[1,8], index: 8, kind: input, shape index: {}]
  %s9 = inlined_call_operand.vmem [shape: f32[1,8], index: 9, kind: input, shape index: {}]
  %s10 = inlined_call_operand.vmem [shape: f32[2,256,32], index: 10, kind: output, shape index: {}]
  %s11 = sld [smem:[#allocation0]]
  $region73: #{tpu_custom_call.1} parent=0
    _
  %s13 = ssub.s32 1, %s11
  %s14 = scalar_select 0, %s13, %s11
  loop: start=0, step=1, limit=4
  $region2: #{tpu_custom_call.1} parent=0 // loop_pre_header
    _
  $region3: #{tpu_custom_call.1} parent=0 // loop_header
    %s16 = sphi 0, %s20
    %p17 = scmp.ge.s32.totalorder %s16, 4
    %s26 = sphi 0, %s28
    %s29 = sphi 0, %s26
    %s30 = sphi 0, %s29
    %s46 = sphi 0, %s30
    %s50 = sphi 0, %s50
    %s52 = sphi 0, %s50
    %s53 = sphi 0, %s52
    %s67 = sphi 0, %s53
    %s71 = sphi 0, %s71
    %s73 = sphi 0, %s71
    %s74 = sphi 0, %s73
    %s88 = sphi 0, %s74
    %s92 = sphi 0, %s92
    %s94 = sphi 0, %s92
    %s95 = sphi 0, %s94
    %s109 = sphi 0, %s95
    %s113 = sphi 0, %s113
    %s115 = sphi 0, %s113
    %s116 = sphi 0, %s115
    %s130 = sphi 0, %s116
    %s134 = sphi 0, %s134
    %s136 = sphi 0, %s134
    %s137 = sphi 0, %s136
    %s151 = sphi 0, %s137
    %s155 = sphi 0, %s155
    %s157 = sphi 0, %s155
    %s158 = sphi 0, %s157
    %s172 = sphi 0, %s158
    %s176 = sphi 0, %s176
    %s178 = sphi 0, %s176
    %s179 = sphi 0, %s178
    %s193 = sphi 0, %s179
    %s197 = sphi 0, %s197
    %s199 = sphi 0, %s197
    %s200 = sphi 0, %s199
    %s214 = sphi 0, %s200
    %s218 = sphi 0, %s218
    %s220 = sphi 0, %s218
    %s221 = sphi 0, %s220
    %s235 = sphi 0, %s221
    %s241 = sphi 0, %s243
    %s244 = sphi 0, %s241
    %s245 = sphi 0, %s244
    %s261 = sphi 0, %s245
  $region4: #{tpu_custom_call.1} parent=0 // loop_header_branch
    %19 = sbr.rel (%p17) target = $region8
  $region5: #{tpu_custom_call.1} parent=0 // loop_body
    %s21 = ssub.s32 %s16, 1
    %s22 = ssub.s32 %s16, 2
    %s23 = sadd.s32 %s16, 1
    %s24 = ssub.s32 %s16, %s23
    %p25 = scmp.eq.s32.totalorder %s24, 0
    %s27 = sadd.s32 %s26, 1
    %s28 = scalar_select %p25, %s26, %s27
    %p31 = pneg %p25
    %p32 = scmp.eq.s32.totalorder %s16, 1
    %p33 = por %p31, %p32
    %p34 = scmp.ne.s32.totalorder %s26, %s29
    %p35 = scmp.eq.s32.totalorder %s16, 0
    %p36 = por %p34, %p35
    %p37 = scmp.ne.s32.totalorder %s26, %s29
    %p38 = scmp.eq.s32.totalorder %s21, 1
    %p39 = por %p37, %p38
    %p40 = scmp.ne.s32.totalorder %s29, %s30
    %p41 = scmp.eq.s32.totalorder %s21, 0
    %p42 = por %p40, %p41
    %p43 = scmp.ne.s32.totalorder %s29, %s30
    %p44 = scmp.eq.s32.totalorder %s22, 1
    %p45 = por %p43, %p44
    %p47 = scmp.ne.s32.totalorder %s30, %s46
    %p48 = scmp.eq.s32.totalorder %s22, 0
    %p49 = por %p47, %p48
    %s51 = sadd.s32 %s50, 1
    %p54 = scmp.eq.s32.totalorder %s16, 1
    %p55 = scmp.ne.s32.totalorder %s50, %s52
    %p56 = scmp.eq.s32.totalorder %s16, 0
    %p57 = por %p55, %p56
    %p58 = scmp.ne.s32.totalorder %s50, %s52
    %p59 = scmp.eq.s32.totalorder %s21, 1
    %p60 = por %p58, %p59
    %p61 = scmp.ne.s32.totalorder %s52, %s53
    %p62 = scmp.eq.s32.totalorder %s21, 0
    %p63 = por %p61, %p62
    %p64 = scmp.ne.s32.totalorder %s52, %s53
    %p65 = scmp.eq.s32.totalorder %s22, 1
    %p66 = por %p64, %p65
    %p68 = scmp.ne.s32.totalorder %s53, %s67
    %p69 = scmp.eq.s32.totalorder %s22, 0
    %p70 = por %p68, %p69
    %s72 = sadd.s32 %s71, 1
    %p75 = scmp.eq.s32.totalorder %s16, 1
    %p76 = scmp.ne.s32.totalorder %s71, %s73
    %p77 = scmp.eq.s32.totalorder %s16, 0
    %p78 = por %p76, %p77
    %p79 = scmp.ne.s32.totalorder %s71, %s73
    %p80 = scmp.eq.s32.totalorder %s21, 1
    %p81 = por %p79, %p80
    %p82 = scmp.ne.s32.totalorder %s73, %s74
    %p83 = scmp.eq.s32.totalorder %s21, 0
    %p84 = por %p82, %p83
    %p85 = scmp.ne.s32.totalorder %s73, %s74
    %p86 = scmp.eq.s32.totalorder %s22, 1
    %p87 = por %p85, %p86
    %p89 = scmp.ne.s32.totalorder %s74, %s88
    %p90 = scmp.eq.s32.totalorder %s22, 0
    %p91 = por %p89, %p90
    %s93 = sadd.s32 %s92, 1
    %p96 = scmp.eq.s32.totalorder %s16, 1
    %p97 = scmp.ne.s32.totalorder %s92, %s94
    %p98 = scmp.eq.s32.totalorder %s16, 0
    %p99 = por %p97, %p98
    %p100 = scmp.ne.s32.totalorder %s92, %s94
    %p101 = scmp.eq.s32.totalorder %s21, 1
    %p102 = por %p100, %p101
    %p103 = scmp.ne.s32.totalorder %s94, %s95
    %p104 = scmp.eq.s32.totalorder %s21, 0
    %p105 = por %p103, %p104
    %p106 = scmp.ne.s32.totalorder %s94, %s95
    %p107 = scmp.eq.s32.totalorder %s22, 1
    %p108 = por %p106, %p107
    %p110 = scmp.ne.s32.totalorder %s95, %s109
    %p111 = scmp.eq.s32.totalorder %s22, 0
    %p112 = por %p110, %p111
    %s114 = sadd.s32 %s113, 1
    %p117 = scmp.eq.s32.totalorder %s16, 1
    %p118 = scmp.ne.s32.totalorder %s113, %s115
    %p119 = scmp.eq.s32.totalorder %s16, 0
    %p120 = por %p118, %p119
    %p121 = scmp.ne.s32.totalorder %s113, %s115
    %p122 = scmp.eq.s32.totalorder %s21, 1
    %p123 = por %p121, %p122
    %p124 = scmp.ne.s32.totalorder %s115, %s116
    %p125 = scmp.eq.s32.totalorder %s21, 0
    %p126 = por %p124, %p125
    %p127 = scmp.ne.s32.totalorder %s115, %s116
    %p128 = scmp.eq.s32.totalorder %s22, 1
    %p129 = por %p127, %p128
    %p131 = scmp.ne.s32.totalorder %s116, %s130
    %p132 = scmp.eq.s32.totalorder %s22, 0
    %p133 = por %p131, %p132
    %s135 = sadd.s32 %s134, 1
    %p138 = scmp.eq.s32.totalorder %s16, 1
    %p139 = scmp.ne.s32.totalorder %s134, %s136
    %p140 = scmp.eq.s32.totalorder %s16, 0
    %p141 = por %p139, %p140
    %p142 = scmp.ne.s32.totalorder %s134, %s136
    %p143 = scmp.eq.s32.totalorder %s21, 1
    %p144 = por %p142, %p143
    %p145 = scmp.ne.s32.totalorder %s136, %s137
    %p146 = scmp.eq.s32.totalorder %s21, 0
    %p147 = por %p145, %p146
    %p148 = scmp.ne.s32.totalorder %s136, %s137
    %p149 = scmp.eq.s32.totalorder %s22, 1
    %p150 = por %p148, %p149
    %p152 = scmp.ne.s32.totalorder %s137, %s151
    %p153 = scmp.eq.s32.totalorder %s22, 0
    %p154 = por %p152, %p153
    %s156 = sadd.s32 %s155, 1
    %p159 = scmp.eq.s32.totalorder %s16, 1
    %p160 = scmp.ne.s32.totalorder %s155, %s157
    %p161 = scmp.eq.s32.totalorder %s16, 0
    %p162 = por %p160, %p161
    %p163 = scmp.ne.s32.totalorder %s155, %s157
    %p164 = scmp.eq.s32.totalorder %s21, 1
    %p165 = por %p163, %p164
    %p166 = scmp.ne.s32.totalorder %s157, %s158
    %p167 = scmp.eq.s32.totalorder %s21, 0
    %p168 = por %p166, %p167
    %p169 = scmp.ne.s32.totalorder %s157, %s158
    %p170 = scmp.eq.s32.totalorder %s22, 1
    %p171 = por %p169, %p170
    %p173 = scmp.ne.s32.totalorder %s158, %s172
    %p174 = scmp.eq.s32.totalorder %s22, 0
    %p175 = por %p173, %p174
    %s177 = sadd.s32 %s176, 1
    %p180 = scmp.eq.s32.totalorder %s16, 1
    %p181 = scmp.ne.s32.totalorder %s176, %s178
    %p182 = scmp.eq.s32.totalorder %s16, 0
    %p183 = por %p181, %p182
    %p184 = scmp.ne.s32.totalorder %s176, %s178
    %p185 = scmp.eq.s32.totalorder %s21, 1
    %p186 = por %p184, %p185
    %p187 = scmp.ne.s32.totalorder %s178, %s179
    %p188 = scmp.eq.s32.totalorder %s21, 0
    %p189 = por %p187, %p188
    %p190 = scmp.ne.s32.totalorder %s178, %s179
    %p191 = scmp.eq.s32.totalorder %s22, 1
    %p192 = por %p190, %p191
    %p194 = scmp.ne.s32.totalorder %s179, %s193
    %p195 = scmp.eq.s32.totalorder %s22, 0
    %p196 = por %p194, %p195
    %s198 = sadd.s32 %s197, 1
    %p201 = scmp.eq.s32.totalorder %s16, 1
    %p202 = scmp.ne.s32.totalorder %s197, %s199
    %p203 = scmp.eq.s32.totalorder %s16, 0
    %p204 = por %p202, %p203
    %p205 = scmp.ne.s32.totalorder %s197, %s199
    %p206 = scmp.eq.s32.totalorder %s21, 1
    %p207 = por %p205, %p206
    %p208 = scmp.ne.s32.totalorder %s199, %s200
    %p209 = scmp.eq.s32.totalorder %s21, 0
    %p210 = por %p208, %p209
    %p211 = scmp.ne.s32.totalorder %s199, %s200
    %p212 = scmp.eq.s32.totalorder %s22, 1
    %p213 = por %p211, %p212
    %p215 = scmp.ne.s32.totalorder %s200, %s214
    %p216 = scmp.eq.s32.totalorder %s22, 0
    %p217 = por %p215, %p216
    %s219 = sadd.s32 %s218, 1
    %p222 = scmp.eq.s32.totalorder %s16, 1
    %p223 = scmp.ne.s32.totalorder %s218, %s220
    %p224 = scmp.eq.s32.totalorder %s16, 0
    %p225 = por %p223, %p224
    %p226 = scmp.ne.s32.totalorder %s218, %s220
    %p227 = scmp.eq.s32.totalorder %s21, 1
    %p228 = por %p226, %p227
    %p229 = scmp.ne.s32.totalorder %s220, %s221
    %p230 = scmp.eq.s32.totalorder %s21, 0
    %p231 = por %p229, %p230
    %p232 = scmp.ne.s32.totalorder %s220, %s221
    %p233 = scmp.eq.s32.totalorder %s22, 1
    %p234 = por %p232, %p233
    %p236 = scmp.ne.s32.totalorder %s221, %s235
    %p237 = scmp.eq.s32.totalorder %s22, 0
    %p238 = por %p236, %p237
    %s239 = ssub.s32 %s16, %s23
    %p240 = scmp.eq.s32.totalorder %s239, 0
    %s242 = sadd.s32 %s241, 1
    %s243 = scalar_select %p240, %s241, %s242
    %p246 = pneg %p240
    %p247 = scmp.eq.s32.totalorder %s16, 1
    %p248 = por %p246, %p247
    %p249 = scmp.ne.s32.totalorder %s241, %s244
    %p250 = scmp.eq.s32.totalorder %s16, 0
    %p251 = por %p249, %p250
    %p252 = scmp.ne.s32.totalorder %s241, %s244
    %p253 = scmp.eq.s32.totalorder %s21, 1
    %p254 = por %p252, %p253
    %p255 = scmp.ne.s32.totalorder %s244, %s245
    %p256 = scmp.eq.s32.totalorder %s21, 0
    %p257 = por %p255, %p256
    %p258 = scmp.ne.s32.totalorder %s244, %s245
    %p259 = scmp.eq.s32.totalorder %s22, 1
    %p260 = por %p258, %p259
    %p262 = scmp.ne.s32.totalorder %s245, %s261
    %p263 = scmp.eq.s32.totalorder %s22, 0
    %p264 = por %p262, %p263
    %p265 = scmp.le.s32.totalorder 1, %s16
    %p266 = scmp.lt.s32.totalorder %s16, 3
    %p267 = pnand %p265, %p266
    %p268 = pneg %p267
    // Predicated region
    $region9: #{tpu_custom_call.1} parent=5 // pred_check
      _
    $region10: #{tpu_custom_call.1} parent=5 // pred_check_branch
      %270 = sbr.rel (%p267) target = $region12
    $region11: #{tpu_custom_call.1} parent=5 // pred_region
      %s271 = ssub.s32 %s16, 1
      // Predicated region
      $region13: #{tpu_custom_call.1} parent=11 // pred_check
        %p272 = pneg %p63
      $region14: #{tpu_custom_call.1} parent=11 // pred_check_branch
        %274 = sbr.rel (%p272) target = $region16
      $region15: #{tpu_custom_call.1} parent=11 // pred_region
        _
      $region16: #{tpu_custom_call.1} parent=11 // pred_fallthru
        _
      // Predicated region
      $region17: #{tpu_custom_call.1} parent=11 // pred_check
        %p275 = pneg %p84
      $region18: #{tpu_custom_call.1} parent=11 // pred_check_branch
        %277 = sbr.rel (%p275) target = $region20
      $region19: #{tpu_custom_call.1} parent=11 // pred_region
        _
      $region20: #{tpu_custom_call.1} parent=11 // pred_fallthru
        _
      // Predicated region
      $region21: #{tpu_custom_call.1} parent=11 // pred_check
        %p278 = pneg %p105
      $region22: #{tpu_custom_call.1} parent=11 // pred_check_branch
        %280 = sbr.rel (%p278) target = $region24
      $region23: #{tpu_custom_call.1} parent=11 // pred_region
        _
      $region24: #{tpu_custom_call.1} parent=11 // pred_fallthru
        _
      // Predicated region
      $region25: #{tpu_custom_call.1} parent=11 // pred_check
        %p281 = pneg %p126
      $region26: #{tpu_custom_call.1} parent=11 // pred_check_branch
        %283 = sbr.rel (%p281) target = $region28
      $region27: #{tpu_custom_call.1} parent=11 // pred_region
        _
      $region28: #{tpu_custom_call.1} parent=11 // pred_fallthru
        _
      // Predicated region
      $region29: #{tpu_custom_call.1} parent=11 // pred_check
        %p284 = pneg %p147
      $region30: #{tpu_custom_call.1} parent=11 // pred_check_branch
        %286 = sbr.rel (%p284) target = $region32
      $region31: #{tpu_custom_call.1} parent=11 // pred_region
        _
      $region32: #{tpu_custom_call.1} parent=11 // pred_fallthru
        _
      // Predicated region
      $region33: #{tpu_custom_call.1} parent=11 // pred_check
        %p287 = pneg %p168
      $region34: #{tpu_custom_call.1} parent=11 // pred_check_branch
        %289 = sbr.rel (%p287) target = $region36
      $region35: #{tpu_custom_call.1} parent=11 // pred_region
        _
      $region36: #{tpu_custom_call.1} parent=11 // pred_fallthru
        _
      // Predicated region
      $region37: #{tpu_custom_call.1} parent=11 // pred_check
        %p290 = pneg %p189
      $region38: #{tpu_custom_call.1} parent=11 // pred_check_branch
        %292 = sbr.rel (%p290) target = $region40
      $region39: #{tpu_custom_call.1} parent=11 // pred_region
        _
      $region40: #{tpu_custom_call.1} parent=11 // pred_fallthru
        _
      // Predicated region
      $region41: #{tpu_custom_call.1} parent=11 // pred_check
        %p293 = pneg %p210
      $region42: #{tpu_custom_call.1} parent=11 // pred_check_branch
        %295 = sbr.rel (%p293) target = $region44
      $region43: #{tpu_custom_call.1} parent=11 // pred_region
        _
      $region44: #{tpu_custom_call.1} parent=11 // pred_fallthru
        _
      // Predicated region
      $region45: #{tpu_custom_call.1} parent=11 // pred_check
        %p296 = pneg %p231
      $region46: #{tpu_custom_call.1} parent=11 // pred_check_branch
        %298 = sbr.rel (%p296) target = $region48
      $region47: #{tpu_custom_call.1} parent=11 // pred_region
        _
      $region48: #{tpu_custom_call.1} parent=11 // pred_fallthru
        _
    $region12: #{tpu_custom_call.1} parent=5 // pred_fallthru
      _
    %p299 = scmp.lt.s32.totalorder %s16, 2
    // Predicated region
    $region49: #{tpu_custom_call.1} parent=5 // pred_check
      %p300 = pneg %p299
    $region50: #{tpu_custom_call.1} parent=5 // pred_check_branch
      %302 = sbr.rel (%p300) target = $region52
    $region51: #{tpu_custom_call.1} parent=5 // pred_region
      // Predicated region
      $region53: #{tpu_custom_call.1} parent=51 // pred_check
        %p303 = pneg %p36
      $region54: #{tpu_custom_call.1} parent=51 // pred_check_branch
        %305 = sbr.rel (%p303) target = $region56
      $region55: #{tpu_custom_call.1} parent=51 // pred_region
        %p306 = scmp.lt.s32.totalorder %s16, 1
        %s307 = scalar_select %p306, %s16, 1
        %s308 = smul.addr %s307, 54
        %s309 = smul.addr %s308, 8
        %s310 = scalar_lea.vmem %s0, %s309
      $region56: #{tpu_custom_call.1} parent=51 // pred_fallthru
        _
    $region52: #{tpu_custom_call.1} parent=5 // pred_fallthru
      _
    %p311 = scmp.le.s32.totalorder 1, %s16
    %p312 = scmp.lt.s32.totalorder %s16, 3
    %p313 = pnand %p311, %p312
    %p314 = pneg %p313
    // Predicated region
    $region57: #{tpu_custom_call.1} parent=5 // pred_check
      _
    $region58: #{tpu_custom_call.1} parent=5 // pred_check_branch
      %316 = sbr.rel (%p313) target = $region60
    $region59: #{tpu_custom_call.1} parent=5 // pred_region
      %s317 = ssub.s32 %s16, 1
      %p318 = scmp.lt.s32.totalorder %s21, 1
      %s319 = scalar_select %p318, %s21, 1
      %s320 = smul.addr %s319, 54
      %s321 = smul.addr %s320, 8
      %s322 = scalar_lea.vmem %s0, %s321
      %p323 = pneg %p42
      %p324 = pneg %p39
      %p325 = pneg %p63
      %p326 = pneg %p60
      %p327 = pneg %p84
      %p328 = pneg %p81
      %p329 = pneg %p105
      %p330 = pneg %p102
      %p331 = pneg %p126
      %p332 = pneg %p123
      %p333 = pneg %p147
      %p334 = pneg %p144
      %p335 = pneg %p168
      %p336 = pneg %p165
      %p337 = pneg %p189
      %p338 = pneg %p186
      %p339 = pneg %p210
      %p340 = pneg %p207
      %p341 = pneg %p231
      %p342 = pneg %p228
      %p343 = pneg %p257
      %p344 = pneg %p254
      %p345 = scmp.lt.s32.totalorder %s21, 1
      %s346 = scalar_select %p345, %s21, 1
      %s347 = smul.addr %s346, 32
      %s348 = smul.addr %s347, 8
      %s349 = scalar_lea.vmem %s10, %s348
      %p350 = scmp.lt.s32.totalorder %s21, 1
      %s351 = scalar_select %p350, %s21, 1
      %s352 = smul.addr %s351, 54
      %s353 = smul.addr %s352, 8
      %s354 = scalar_lea.vmem %s0, %s353
      %p355 = scmp.lt.s32.totalorder %s21, 1
      %s356 = scalar_select %p355, %s21, 1
      %s357 = smul.addr %s356, 32
      %s358 = smul.addr %s357, 8
      %s359 = scalar_lea.vmem %s10, %s358
      %v360 = vld [vmem:[%s354] sm:$0xff]
      %v361 = vld [vmem:[%s354 + $0x8] sm:$0xff]
      %v362 = vld [vmem:[%s354 + $0x10] sm:$0x3]
      %v363 = vld [vmem:[%s354 + $0x18] sm:$0xff]
      %v364 = vld [vmem:[%s354 + $0x20] sm:$0xff]
      %v365 = vld [vmem:[%s354 + $0x28] sm:$0x3]
      %v366 = vld [vmem:[%s354 + $0x30] sm:$0xff]
      %v367 = vld [vmem:[%s354 + $0x38] sm:$0xff]
      %v368 = vld [vmem:[%s354 + $0x40] sm:$0x3]
      %v369 = vld [vmem:[%s354 + $0x48] sm:$0xff]
      %v370 = vld [vmem:[%s354 + $0x50] sm:$0xff]
      %v371 = vld [vmem:[%s354 + $0x58] sm:$0x3]
      %v372 = vld [vmem:[%s354 + $0x60] sm:$0xff]
      %v373 = vld [vmem:[%s354 + $0x68] sm:$0xff]
      %v374 = vld [vmem:[%s354 + $0x70] sm:$0x3]
      %v375 = vld [vmem:[%s354 + $0x78] sm:$0xff]
      %v376 = vld [vmem:[%s354 + $0x80] sm:$0xff]
      %v377 = vld [vmem:[%s354 + $0x88] sm:$0x3]
      %v378 = vld [vmem:[%s354 + $0x90] sm:$0xff]
      %v379 = vld [vmem:[%s354 + $0x98] sm:$0xff]
      %v380 = vld [vmem:[%s354 + $0xa0] sm:$0x3]
      %v381 = vld [vmem:[%s354 + $0xa8] sm:$0xff]
      %v382 = vld [vmem:[%s354 + $0xb0] sm:$0xff]
      %v383 = vld [vmem:[%s354 + $0xb8] sm:$0x3]
      %v384 = vld [vmem:[%s354 + $0xc0] sm:$0xff]
      %v385 = vld [vmem:[%s354 + $0xc8] sm:$0xff]
      %v386 = vld [vmem:[%s354 + $0xd0] sm:$0x3]
      %v387 = vld [vmem:[%s354 + $0xd8] sm:$0xff]
      %v388 = vld [vmem:[%s354 + $0xe0] sm:$0xff]
      %v389 = vld [vmem:[%s354 + $0xe8] sm:$0x3]
      %v390 = vld [vmem:[%s354 + $0xf0] sm:$0xff]
      %v391 = vld [vmem:[%s354 + $0xf8] sm:$0xff]
      %v392 = vld [vmem:[%s354 + $0x100] sm:$0x3]
      %v393 = vld [vmem:[%s354 + $0x108] sm:$0xff]
      %v394 = vld [vmem:[%s354 + $0x110] sm:$0xff]
      %v395 = vld [vmem:[%s354 + $0x118] sm:$0x3]
      %v396 = vld [vmem:[%s354 + $0x120] sm:$0xff]
      %v397 = vld [vmem:[%s354 + $0x128] sm:$0xff]
      %v398 = vld [vmem:[%s354 + $0x130] sm:$0x3]
      %v399 = vld [vmem:[%s354 + $0x138] sm:$0xff]
      %v400 = vld [vmem:[%s354 + $0x140] sm:$0xff]
      %v401 = vld [vmem:[%s354 + $0x148] sm:$0x3]
      %v402 = vld [vmem:[%s354 + $0x150] sm:$0xff]
      %v403 = vld [vmem:[%s354 + $0x158] sm:$0xff]
      %v404 = vld [vmem:[%s354 + $0x160] sm:$0x3]
      %v405 = vld [vmem:[%s354 + $0x168] sm:$0xff]
      %v406 = vld [vmem:[%s354 + $0x170] sm:$0xff]
      %v407 = vld [vmem:[%s354 + $0x178] sm:$0x3]
      %v408 = vld [vmem:[%s354 + $0x180] sm:$0xff]
      %v409 = vld [vmem:[%s354 + $0x188] sm:$0xff]
      %v410 = vld [vmem:[%s354 + $0x190] sm:$0x3]
      %v411 = vld [vmem:[%s354 + $0x198] sm:$0xff]
      %v412 = vld [vmem:[%s354 + $0x1a0] sm:$0xff]
      %v413 = vld [vmem:[%s354 + $0x1a8] sm:$0x3]
      %vm446 = vcmask 1040384
      %v447 = vrot.slane %v360, 7
      %v448 = vrot.slane %v361, 7
      %v449 = vsel %vm446, %v447, %v448
      %v450 = vrot.slane %v363, 7
      %v451 = vrot.slane %v364, 7
      %v452 = vsel %vm446, %v450, %v451
      %v453 = vrot.slane %v366, 7
      %v454 = vrot.slane %v367, 7
      %v455 = vsel %vm446, %v453, %v454
      %v456 = vrot.slane %v369, 7
      %v457 = vrot.slane %v370, 7
      %v458 = vsel %vm446, %v456, %v457
      %v459 = vrot.slane %v372, 7
      %v460 = vrot.slane %v373, 7
      %v461 = vsel %vm446, %v459, %v460
      %v462 = vrot.slane %v375, 7
      %v463 = vrot.slane %v376, 7
      %v464 = vsel %vm446, %v462, %v463
      %v465 = vrot.slane %v378, 7
      %v466 = vrot.slane %v379, 7
      %v467 = vsel %vm446, %v465, %v466
      %v468 = vrot.slane %v381, 7
      %v469 = vrot.slane %v382, 7
      %v470 = vsel %vm446, %v468, %v469
      %v471 = vrot.slane %v384, 7
      %v472 = vrot.slane %v385, 7
      %v473 = vsel %vm446, %v471, %v472
      %v474 = vrot.slane %v387, 7
      %v475 = vrot.slane %v388, 7
      %v476 = vsel %vm446, %v474, %v475
      %v477 = vrot.slane %v390, 7
      %v478 = vrot.slane %v391, 7
      %v479 = vsel %vm446, %v477, %v478
      %v480 = vrot.slane %v393, 7
      %v481 = vrot.slane %v394, 7
      %v482 = vsel %vm446, %v480, %v481
      %v483 = vrot.slane %v396, 7
      %v484 = vrot.slane %v397, 7
      %v485 = vsel %vm446, %v483, %v484
      %v486 = vrot.slane %v399, 7
      %v487 = vrot.slane %v400, 7
      %v488 = vsel %vm446, %v486, %v487
      %v489 = vrot.slane %v402, 7
      %v490 = vrot.slane %v403, 7
      %v491 = vsel %vm446, %v489, %v490
      %v492 = vrot.slane %v405, 7
      %v493 = vrot.slane %v406, 7
      %v494 = vsel %vm446, %v492, %v493
      %v543 = vmax.f32 %v363, %v447
      %v544 = vmax.f32 %v364, %v449
      %v545 = vmax.f32 %v365, %v448
      %v546 = vmax.f32 %v366, %v450
      %v547 = vmax.f32 %v367, %v452
      %v548 = vmax.f32 %v368, %v451
      %v549 = vmax.f32 %v369, %v453
      %v550 = vmax.f32 %v370, %v455
      %v551 = vmax.f32 %v371, %v454
      %v552 = vmax.f32 %v372, %v456
      %v553 = vmax.f32 %v373, %v458
      %v554 = vmax.f32 %v374, %v457
      %v555 = vmax.f32 %v375, %v459
      %v556 = vmax.f32 %v376, %v461
      %v557 = vmax.f32 %v377, %v460
      %v558 = vmax.f32 %v378, %v462
      %v559 = vmax.f32 %v379, %v464
      %v560 = vmax.f32 %v380, %v463
      %v561 = vmax.f32 %v381, %v465
      %v562 = vmax.f32 %v382, %v467
      %v563 = vmax.f32 %v383, %v466
      %v564 = vmax.f32 %v384, %v468
      %v565 = vmax.f32 %v385, %v470
      %v566 = vmax.f32 %v386, %v469
      %v567 = vmax.f32 %v387, %v471
      %v568 = vmax.f32 %v388, %v473
      %v569 = vmax.f32 %v389, %v472
      %v570 = vmax.f32 %v390, %v474
      %v571 = vmax.f32 %v391, %v476
      %v572 = vmax.f32 %v392, %v475
      %v573 = vmax.f32 %v393, %v477
      %v574 = vmax.f32 %v394, %v479
      %v575 = vmax.f32 %v395, %v478
      %v576 = vmax.f32 %v396, %v480
      %v577 = vmax.f32 %v397, %v482
      %v578 = vmax.f32 %v398, %v481
      %v579 = vmax.f32 %v399, %v483
      %v580 = vmax.f32 %v400, %v485
      %v581 = vmax.f32 %v401, %v484
      %v582 = vmax.f32 %v402, %v486
      %v583 = vmax.f32 %v403, %v488
      %v584 = vmax.f32 %v404, %v487
      %v585 = vmax.f32 %v405, %v489
      %v586 = vmax.f32 %v406, %v491
      %v587 = vmax.f32 %v407, %v490
      %v588 = vmax.f32 %v408, %v492
      %v589 = vmax.f32 %v409, %v494
      %v590 = vmax.f32 %v410, %v493
      %v591 = vmax.f32 %v543, %v360
      %v592 = vmax.f32 %v544, %v361
      %v593 = vmax.f32 %v545, %v362
      %v594 = vmax.f32 %v546, %v363
      %v595 = vmax.f32 %v547, %v364
      %v596 = vmax.f32 %v548, %v365
      %v597 = vmax.f32 %v549, %v366
      %v598 = vmax.f32 %v550, %v367
      %v599 = vmax.f32 %v551, %v368
      %v600 = vmax.f32 %v552, %v369
      %v601 = vmax.f32 %v553, %v370
      %v602 = vmax.f32 %v554, %v371
      %v603 = vmax.f32 %v555, %v372
      %v604 = vmax.f32 %v556, %v373
      %v605 = vmax.f32 %v557, %v374
      %v606 = vmax.f32 %v558, %v375
      %v607 = vmax.f32 %v559, %v376
      %v608 = vmax.f32 %v560, %v377
      %v609 = vmax.f32 %v561, %v378
      %v610 = vmax.f32 %v562, %v379
      %v611 = vmax.f32 %v563, %v380
      %v612 = vmax.f32 %v564, %v381
      %v613 = vmax.f32 %v565, %v382
      %v614 = vmax.f32 %v566, %v383
      %v615 = vmax.f32 %v567, %v384
      %v616 = vmax.f32 %v568, %v385
      %v617 = vmax.f32 %v569, %v386
      %v618 = vmax.f32 %v570, %v387
      %v619 = vmax.f32 %v571, %v388
      %v620 = vmax.f32 %v572, %v389
      %v621 = vmax.f32 %v573, %v390
      %v622 = vmax.f32 %v574, %v391
      %v623 = vmax.f32 %v575, %v392
      %v624 = vmax.f32 %v576, %v393
      %v625 = vmax.f32 %v577, %v394
      %v626 = vmax.f32 %v578, %v395
      %v627 = vmax.f32 %v579, %v396
      %v628 = vmax.f32 %v580, %v397
      %v629 = vmax.f32 %v581, %v398
      %v630 = vmax.f32 %v582, %v399
      %v631 = vmax.f32 %v583, %v400
      %v632 = vmax.f32 %v584, %v401
      %v633 = vmax.f32 %v585, %v402
      %v634 = vmax.f32 %v586, %v403
      %v635 = vmax.f32 %v587, %v404
      %v636 = vmax.f32 %v588, %v405
      %v637 = vmax.f32 %v589, %v406
      %v638 = vmax.f32 %v590, %v407
      %vm655 = vcmask 1046528
      %v656 = vrot.slane %v360, 1
      %v657 = vrot.slane %v361, 1
      %v658 = vsel %vm655, %v656, %v657
      %v659 = vrot.slane %v362, 1
      %v660 = vsel %vm655, %v657, %v659
      %v661 = vrot.slane %v363, 1
      %v662 = vrot.slane %v364, 1
      %v663 = vsel %vm655, %v661, %v662
      %v664 = vrot.slane %v365, 1
      %v665 = vsel %vm655, %v662, %v664
      %v666 = vrot.slane %v366, 1
      %v667 = vrot.slane %v367, 1
      %v668 = vsel %vm655, %v666, %v667
      %v669 = vrot.slane %v368, 1
      %v670 = vsel %vm655, %v667, %v669
      %v671 = vrot.slane %v369, 1
      %v672 = vrot.slane %v370, 1
      %v673 = vsel %vm655, %v671, %v672
      %v674 = vrot.slane %v371, 1
      %v675 = vsel %vm655, %v672, %v674
      %v676 = vrot.slane %v372, 1
      %v677 = vrot.slane %v373, 1
      %v678 = vsel %vm655, %v676, %v677
      %v679 = vrot.slane %v374, 1
      %v680 = vsel %vm655, %v677, %v679
      %v681 = vrot.slane %v375, 1
      %v682 = vrot.slane %v376, 1
      %v683 = vsel %vm655, %v681, %v682
      %v684 = vrot.slane %v377, 1
      %v685 = vsel %vm655, %v682, %v684
      %v686 = vrot.slane %v378, 1
      %v687 = vrot.slane %v379, 1
      %v688 = vsel %vm655, %v686, %v687
      %v689 = vrot.slane %v380, 1
      %v690 = vsel %vm655, %v687, %v689
      %v691 = vrot.slane %v381, 1
      %v692 = vrot.slane %v382, 1
      %v693 = vsel %vm655, %v691, %v692
      %v694 = vrot.slane %v383, 1
      %v695 = vsel %vm655, %v692, %v694
      %v696 = vrot.slane %v384, 1
      %v697 = vrot.slane %v385, 1
      %v698 = vsel %vm655, %v696, %v697
      %v699 = vrot.slane %v386, 1
      %v700 = vsel %vm655, %v697, %v699
      %v701 = vrot.slane %v387, 1
      %v702 = vrot.slane %v388, 1
      %v703 = vsel %vm655, %v701, %v702
      %v704 = vrot.slane %v389, 1
      %v705 = vsel %vm655, %v702, %v704
      %v706 = vrot.slane %v390, 1
      %v707 = vrot.slane %v391, 1
      %v708 = vsel %vm655, %v706, %v707
      %v709 = vrot.slane %v392, 1
      %v710 = vsel %vm655, %v707, %v709
      %v711 = vrot.slane %v393, 1
      %v712 = vrot.slane %v394, 1
      %v713 = vsel %vm655, %v711, %v712
      %v714 = vrot.slane %v395, 1
      %v715 = vsel %vm655, %v712, %v714
      %v716 = vrot.slane %v396, 1
      %v717 = vrot.slane %v397, 1
      %v718 = vsel %vm655, %v716, %v717
      %v719 = vrot.slane %v398, 1
      %v720 = vsel %vm655, %v717, %v719
      %v721 = vrot.slane %v399, 1
      %v722 = vrot.slane %v400, 1
      %v723 = vsel %vm655, %v721, %v722
      %v724 = vrot.slane %v401, 1
      %v725 = vsel %vm655, %v722, %v724
      %v726 = vrot.slane %v402, 1
      %v727 = vrot.slane %v403, 1
      %v728 = vsel %vm655, %v726, %v727
      %v729 = vrot.slane %v404, 1
      %v730 = vsel %vm655, %v727, %v729
      %v731 = vrot.slane %v405, 1
      %v732 = vrot.slane %v406, 1
      %v733 = vsel %vm655, %v731, %v732
      %v734 = vrot.slane %v407, 1
      %v735 = vsel %vm655, %v732, %v734
      %v784 = vmax.f32 %v591, %v658
      %v785 = vmax.f32 %v592, %v660
      %v786 = vmax.f32 %v593, %v659
      %v787 = vmax.f32 %v594, %v663
      %v788 = vmax.f32 %v595, %v665
      %v789 = vmax.f32 %v596, %v664
      %v790 = vmax.f32 %v597, %v668
      %v791 = vmax.f32 %v598, %v670
      %v792 = vmax.f32 %v599, %v669
      %v793 = vmax.f32 %v600, %v673
      %v794 = vmax.f32 %v601, %v675
      %v795 = vmax.f32 %v602, %v674
      %v796 = vmax.f32 %v603, %v678
      %v797 = vmax.f32 %v604, %v680
      %v798 = vmax.f32 %v605, %v679
      %v799 = vmax.f32 %v606, %v683
      %v800 = vmax.f32 %v607, %v685
      %v801 = vmax.f32 %v608, %v684
      %v802 = vmax.f32 %v609, %v688
      %v803 = vmax.f32 %v610, %v690
      %v804 = vmax.f32 %v611, %v689
      %v805 = vmax.f32 %v612, %v693
      %v806 = vmax.f32 %v613, %v695
      %v807 = vmax.f32 %v614, %v694
      %v808 = vmax.f32 %v615, %v698
      %v809 = vmax.f32 %v616, %v700
      %v810 = vmax.f32 %v617, %v699
      %v811 = vmax.f32 %v618, %v703
      %v812 = vmax.f32 %v619, %v705
      %v813 = vmax.f32 %v620, %v704
      %v814 = vmax.f32 %v621, %v708
      %v815 = vmax.f32 %v622, %v710
      %v816 = vmax.f32 %v623, %v709
      %v817 = vmax.f32 %v624, %v713
      %v818 = vmax.f32 %v625, %v715
      %v819 = vmax.f32 %v626, %v714
      %v820 = vmax.f32 %v627, %v718
      %v821 = vmax.f32 %v628, %v720
      %v822 = vmax.f32 %v629, %v719
      %v823 = vmax.f32 %v630, %v723
      %v824 = vmax.f32 %v631, %v725
      %v825 = vmax.f32 %v632, %v724
      %v826 = vmax.f32 %v633, %v728
      %v827 = vmax.f32 %v634, %v730
      %v828 = vmax.f32 %v635, %v729
      %v829 = vmax.f32 %v636, %v733
      %v830 = vmax.f32 %v637, %v735
      %v831 = vmax.f32 %v638, %v734
      %v834 = vrot.slane %v408, 7
      %v835 = vrot.slane %v409, 7
      %v836 = vsel %vm446, %v834, %v835
      %v840 = vmax.f32 %v784, %v450
      %v841 = vmax.f32 %v785, %v452
      %v842 = vmax.f32 %v786, %v451
      %v843 = vmax.f32 %v787, %v453
      %v844 = vmax.f32 %v788, %v455
      %v845 = vmax.f32 %v789, %v454
      %v846 = vmax.f32 %v790, %v456
      %v847 = vmax.f32 %v791, %v458
      %v848 = vmax.f32 %v792, %v457
      %v849 = vmax.f32 %v793, %v459
      %v850 = vmax.f32 %v794, %v461
      %v851 = vmax.f32 %v795, %v460
      %v852 = vmax.f32 %v796, %v462
      %v853 = vmax.f32 %v797, %v464
      %v854 = vmax.f32 %v798, %v463
      %v855 = vmax.f32 %v799, %v465
      %v856 = vmax.f32 %v800, %v467
      %v857 = vmax.f32 %v801, %v466
      %v858 = vmax.f32 %v802, %v468
      %v859 = vmax.f32 %v803, %v470
      %v860 = vmax.f32 %v804, %v469
      %v861 = vmax.f32 %v805, %v471
      %v862 = vmax.f32 %v806, %v473
      %v863 = vmax.f32 %v807, %v472
      %v864 = vmax.f32 %v808, %v474
      %v865 = vmax.f32 %v809, %v476
      %v866 = vmax.f32 %v810, %v475
      %v867 = vmax.f32 %v811, %v477
      %v868 = vmax.f32 %v812, %v479
      %v869 = vmax.f32 %v813, %v478
      %v870 = vmax.f32 %v814, %v480
      %v871 = vmax.f32 %v815, %v482
      %v872 = vmax.f32 %v816, %v481
      %v873 = vmax.f32 %v817, %v483
      %v874 = vmax.f32 %v818, %v485
      %v875 = vmax.f32 %v819, %v484
      %v876 = vmax.f32 %v820, %v486
      %v877 = vmax.f32 %v821, %v488
      %v878 = vmax.f32 %v822, %v487
      %v879 = vmax.f32 %v823, %v489
      %v880 = vmax.f32 %v824, %v491
      %v881 = vmax.f32 %v825, %v490
      %v882 = vmax.f32 %v826, %v492
      %v883 = vmax.f32 %v827, %v494
      %v884 = vmax.f32 %v828, %v493
      %v885 = vmax.f32 %v829, %v834
      %v886 = vmax.f32 %v830, %v836
      %v887 = vmax.f32 %v831, %v835
      %v888 = vmax.f32 %v840, %v363
      %v889 = vmax.f32 %v841, %v364
      %v890 = vmax.f32 %v842, %v365
      %v891 = vmax.f32 %v843, %v366
      %v892 = vmax.f32 %v844, %v367
      %v893 = vmax.f32 %v845, %v368
      %v894 = vmax.f32 %v846, %v369
      %v895 = vmax.f32 %v847, %v370
      %v896 = vmax.f32 %v848, %v371
      %v897 = vmax.f32 %v849, %v372
      %v898 = vmax.f32 %v850, %v373
      %v899 = vmax.f32 %v851, %v374
      %v900 = vmax.f32 %v852, %v375
      %v901 = vmax.f32 %v853, %v376
      %v902 = vmax.f32 %v854, %v377
      %v903 = vmax.f32 %v855, %v378
      %v904 = vmax.f32 %v856, %v379
      %v905 = vmax.f32 %v857, %v380
      %v906 = vmax.f32 %v858, %v381
      %v907 = vmax.f32 %v859, %v382
      %v908 = vmax.f32 %v860, %v383
      %v909 = vmax.f32 %v861, %v384
      %v910 = vmax.f32 %v862, %v385
      %v911 = vmax.f32 %v863, %v386
      %v912 = vmax.f32 %v864, %v387
      %v913 = vmax.f32 %v865, %v388
      %v914 = vmax.f32 %v866, %v389
      %v915 = vmax.f32 %v867, %v390
      %v916 = vmax.f32 %v868, %v391
      %v917 = vmax.f32 %v869, %v392
      %v918 = vmax.f32 %v870, %v393
      %v919 = vmax.f32 %v871, %v394
      %v920 = vmax.f32 %v872, %v395
      %v921 = vmax.f32 %v873, %v396
      %v922 = vmax.f32 %v874, %v397
      %v923 = vmax.f32 %v875, %v398
      %v924 = vmax.f32 %v876, %v399
      %v925 = vmax.f32 %v877, %v400
      %v926 = vmax.f32 %v878, %v401
      %v927 = vmax.f32 %v879, %v402
      %v928 = vmax.f32 %v880, %v403
      %v929 = vmax.f32 %v881, %v404
      %v930 = vmax.f32 %v882, %v405
      %v931 = vmax.f32 %v883, %v406
      %v932 = vmax.f32 %v884, %v407
      %v933 = vmax.f32 %v885, %v408
      %v934 = vmax.f32 %v886, %v409
      %v935 = vmax.f32 %v887, %v410
      %v937 = vrot.slane %v408, 1
      %v938 = vrot.slane %v409, 1
      %v939 = vsel %vm655, %v937, %v938
      %v940 = vrot.slane %v410, 1
      %v941 = vsel %vm655, %v938, %v940
      %v945 = vmax.f32 %v888, %v663
      %v946 = vmax.f32 %v889, %v665
      %v947 = vmax.f32 %v890, %v664
      %v948 = vmax.f32 %v891, %v668
      %v949 = vmax.f32 %v892, %v670
      %v950 = vmax.f32 %v893, %v669
      %v951 = vmax.f32 %v894, %v673
      %v952 = vmax.f32 %v895, %v675
      %v953 = vmax.f32 %v896, %v674
      %v954 = vmax.f32 %v897, %v678
      %v955 = vmax.f32 %v898, %v680
      %v956 = vmax.f32 %v899, %v679
      %v957 = vmax.f32 %v900, %v683
      %v958 = vmax.f32 %v901, %v685
      %v959 = vmax.f32 %v902, %v684
      %v960 = vmax.f32 %v903, %v688
      %v961 = vmax.f32 %v904, %v690
      %v962 = vmax.f32 %v905, %v689
      %v963 = vmax.f32 %v906, %v693
      %v964 = vmax.f32 %v907, %v695
      %v965 = vmax.f32 %v908, %v694
      %v966 = vmax.f32 %v909, %v698
      %v967 = vmax.f32 %v910, %v700
      %v968 = vmax.f32 %v911, %v699
      %v969 = vmax.f32 %v912, %v703
      %v970 = vmax.f32 %v913, %v705
      %v971 = vmax.f32 %v914, %v704
      %v972 = vmax.f32 %v915, %v708
      %v973 = vmax.f32 %v916, %v710
      %v974 = vmax.f32 %v917, %v709
      %v975 = vmax.f32 %v918, %v713
      %v976 = vmax.f32 %v919, %v715
      %v977 = vmax.f32 %v920, %v714
      %v978 = vmax.f32 %v921, %v718
      %v979 = vmax.f32 %v922, %v720
      %v980 = vmax.f32 %v923, %v719
      %v981 = vmax.f32 %v924, %v723
      %v982 = vmax.f32 %v925, %v725
      %v983 = vmax.f32 %v926, %v724
      %v984 = vmax.f32 %v927, %v728
      %v985 = vmax.f32 %v928, %v730
      %v986 = vmax.f32 %v929, %v729
      %v987 = vmax.f32 %v930, %v733
      %v988 = vmax.f32 %v931, %v735
      %v989 = vmax.f32 %v932, %v734
      %v990 = vmax.f32 %v933, %v939
      %v991 = vmax.f32 %v934, %v941
      %v992 = vmax.f32 %v935, %v940
      %v995 = vrot.slane %v411, 7
      %v996 = vrot.slane %v412, 7
      %v997 = vsel %vm446, %v995, %v996
      %v1001 = vmax.f32 %v945, %v453
      %v1002 = vmax.f32 %v946, %v455
      %v1003 = vmax.f32 %v947, %v454
      %v1004 = vmax.f32 %v948, %v456
      %v1005 = vmax.f32 %v949, %v458
      %v1006 = vmax.f32 %v950, %v457
      %v1007 = vmax.f32 %v951, %v459
      %v1008 = vmax.f32 %v952, %v461
      %v1009 = vmax.f32 %v953, %v460
      %v1010 = vmax.f32 %v954, %v462
      %v1011 = vmax.f32 %v955, %v464
      %v1012 = vmax.f32 %v956, %v463
      %v1013 = vmax.f32 %v957, %v465
      %v1014 = vmax.f32 %v958, %v467
      %v1015 = vmax.f32 %v959, %v466
      %v1016 = vmax.f32 %v960, %v468
      %v1017 = vmax.f32 %v961, %v470
      %v1018 = vmax.f32 %v962, %v469
      %v1019 = vmax.f32 %v963, %v471
      %v1020 = vmax.f32 %v964, %v473
      %v1021 = vmax.f32 %v965, %v472
      %v1022 = vmax.f32 %v966, %v474
      %v1023 = vmax.f32 %v967, %v476
      %v1024 = vmax.f32 %v968, %v475
      %v1025 = vmax.f32 %v969, %v477
      %v1026 = vmax.f32 %v970, %v479
      %v1027 = vmax.f32 %v971, %v478
      %v1028 = vmax.f32 %v972, %v480
      %v1029 = vmax.f32 %v973, %v482
      %v1030 = vmax.f32 %v974, %v481
      %v1031 = vmax.f32 %v975, %v483
      %v1032 = vmax.f32 %v976, %v485
      %v1033 = vmax.f32 %v977, %v484
      %v1034 = vmax.f32 %v978, %v486
      %v1035 = vmax.f32 %v979, %v488
      %v1036 = vmax.f32 %v980, %v487
      %v1037 = vmax.f32 %v981, %v489
      %v1038 = vmax.f32 %v982, %v491
      %v1039 = vmax.f32 %v983, %v490
      %v1040 = vmax.f32 %v984, %v492
      %v1041 = vmax.f32 %v985, %v494
      %v1042 = vmax.f32 %v986, %v493
      %v1043 = vmax.f32 %v987, %v834
      %v1044 = vmax.f32 %v988, %v836
      %v1045 = vmax.f32 %v989, %v835
      %v1046 = vmax.f32 %v990, %v995
      %v1047 = vmax.f32 %v991, %v997
      %v1048 = vmax.f32 %v992, %v996
      %v1049 = vmax.f32 %v1001, %v366
      %v1050 = vmax.f32 %v1002, %v367
      %v1051 = vmax.f32 %v1003, %v368
      %v1052 = vmax.f32 %v1004, %v369
      %v1053 = vmax.f32 %v1005, %v370
      %v1054 = vmax.f32 %v1006, %v371
      %v1055 = vmax.f32 %v1007, %v372
      %v1056 = vmax.f32 %v1008, %v373
      %v1057 = vmax.f32 %v1009, %v374
      %v1058 = vmax.f32 %v1010, %v375
      %v1059 = vmax.f32 %v1011, %v376
      %v1060 = vmax.f32 %v1012, %v377
      %v1061 = vmax.f32 %v1013, %v378
      %v1062 = vmax.f32 %v1014, %v379
      %v1063 = vmax.f32 %v1015, %v380
      %v1064 = vmax.f32 %v1016, %v381
      %v1065 = vmax.f32 %v1017, %v382
      %v1066 = vmax.f32 %v1018, %v383
      %v1067 = vmax.f32 %v1019, %v384
      %v1068 = vmax.f32 %v1020, %v385
      %v1069 = vmax.f32 %v1021, %v386
      %v1070 = vmax.f32 %v1022, %v387
      %v1071 = vmax.f32 %v1023, %v388
      %v1072 = vmax.f32 %v1024, %v389
      %v1073 = vmax.f32 %v1025, %v390
      %v1074 = vmax.f32 %v1026, %v391
      %v1075 = vmax.f32 %v1027, %v392
      %v1076 = vmax.f32 %v1028, %v393
      %v1077 = vmax.f32 %v1029, %v394
      %v1078 = vmax.f32 %v1030, %v395
      %v1079 = vmax.f32 %v1031, %v396
      %v1080 = vmax.f32 %v1032, %v397
      %v1081 = vmax.f32 %v1033, %v398
      %v1082 = vmax.f32 %v1034, %v399
      %v1083 = vmax.f32 %v1035, %v400
      %v1084 = vmax.f32 %v1036, %v401
      %v1085 = vmax.f32 %v1037, %v402
      %v1086 = vmax.f32 %v1038, %v403
      %v1087 = vmax.f32 %v1039, %v404
      %v1088 = vmax.f32 %v1040, %v405
      %v1089 = vmax.f32 %v1041, %v406
      %v1090 = vmax.f32 %v1042, %v407
      %v1091 = vmax.f32 %v1043, %v408
      %v1092 = vmax.f32 %v1044, %v409
      %v1093 = vmax.f32 %v1045, %v410
      %v1094 = vmax.f32 %v1046, %v411
      %v1095 = vmax.f32 %v1047, %v412
      %v1096 = vmax.f32 %v1048, %v413
      %v1098 = vrot.slane %v411, 1
      %v1099 = vrot.slane %v412, 1
      %v1100 = vsel %vm655, %v1098, %v1099
      %v1101 = vrot.slane %v413, 1
      %v1102 = vsel %vm655, %v1099, %v1101
      %v1106 = vmax.f32 %v1049, %v668
      %v1107 = vmax.f32 %v1050, %v670
      %v1108 = vmax.f32 %v1051, %v669
      %v1109 = vmax.f32 %v1052, %v673
      %v1110 = vmax.f32 %v1053, %v675
      %v1111 = vmax.f32 %v1054, %v674
      %v1112 = vmax.f32 %v1055, %v678
      %v1113 = vmax.f32 %v1056, %v680
      %v1114 = vmax.f32 %v1057, %v679
      %v1115 = vmax.f32 %v1058, %v683
      %v1116 = vmax.f32 %v1059, %v685
      %v1117 = vmax.f32 %v1060, %v684
      %v1118 = vmax.f32 %v1061, %v688
      %v1119 = vmax.f32 %v1062, %v690
      %v1120 = vmax.f32 %v1063, %v689
      %v1121 = vmax.f32 %v1064, %v693
      %v1122 = vmax.f32 %v1065, %v695
      %v1123 = vmax.f32 %v1066, %v694
      %v1124 = vmax.f32 %v1067, %v698
      %v1125 = vmax.f32 %v1068, %v700
      %v1126 = vmax.f32 %v1069, %v699
      %v1127 = vmax.f32 %v1070, %v703
      %v1128 = vmax.f32 %v1071, %v705
      %v1129 = vmax.f32 %v1072, %v704
      %v1130 = vmax.f32 %v1073, %v708
      %v1131 = vmax.f32 %v1074, %v710
      %v1132 = vmax.f32 %v1075, %v709
      %v1133 = vmax.f32 %v1076, %v713
      %v1134 = vmax.f32 %v1077, %v715
      %v1135 = vmax.f32 %v1078, %v714
      %v1136 = vmax.f32 %v1079, %v718
      %v1137 = vmax.f32 %v1080, %v720
      %v1138 = vmax.f32 %v1081, %v719
      %v1139 = vmax.f32 %v1082, %v723
      %v1140 = vmax.f32 %v1083, %v725
      %v1141 = vmax.f32 %v1084, %v724
      %v1142 = vmax.f32 %v1085, %v728
      %v1143 = vmax.f32 %v1086, %v730
      %v1144 = vmax.f32 %v1087, %v729
      %v1145 = vmax.f32 %v1088, %v733
      %v1146 = vmax.f32 %v1089, %v735
      %v1147 = vmax.f32 %v1090, %v734
      %v1148 = vmax.f32 %v1091, %v939
      %v1149 = vmax.f32 %v1092, %v941
      %v1150 = vmax.f32 %v1093, %v940
      %v1151 = vmax.f32 %v1094, %v1100
      %v1152 = vmax.f32 %v1095, %v1102
      %v1153 = vmax.f32 %v1096, %v1101
      %1202 = vrot.lane.b32.xlu0 %v1106, 4
      %v1203 = vpop.permute.xlu0 %1202
      %1204 = vrot.lane.b32.xlu0 %v1107, 4
      %v1205 = vpop.permute.xlu0 %1204
      %1206 = vrot.lane.b32.xlu0 %v1108, 4
      %v1207 = vpop.permute.xlu0 %1206
      %1208 = vrot.lane.b32.xlu0 %v1109, 4
      %v1209 = vpop.permute.xlu0 %1208
      %1210 = vrot.lane.b32.xlu0 %v1110, 4
      %v1211 = vpop.permute.xlu0 %1210
      %1212 = vrot.lane.b32.xlu0 %v1111, 4
      %v1213 = vpop.permute.xlu0 %1212
      %1214 = vrot.lane.b32.xlu0 %v1112, 4
      %v1215 = vpop.permute.xlu0 %1214
      %1216 = vrot.lane.b32.xlu0 %v1113, 4
      %v1217 = vpop.permute.xlu0 %1216
      %1218 = vrot.lane.b32.xlu0 %v1114, 4
      %v1219 = vpop.permute.xlu0 %1218
      %1220 = vrot.lane.b32.xlu0 %v1115, 4
      %v1221 = vpop.permute.xlu0 %1220
      %1222 = vrot.lane.b32.xlu0 %v1116, 4
      %v1223 = vpop.permute.xlu0 %1222
      %1224 = vrot.lane.b32.xlu0 %v1117, 4
      %v1225 = vpop.permute.xlu0 %1224
      %1226 = vrot.lane.b32.xlu0 %v1118, 4
      %v1227 = vpop.permute.xlu0 %1226
      %1228 = vrot.lane.b32.xlu0 %v1119, 4
      %v1229 = vpop.permute.xlu0 %1228
      %1230 = vrot.lane.b32.xlu0 %v1120, 4
      %v1231 = vpop.permute.xlu0 %1230
      %1232 = vrot.lane.b32.xlu0 %v1121, 4
      %v1233 = vpop.permute.xlu0 %1232
      %1234 = vrot.lane.b32.xlu0 %v1122, 4
      %v1235 = vpop.permute.xlu0 %1234
      %1236 = vrot.lane.b32.xlu0 %v1123, 4
      %v1237 = vpop.permute.xlu0 %1236
      %1238 = vrot.lane.b32.xlu0 %v1124, 4
      %v1239 = vpop.permute.xlu0 %1238
      %1240 = vrot.lane.b32.xlu0 %v1125, 4
      %v1241 = vpop.permute.xlu0 %1240
      %1242 = vrot.lane.b32.xlu0 %v1126, 4
      %v1243 = vpop.permute.xlu0 %1242
      %1244 = vrot.lane.b32.xlu0 %v1127, 4
      %v1245 = vpop.permute.xlu0 %1244
      %1246 = vrot.lane.b32.xlu0 %v1128, 4
      %v1247 = vpop.permute.xlu0 %1246
      %1248 = vrot.lane.b32.xlu0 %v1129, 4
      %v1249 = vpop.permute.xlu0 %1248
      %1250 = vrot.lane.b32.xlu0 %v1130, 4
      %v1251 = vpop.permute.xlu0 %1250
      %1252 = vrot.lane.b32.xlu0 %v1131, 4
      %v1253 = vpop.permute.xlu0 %1252
      %1254 = vrot.lane.b32.xlu0 %v1132, 4
      %v1255 = vpop.permute.xlu0 %1254
      %1256 = vrot.lane.b32.xlu0 %v1133, 4
      %v1257 = vpop.permute.xlu0 %1256
      %1258 = vrot.lane.b32.xlu0 %v1134, 4
      %v1259 = vpop.permute.xlu0 %1258
      %1260 = vrot.lane.b32.xlu0 %v1135, 4
      %v1261 = vpop.permute.xlu0 %1260
      %1262 = vrot.lane.b32.xlu0 %v1136, 4
      %v1263 = vpop.permute.xlu0 %1262
      %1264 = vrot.lane.b32.xlu0 %v1137, 4
      %v1265 = vpop.permute.xlu0 %1264
      %1266 = vrot.lane.b32.xlu0 %v1138, 4
      %v1267 = vpop.permute.xlu0 %1266
      %1268 = vrot.lane.b32.xlu0 %v1139, 4
      %v1269 = vpop.permute.xlu0 %1268
      %1270 = vrot.lane.b32.xlu0 %v1140, 4
      %v1271 = vpop.permute.xlu0 %1270
      %1272 = vrot.lane.b32.xlu0 %v1141, 4
      %v1273 = vpop.permute.xlu0 %1272
      %1274 = vrot.lane.b32.xlu0 %v1142, 4
      %v1275 = vpop.permute.xlu0 %1274
      %1276 = vrot.lane.b32.xlu0 %v1143, 4
      %v1277 = vpop.permute.xlu0 %1276
      %1278 = vrot.lane.b32.xlu0 %v1144, 4
      %v1279 = vpop.permute.xlu0 %1278
      %1280 = vrot.lane.b32.xlu0 %v1145, 4
      %v1281 = vpop.permute.xlu0 %1280
      %1282 = vrot.lane.b32.xlu0 %v1146, 4
      %v1283 = vpop.permute.xlu0 %1282
      %1284 = vrot.lane.b32.xlu0 %v1147, 4
      %v1285 = vpop.permute.xlu0 %1284
      %1286 = vrot.lane.b32.xlu0 %v1148, 4
      %v1287 = vpop.permute.xlu0 %1286
      %1288 = vrot.lane.b32.xlu0 %v1149, 4
      %v1289 = vpop.permute.xlu0 %1288
      %1290 = vrot.lane.b32.xlu0 %v1150, 4
      %v1291 = vpop.permute.xlu0 %1290
      %1292 = vrot.lane.b32.xlu0 %v1151, 4
      %v1293 = vpop.permute.xlu0 %1292
      %1294 = vrot.lane.b32.xlu0 %v1152, 4
      %v1295 = vpop.permute.xlu0 %1294
      %1296 = vrot.lane.b32.xlu0 %v1153, 4
      %v1297 = vpop.permute.xlu0 %1296
      %vm1346 = vcmask 31744
      %v1347 = vsel %vm1346, %v363, %v1203
      %v1348 = vsel %vm1346, %v364, %v1205
      %v1349 = vsel %vm1346, %v365, %v1207
      %v1350 = vsel %vm1346, %v366, %v1209
      %v1351 = vsel %vm1346, %v367, %v1211
      %v1352 = vsel %vm1346, %v368, %v1213
      %v1353 = vsel %vm1346, %v369, %v1215
      %v1354 = vsel %vm1346, %v370, %v1217
      %v1355 = vsel %vm1346, %v371, %v1219
      %v1356 = vsel %vm1346, %v372, %v1221
      %v1357 = vsel %vm1346, %v373, %v1223
      %v1358 = vsel %vm1346, %v374, %v1225
      %v1359 = vsel %vm1346, %v375, %v1227
      %v1360 = vsel %vm1346, %v376, %v1229
      %v1361 = vsel %vm1346, %v377, %v1231
      %v1362 = vsel %vm1346, %v378, %v1233
      %v1363 = vsel %vm1346, %v379, %v1235
      %v1364 = vsel %vm1346, %v380, %v1237
      %v1365 = vsel %vm1346, %v381, %v1239
      %v1366 = vsel %vm1346, %v382, %v1241
      %v1367 = vsel %vm1346, %v383, %v1243
      %v1368 = vsel %vm1346, %v384, %v1245
      %v1369 = vsel %vm1346, %v385, %v1247
      %v1370 = vsel %vm1346, %v386, %v1249
      %v1371 = vsel %vm1346, %v387, %v1251
      %v1372 = vsel %vm1346, %v388, %v1253
      %v1373 = vsel %vm1346, %v389, %v1255
      %v1374 = vsel %vm1346, %v390, %v1257
      %v1375 = vsel %vm1346, %v391, %v1259
      %v1376 = vsel %vm1346, %v392, %v1261
      %v1377 = vsel %vm1346, %v393, %v1263
      %v1378 = vsel %vm1346, %v394, %v1265
      %v1379 = vsel %vm1346, %v395, %v1267
      %v1380 = vsel %vm1346, %v396, %v1269
      %v1381 = vsel %vm1346, %v397, %v1271
      %v1382 = vsel %vm1346, %v398, %v1273
      %v1383 = vsel %vm1346, %v399, %v1275
      %v1384 = vsel %vm1346, %v400, %v1277
      %v1385 = vsel %vm1346, %v401, %v1279
      %v1386 = vsel %vm1346, %v402, %v1281
      %v1387 = vsel %vm1346, %v403, %v1283
      %v1388 = vsel %vm1346, %v404, %v1285
      %v1389 = vsel %vm1346, %v405, %v1287
      %v1390 = vsel %vm1346, %v406, %v1289
      %v1391 = vsel %vm1346, %v407, %v1291
      %v1392 = vsel %vm1346, %v408, %v1293
      %v1393 = vsel %vm1346, %v409, %v1295
      %v1394 = vsel %vm1346, %v410, %v1297
      %v1443 = vrot.slane %v1347, 1
      %v1444 = vrot.slane %v1348, 1
      %v1445 = vsel %vm655, %v1443, %v1444
      %v1446 = vrot.slane %v1349, 1
      %v1447 = vsel %vm655, %v1444, %v1446
      %v1448 = vrot.slane %v1350, 1
      %v1449 = vrot.slane %v1351, 1
      %v1450 = vsel %vm655, %v1448, %v1449
      %v1451 = vrot.slane %v1352, 1
      %v1452 = vsel %vm655, %v1449, %v1451
      %v1453 = vrot.slane %v1353, 1
      %v1454 = vrot.slane %v1354, 1
      %v1455 = vsel %vm655, %v1453, %v1454
      %v1456 = vrot.slane %v1355, 1
      %v1457 = vsel %vm655, %v1454, %v1456
      %v1458 = vrot.slane %v1356, 1
      %v1459 = vrot.slane %v1357, 1
      %v1460 = vsel %vm655, %v1458, %v1459
      %v1461 = vrot.slane %v1358, 1
      %v1462 = vsel %vm655, %v1459, %v1461
      %v1463 = vrot.slane %v1359, 1
      %v1464 = vrot.slane %v1360, 1
      %v1465 = vsel %vm655, %v1463, %v1464
      %v1466 = vrot.slane %v1361, 1
      %v1467 = vsel %vm655, %v1464, %v1466
      %v1468 = vrot.slane %v1362, 1
      %v1469 = vrot.slane %v1363, 1
      %v1470 = vsel %vm655, %v1468, %v1469
      %v1471 = vrot.slane %v1364, 1
      %v1472 = vsel %vm655, %v1469, %v1471
      %v1473 = vrot.slane %v1365, 1
      %v1474 = vrot.slane %v1366, 1
      %v1475 = vsel %vm655, %v1473, %v1474
      %v1476 = vrot.slane %v1367, 1
      %v1477 = vsel %vm655, %v1474, %v1476
      %v1478 = vrot.slane %v1368, 1
      %v1479 = vrot.slane %v1369, 1
      %v1480 = vsel %vm655, %v1478, %v1479
      %v1481 = vrot.slane %v1370, 1
      %v1482 = vsel %vm655, %v1479, %v1481
      %v1483 = vrot.slane %v1371, 1
      %v1484 = vrot.slane %v1372, 1
      %v1485 = vsel %vm655, %v1483, %v1484
      %v1486 = vrot.slane %v1373, 1
      %v1487 = vsel %vm655, %v1484, %v1486
      %v1488 = vrot.slane %v1374, 1
      %v1489 = vrot.slane %v1375, 1
      %v1490 = vsel %vm655, %v1488, %v1489
      %v1491 = vrot.slane %v1376, 1
      %v1492 = vsel %vm655, %v1489, %v1491
      %v1493 = vrot.slane %v1377, 1
      %v1494 = vrot.slane %v1378, 1
      %v1495 = vsel %vm655, %v1493, %v1494
      %v1496 = vrot.slane %v1379, 1
      %v1497 = vsel %vm655, %v1494, %v1496
      %v1498 = vrot.slane %v1380, 1
      %v1499 = vrot.slane %v1381, 1
      %v1500 = vsel %vm655, %v1498, %v1499
      %v1501 = vrot.slane %v1382, 1
      %v1502 = vsel %vm655, %v1499, %v1501
      %v1503 = vrot.slane %v1383, 1
      %v1504 = vrot.slane %v1384, 1
      %v1505 = vsel %vm655, %v1503, %v1504
      %v1506 = vrot.slane %v1385, 1
      %v1507 = vsel %vm655, %v1504, %v1506
      %v1508 = vrot.slane %v1386, 1
      %v1509 = vrot.slane %v1387, 1
      %v1510 = vsel %vm655, %v1508, %v1509
      %v1511 = vrot.slane %v1388, 1
      %v1512 = vsel %vm655, %v1509, %v1511
      %v1513 = vrot.slane %v1389, 1
      %v1514 = vrot.slane %v1390, 1
      %v1515 = vsel %vm655, %v1513, %v1514
      %v1516 = vrot.slane %v1391, 1
      %v1517 = vsel %vm655, %v1514, %v1516
      %v1518 = vrot.slane %v1392, 1
      %v1519 = vrot.slane %v1393, 1
      %v1520 = vsel %vm655, %v1518, %v1519
      %v1521 = vrot.slane %v1394, 1
      %v1522 = vsel %vm655, %v1519, %v1521
      %v1523 = vld [vmem:[%s1] sm:$0xff]
      %vm1524 = vcmask 64512
      %v1525 = vsel %vm1524, %v1445, 0
      %v1527 = vsel %vm1524, %v1447, 0
      %v1529 = vsel %vm1524, %v1450, 0
      %v1531 = vsel %vm1524, %v1452, 0
      %v1533 = vsel %vm1524, %v1455, 0
      %v1535 = vsel %vm1524, %v1457, 0
      %v1537 = vsel %vm1524, %v1460, 0
      %v1539 = vsel %vm1524, %v1462, 0
      %v1541 = vsel %vm1524, %v1465, 0
      %v1543 = vsel %vm1524, %v1467, 0
      %v1545 = vsel %vm1524, %v1470, 0
      %v1547 = vsel %vm1524, %v1472, 0
      %v1549 = vsel %vm1524, %v1475, 0
      %v1551 = vsel %vm1524, %v1477, 0
      %v1553 = vsel %vm1524, %v1480, 0
      %v1555 = vsel %vm1524, %v1482, 0
      %v1557 = vsel %vm1524, %v1485, 0
      %v1559 = vsel %vm1524, %v1487, 0
      %v1561 = vsel %vm1524, %v1490, 0
      %v1563 = vsel %vm1524, %v1492, 0
      %v1565 = vsel %vm1524, %v1495, 0
      %v1567 = vsel %vm1524, %v1497, 0
      %v1569 = vsel %vm1524, %v1500, 0
      %v1571 = vsel %vm1524, %v1502, 0
      %v1573 = vsel %vm1524, %v1505, 0
      %v1575 = vsel %vm1524, %v1507, 0
      %v1577 = vsel %vm1524, %v1510, 0
      %v1579 = vsel %vm1524, %v1512, 0
      %v1581 = vsel %vm1524, %v1515, 0
      %v1583 = vsel %vm1524, %v1517, 0
      %v1585 = vsel %vm1524, %v1520, 0
      %v1587 = vsel %vm1524, %v1522, 0
      %1589 = vmatprep.subr.mxu0 0.0
      %1590 = vmatpush1.msra.mxu0 %v1523
      %1591 = vmatprep.subr.mxu0 0.0
      %1592 = vmatpush1.msra.mxu0 0.0
      %1593 = vmatprep.subr.mxu0 0.0
      %1594 = vmatpush1.msra.mxu0 0.0
      %1595 = vmatprep.subr.mxu0 0.0
      %1596 = vmatpush1.msra.mxu0 0.0
      %1597 = vmatprep.subr.mxu0 0.0
      %1598 = vmatpush1.msra.mxu0 0.0
      %1599 = vmatprep.subr.mxu0 0.0
      %1600 = vmatpush1.msra.mxu0 0.0
      %1601 = vmatprep.subr.mxu0 0.0
      %1602 = vmatpush1.msra.mxu0 0.0
      %1603 = vmatprep.subr.mxu0 0.0
      %1604 = vmatpush1.msra.mxu0 0.0
      %1605 = vmatprep.subr.mxu0 0.0
      %1606 = vmatpush1.msra.mxu0 0.0
      %1607 = vmatprep.subr.mxu0 0.0
      %1608 = vmatpush1.msra.mxu0 0.0
      %1609 = vmatprep.subr.mxu0 0.0
      %1610 = vmatpush1.msra.mxu0 0.0
      %1611 = vmatprep.subr.mxu0 0.0
      %1612 = vmatpush1.msra.mxu0 0.0
      %1613 = vmatprep.subr.mxu0 0.0
      %1614 = vmatpush1.msra.mxu0 0.0
      %1615 = vmatprep.subr.mxu0 0.0
      %1616 = vmatpush1.msra.mxu0 0.0
      %1617 = vmatprep.subr.mxu0 0.0
      %1618 = vmatpush1.msra.mxu0 0.0
      %1619 = vmatprep.subr.mxu0 0.0
      %1620 = vmatpush1.msra.mxu0 0.0
      %1621 = vmatprep.subr.mxu0 0.0
      %1622 = vmatpush1.msra.mxu0 0.0
      %1623 = vmatprep.subr.mxu0 0.0
      %1624 = vmatpush1.msra.mxu0 0.0
      %1625 = vmatprep.subr.mxu0 0.0
      %1626 = vmatpush1.msra.mxu0 0.0
      %1627 = vmatprep.subr.mxu0 0.0
      %1628 = vmatpush1.msra.mxu0 0.0
      %1629 = vmatprep.subr.mxu0 0.0
      %1630 = vmatpush1.msra.mxu0 0.0
      %1631 = vmatprep.subr.mxu0 0.0
      %1632 = vmatpush1.msra.mxu0 0.0
      %1633 = vmatprep.subr.mxu0 0.0
      %1634 = vmatpush1.msra.mxu0 0.0
      %1635 = vmatprep.subr.mxu0 0.0
      %1636 = vmatpush1.msra.mxu0 0.0
      %1637 = vmatprep.subr.mxu0 0.0
      %1638 = vmatpush1.msra.mxu0 0.0
      %1639 = vmatprep.subr.mxu0 0.0
      %1640 = vmatpush1.msra.mxu0 0.0
      %1641 = vmatprep.subr.mxu0 0.0
      %1642 = vmatpush1.msra.mxu0 0.0
      %1643 = vmatprep.subr.mxu0 0.0
      %1644 = vmatpush1.msra.mxu0 0.0
      %1645 = vmatprep.subr.mxu0 0.0
      %1646 = vmatpush1.msra.mxu0 0.0
      %1647 = vmatprep.subr.mxu0 0.0
      %1648 = vmatpush1.msra.mxu0 0.0
      %1649 = vmatprep.subr.mxu0 0.0
      %1650 = vmatpush1.msra.mxu0 0.0
      %1651 = vmatprep.subr.mxu0 0.0
      %1652 = vmatpush1.msra.mxu0 0.0
      %1653 = vmatprep.mubr.f32.mxu0 0.0
      %1654 = vmatmul.mubr.f32.gmra.mrb[0].mxu0 %v1525
      %v1655 = vpop.f32.mrb[0].mxu0
      %v1656 = vadd.f32 0.0, %v1655
      %v1657 = vpop.f32.mrb[0].mxu0
      %1658 = vmatprep.mubr.f32.mxu0 0.0
      %1659 = vmatmul.mubr.f32.gmra.mrb[0].mxu0 %v1527
      %v1660 = vpop.f32.mrb[0].mxu0
      %v1661 = vadd.f32 0.0, %v1660
      %v1662 = vpop.f32.mrb[0].mxu0
      %1663 = vmatprep.mubr.f32.mxu0 0.0
      %1664 = vmatmul.mubr.f32.gmra.mrb[0].mxu0 %v1529
      %v1665 = vpop.f32.mrb[0].mxu0
      %v1666 = vadd.f32 0.0, %v1665
      %v1667 = vpop.f32.mrb[0].mxu0
      %1668 = vmatprep.mubr.f32.mxu0 0.0
      %1669 = vmatmul.mubr.f32.gmra.mrb[0].mxu0 %v1531
      %v1670 = vpop.f32.mrb[0].mxu0
      %v1671 = vadd.f32 0.0, %v1670
      %v1672 = vpop.f32.mrb[0].mxu0
      %1673 = vmatprep.mubr.f32.mxu0 0.0
      %1674 = vmatmul.mubr.f32.gmra.mrb[0].mxu0 %v1533
      %v1675 = vpop.f32.mrb[0].mxu0
      %v1676 = vadd.f32 0.0, %v1675
      %v1677 = vpop.f32.mrb[0].mxu0
      %1678 = vmatprep.mubr.f32.mxu0 0.0
      %1679 = vmatmul.mubr.f32.gmra.mrb[0].mxu0 %v1535
      %v1680 = vpop.f32.mrb[0].mxu0
      %v1681 = vadd.f32 0.0, %v1680
      %v1682 = vpop.f32.mrb[0].mxu0
      %1683 = vmatprep.mubr.f32.mxu0 0.0
      %1684 = vmatmul.mubr.f32.gmra.mrb[0].mxu0 %v1537
      %v1685 = vpop.f32.mrb[0].mxu0
      %v1686 = vadd.f32 0.0, %v1685
      %v1687 = vpop.f32.mrb[0].mxu0
      %1688 = vmatprep.mubr.f32.mxu0 0.0
      %1689 = vmatmul.mubr.f32.gmra.mrb[0].mxu0 %v1539
      %v1690 = vpop.f32.mrb[0].mxu0
      %v1691 = vadd.f32 0.0, %v1690
      %v1692 = vpop.f32.mrb[0].mxu0
      %1693 = vmatprep.mubr.f32.mxu0 0.0
      %1694 = vmatmul.mubr.f32.gmra.mrb[0].mxu0 %v1541
      %v1695 = vpop.f32.mrb[0].mxu0
      %v1696 = vadd.f32 0.0, %v1695
      %v1697 = vpop.f32.mrb[0].mxu0
      %1698 = vmatprep.mubr.f32.mxu0 0.0
      %1699 = vmatmul.mubr.f32.gmra.mrb[0].mxu0 %v1543
      %v1700 = vpop.f32.mrb[0].mxu0
      %v1701 = vadd.f32 0.0, %v1700
      %v1702 = vpop.f32.mrb[0].mxu0
      %1703 = vmatprep.mubr.f32.mxu0 0.0
      %1704 = vmatmul.mubr.f32.gmra.mrb[0].mxu0 %v1545
      %v1705 = vpop.f32.mrb[0].mxu0
      %v1706 = vadd.f32 0.0, %v1705
      %v1707 = vpop.f32.mrb[0].mxu0
      %1708 = vmatprep.mubr.f32.mxu0 0.0
      %1709 = vmatmul.mubr.f32.gmra.mrb[0].mxu0 %v1547
      %v1710 = vpop.f32.mrb[0].mxu0
      %v1711 = vadd.f32 0.0, %v1710
      %v1712 = vpop.f32.mrb[0].mxu0
      %1713 = vmatprep.mubr.f32.mxu0 0.0
      %1714 = vmatmul.mubr.f32.gmra.mrb[0].mxu0 %v1549
      %v1715 = vpop.f32.mrb[0].mxu0
      %v1716 = vadd.f32 0.0, %v1715
      %v1717 = vpop.f32.mrb[0].mxu0
      %1718 = vmatprep.mubr.f32.mxu0 0.0
      %1719 = vmatmul.mubr.f32.gmra.mrb[0].mxu0 %v1551
      %v1720 = vpop.f32.mrb[0].mxu0
      %v1721 = vadd.f32 0.0, %v1720
      %v1722 = vpop.f32.mrb[0].mxu0
      %1723 = vmatprep.mubr.f32.mxu0 0.0
      %1724 = vmatmul.mubr.f32.gmra.mrb[0].mxu0 %v1553
      %v1725 = vpop.f32.mrb[0].mxu0
      %v1726 = vadd.f32 0.0, %v1725
      %v1727 = vpop.f32.mrb[0].mxu0
      %1728 = vmatprep.mubr.f32.mxu0 0.0
      %1729 = vmatmul.mubr.f32.gmra.mrb[0].mxu0 %v1555
      %v1730 = vpop.f32.mrb[0].mxu0
      %v1731 = vadd.f32 0.0, %v1730
      %v1732 = vpop.f32.mrb[0].mxu0
      %1733 = vmatprep.mubr.f32.mxu0 0.0
      %1734 = vmatmul.mubr.f32.gmra.mrb[0].mxu0 %v1557
      %v1735 = vpop.f32.mrb[0].mxu0
      %v1736 = vadd.f32 0.0, %v1735
      %v1737 = vpop.f32.mrb[0].mxu0
      %1738 = vmatprep.mubr.f32.mxu0 0.0
      %1739 = vmatmul.mubr.f32.gmra.mrb[0].mxu0 %v1559
      %v1740 = vpop.f32.mrb[0].mxu0
      %v1741 = vadd.f32 0.0, %v1740
      %v1742 = vpop.f32.mrb[0].mxu0
      %1743 = vmatprep.mubr.f32.mxu0 0.0
      %1744 = vmatmul.mubr.f32.gmra.mrb[0].mxu0 %v1561
      %v1745 = vpop.f32.mrb[0].mxu0
      %v1746 = vadd.f32 0.0, %v1745
      %v1747 = vpop.f32.mrb[0].mxu0
      %1748 = vmatprep.mubr.f32.mxu0 0.0
      %1749 = vmatmul.mubr.f32.gmra.mrb[0].mxu0 %v1563
      %v1750 = vpop.f32.mrb[0].mxu0
      %v1751 = vadd.f32 0.0, %v1750
      %v1752 = vpop.f32.mrb[0].mxu0
      %1753 = vmatprep.mubr.f32.mxu0 0.0
      %1754 = vmatmul.mubr.f32.gmra.mrb[0].mxu0 %v1565
      %v1755 = vpop.f32.mrb[0].mxu0
      %v1756 = vadd.f32 0.0, %v1755
      %v1757 = vpop.f32.mrb[0].mxu0
      %1758 = vmatprep.mubr.f32.mxu0 0.0
      %1759 = vmatmul.mubr.f32.gmra.mrb[0].mxu0 %v1567
      %v1760 = vpop.f32.mrb[0].mxu0
      %v1761 = vadd.f32 0.0, %v1760
      %v1762 = vpop.f32.mrb[0].mxu0
      %1763 = vmatprep.mubr.f32.mxu0 0.0
      %1764 = vmatmul.mubr.f32.gmra.mrb[0].mxu0 %v1569
      %v1765 = vpop.f32.mrb[0].mxu0
      %v1766 = vadd.f32 0.0, %v1765
      %v1767 = vpop.f32.mrb[0].mxu0
      %1768 = vmatprep.mubr.f32.mxu0 0.0
      %1769 = vmatmul.mubr.f32.gmra.mrb[0].mxu0 %v1571
      %v1770 = vpop.f32.mrb[0].mxu0
      %v1771 = vadd.f32 0.0, %v1770
      %v1772 = vpop.f32.mrb[0].mxu0
      %1773 = vmatprep.mubr.f32.mxu0 0.0
      %1774 = vmatmul.mubr.f32.gmra.mrb[0].mxu0 %v1573
      %v1775 = vpop.f32.mrb[0].mxu0
      %v1776 = vadd.f32 0.0, %v1775
      %v1777 = vpop.f32.mrb[0].mxu0
      %1778 = vmatprep.mubr.f32.mxu0 0.0
      %1779 = vmatmul.mubr.f32.gmra.mrb[0].mxu0 %v1575
      %v1780 = vpop.f32.mrb[0].mxu0
      %v1781 = vadd.f32 0.0, %v1780
      %v1782 = vpop.f32.mrb[0].mxu0
      %1783 = vmatprep.mubr.f32.mxu0 0.0
      %1784 = vmatmul.mubr.f32.gmra.mrb[0].mxu0 %v1577
      %v1785 = vpop.f32.mrb[0].mxu0
      %v1786 = vadd.f32 0.0, %v1785
      %v1787 = vpop.f32.mrb[0].mxu0
      %1788 = vmatprep.mubr.f32.mxu0 0.0
      %1789 = vmatmul.mubr.f32.gmra.mrb[0].mxu0 %v1579
      %v1790 = vpop.f32.mrb[0].mxu0
      %v1791 = vadd.f32 0.0, %v1790
      %v1792 = vpop.f32.mrb[0].mxu0
      %1793 = vmatprep.mubr.f32.mxu0 0.0
      %1794 = vmatmul.mubr.f32.gmra.mrb[0].mxu0 %v1581
      %v1795 = vpop.f32.mrb[0].mxu0
      %v1796 = vadd.f32 0.0, %v1795
      %v1797 = vpop.f32.mrb[0].mxu0
      %1798 = vmatprep.mubr.f32.mxu0 0.0
      %1799 = vmatmul.mubr.f32.gmra.mrb[0].mxu0 %v1583
      %v1800 = vpop.f32.mrb[0].mxu0
      %v1801 = vadd.f32 0.0, %v1800
      %v1802 = vpop.f32.mrb[0].mxu0
      %1803 = vmatprep.mubr.f32.mxu0 0.0
      %1804 = vmatmul.mubr.f32.gmra.mrb[0].mxu0 %v1585
      %v1805 = vpop.f32.mrb[0].mxu0
      %v1806 = vadd.f32 0.0, %v1805
      %v1807 = vpop.f32.mrb[0].mxu0
      %1808 = vmatprep.mubr.f32.mxu0 0.0
      %1809 = vmatmul.mubr.f32.gmra.mrb[0].mxu0 %v1587
      %v1810 = vpop.f32.mrb[0].mxu0
      %v1811 = vadd.f32 0.0, %v1810
      %v1812 = vpop.f32.mrb[0].mxu0
      %1813 = vdwg.mxu0
      %v1814 = vld [vmem:[%s2] sm:$0x1]
      %v1816 = vlaneseq
      %v1817 = vshrl.u32 %v1816, 7
      %v1818 = vsub.s32 0, %v1817
      %v1819 = vrot.slane %v1814, %v1818
      %v1821 = vmul.f32 %v1656, %v1819
      %v1822 = vmul.f32 %v1661, %v1819
      %v1823 = vmul.f32 %v1666, %v1819
      %v1824 = vmul.f32 %v1671, %v1819
      %v1825 = vmul.f32 %v1676, %v1819
      %v1826 = vmul.f32 %v1681, %v1819
      %v1827 = vmul.f32 %v1686, %v1819
      %v1828 = vmul.f32 %v1691, %v1819
      %v1829 = vmul.f32 %v1696, %v1819
      %v1830 = vmul.f32 %v1701, %v1819
      %v1831 = vmul.f32 %v1706, %v1819
      %v1832 = vmul.f32 %v1711, %v1819
      %v1833 = vmul.f32 %v1716, %v1819
      %v1834 = vmul.f32 %v1721, %v1819
      %v1835 = vmul.f32 %v1726, %v1819
      %v1836 = vmul.f32 %v1731, %v1819
      %v1837 = vmul.f32 %v1736, %v1819
      %v1838 = vmul.f32 %v1741, %v1819
      %v1839 = vmul.f32 %v1746, %v1819
      %v1840 = vmul.f32 %v1751, %v1819
      %v1841 = vmul.f32 %v1756, %v1819
      %v1842 = vmul.f32 %v1761, %v1819
      %v1843 = vmul.f32 %v1766, %v1819
      %v1844 = vmul.f32 %v1771, %v1819
      %v1845 = vmul.f32 %v1776, %v1819
      %v1846 = vmul.f32 %v1781, %v1819
      %v1847 = vmul.f32 %v1786, %v1819
      %v1848 = vmul.f32 %v1791, %v1819
      %v1849 = vmul.f32 %v1796, %v1819
      %v1850 = vmul.f32 %v1801, %v1819
      %v1851 = vmul.f32 %v1806, %v1819
      %v1852 = vmul.f32 %v1811, %v1819
      %v1853 = vld [vmem:[%s3] sm:$0x1]
      %v1855 = vlaneseq
      %v1856 = vshrl.u32 %v1855, 7
      %v1857 = vsub.s32 0, %v1856
      %v1858 = vrot.slane %v1853, %v1857
      %v1860 = vadd.f32 %v1821, %v1858
      %v1861 = vadd.f32 %v1822, %v1858
      %v1862 = vadd.f32 %v1823, %v1858
      %v1863 = vadd.f32 %v1824, %v1858
      %v1864 = vadd.f32 %v1825, %v1858
      %v1865 = vadd.f32 %v1826, %v1858
      %v1866 = vadd.f32 %v1827, %v1858
      %v1867 = vadd.f32 %v1828, %v1858
      %v1868 = vadd.f32 %v1829, %v1858
      %v1869 = vadd.f32 %v1830, %v1858
      %v1870 = vadd.f32 %v1831, %v1858
      %v1871 = vadd.f32 %v1832, %v1858
      %v1872 = vadd.f32 %v1833, %v1858
      %v1873 = vadd.f32 %v1834, %v1858
      %v1874 = vadd.f32 %v1835, %v1858
      %v1875 = vadd.f32 %v1836, %v1858
      %v1876 = vadd.f32 %v1837, %v1858
      %v1877 = vadd.f32 %v1838, %v1858
      %v1878 = vadd.f32 %v1839, %v1858
      %v1879 = vadd.f32 %v1840, %v1858
      %v1880 = vadd.f32 %v1841, %v1858
      %v1881 = vadd.f32 %v1842, %v1858
      %v1882 = vadd.f32 %v1843, %v1858
      %v1883 = vadd.f32 %v1844, %v1858
      %v1884 = vadd.f32 %v1845, %v1858
      %v1885 = vadd.f32 %v1846, %v1858
      %v1886 = vadd.f32 %v1847, %v1858
      %v1887 = vadd.f32 %v1848, %v1858
      %v1888 = vadd.f32 %v1849, %v1858
      %v1889 = vadd.f32 %v1850, %v1858
      %v1890 = vadd.f32 %v1851, %v1858
      %v1891 = vadd.f32 %v1852, %v1858
      %v1892 = vmax.f32 %v1860, 0.0
      %v1893 = vmax.f32 %v1861, 0.0
      %v1894 = vmax.f32 %v1862, 0.0
      %v1895 = vmax.f32 %v1863, 0.0
      %v1896 = vmax.f32 %v1864, 0.0
      %v1897 = vmax.f32 %v1865, 0.0
      %v1898 = vmax.f32 %v1866, 0.0
      %v1899 = vmax.f32 %v1867, 0.0
      %v1900 = vmax.f32 %v1868, 0.0
      %v1901 = vmax.f32 %v1869, 0.0
      %v1902 = vmax.f32 %v1870, 0.0
      %v1903 = vmax.f32 %v1871, 0.0
      %v1904 = vmax.f32 %v1872, 0.0
      %v1905 = vmax.f32 %v1873, 0.0
      %v1906 = vmax.f32 %v1874, 0.0
      %v1907 = vmax.f32 %v1875, 0.0
      %v1908 = vmax.f32 %v1876, 0.0
      %v1909 = vmax.f32 %v1877, 0.0
      %v1910 = vmax.f32 %v1878, 0.0
      %v1911 = vmax.f32 %v1879, 0.0
      %v1912 = vmax.f32 %v1880, 0.0
      %v1913 = vmax.f32 %v1881, 0.0
      %v1914 = vmax.f32 %v1882, 0.0
      %v1915 = vmax.f32 %v1883, 0.0
      %v1916 = vmax.f32 %v1884, 0.0
      %v1917 = vmax.f32 %v1885, 0.0
      %v1918 = vmax.f32 %v1886, 0.0
      %v1919 = vmax.f32 %v1887, 0.0
      %v1920 = vmax.f32 %v1888, 0.0
      %v1921 = vmax.f32 %v1889, 0.0
      %v1922 = vmax.f32 %v1890, 0.0
      %v1923 = vmax.f32 %v1891, 0.0
      %1924 = vst.msk [vmem:[%s359] sm:$0xff] %vm1524, %v1892
      %1925 = vst.msk [vmem:[%s359 + $0x8] sm:$0xff] %vm1524, %v1893
      %1926 = vst.msk [vmem:[%s359 + $0x10] sm:$0xff] %vm1524, %v1894
      %1927 = vst.msk [vmem:[%s359 + $0x18] sm:$0xff] %vm1524, %v1895
      %1928 = vst.msk [vmem:[%s359 + $0x20] sm:$0xff] %vm1524, %v1896
      %1929 = vst.msk [vmem:[%s359 + $0x28] sm:$0xff] %vm1524, %v1897
      %1930 = vst.msk [vmem:[%s359 + $0x30] sm:$0xff] %vm1524, %v1898
      %1931 = vst.msk [vmem:[%s359 + $0x38] sm:$0xff] %vm1524, %v1899
      %1932 = vst.msk [vmem:[%s359 + $0x40] sm:$0xff] %vm1524, %v1900
      %1933 = vst.msk [vmem:[%s359 + $0x48] sm:$0xff] %vm1524, %v1901
      %1934 = vst.msk [vmem:[%s359 + $0x50] sm:$0xff] %vm1524, %v1902
      %1935 = vst.msk [vmem:[%s359 + $0x58] sm:$0xff] %vm1524, %v1903
      %1936 = vst.msk [vmem:[%s359 + $0x60] sm:$0xff] %vm1524, %v1904
      %1937 = vst.msk [vmem:[%s359 + $0x68] sm:$0xff] %vm1524, %v1905
      %1938 = vst.msk [vmem:[%s359 + $0x70] sm:$0xff] %vm1524, %v1906
      %1939 = vst.msk [vmem:[%s359 + $0x78] sm:$0xff] %vm1524, %v1907
      %1940 = vst.msk [vmem:[%s359 + $0x80] sm:$0xff] %vm1524, %v1908
      %1941 = vst.msk [vmem:[%s359 + $0x88] sm:$0xff] %vm1524, %v1909
      %1942 = vst.msk [vmem:[%s359 + $0x90] sm:$0xff] %vm1524, %v1910
      %1943 = vst.msk [vmem:[%s359 + $0x98] sm:$0xff] %vm1524, %v1911
      %1944 = vst.msk [vmem:[%s359 + $0xa0] sm:$0xff] %vm1524, %v1912
      %1945 = vst.msk [vmem:[%s359 + $0xa8] sm:$0xff] %vm1524, %v1913
      %1946 = vst.msk [vmem:[%s359 + $0xb0] sm:$0xff] %vm1524, %v1914
      %1947 = vst.msk [vmem:[%s359 + $0xb8] sm:$0xff] %vm1524, %v1915
      %1948 = vst.msk [vmem:[%s359 + $0xc0] sm:$0xff] %vm1524, %v1916
      %1949 = vst.msk [vmem:[%s359 + $0xc8] sm:$0xff] %vm1524, %v1917
      %1950 = vst.msk [vmem:[%s359 + $0xd0] sm:$0xff] %vm1524, %v1918
      %1951 = vst.msk [vmem:[%s359 + $0xd8] sm:$0xff] %vm1524, %v1919
      %1952 = vst.msk [vmem:[%s359 + $0xe0] sm:$0xff] %vm1524, %v1920
      %1953 = vst.msk [vmem:[%s359 + $0xe8] sm:$0xff] %vm1524, %v1921
      %1954 = vst.msk [vmem:[%s359 + $0xf0] sm:$0xff] %vm1524, %v1922
      %1955 = vst.msk [vmem:[%s359 + $0xf8] sm:$0xff] %vm1524, %v1923
      %1988 = vrot.lane.b32.xlu0 %v1892, 8
      %v1989 = vpop.permute.xlu0 %1988
      %1990 = vrot.lane.b32.xlu0 %v1893, 8
      %v1991 = vpop.permute.xlu0 %1990
      %1992 = vrot.lane.b32.xlu0 %v1894, 8
      %v1993 = vpop.permute.xlu0 %1992
      %1994 = vrot.lane.b32.xlu0 %v1895, 8
      %v1995 = vpop.permute.xlu0 %1994
      %1996 = vrot.lane.b32.xlu0 %v1896, 8
      %v1997 = vpop.permute.xlu0 %1996
      %1998 = vrot.lane.b32.xlu0 %v1897, 8
      %v1999 = vpop.permute.xlu0 %1998
      %2000 = vrot.lane.b32.xlu0 %v1898, 8
      %v2001 = vpop.permute.xlu0 %2000
      %2002 = vrot.lane.b32.xlu0 %v1899, 8
      %v2003 = vpop.permute.xlu0 %2002
      %2004 = vrot.lane.b32.xlu0 %v1900, 8
      %v2005 = vpop.permute.xlu0 %2004
      %2006 = vrot.lane.b32.xlu0 %v1901, 8
      %v2007 = vpop.permute.xlu0 %2006
      %2008 = vrot.lane.b32.xlu0 %v1902, 8
      %v2009 = vpop.permute.xlu0 %2008
      %2010 = vrot.lane.b32.xlu0 %v1903, 8
      %v2011 = vpop.permute.xlu0 %2010
      %2012 = vrot.lane.b32.xlu0 %v1904, 8
      %v2013 = vpop.permute.xlu0 %2012
      %2014 = vrot.lane.b32.xlu0 %v1905, 8
      %v2015 = vpop.permute.xlu0 %2014
      %2016 = vrot.lane.b32.xlu0 %v1906, 8
      %v2017 = vpop.permute.xlu0 %2016
      %2018 = vrot.lane.b32.xlu0 %v1907, 8
      %v2019 = vpop.permute.xlu0 %2018
      %2020 = vrot.lane.b32.xlu0 %v1908, 8
      %v2021 = vpop.permute.xlu0 %2020
      %2022 = vrot.lane.b32.xlu0 %v1909, 8
      %v2023 = vpop.permute.xlu0 %2022
      %2024 = vrot.lane.b32.xlu0 %v1910, 8
      %v2025 = vpop.permute.xlu0 %2024
      %2026 = vrot.lane.b32.xlu0 %v1911, 8
      %v2027 = vpop.permute.xlu0 %2026
      %2028 = vrot.lane.b32.xlu0 %v1912, 8
      %v2029 = vpop.permute.xlu0 %2028
      %2030 = vrot.lane.b32.xlu0 %v1913, 8
      %v2031 = vpop.permute.xlu0 %2030
      %2032 = vrot.lane.b32.xlu0 %v1914, 8
      %v2033 = vpop.permute.xlu0 %2032
      %2034 = vrot.lane.b32.xlu0 %v1915, 8
      %v2035 = vpop.permute.xlu0 %2034
      %2036 = vrot.lane.b32.xlu0 %v1916, 8
      %v2037 = vpop.permute.xlu0 %2036
      %2038 = vrot.lane.b32.xlu0 %v1917, 8
      %v2039 = vpop.permute.xlu0 %2038
      %2040 = vrot.lane.b32.xlu0 %v1918, 8
      %v2041 = vpop.permute.xlu0 %2040
      %2042 = vrot.lane.b32.xlu0 %v1919, 8
      %v2043 = vpop.permute.xlu0 %2042
      %2044 = vrot.lane.b32.xlu0 %v1920, 8
      %v2045 = vpop.permute.xlu0 %2044
      %2046 = vrot.lane.b32.xlu0 %v1921, 8
      %v2047 = vpop.permute.xlu0 %2046
      %2048 = vrot.lane.b32.xlu0 %v1922, 8
      %v2049 = vpop.permute.xlu0 %2048
      %2050 = vrot.lane.b32.xlu0 %v1923, 8
      %v2051 = vpop.permute.xlu0 %2050
      %vm2084 = vcmask 261312
      %2085 = vst.msk [vmem:[%s359] sm:$0xff] %vm2084, %v1989
      %2086 = vst.msk [vmem:[%s359 + $0x8] sm:$0xff] %vm2084, %v1991
      %2087 = vst.msk [vmem:[%s359 + $0x10] sm:$0xff] %vm2084, %v1993
      %2088 = vst.msk [vmem:[%s359 + $0x18] sm:$0xff] %vm2084, %v1995
      %2089 = vst.msk [vmem:[%s359 + $0x20] sm:$0xff] %vm2084, %v1997
      %2090 = vst.msk [vmem:[%s359 + $0x28] sm:$0xff] %vm2084, %v1999
      %2091 = vst.msk [vmem:[%s359 + $0x30] sm:$0xff] %vm2084, %v2001
      %2092 = vst.msk [vmem:[%s359 + $0x38] sm:$0xff] %vm2084, %v2003
      %2093 = vst.msk [vmem:[%s359 + $0x40] sm:$0xff] %vm2084, %v2005
      %2094 = vst.msk [vmem:[%s359 + $0x48] sm:$0xff] %vm2084, %v2007
      %2095 = vst.msk [vmem:[%s359 + $0x50] sm:$0xff] %vm2084, %v2009
      %2096 = vst.msk [vmem:[%s359 + $0x58] sm:$0xff] %vm2084, %v2011
      %2097 = vst.msk [vmem:[%s359 + $0x60] sm:$0xff] %vm2084, %v2013
      %2098 = vst.msk [vmem:[%s359 + $0x68] sm:$0xff] %vm2084, %v2015
      %2099 = vst.msk [vmem:[%s359 + $0x70] sm:$0xff] %vm2084, %v2017
      %2100 = vst.msk [vmem:[%s359 + $0x78] sm:$0xff] %vm2084, %v2019
      %2101 = vst.msk [vmem:[%s359 + $0x80] sm:$0xff] %vm2084, %v2021
      %2102 = vst.msk [vmem:[%s359 + $0x88] sm:$0xff] %vm2084, %v2023
      %2103 = vst.msk [vmem:[%s359 + $0x90] sm:$0xff] %vm2084, %v2025
      %2104 = vst.msk [vmem:[%s359 + $0x98] sm:$0xff] %vm2084, %v2027
      %2105 = vst.msk [vmem:[%s359 + $0xa0] sm:$0xff] %vm2084, %v2029
      %2106 = vst.msk [vmem:[%s359 + $0xa8] sm:$0xff] %vm2084, %v2031
      %2107 = vst.msk [vmem:[%s359 + $0xb0] sm:$0xff] %vm2084, %v2033
      %2108 = vst.msk [vmem:[%s359 + $0xb8] sm:$0xff] %vm2084, %v2035
      %2109 = vst.msk [vmem:[%s359 + $0xc0] sm:$0xff] %vm2084, %v2037
      %2110 = vst.msk [vmem:[%s359 + $0xc8] sm:$0xff] %vm2084, %v2039
      %2111 = vst.msk [vmem:[%s359 + $0xd0] sm:$0xff] %vm2084, %v2041
      %2112 = vst.msk [vmem:[%s359 + $0xd8] sm:$0xff] %vm2084, %v2043
      %2113 = vst.msk [vmem:[%s359 + $0xe0] sm:$0xff] %vm2084, %v2045
      %2114 = vst.msk [vmem:[%s359 + $0xe8] sm:$0xff] %vm2084, %v2047
      %2115 = vst.msk [vmem:[%s359 + $0xf0] sm:$0xff] %vm2084, %v2049
      %2116 = vst.msk [vmem:[%s359 + $0xf8] sm:$0xff] %vm2084, %v2051
      %2117 = vst.msk [vmem:[#allocation2] sm:$0xff] %vm1346, 0.0
      %2118 = vst.msk [vmem:[#allocation2 + $0x8] sm:$0xff] %vm1346, 0.0
      %vm2119 = vcmask 25600
      %2120 = vst.msk [vmem:[#allocation2 + $0x10] sm:$0x3] %vm2119, 0.0
      %2121 = vst.msk [vmem:[#allocation2 + $0x18] sm:$0xff] %vm1346, 0.0
      %2122 = vst.msk [vmem:[#allocation2 + $0x20] sm:$0xff] %vm1346, 0.0
      %2123 = vst.msk [vmem:[#allocation2 + $0x28] sm:$0x3] %vm2119, 0.0
      %2124 = vst.msk [vmem:[#allocation2 + $0x30] sm:$0xff] %vm1346, 0.0
      %2125 = vst.msk [vmem:[#allocation2 + $0x38] sm:$0xff] %vm1346, 0.0
      %2126 = vst.msk [vmem:[#allocation2 + $0x40] sm:$0x3] %vm2119, 0.0
      %2127 = vst.msk [vmem:[#allocation2 + $0x48] sm:$0xff] %vm1346, 0.0
      %2128 = vst.msk [vmem:[#allocation2 + $0x50] sm:$0xff] %vm1346, 0.0
      %2129 = vst.msk [vmem:[#allocation2 + $0x58] sm:$0x3] %vm2119, 0.0
      %2130 = vst.msk [vmem:[#allocation2 + $0x60] sm:$0xff] %vm1346, 0.0
      %2131 = vst.msk [vmem:[#allocation2 + $0x68] sm:$0xff] %vm1346, 0.0
      %2132 = vst.msk [vmem:[#allocation2 + $0x70] sm:$0x3] %vm2119, 0.0
      %2133 = vst.msk [vmem:[#allocation2 + $0x78] sm:$0xff] %vm1346, 0.0
      %2134 = vst.msk [vmem:[#allocation2 + $0x80] sm:$0xff] %vm1346, 0.0
      %2135 = vst.msk [vmem:[#allocation2 + $0x88] sm:$0x3] %vm2119, 0.0
      %2136 = vst.msk [vmem:[#allocation2 + $0x90] sm:$0xff] %vm1346, 0.0
      %2137 = vst.msk [vmem:[#allocation2 + $0x98] sm:$0xff] %vm1346, 0.0
      %2138 = vst.msk [vmem:[#allocation2 + $0xa0] sm:$0x3] %vm2119, 0.0
      %2139 = vst.msk [vmem:[#allocation2 + $0xa8] sm:$0xff] %vm1346, 0.0
      %2140 = vst.msk [vmem:[#allocation2 + $0xb0] sm:$0xff] %vm1346, 0.0
      %2141 = vst.msk [vmem:[#allocation2 + $0xb8] sm:$0x3] %vm2119, 0.0
      %2142 = vst.msk [vmem:[#allocation2 + $0xc0] sm:$0xff] %vm1346, 0.0
      %2143 = vst.msk [vmem:[#allocation2 + $0xc8] sm:$0xff] %vm1346, 0.0
      %2144 = vst.msk [vmem:[#allocation2 + $0xd0] sm:$0x3] %vm2119, 0.0
      %2145 = vst.msk [vmem:[#allocation2 + $0xd8] sm:$0xff] %vm1346, 0.0
      %2146 = vst.msk [vmem:[#allocation2 + $0xe0] sm:$0xff] %vm1346, 0.0
      %2147 = vst.msk [vmem:[#allocation2 + $0xe8] sm:$0x3] %vm2119, 0.0
      %2148 = vst.msk [vmem:[#allocation2 + $0xf0] sm:$0xff] %vm1346, 0.0
      %2149 = vst.msk [vmem:[#allocation2 + $0xf8] sm:$0xff] %vm1346, 0.0
      %2150 = vst.msk [vmem:[#allocation2 + $0x100] sm:$0x3] %vm2119, 0.0
      %2151 = vst.msk [vmem:[#allocation2 + $0x108] sm:$0xff] %vm1346, 0.0
      %2152 = vst.msk [vmem:[#allocation2 + $0x110] sm:$0xff] %vm1346, 0.0
      %2153 = vst.msk [vmem:[#allocation2 + $0x118] sm:$0x3] %vm2119, 0.0
      %2154 = vst.msk [vmem:[#allocation2 + $0x120] sm:$0xff] %vm1346, 0.0
      %2155 = vst.msk [vmem:[#allocation2 + $0x128] sm:$0xff] %vm1346, 0.0
      %2156 = vst.msk [vmem:[#allocation2 + $0x130] sm:$0x3] %vm2119, 0.0
      %2157 = vst.msk [vmem:[#allocation2 + $0x138] sm:$0xff] %vm1346, 0.0
      %2158 = vst.msk [vmem:[#allocation2 + $0x140] sm:$0xff] %vm1346, 0.0
      %2159 = vst.msk [vmem:[#allocation2 + $0x148] sm:$0x3] %vm2119, 0.0
      %2160 = vst.msk [vmem:[#allocation2 + $0x150] sm:$0xff] %vm1346, 0.0
      %2161 = vst.msk [vmem:[#allocation2 + $0x158] sm:$0xff] %vm1346, 0.0
      %2162 = vst.msk [vmem:[#allocation2 + $0x160] sm:$0x3] %vm2119, 0.0
      %2163 = vst.msk [vmem:[#allocation2 + $0x168] sm:$0xff] %vm1346, 0.0
      %2164 = vst.msk [vmem:[#allocation2 + $0x170] sm:$0xff] %vm1346, 0.0
      %2165 = vst.msk [vmem:[#allocation2 + $0x178] sm:$0x3] %vm2119, 0.0
      %2166 = vst.msk [vmem:[#allocation2 + $0x180] sm:$0xff] %vm1346, 0.0
      %2167 = vst.msk [vmem:[#allocation2 + $0x188] sm:$0xff] %vm1346, 0.0
      %2168 = vst.msk [vmem:[#allocation2 + $0x190] sm:$0x3] %vm2119, 0.0
      %2169 = vst.msk [vmem:[#allocation2 + $0x198] sm:$0xff] %vm1346, 0.0
      %2170 = vst.msk [vmem:[#allocation2 + $0x1a0] sm:$0xff] %vm1346, 0.0
      %2171 = vst.msk [vmem:[#allocation2 + $0x1a8] sm:$0x3] %vm2119, 0.0
      %2172 = vrot.lane.b32.xlu0 %v1892, 120
      %v2173 = vpop.permute.xlu0 %2172
      %2174 = vrot.lane.b32.xlu0 %v1893, 120
      %v2175 = vpop.permute.xlu0 %2174
      %2176 = vrot.lane.b32.xlu0 %v1894, 120
      %v2177 = vpop.permute.xlu0 %2176
      %2178 = vrot.lane.b32.xlu0 %v1895, 120
      %v2179 = vpop.permute.xlu0 %2178
      %2180 = vrot.lane.b32.xlu0 %v1896, 120
      %v2181 = vpop.permute.xlu0 %2180
      %2182 = vrot.lane.b32.xlu0 %v1897, 120
      %v2183 = vpop.permute.xlu0 %2182
      %2184 = vrot.lane.b32.xlu0 %v1898, 120
      %v2185 = vpop.permute.xlu0 %2184
      %2186 = vrot.lane.b32.xlu0 %v1899, 120
      %v2187 = vpop.permute.xlu0 %2186
      %2188 = vrot.lane.b32.xlu0 %v1900, 120
      %v2189 = vpop.permute.xlu0 %2188
      %2190 = vrot.lane.b32.xlu0 %v1901, 120
      %v2191 = vpop.permute.xlu0 %2190
      %2192 = vrot.lane.b32.xlu0 %v1902, 120
      %v2193 = vpop.permute.xlu0 %2192
      %2194 = vrot.lane.b32.xlu0 %v1903, 120
      %v2195 = vpop.permute.xlu0 %2194
      %2196 = vrot.lane.b32.xlu0 %v1904, 120
      %v2197 = vpop.permute.xlu0 %2196
      %2198 = vrot.lane.b32.xlu0 %v1905, 120
      %v2199 = vpop.permute.xlu0 %2198
      %2200 = vrot.lane.b32.xlu0 %v1906, 120
      %v2201 = vpop.permute.xlu0 %2200
      %2202 = vrot.lane.b32.xlu0 %v1907, 120
      %v2203 = vpop.permute.xlu0 %2202
      %2204 = vrot.lane.b32.xlu0 %v1908, 120
      %v2205 = vpop.permute.xlu0 %2204
      %2206 = vrot.lane.b32.xlu0 %v1909, 120
      %v2207 = vpop.permute.xlu0 %2206
      %2208 = vrot.lane.b32.xlu0 %v1910, 120
      %v2209 = vpop.permute.xlu0 %2208
      %2210 = vrot.lane.b32.xlu0 %v1911, 120
      %v2211 = vpop.permute.xlu0 %2210
      %2212 = vrot.lane.b32.xlu0 %v1912, 120
      %v2213 = vpop.permute.xlu0 %2212
      %2214 = vrot.lane.b32.xlu0 %v1913, 120
      %v2215 = vpop.permute.xlu0 %2214
      %2216 = vrot.lane.b32.xlu0 %v1914, 120
      %v2217 = vpop.permute.xlu0 %2216
      %2218 = vrot.lane.b32.xlu0 %v1915, 120
      %v2219 = vpop.permute.xlu0 %2218
      %2220 = vrot.lane.b32.xlu0 %v1916, 120
      %v2221 = vpop.permute.xlu0 %2220
      %2222 = vrot.lane.b32.xlu0 %v1917, 120
      %v2223 = vpop.permute.xlu0 %2222
      %2224 = vrot.lane.b32.xlu0 %v1918, 120
      %v2225 = vpop.permute.xlu0 %2224
      %2226 = vrot.lane.b32.xlu0 %v1919, 120
      %v2227 = vpop.permute.xlu0 %2226
      %2228 = vrot.lane.b32.xlu0 %v1920, 120
      %v2229 = vpop.permute.xlu0 %2228
      %2230 = vrot.lane.b32.xlu0 %v1921, 120
      %v2231 = vpop.permute.xlu0 %2230
      %2232 = vrot.lane.b32.xlu0 %v1922, 120
      %v2233 = vpop.permute.xlu0 %2232
      %2234 = vrot.lane.b32.xlu0 %v1923, 120
      %v2235 = vpop.permute.xlu0 %2234
      %s2268 = scalar_lea.vmem [#allocation2], 24
      %2269 = vst.msk [vmem:[%s2268 + $0x1] sm:$0xff] %vm1346, %v2173
      %2270 = vst.msk [vmem:[%s2268 + $0x9] sm:$0xff] %vm1346, %v2175
      %2271 = vst.msk [vmem:[%s2268 + $0x19] sm:$0xff] %vm1346, %v2177
      %2272 = vst.msk [vmem:[%s2268 + $0x21] sm:$0xff] %vm1346, %v2179
      %2273 = vst.msk [vmem:[%s2268 + $0x31] sm:$0xff] %vm1346, %v2181
      %2274 = vst.msk [vmem:[%s2268 + $0x39] sm:$0xff] %vm1346, %v2183
      %2275 = vst.msk [vmem:[%s2268 + $0x49] sm:$0xff] %vm1346, %v2185
      %2276 = vst.msk [vmem:[%s2268 + $0x51] sm:$0xff] %vm1346, %v2187
      %2277 = vst.msk [vmem:[%s2268 + $0x61] sm:$0xff] %vm1346, %v2189
      %2278 = vst.msk [vmem:[%s2268 + $0x69] sm:$0xff] %vm1346, %v2191
      %2279 = vst.msk [vmem:[%s2268 + $0x79] sm:$0xff] %vm1346, %v2193
      %2280 = vst.msk [vmem:[%s2268 + $0x81] sm:$0xff] %vm1346, %v2195
      %2281 = vst.msk [vmem:[%s2268 + $0x91] sm:$0xff] %vm1346, %v2197
      %2282 = vst.msk [vmem:[%s2268 + $0x99] sm:$0xff] %vm1346, %v2199
      %2283 = vst.msk [vmem:[%s2268 + $0xa9] sm:$0xff] %vm1346, %v2201
      %2284 = vst.msk [vmem:[%s2268 + $0xb1] sm:$0xff] %vm1346, %v2203
      %2285 = vst.msk [vmem:[%s2268 + $0xc1] sm:$0xff] %vm1346, %v2205
      %2286 = vst.msk [vmem:[%s2268 + $0xc9] sm:$0xff] %vm1346, %v2207
      %2287 = vst.msk [vmem:[%s2268 + $0xd9] sm:$0xff] %vm1346, %v2209
      %2288 = vst.msk [vmem:[%s2268 + $0xe1] sm:$0xff] %vm1346, %v2211
      %2289 = vst.msk [vmem:[%s2268 + $0xf1] sm:$0xff] %vm1346, %v2213
      %2290 = vst.msk [vmem:[%s2268 + $0xf9] sm:$0xff] %vm1346, %v2215
      %2291 = vst.msk [vmem:[%s2268 + $0x109] sm:$0xff] %vm1346, %v2217
      %2292 = vst.msk [vmem:[%s2268 + $0x111] sm:$0xff] %vm1346, %v2219
      %2293 = vst.msk [vmem:[%s2268 + $0x121] sm:$0xff] %vm1346, %v2221
      %2294 = vst.msk [vmem:[%s2268 + $0x129] sm:$0xff] %vm1346, %v2223
      %2295 = vst.msk [vmem:[%s2268 + $0x139] sm:$0xff] %vm1346, %v2225
      %2296 = vst.msk [vmem:[%s2268 + $0x141] sm:$0xff] %vm1346, %v2227
      %2297 = vst.msk [vmem:[%s2268 + $0x151] sm:$0xff] %vm1346, %v2229
      %2298 = vst.msk [vmem:[%s2268 + $0x159] sm:$0xff] %vm1346, %v2231
      %2299 = vst.msk [vmem:[%s2268 + $0x169] sm:$0xff] %vm1346, %v2233
      %2300 = vst.msk [vmem:[%s2268 + $0x171] sm:$0xff] %vm1346, %v2235
      %v2301 = vld [vmem:[#allocation2] sm:$0xff]
      %v2302 = vld [vmem:[#allocation2 + $0x8] sm:$0xff]
      %v2303 = vld [vmem:[#allocation2 + $0x10] sm:$0x3]
      %v2304 = vld [vmem:[#allocation2 + $0x18] sm:$0xff]
      %v2305 = vld [vmem:[#allocation2 + $0x20] sm:$0xff]
      %v2306 = vld [vmem:[#allocation2 + $0x28] sm:$0x3]
      %v2307 = vld [vmem:[#allocation2 + $0x30] sm:$0xff]
      %v2308 = vld [vmem:[#allocation2 + $0x38] sm:$0xff]
      %v2309 = vld [vmem:[#allocation2 + $0x40] sm:$0x3]
      %v2310 = vld [vmem:[#allocation2 + $0x48] sm:$0xff]
      %v2311 = vld [vmem:[#allocation2 + $0x50] sm:$0xff]
      %v2312 = vld [vmem:[#allocation2 + $0x58] sm:$0x3]
      %v2313 = vld [vmem:[#allocation2 + $0x60] sm:$0xff]
      %v2314 = vld [vmem:[#allocation2 + $0x68] sm:$0xff]
      %v2315 = vld [vmem:[#allocation2 + $0x70] sm:$0x3]
      %v2316 = vld [vmem:[#allocation2 + $0x78] sm:$0xff]
      %v2317 = vld [vmem:[#allocation2 + $0x80] sm:$0xff]
      %v2318 = vld [vmem:[#allocation2 + $0x88] sm:$0x3]
      %v2319 = vld [vmem:[#allocation2 + $0x90] sm:$0xff]
      %v2320 = vld [vmem:[#allocation2 + $0x98] sm:$0xff]
      %v2321 = vld [vmem:[#allocation2 + $0xa0] sm:$0x3]
      %v2322 = vld [vmem:[#allocation2 + $0xa8] sm:$0xff]
      %v2323 = vld [vmem:[#allocation2 + $0xb0] sm:$0xff]
      %v2324 = vld [vmem:[#allocation2 + $0xb8] sm:$0x3]
      %v2325 = vld [vmem:[#allocation2 + $0xc0] sm:$0xff]
      %v2326 = vld [vmem:[#allocation2 + $0xc8] sm:$0xff]
      %v2327 = vld [vmem:[#allocation2 + $0xd0] sm:$0x3]
      %v2328 = vld [vmem:[#allocation2 + $0xd8] sm:$0xff]
      %v2329 = vld [vmem:[#allocation2 + $0xe0] sm:$0xff]
      %v2330 = vld [vmem:[#allocation2 + $0xe8] sm:$0x3]
      %v2331 = vld [vmem:[#allocation2 + $0xf0] sm:$0xff]
      %v2332 = vld [vmem:[#allocation2 + $0xf8] sm:$0xff]
      %v2333 = vld [vmem:[#allocation2 + $0x100] sm:$0x3]
      %v2334 = vld [vmem:[#allocation2 + $0x108] sm:$0xff]
      %v2335 = vld [vmem:[#allocation2 + $0x110] sm:$0xff]
      %v2336 = vld [vmem:[#allocation2 + $0x118] sm:$0x3]
      %v2337 = vld [vmem:[#allocation2 + $0x120] sm:$0xff]
      %v2338 = vld [vmem:[#allocation2 + $0x128] sm:$0xff]
      %v2339 = vld [vmem:[#allocation2 + $0x130] sm:$0x3]
      %v2340 = vld [vmem:[#allocation2 + $0x138] sm:$0xff]
      %v2341 = vld [vmem:[#allocation2 + $0x140] sm:$0xff]
      %v2342 = vld [vmem:[#allocation2 + $0x148] sm:$0x3]
      %v2343 = vld [vmem:[#allocation2 + $0x150] sm:$0xff]
      %v2344 = vld [vmem:[#allocation2 + $0x158] sm:$0xff]
      %v2345 = vld [vmem:[#allocation2 + $0x160] sm:$0x3]
      %v2346 = vld [vmem:[#allocation2 + $0x168] sm:$0xff]
      %v2347 = vld [vmem:[#allocation2 + $0x170] sm:$0xff]
      %v2348 = vld [vmem:[#allocation2 + $0x178] sm:$0x3]
      %v2349 = vld [vmem:[#allocation2 + $0x180] sm:$0xff]
      %v2350 = vld [vmem:[#allocation2 + $0x188] sm:$0xff]
      %v2351 = vld [vmem:[#allocation2 + $0x190] sm:$0x3]
      %v2352 = vld [vmem:[#allocation2 + $0x198] sm:$0xff]
      %v2353 = vld [vmem:[#allocation2 + $0x1a0] sm:$0xff]
      %v2354 = vld [vmem:[#allocation2 + $0x1a8] sm:$0x3]
      %v2403 = vrot.slane %v2301, 1
      %v2404 = vrot.slane %v2302, 1
      %v2405 = vsel %vm655, %v2403, %v2404
      %v2406 = vrot.slane %v2303, 1
      %v2407 = vsel %vm655, %v2404, %v2406
      %v2408 = vrot.slane %v2304, 1
      %v2409 = vrot.slane %v2305, 1
      %v2410 = vsel %vm655, %v2408, %v2409
      %v2411 = vrot.slane %v2306, 1
      %v2412 = vsel %vm655, %v2409, %v2411
      %v2413 = vrot.slane %v2307, 1
      %v2414 = vrot.slane %v2308, 1
      %v2415 = vsel %vm655, %v2413, %v2414
      %v2416 = vrot.slane %v2309, 1
      %v2417 = vsel %vm655, %v2414, %v2416
      %v2418 = vrot.slane %v2310, 1
      %v2419 = vrot.slane %v2311, 1
      %v2420 = vsel %vm655, %v2418, %v2419
      %v2421 = vrot.slane %v2312, 1
      %v2422 = vsel %vm655, %v2419, %v2421
      %v2423 = vrot.slane %v2313, 1
      %v2424 = vrot.slane %v2314, 1
      %v2425 = vsel %vm655, %v2423, %v2424
      %v2426 = vrot.slane %v2315, 1
      %v2427 = vsel %vm655, %v2424, %v2426
      %v2428 = vrot.slane %v2316, 1
      %v2429 = vrot.slane %v2317, 1
      %v2430 = vsel %vm655, %v2428, %v2429
      %v2431 = vrot.slane %v2318, 1
      %v2432 = vsel %vm655, %v2429, %v2431
      %v2433 = vrot.slane %v2319, 1
      %v2434 = vrot.slane %v2320, 1
      %v2435 = vsel %vm655, %v2433, %v2434
      %v2436 = vrot.slane %v2321, 1
      %v2437 = vsel %vm655, %v2434, %v2436
      %v2438 = vrot.slane %v2322, 1
      %v2439 = vrot.slane %v2323, 1
      %v2440 = vsel %vm655, %v2438, %v2439
      %v2441 = vrot.slane %v2324, 1
      %v2442 = vsel %vm655, %v2439, %v2441
      %v2443 = vrot.slane %v2325, 1
      %v2444 = vrot.slane %v2326, 1
      %v2445 = vsel %vm655, %v2443, %v2444
      %v2446 = vrot.slane %v2327, 1
      %v2447 = vsel %vm655, %v2444, %v2446
      %v2448 = vrot.slane %v2328, 1
      %v2449 = vrot.slane %v2329, 1
      %v2450 = vsel %vm655, %v2448, %v2449
      %v2451 = vrot.slane %v2330, 1
      %v2452 = vsel %vm655, %v2449, %v2451
      %v2453 = vrot.slane %v2331, 1
      %v2454 = vrot.slane %v2332, 1
      %v2455 = vsel %vm655, %v2453, %v2454
      %v2456 = vrot.slane %v2333, 1
      %v2457 = vsel %vm655, %v2454, %v2456
      %v2458 = vrot.slane %v2334, 1
      %v2459 = vrot.slane %v2335, 1
      %v2460 = vsel %vm655, %v2458, %v2459
      %v2461 = vrot.slane %v2336, 1
      %v2462 = vsel %vm655, %v2459, %v2461
      %v2463 = vrot.slane %v2337, 1
      %v2464 = vrot.slane %v2338, 1
      %v2465 = vsel %vm655, %v2463, %v2464
      %v2466 = vrot.slane %v2339, 1
      %v2467 = vsel %vm655, %v2464, %v2466
      %v2468 = vrot.slane %v2340, 1
      %v2469 = vrot.slane %v2341, 1
      %v2470 = vsel %vm655, %v2468, %v2469
      %v2471 = vrot.slane %v2342, 1
      %v2472 = vsel %vm655, %v2469, %v2471
      %v2473 = vrot.slane %v2343, 1
      %v2474 = vrot.slane %v2344, 1
      %v2475 = vsel %vm655, %v2473, %v2474
      %v2476 = vrot.slane %v2345, 1
      %v2477 = vsel %vm655, %v2474, %v2476
      %v2478 = vrot.slane %v2346, 1
      %v2479 = vrot.slane %v2347, 1
      %v2480 = vsel %vm655, %v2478, %v2479
      %v2481 = vrot.slane %v2348, 1
      %v2482 = vsel %vm655, %v2479, %v2481
      %2483 = vrot.lane.b32.xlu0 %v2405, 4
      %v2484 = vpop.permute.xlu0 %2483
      %2485 = vrot.lane.b32.xlu0 %v2407, 4
      %v2486 = vpop.permute.xlu0 %2485
      %2487 = vrot.lane.b32.xlu0 %v2410, 4
      %v2488 = vpop.permute.xlu0 %2487
      %2489 = vrot.lane.b32.xlu0 %v2412, 4
      %v2490 = vpop.permute.xlu0 %2489
      %2491 = vrot.lane.b32.xlu0 %v2415, 4
      %v2492 = vpop.permute.xlu0 %2491
      %2493 = vrot.lane.b32.xlu0 %v2417, 4
      %v2494 = vpop.permute.xlu0 %2493
      %2495 = vrot.lane.b32.xlu0 %v2420, 4
      %v2496 = vpop.permute.xlu0 %2495
      %2497 = vrot.lane.b32.xlu0 %v2422, 4
      %v2498 = vpop.permute.xlu0 %2497
      %2499 = vrot.lane.b32.xlu0 %v2425, 4
      %v2500 = vpop.permute.xlu0 %2499
      %2501 = vrot.lane.b32.xlu0 %v2427, 4
      %v2502 = vpop.permute.xlu0 %2501
      %2503 = vrot.lane.b32.xlu0 %v2430, 4
      %v2504 = vpop.permute.xlu0 %2503
      %2505 = vrot.lane.b32.xlu0 %v2432, 4
      %v2506 = vpop.permute.xlu0 %2505
      %2507 = vrot.lane.b32.xlu0 %v2435, 4
      %v2508 = vpop.permute.xlu0 %2507
      %2509 = vrot.lane.b32.xlu0 %v2437, 4
      %v2510 = vpop.permute.xlu0 %2509
      %2511 = vrot.lane.b32.xlu0 %v2440, 4
      %v2512 = vpop.permute.xlu0 %2511
      %2513 = vrot.lane.b32.xlu0 %v2442, 4
      %v2514 = vpop.permute.xlu0 %2513
      %2515 = vrot.lane.b32.xlu0 %v2445, 4
      %v2516 = vpop.permute.xlu0 %2515
      %2517 = vrot.lane.b32.xlu0 %v2447, 4
      %v2518 = vpop.permute.xlu0 %2517
      %2519 = vrot.lane.b32.xlu0 %v2450, 4
      %v2520 = vpop.permute.xlu0 %2519
      %2521 = vrot.lane.b32.xlu0 %v2452, 4
      %v2522 = vpop.permute.xlu0 %2521
      %2523 = vrot.lane.b32.xlu0 %v2455, 4
      %v2524 = vpop.permute.xlu0 %2523
      %2525 = vrot.lane.b32.xlu0 %v2457, 4
      %v2526 = vpop.permute.xlu0 %2525
      %2527 = vrot.lane.b32.xlu0 %v2460, 4
      %v2528 = vpop.permute.xlu0 %2527
      %2529 = vrot.lane.b32.xlu0 %v2462, 4
      %v2530 = vpop.permute.xlu0 %2529
      %2531 = vrot.lane.b32.xlu0 %v2465, 4
      %v2532 = vpop.permute.xlu0 %2531
      %2533 = vrot.lane.b32.xlu0 %v2467, 4
      %v2534 = vpop.permute.xlu0 %2533
      %2535 = vrot.lane.b32.xlu0 %v2470, 4
      %v2536 = vpop.permute.xlu0 %2535
      %2537 = vrot.lane.b32.xlu0 %v2472, 4
      %v2538 = vpop.permute.xlu0 %2537
      %2539 = vrot.lane.b32.xlu0 %v2475, 4
      %v2540 = vpop.permute.xlu0 %2539
      %2541 = vrot.lane.b32.xlu0 %v2477, 4
      %v2542 = vpop.permute.xlu0 %2541
      %2543 = vrot.lane.b32.xlu0 %v2480, 4
      %v2544 = vpop.permute.xlu0 %2543
      %2545 = vrot.lane.b32.xlu0 %v2482, 4
      %v2546 = vpop.permute.xlu0 %2545
      %vm2579 = vcmask 1045504
      %v2580 = vrot.slane %v2301, 2
      %v2581 = vrot.slane %v2302, 2
      %v2582 = vsel %vm2579, %v2580, %v2581
      %v2583 = vrot.slane %v2303, 2
      %v2584 = vsel %vm2579, %v2581, %v2583
      %v2585 = vrot.slane %v2304, 2
      %v2586 = vrot.slane %v2305, 2
      %v2587 = vsel %vm2579, %v2585, %v2586
      %v2588 = vrot.slane %v2306, 2
      %v2589 = vsel %vm2579, %v2586, %v2588
      %v2590 = vrot.slane %v2307, 2
      %v2591 = vrot.slane %v2308, 2
      %v2592 = vsel %vm2579, %v2590, %v2591
      %v2593 = vrot.slane %v2309, 2
      %v2594 = vsel %vm2579, %v2591, %v2593
      %v2595 = vrot.slane %v2310, 2
      %v2596 = vrot.slane %v2311, 2
      %v2597 = vsel %vm2579, %v2595, %v2596
      %v2598 = vrot.slane %v2312, 2
      %v2599 = vsel %vm2579, %v2596, %v2598
      %v2600 = vrot.slane %v2313, 2
      %v2601 = vrot.slane %v2314, 2
      %v2602 = vsel %vm2579, %v2600, %v2601
      %v2603 = vrot.slane %v2315, 2
      %v2604 = vsel %vm2579, %v2601, %v2603
      %v2605 = vrot.slane %v2316, 2
      %v2606 = vrot.slane %v2317, 2
      %v2607 = vsel %vm2579, %v2605, %v2606
      %v2608 = vrot.slane %v2318, 2
      %v2609 = vsel %vm2579, %v2606, %v2608
      %v2610 = vrot.slane %v2319, 2
      %v2611 = vrot.slane %v2320, 2
      %v2612 = vsel %vm2579, %v2610, %v2611
      %v2613 = vrot.slane %v2321, 2
      %v2614 = vsel %vm2579, %v2611, %v2613
      %v2615 = vrot.slane %v2322, 2
      %v2616 = vrot.slane %v2323, 2
      %v2617 = vsel %vm2579, %v2615, %v2616
      %v2618 = vrot.slane %v2324, 2
      %v2619 = vsel %vm2579, %v2616, %v2618
      %v2620 = vrot.slane %v2325, 2
      %v2621 = vrot.slane %v2326, 2
      %v2622 = vsel %vm2579, %v2620, %v2621
      %v2623 = vrot.slane %v2327, 2
      %v2624 = vsel %vm2579, %v2621, %v2623
      %v2625 = vrot.slane %v2328, 2
      %v2626 = vrot.slane %v2329, 2
      %v2627 = vsel %vm2579, %v2625, %v2626
      %v2628 = vrot.slane %v2330, 2
      %v2629 = vsel %vm2579, %v2626, %v2628
      %v2630 = vrot.slane %v2331, 2
      %v2631 = vrot.slane %v2332, 2
      %v2632 = vsel %vm2579, %v2630, %v2631
      %v2633 = vrot.slane %v2333, 2
      %v2634 = vsel %vm2579, %v2631, %v2633
      %v2635 = vrot.slane %v2334, 2
      %v2636 = vrot.slane %v2335, 2
      %v2637 = vsel %vm2579, %v2635, %v2636
      %v2638 = vrot.slane %v2336, 2
      %v2639 = vsel %vm2579, %v2636, %v2638
      %v2640 = vrot.slane %v2337, 2
      %v2641 = vrot.slane %v2338, 2
      %v2642 = vsel %vm2579, %v2640, %v2641
      %v2643 = vrot.slane %v2339, 2
      %v2644 = vsel %vm2579, %v2641, %v2643
      %v2645 = vrot.slane %v2340, 2
      %v2646 = vrot.slane %v2341, 2
      %v2647 = vsel %vm2579, %v2645, %v2646
      %v2648 = vrot.slane %v2342, 2
      %v2649 = vsel %vm2579, %v2646, %v2648
      %v2650 = vrot.slane %v2343, 2
      %v2651 = vrot.slane %v2344, 2
      %v2652 = vsel %vm2579, %v2650, %v2651
      %v2653 = vrot.slane %v2345, 2
      %v2654 = vsel %vm2579, %v2651, %v2653
      %v2655 = vrot.slane %v2346, 2
      %v2656 = vrot.slane %v2347, 2
      %v2657 = vsel %vm2579, %v2655, %v2656
      %v2658 = vrot.slane %v2348, 2
      %v2659 = vsel %vm2579, %v2656, %v2658
      %2660 = vrot.lane.b32.xlu0 %v2582, 8
      %v2661 = vpop.permute.xlu0 %2660
      %2662 = vrot.lane.b32.xlu0 %v2584, 8
      %v2663 = vpop.permute.xlu0 %2662
      %2664 = vrot.lane.b32.xlu0 %v2587, 8
      %v2665 = vpop.permute.xlu0 %2664
      %2666 = vrot.lane.b32.xlu0 %v2589, 8
      %v2667 = vpop.permute.xlu0 %2666
      %2668 = vrot.lane.b32.xlu0 %v2592, 8
      %v2669 = vpop.permute.xlu0 %2668
      %2670 = vrot.lane.b32.xlu0 %v2594, 8
      %v2671 = vpop.permute.xlu0 %2670
      %2672 = vrot.lane.b32.xlu0 %v2597, 8
      %v2673 = vpop.permute.xlu0 %2672
      %2674 = vrot.lane.b32.xlu0 %v2599, 8
      %v2675 = vpop.permute.xlu0 %2674
      %2676 = vrot.lane.b32.xlu0 %v2602, 8
      %v2677 = vpop.permute.xlu0 %2676
      %2678 = vrot.lane.b32.xlu0 %v2604, 8
      %v2679 = vpop.permute.xlu0 %2678
      %2680 = vrot.lane.b32.xlu0 %v2607, 8
      %v2681 = vpop.permute.xlu0 %2680
      %2682 = vrot.lane.b32.xlu0 %v2609, 8
      %v2683 = vpop.permute.xlu0 %2682
      %2684 = vrot.lane.b32.xlu0 %v2612, 8
      %v2685 = vpop.permute.xlu0 %2684
      %2686 = vrot.lane.b32.xlu0 %v2614, 8
      %v2687 = vpop.permute.xlu0 %2686
      %2688 = vrot.lane.b32.xlu0 %v2617, 8
      %v2689 = vpop.permute.xlu0 %2688
      %2690 = vrot.lane.b32.xlu0 %v2619, 8
      %v2691 = vpop.permute.xlu0 %2690
      %2692 = vrot.lane.b32.xlu0 %v2622, 8
      %v2693 = vpop.permute.xlu0 %2692
      %2694 = vrot.lane.b32.xlu0 %v2624, 8
      %v2695 = vpop.permute.xlu0 %2694
      %2696 = vrot.lane.b32.xlu0 %v2627, 8
      %v2697 = vpop.permute.xlu0 %2696
      %2698 = vrot.lane.b32.xlu0 %v2629, 8
      %v2699 = vpop.permute.xlu0 %2698
      %2700 = vrot.lane.b32.xlu0 %v2632, 8
      %v2701 = vpop.permute.xlu0 %2700
      %2702 = vrot.lane.b32.xlu0 %v2634, 8
      %v2703 = vpop.permute.xlu0 %2702
      %2704 = vrot.lane.b32.xlu0 %v2637, 8
      %v2705 = vpop.permute.xlu0 %2704
      %2706 = vrot.lane.b32.xlu0 %v2639, 8
      %v2707 = vpop.permute.xlu0 %2706
      %2708 = vrot.lane.b32.xlu0 %v2642, 8
      %v2709 = vpop.permute.xlu0 %2708
      %2710 = vrot.lane.b32.xlu0 %v2644, 8
      %v2711 = vpop.permute.xlu0 %2710
      %2712 = vrot.lane.b32.xlu0 %v2647, 8
      %v2713 = vpop.permute.xlu0 %2712
      %2714 = vrot.lane.b32.xlu0 %v2649, 8
      %v2715 = vpop.permute.xlu0 %2714
      %2716 = vrot.lane.b32.xlu0 %v2652, 8
      %v2717 = vpop.permute.xlu0 %2716
      %2718 = vrot.lane.b32.xlu0 %v2654, 8
      %v2719 = vpop.permute.xlu0 %2718
      %2720 = vrot.lane.b32.xlu0 %v2657, 8
      %v2721 = vpop.permute.xlu0 %2720
      %2722 = vrot.lane.b32.xlu0 %v2659, 8
      %v2723 = vpop.permute.xlu0 %2722
      %2758 = vrot.lane.b32.xlu0 %v2304, 12
      %v2759 = vpop.permute.xlu0 %2758
      %2760 = vrot.lane.b32.xlu0 %v2305, 12
      %v2761 = vpop.permute.xlu0 %2760
      %2762 = vrot.lane.b32.xlu0 %v2307, 12
      %v2763 = vpop.permute.xlu0 %2762
      %2764 = vrot.lane.b32.xlu0 %v2308, 12
      %v2765 = vpop.permute.xlu0 %2764
      %2766 = vrot.lane.b32.xlu0 %v2310, 12
      %v2767 = vpop.permute.xlu0 %2766
      %2768 = vrot.lane.b32.xlu0 %v2311, 12
      %v2769 = vpop.permute.xlu0 %2768
      %2770 = vrot.lane.b32.xlu0 %v2313, 12
      %v2771 = vpop.permute.xlu0 %2770
      %2772 = vrot.lane.b32.xlu0 %v2314, 12
      %v2773 = vpop.permute.xlu0 %2772
      %2774 = vrot.lane.b32.xlu0 %v2316, 12
      %v2775 = vpop.permute.xlu0 %2774
      %2776 = vrot.lane.b32.xlu0 %v2317, 12
      %v2777 = vpop.permute.xlu0 %2776
      %2778 = vrot.lane.b32.xlu0 %v2319, 12
      %v2779 = vpop.permute.xlu0 %2778
      %2780 = vrot.lane.b32.xlu0 %v2320, 12
      %v2781 = vpop.permute.xlu0 %2780
      %2782 = vrot.lane.b32.xlu0 %v2322, 12
      %v2783 = vpop.permute.xlu0 %2782
      %2784 = vrot.lane.b32.xlu0 %v2323, 12
      %v2785 = vpop.permute.xlu0 %2784
      %2786 = vrot.lane.b32.xlu0 %v2325, 12
      %v2787 = vpop.permute.xlu0 %2786
      %2788 = vrot.lane.b32.xlu0 %v2326, 12
      %v2789 = vpop.permute.xlu0 %2788
      %2790 = vrot.lane.b32.xlu0 %v2328, 12
      %v2791 = vpop.permute.xlu0 %2790
      %2792 = vrot.lane.b32.xlu0 %v2329, 12
      %v2793 = vpop.permute.xlu0 %2792
      %2794 = vrot.lane.b32.xlu0 %v2331, 12
      %v2795 = vpop.permute.xlu0 %2794
      %2796 = vrot.lane.b32.xlu0 %v2332, 12
      %v2797 = vpop.permute.xlu0 %2796
      %2798 = vrot.lane.b32.xlu0 %v2334, 12
      %v2799 = vpop.permute.xlu0 %2798
      %2800 = vrot.lane.b32.xlu0 %v2335, 12
      %v2801 = vpop.permute.xlu0 %2800
      %2802 = vrot.lane.b32.xlu0 %v2337, 12
      %v2803 = vpop.permute.xlu0 %2802
      %2804 = vrot.lane.b32.xlu0 %v2338, 12
      %v2805 = vpop.permute.xlu0 %2804
      %2806 = vrot.lane.b32.xlu0 %v2340, 12
      %v2807 = vpop.permute.xlu0 %2806
      %2808 = vrot.lane.b32.xlu0 %v2341, 12
      %v2809 = vpop.permute.xlu0 %2808
      %2810 = vrot.lane.b32.xlu0 %v2343, 12
      %v2811 = vpop.permute.xlu0 %2810
      %2812 = vrot.lane.b32.xlu0 %v2344, 12
      %v2813 = vpop.permute.xlu0 %2812
      %2814 = vrot.lane.b32.xlu0 %v2346, 12
      %v2815 = vpop.permute.xlu0 %2814
      %2816 = vrot.lane.b32.xlu0 %v2347, 12
      %v2817 = vpop.permute.xlu0 %2816
      %2818 = vrot.lane.b32.xlu0 %v2349, 12
      %v2819 = vpop.permute.xlu0 %2818
      %2820 = vrot.lane.b32.xlu0 %v2350, 12
      %v2821 = vpop.permute.xlu0 %2820
      %v2855 = vrot.slane %v2349, 1
      %v2856 = vrot.slane %v2350, 1
      %v2857 = vsel %vm655, %v2855, %v2856
      %v2858 = vrot.slane %v2351, 1
      %v2859 = vsel %vm655, %v2856, %v2858
      %2860 = vrot.lane.b32.xlu0 %v2410, 16
      %v2861 = vpop.permute.xlu0 %2860
      %2862 = vrot.lane.b32.xlu0 %v2412, 16
      %v2863 = vpop.permute.xlu0 %2862
      %2864 = vrot.lane.b32.xlu0 %v2415, 16
      %v2865 = vpop.permute.xlu0 %2864
      %2866 = vrot.lane.b32.xlu0 %v2417, 16
      %v2867 = vpop.permute.xlu0 %2866
      %2868 = vrot.lane.b32.xlu0 %v2420, 16
      %v2869 = vpop.permute.xlu0 %2868
      %2870 = vrot.lane.b32.xlu0 %v2422, 16
      %v2871 = vpop.permute.xlu0 %2870
      %2872 = vrot.lane.b32.xlu0 %v2425, 16
      %v2873 = vpop.permute.xlu0 %2872
      %2874 = vrot.lane.b32.xlu0 %v2427, 16
      %v2875 = vpop.permute.xlu0 %2874
      %2876 = vrot.lane.b32.xlu0 %v2430, 16
      %v2877 = vpop.permute.xlu0 %2876
      %2878 = vrot.lane.b32.xlu0 %v2432, 16
      %v2879 = vpop.permute.xlu0 %2878
      %2880 = vrot.lane.b32.xlu0 %v2435, 16
      %v2881 = vpop.permute.xlu0 %2880
      %2882 = vrot.lane.b32.xlu0 %v2437, 16
      %v2883 = vpop.permute.xlu0 %2882
      %2884 = vrot.lane.b32.xlu0 %v2440, 16
      %v2885 = vpop.permute.xlu0 %2884
      %2886 = vrot.lane.b32.xlu0 %v2442, 16
      %v2887 = vpop.permute.xlu0 %2886
      %2888 = vrot.lane.b32.xlu0 %v2445, 16
      %v2889 = vpop.permute.xlu0 %2888
      %2890 = vrot.lane.b32.xlu0 %v2447, 16
      %v2891 = vpop.permute.xlu0 %2890
      %2892 = vrot.lane.b32.xlu0 %v2450, 16
      %v2893 = vpop.permute.xlu0 %2892
      %2894 = vrot.lane.b32.xlu0 %v2452, 16
      %v2895 = vpop.permute.xlu0 %2894
      %2896 = vrot.lane.b32.xlu0 %v2455, 16
      %v2897 = vpop.permute.xlu0 %2896
      %2898 = vrot.lane.b32.xlu0 %v2457, 16
      %v2899 = vpop.permute.xlu0 %2898
      %2900 = vrot.lane.b32.xlu0 %v2460, 16
      %v2901 = vpop.permute.xlu0 %2900
      %2902 = vrot.lane.b32.xlu0 %v2462, 16
      %v2903 = vpop.permute.xlu0 %2902
      %2904 = vrot.lane.b32.xlu0 %v2465, 16
      %v2905 = vpop.permute.xlu0 %2904
      %2906 = vrot.lane.b32.xlu0 %v2467, 16
      %v2907 = vpop.permute.xlu0 %2906
      %2908 = vrot.lane.b32.xlu0 %v2470, 16
      %v2909 = vpop.permute.xlu0 %2908
      %2910 = vrot.lane.b32.xlu0 %v2472, 16
      %v2911 = vpop.permute.xlu0 %2910
      %2912 = vrot.lane.b32.xlu0 %v2475, 16
      %v2913 = vpop.permute.xlu0 %2912
      %2914 = vrot.lane.b32.xlu0 %v2477, 16
      %v2915 = vpop.permute.xlu0 %2914
      %2916 = vrot.lane.b32.xlu0 %v2480, 16
      %v2917 = vpop.permute.xlu0 %2916
      %2918 = vrot.lane.b32.xlu0 %v2482, 16
      %v2919 = vpop.permute.xlu0 %2918
      %2920 = vrot.lane.b32.xlu0 %v2857, 16
      %v2921 = vpop.permute.xlu0 %2920
      %2922 = vrot.lane.b32.xlu0 %v2859, 16
      %v2923 = vpop.permute.xlu0 %2922
      %v2956 = vrot.slane %v2349, 2
      %v2957 = vrot.slane %v2350, 2
      %v2958 = vsel %vm2579, %v2956, %v2957
      %v2959 = vrot.slane %v2351, 2
      %v2960 = vsel %vm2579, %v2957, %v2959
      %2961 = vrot.lane.b32.xlu0 %v2587, 20
      %v2962 = vpop.permute.xlu0 %2961
      %2963 = vrot.lane.b32.xlu0 %v2589, 20
      %v2964 = vpop.permute.xlu0 %2963
      %2965 = vrot.lane.b32.xlu0 %v2592, 20
      %v2966 = vpop.permute.xlu0 %2965
      %2967 = vrot.lane.b32.xlu0 %v2594, 20
      %v2968 = vpop.permute.xlu0 %2967
      %2969 = vrot.lane.b32.xlu0 %v2597, 20
      %v2970 = vpop.permute.xlu0 %2969
      %2971 = vrot.lane.b32.xlu0 %v2599, 20
      %v2972 = vpop.permute.xlu0 %2971
      %2973 = vrot.lane.b32.xlu0 %v2602, 20
      %v2974 = vpop.permute.xlu0 %2973
      %2975 = vrot.lane.b32.xlu0 %v2604, 20
      %v2976 = vpop.permute.xlu0 %2975
      %2977 = vrot.lane.b32.xlu0 %v2607, 20
      %v2978 = vpop.permute.xlu0 %2977
      %2979 = vrot.lane.b32.xlu0 %v2609, 20
      %v2980 = vpop.permute.xlu0 %2979
      %2981 = vrot.lane.b32.xlu0 %v2612, 20
      %v2982 = vpop.permute.xlu0 %2981
      %2983 = vrot.lane.b32.xlu0 %v2614, 20
      %v2984 = vpop.permute.xlu0 %2983
      %2985 = vrot.lane.b32.xlu0 %v2617, 20
      %v2986 = vpop.permute.xlu0 %2985
      %2987 = vrot.lane.b32.xlu0 %v2619, 20
      %v2988 = vpop.permute.xlu0 %2987
      %2989 = vrot.lane.b32.xlu0 %v2622, 20
      %v2990 = vpop.permute.xlu0 %2989
      %2991 = vrot.lane.b32.xlu0 %v2624, 20
      %v2992 = vpop.permute.xlu0 %2991
      %2993 = vrot.lane.b32.xlu0 %v2627, 20
      %v2994 = vpop.permute.xlu0 %2993
      %2995 = vrot.lane.b32.xlu0 %v2629, 20
      %v2996 = vpop.permute.xlu0 %2995
      %2997 = vrot.lane.b32.xlu0 %v2632, 20
      %v2998 = vpop.permute.xlu0 %2997
      %2999 = vrot.lane.b32.xlu0 %v2634, 20
      %v3000 = vpop.permute.xlu0 %2999
      %3001 = vrot.lane.b32.xlu0 %v2637, 20
      %v3002 = vpop.permute.xlu0 %3001
      %3003 = vrot.lane.b32.xlu0 %v2639, 20
      %v3004 = vpop.permute.xlu0 %3003
      %3005 = vrot.lane.b32.xlu0 %v2642, 20
      %v3006 = vpop.permute.xlu0 %3005
      %3007 = vrot.lane.b32.xlu0 %v2644, 20
      %v3008 = vpop.permute.xlu0 %3007
      %3009 = vrot.lane.b32.xlu0 %v2647, 20
      %v3010 = vpop.permute.xlu0 %3009
      %3011 = vrot.lane.b32.xlu0 %v2649, 20
      %v3012 = vpop.permute.xlu0 %3011
      %3013 = vrot.lane.b32.xlu0 %v2652, 20
      %v3014 = vpop.permute.xlu0 %3013
      %3015 = vrot.lane.b32.xlu0 %v2654, 20
      %v3016 = vpop.permute.xlu0 %3015
      %3017 = vrot.lane.b32.xlu0 %v2657, 20
      %v3018 = vpop.permute.xlu0 %3017
      %3019 = vrot.lane.b32.xlu0 %v2659, 20
      %v3020 = vpop.permute.xlu0 %3019
      %3021 = vrot.lane.b32.xlu0 %v2958, 20
      %v3022 = vpop.permute.xlu0 %3021
      %3023 = vrot.lane.b32.xlu0 %v2960, 20
      %v3024 = vpop.permute.xlu0 %3023
      %3059 = vrot.lane.b32.xlu0 %v2307, 24
      %v3060 = vpop.permute.xlu0 %3059
      %3061 = vrot.lane.b32.xlu0 %v2308, 24
      %v3062 = vpop.permute.xlu0 %3061
      %3063 = vrot.lane.b32.xlu0 %v2310, 24
      %v3064 = vpop.permute.xlu0 %3063
      %3065 = vrot.lane.b32.xlu0 %v2311, 24
      %v3066 = vpop.permute.xlu0 %3065
      %3067 = vrot.lane.b32.xlu0 %v2313, 24
      %v3068 = vpop.permute.xlu0 %3067
      %3069 = vrot.lane.b32.xlu0 %v2314, 24
      %v3070 = vpop.permute.xlu0 %3069
      %3071 = vrot.lane.b32.xlu0 %v2316, 24
      %v3072 = vpop.permute.xlu0 %3071
      %3073 = vrot.lane.b32.xlu0 %v2317, 24
      %v3074 = vpop.permute.xlu0 %3073
      %3075 = vrot.lane.b32.xlu0 %v2319, 24
      %v3076 = vpop.permute.xlu0 %3075
      %3077 = vrot.lane.b32.xlu0 %v2320, 24
      %v3078 = vpop.permute.xlu0 %3077
      %3079 = vrot.lane.b32.xlu0 %v2322, 24
      %v3080 = vpop.permute.xlu0 %3079
      %3081 = vrot.lane.b32.xlu0 %v2323, 24
      %v3082 = vpop.permute.xlu0 %3081
      %3083 = vrot.lane.b32.xlu0 %v2325, 24
      %v3084 = vpop.permute.xlu0 %3083
      %3085 = vrot.lane.b32.xlu0 %v2326, 24
      %v3086 = vpop.permute.xlu0 %3085
      %3087 = vrot.lane.b32.xlu0 %v2328, 24
      %v3088 = vpop.permute.xlu0 %3087
      %3089 = vrot.lane.b32.xlu0 %v2329, 24
      %v3090 = vpop.permute.xlu0 %3089
      %3091 = vrot.lane.b32.xlu0 %v2331, 24
      %v3092 = vpop.permute.xlu0 %3091
      %3093 = vrot.lane.b32.xlu0 %v2332, 24
      %v3094 = vpop.permute.xlu0 %3093
      %3095 = vrot.lane.b32.xlu0 %v2334, 24
      %v3096 = vpop.permute.xlu0 %3095
      %3097 = vrot.lane.b32.xlu0 %v2335, 24
      %v3098 = vpop.permute.xlu0 %3097
      %3099 = vrot.lane.b32.xlu0 %v2337, 24
      %v3100 = vpop.permute.xlu0 %3099
      %3101 = vrot.lane.b32.xlu0 %v2338, 24
      %v3102 = vpop.permute.xlu0 %3101
      %3103 = vrot.lane.b32.xlu0 %v2340, 24
      %v3104 = vpop.permute.xlu0 %3103
      %3105 = vrot.lane.b32.xlu0 %v2341, 24
      %v3106 = vpop.permute.xlu0 %3105
      %3107 = vrot.lane.b32.xlu0 %v2343, 24
      %v3108 = vpop.permute.xlu0 %3107
      %3109 = vrot.lane.b32.xlu0 %v2344, 24
      %v3110 = vpop.permute.xlu0 %3109
      %3111 = vrot.lane.b32.xlu0 %v2346, 24
      %v3112 = vpop.permute.xlu0 %3111
      %3113 = vrot.lane.b32.xlu0 %v2347, 24
      %v3114 = vpop.permute.xlu0 %3113
      %3115 = vrot.lane.b32.xlu0 %v2349, 24
      %v3116 = vpop.permute.xlu0 %3115
      %3117 = vrot.lane.b32.xlu0 %v2350, 24
      %v3118 = vpop.permute.xlu0 %3117
      %3119 = vrot.lane.b32.xlu0 %v2352, 24
      %v3120 = vpop.permute.xlu0 %3119
      %3121 = vrot.lane.b32.xlu0 %v2353, 24
      %v3122 = vpop.permute.xlu0 %3121
      %v3156 = vrot.slane %v2352, 1
      %v3157 = vrot.slane %v2353, 1
      %v3158 = vsel %vm655, %v3156, %v3157
      %v3159 = vrot.slane %v2354, 1
      %v3160 = vsel %vm655, %v3157, %v3159
      %3161 = vrot.lane.b32.xlu0 %v2415, 28
      %v3162 = vpop.permute.xlu0 %3161
      %3163 = vrot.lane.b32.xlu0 %v2417, 28
      %v3164 = vpop.permute.xlu0 %3163
      %3165 = vrot.lane.b32.xlu0 %v2420, 28
      %v3166 = vpop.permute.xlu0 %3165
      %3167 = vrot.lane.b32.xlu0 %v2422, 28
      %v3168 = vpop.permute.xlu0 %3167
      %3169 = vrot.lane.b32.xlu0 %v2425, 28
      %v3170 = vpop.permute.xlu0 %3169
      %3171 = vrot.lane.b32.xlu0 %v2427, 28
      %v3172 = vpop.permute.xlu0 %3171
      %3173 = vrot.lane.b32.xlu0 %v2430, 28
      %v3174 = vpop.permute.xlu0 %3173
      %3175 = vrot.lane.b32.xlu0 %v2432, 28
      %v3176 = vpop.permute.xlu0 %3175
      %3177 = vrot.lane.b32.xlu0 %v2435, 28
      %v3178 = vpop.permute.xlu0 %3177
      %3179 = vrot.lane.b32.xlu0 %v2437, 28
      %v3180 = vpop.permute.xlu0 %3179
      %3181 = vrot.lane.b32.xlu0 %v2440, 28
      %v3182 = vpop.permute.xlu0 %3181
      %3183 = vrot.lane.b32.xlu0 %v2442, 28
      %v3184 = vpop.permute.xlu0 %3183
      %3185 = vrot.lane.b32.xlu0 %v2445, 28
      %v3186 = vpop.permute.xlu0 %3185
      %3187 = vrot.lane.b32.xlu0 %v2447, 28
      %v3188 = vpop.permute.xlu0 %3187
      %3189 = vrot.lane.b32.xlu0 %v2450, 28
      %v3190 = vpop.permute.xlu0 %3189
      %3191 = vrot.lane.b32.xlu0 %v2452, 28
      %v3192 = vpop.permute.xlu0 %3191
      %3193 = vrot.lane.b32.xlu0 %v2455, 28
      %v3194 = vpop.permute.xlu0 %3193
      %3195 = vrot.lane.b32.xlu0 %v2457, 28
      %v3196 = vpop.permute.xlu0 %3195
      %3197 = vrot.lane.b32.xlu0 %v2460, 28
      %v3198 = vpop.permute.xlu0 %3197
      %3199 = vrot.lane.b32.xlu0 %v2462, 28
      %v3200 = vpop.permute.xlu0 %3199
      %3201 = vrot.lane.b32.xlu0 %v2465, 28
      %v3202 = vpop.permute.xlu0 %3201
      %3203 = vrot.lane.b32.xlu0 %v2467, 28
      %v3204 = vpop.permute.xlu0 %3203
      %3205 = vrot.lane.b32.xlu0 %v2470, 28
      %v3206 = vpop.permute.xlu0 %3205
      %3207 = vrot.lane.b32.xlu0 %v2472, 28
      %v3208 = vpop.permute.xlu0 %3207
      %3209 = vrot.lane.b32.xlu0 %v2475, 28
      %v3210 = vpop.permute.xlu0 %3209
      %3211 = vrot.lane.b32.xlu0 %v2477, 28
      %v3212 = vpop.permute.xlu0 %3211
      %3213 = vrot.lane.b32.xlu0 %v2480, 28
      %v3214 = vpop.permute.xlu0 %3213
      %3215 = vrot.lane.b32.xlu0 %v2482, 28
      %v3216 = vpop.permute.xlu0 %3215
      %3217 = vrot.lane.b32.xlu0 %v2857, 28
      %v3218 = vpop.permute.xlu0 %3217
      %3219 = vrot.lane.b32.xlu0 %v2859, 28
      %v3220 = vpop.permute.xlu0 %3219
      %3221 = vrot.lane.b32.xlu0 %v3158, 28
      %v3222 = vpop.permute.xlu0 %3221
      %3223 = vrot.lane.b32.xlu0 %v3160, 28
      %v3224 = vpop.permute.xlu0 %3223
      %v3257 = vrot.slane %v2352, 2
      %v3258 = vrot.slane %v2353, 2
      %v3259 = vsel %vm2579, %v3257, %v3258
      %v3260 = vrot.slane %v2354, 2
      %v3261 = vsel %vm2579, %v3258, %v3260
      %3262 = vrot.lane.b32.xlu0 %v2592, 32
      %v3263 = vpop.permute.xlu0 %3262
      %3264 = vrot.lane.b32.xlu0 %v2594, 32
      %v3265 = vpop.permute.xlu0 %3264
      %3266 = vrot.lane.b32.xlu0 %v2597, 32
      %v3267 = vpop.permute.xlu0 %3266
      %3268 = vrot.lane.b32.xlu0 %v2599, 32
      %v3269 = vpop.permute.xlu0 %3268
      %3270 = vrot.lane.b32.xlu0 %v2602, 32
      %v3271 = vpop.permute.xlu0 %3270
      %3272 = vrot.lane.b32.xlu0 %v2604, 32
      %v3273 = vpop.permute.xlu0 %3272
      %3274 = vrot.lane.b32.xlu0 %v2607, 32
      %v3275 = vpop.permute.xlu0 %3274
      %3276 = vrot.lane.b32.xlu0 %v2609, 32
      %v3277 = vpop.permute.xlu0 %3276
      %3278 = vrot.lane.b32.xlu0 %v2612, 32
      %v3279 = vpop.permute.xlu0 %3278
      %3280 = vrot.lane.b32.xlu0 %v2614, 32
      %v3281 = vpop.permute.xlu0 %3280
      %3282 = vrot.lane.b32.xlu0 %v2617, 32
      %v3283 = vpop.permute.xlu0 %3282
      %3284 = vrot.lane.b32.xlu0 %v2619, 32
      %v3285 = vpop.permute.xlu0 %3284
      %3286 = vrot.lane.b32.xlu0 %v2622, 32
      %v3287 = vpop.permute.xlu0 %3286
      %3288 = vrot.lane.b32.xlu0 %v2624, 32
      %v3289 = vpop.permute.xlu0 %3288
      %3290 = vrot.lane.b32.xlu0 %v2627, 32
      %v3291 = vpop.permute.xlu0 %3290
      %3292 = vrot.lane.b32.xlu0 %v2629, 32
      %v3293 = vpop.permute.xlu0 %3292
      %3294 = vrot.lane.b32.xlu0 %v2632, 32
      %v3295 = vpop.permute.xlu0 %3294
      %3296 = vrot.lane.b32.xlu0 %v2634, 32
      %v3297 = vpop.permute.xlu0 %3296
      %3298 = vrot.lane.b32.xlu0 %v2637, 32
      %v3299 = vpop.permute.xlu0 %3298
      %3300 = vrot.lane.b32.xlu0 %v2639, 32
      %v3301 = vpop.permute.xlu0 %3300
      %3302 = vrot.lane.b32.xlu0 %v2642, 32
      %v3303 = vpop.permute.xlu0 %3302
      %3304 = vrot.lane.b32.xlu0 %v2644, 32
      %v3305 = vpop.permute.xlu0 %3304
      %3306 = vrot.lane.b32.xlu0 %v2647, 32
      %v3307 = vpop.permute.xlu0 %3306
      %3308 = vrot.lane.b32.xlu0 %v2649, 32
      %v3309 = vpop.permute.xlu0 %3308
      %3310 = vrot.lane.b32.xlu0 %v2652, 32
      %v3311 = vpop.permute.xlu0 %3310
      %3312 = vrot.lane.b32.xlu0 %v2654, 32
      %v3313 = vpop.permute.xlu0 %3312
      %3314 = vrot.lane.b32.xlu0 %v2657, 32
      %v3315 = vpop.permute.xlu0 %3314
      %3316 = vrot.lane.b32.xlu0 %v2659, 32
      %v3317 = vpop.permute.xlu0 %3316
      %3318 = vrot.lane.b32.xlu0 %v2958, 32
      %v3319 = vpop.permute.xlu0 %3318
      %3320 = vrot.lane.b32.xlu0 %v2960, 32
      %v3321 = vpop.permute.xlu0 %3320
      %3322 = vrot.lane.b32.xlu0 %v3259, 32
      %v3323 = vpop.permute.xlu0 %3322
      %3324 = vrot.lane.b32.xlu0 %v3261, 32
      %v3325 = vpop.permute.xlu0 %3324
      %v3358 = vsel %vm1346, %v2301, %v2484
      %v3359 = vsel %vm1346, %v2302, %v2486
      %v3360 = vsel %vm1346, %v2304, %v2488
      %v3361 = vsel %vm1346, %v2305, %v2490
      %v3362 = vsel %vm1346, %v2307, %v2492
      %v3363 = vsel %vm1346, %v2308, %v2494
      %v3364 = vsel %vm1346, %v2310, %v2496
      %v3365 = vsel %vm1346, %v2311, %v2498
      %v3366 = vsel %vm1346, %v2313, %v2500
      %v3367 = vsel %vm1346, %v2314, %v2502
      %v3368 = vsel %vm1346, %v2316, %v2504
      %v3369 = vsel %vm1346, %v2317, %v2506
      %v3370 = vsel %vm1346, %v2319, %v2508
      %v3371 = vsel %vm1346, %v2320, %v2510
      %v3372 = vsel %vm1346, %v2322, %v2512
      %v3373 = vsel %vm1346, %v2323, %v2514
      %v3374 = vsel %vm1346, %v2325, %v2516
      %v3375 = vsel %vm1346, %v2326, %v2518
      %v3376 = vsel %vm1346, %v2328, %v2520
      %v3377 = vsel %vm1346, %v2329, %v2522
      %v3378 = vsel %vm1346, %v2331, %v2524
      %v3379 = vsel %vm1346, %v2332, %v2526
      %v3380 = vsel %vm1346, %v2334, %v2528
      %v3381 = vsel %vm1346, %v2335, %v2530
      %v3382 = vsel %vm1346, %v2337, %v2532
      %v3383 = vsel %vm1346, %v2338, %v2534
      %v3384 = vsel %vm1346, %v2340, %v2536
      %v3385 = vsel %vm1346, %v2341, %v2538
      %v3386 = vsel %vm1346, %v2343, %v2540
      %v3387 = vsel %vm1346, %v2344, %v2542
      %v3388 = vsel %vm1346, %v2346, %v2544
      %v3389 = vsel %vm1346, %v2347, %v2546
      %v3390 = vsel %vm1524, %v3358, %v2661
      %v3391 = vsel %vm1524, %v3359, %v2663
      %v3392 = vsel %vm1524, %v3360, %v2665
      %v3393 = vsel %vm1524, %v3361, %v2667
      %v3394 = vsel %vm1524, %v3362, %v2669
      %v3395 = vsel %vm1524, %v3363, %v2671
      %v3396 = vsel %vm1524, %v3364, %v2673
      %v3397 = vsel %vm1524, %v3365, %v2675
      %v3398 = vsel %vm1524, %v3366, %v2677
      %v3399 = vsel %vm1524, %v3367, %v2679
      %v3400 = vsel %vm1524, %v3368, %v2681
      %v3401 = vsel %vm1524, %v3369, %v2683
      %v3402 = vsel %vm1524, %v3370, %v2685
      %v3403 = vsel %vm1524, %v3371, %v2687
      %v3404 = vsel %vm1524, %v3372, %v2689
      %v3405 = vsel %vm1524, %v3373, %v2691
      %v3406 = vsel %vm1524, %v3374, %v2693
      %v3407 = vsel %vm1524, %v3375, %v2695
      %v3408 = vsel %vm1524, %v3376, %v2697
      %v3409 = vsel %vm1524, %v3377, %v2699
      %v3410 = vsel %vm1524, %v3378, %v2701
      %v3411 = vsel %vm1524, %v3379, %v2703
      %v3412 = vsel %vm1524, %v3380, %v2705
      %v3413 = vsel %vm1524, %v3381, %v2707
      %v3414 = vsel %vm1524, %v3382, %v2709
      %v3415 = vsel %vm1524, %v3383, %v2711
      %v3416 = vsel %vm1524, %v3384, %v2713
      %v3417 = vsel %vm1524, %v3385, %v2715
      %v3418 = vsel %vm1524, %v3386, %v2717
      %v3419 = vsel %vm1524, %v3387, %v2719
      %v3420 = vsel %vm1524, %v3388, %v2721
      %v3421 = vsel %vm1524, %v3389, %v2723
      %vm3422 = vcmask 97280
      %v3423 = vsel %vm3422, %v3390, %v2759
      %v3424 = vsel %vm3422, %v3391, %v2761
      %v3425 = vsel %vm3422, %v3392, %v2763
      %v3426 = vsel %vm3422, %v3393, %v2765
      %v3427 = vsel %vm3422, %v3394, %v2767
      %v3428 = vsel %vm3422, %v3395, %v2769
      %v3429 = vsel %vm3422, %v3396, %v2771
      %v3430 = vsel %vm3422, %v3397, %v2773
      %v3431 = vsel %vm3422, %v3398, %v2775
      %v3432 = vsel %vm3422, %v3399, %v2777
      %v3433 = vsel %vm3422, %v3400, %v2779
      %v3434 = vsel %vm3422, %v3401, %v2781
      %v3435 = vsel %vm3422, %v3402, %v2783
      %v3436 = vsel %vm3422, %v3403, %v2785
      %v3437 = vsel %vm3422, %v3404, %v2787
      %v3438 = vsel %vm3422, %v3405, %v2789
      %v3439 = vsel %vm3422, %v3406, %v2791
      %v3440 = vsel %vm3422, %v3407, %v2793
      %v3441 = vsel %vm3422, %v3408, %v2795
      %v3442 = vsel %vm3422, %v3409, %v2797
      %v3443 = vsel %vm3422, %v3410, %v2799
      %v3444 = vsel %vm3422, %v3411, %v2801
      %v3445 = vsel %vm3422, %v3412, %v2803
      %v3446 = vsel %vm3422, %v3413, %v2805
      %v3447 = vsel %vm3422, %v3414, %v2807
      %v3448 = vsel %vm3422, %v3415, %v2809
      %v3449 = vsel %vm3422, %v3416, %v2811
      %v3450 = vsel %vm3422, %v3417, %v2813
      %v3451 = vsel %vm3422, %v3418, %v2815
      %v3452 = vsel %vm3422, %v3419, %v2817
      %v3453 = vsel %vm3422, %v3420, %v2819
      %v3454 = vsel %vm3422, %v3421, %v2821
      %vm3455 = vcmask 130048
      %v3456 = vsel %vm3455, %v3423, %v2861
      %v3457 = vsel %vm3455, %v3424, %v2863
      %v3458 = vsel %vm3455, %v3425, %v2865
      %v3459 = vsel %vm3455, %v3426, %v2867
      %v3460 = vsel %vm3455, %v3427, %v2869
      %v3461 = vsel %vm3455, %v3428, %v2871
      %v3462 = vsel %vm3455, %v3429, %v2873
      %v3463 = vsel %vm3455, %v3430, %v2875
      %v3464 = vsel %vm3455, %v3431, %v2877
      %v3465 = vsel %vm3455, %v3432, %v2879
      %v3466 = vsel %vm3455, %v3433, %v2881
      %v3467 = vsel %vm3455, %v3434, %v2883
      %v3468 = vsel %vm3455, %v3435, %v2885
      %v3469 = vsel %vm3455, %v3436, %v2887
      %v3470 = vsel %vm3455, %v3437, %v2889
      %v3471 = vsel %vm3455, %v3438, %v2891
      %v3472 = vsel %vm3455, %v3439, %v2893
      %v3473 = vsel %vm3455, %v3440, %v2895
      %v3474 = vsel %vm3455, %v3441, %v2897
      %v3475 = vsel %vm3455, %v3442, %v2899
      %v3476 = vsel %vm3455, %v3443, %v2901
      %v3477 = vsel %vm3455, %v3444, %v2903
      %v3478 = vsel %vm3455, %v3445, %v2905
      %v3479 = vsel %vm3455, %v3446, %v2907
      %v3480 = vsel %vm3455, %v3447, %v2909
      %v3481 = vsel %vm3455, %v3448, %v2911
      %v3482 = vsel %vm3455, %v3449, %v2913
      %v3483 = vsel %vm3455, %v3450, %v2915
      %v3484 = vsel %vm3455, %v3451, %v2917
      %v3485 = vsel %vm3455, %v3452, %v2919
      %v3486 = vsel %vm3455, %v3453, %v2921
      %v3487 = vsel %vm3455, %v3454, %v2923
      %vm3488 = vcmask 162816
      %v3489 = vsel %vm3488, %v3456, %v2962
      %v3490 = vsel %vm3488, %v3457, %v2964
      %v3491 = vsel %vm3488, %v3458, %v2966
      %v3492 = vsel %vm3488, %v3459, %v2968
      %v3493 = vsel %vm3488, %v3460, %v2970
      %v3494 = vsel %vm3488, %v3461, %v2972
      %v3495 = vsel %vm3488, %v3462, %v2974
      %v3496 = vsel %vm3488, %v3463, %v2976
      %v3497 = vsel %vm3488, %v3464, %v2978
      %v3498 = vsel %vm3488, %v3465, %v2980
      %v3499 = vsel %vm3488, %v3466, %v2982
      %v3500 = vsel %vm3488, %v3467, %v2984
      %v3501 = vsel %vm3488, %v3468, %v2986
      %v3502 = vsel %vm3488, %v3469, %v2988
      %v3503 = vsel %vm3488, %v3470, %v2990
      %v3504 = vsel %vm3488, %v3471, %v2992
      %v3505 = vsel %vm3488, %v3472, %v2994
      %v3506 = vsel %vm3488, %v3473, %v2996
      %v3507 = vsel %vm3488, %v3474, %v2998
      %v3508 = vsel %vm3488, %v3475, %v3000
      %v3509 = vsel %vm3488, %v3476, %v3002
      %v3510 = vsel %vm3488, %v3477, %v3004
      %v3511 = vsel %vm3488, %v3478, %v3006
      %v3512 = vsel %vm3488, %v3479, %v3008
      %v3513 = vsel %vm3488, %v3480, %v3010
      %v3514 = vsel %vm3488, %v3481, %v3012
      %v3515 = vsel %vm3488, %v3482, %v3014
      %v3516 = vsel %vm3488, %v3483, %v3016
      %v3517 = vsel %vm3488, %v3484, %v3018
      %v3518 = vsel %vm3488, %v3485, %v3020
      %v3519 = vsel %vm3488, %v3486, %v3022
      %v3520 = vsel %vm3488, %v3487, %v3024
      %vm3521 = vcmask 195584
      %v3522 = vsel %vm3521, %v3489, %v3060
      %v3523 = vsel %vm3521, %v3490, %v3062
      %v3524 = vsel %vm3521, %v3491, %v3064
      %v3525 = vsel %vm3521, %v3492, %v3066
      %v3526 = vsel %vm3521, %v3493, %v3068
      %v3527 = vsel %vm3521, %v3494, %v3070
      %v3528 = vsel %vm3521, %v3495, %v3072
      %v3529 = vsel %vm3521, %v3496, %v3074
      %v3530 = vsel %vm3521, %v3497, %v3076
      %v3531 = vsel %vm3521, %v3498, %v3078
      %v3532 = vsel %vm3521, %v3499, %v3080
      %v3533 = vsel %vm3521, %v3500, %v3082
      %v3534 = vsel %vm3521, %v3501, %v3084
      %v3535 = vsel %vm3521, %v3502, %v3086
      %v3536 = vsel %vm3521, %v3503, %v3088
      %v3537 = vsel %vm3521, %v3504, %v3090
      %v3538 = vsel %vm3521, %v3505, %v3092
      %v3539 = vsel %vm3521, %v3506, %v3094
      %v3540 = vsel %vm3521, %v3507, %v3096
      %v3541 = vsel %vm3521, %v3508, %v3098
      %v3542 = vsel %vm3521, %v3509, %v3100
      %v3543 = vsel %vm3521, %v3510, %v3102
      %v3544 = vsel %vm3521, %v3511, %v3104
      %v3545 = vsel %vm3521, %v3512, %v3106
      %v3546 = vsel %vm3521, %v3513, %v3108
      %v3547 = vsel %vm3521, %v3514, %v3110
      %v3548 = vsel %vm3521, %v3515, %v3112
      %v3549 = vsel %vm3521, %v3516, %v3114
      %v3550 = vsel %vm3521, %v3517, %v3116
      %v3551 = vsel %vm3521, %v3518, %v3118
      %v3552 = vsel %vm3521, %v3519, %v3120
      %v3553 = vsel %vm3521, %v3520, %v3122
      %vm3554 = vcmask 228352
      %v3555 = vsel %vm3554, %v3522, %v3162
      %v3556 = vsel %vm3554, %v3523, %v3164
      %v3557 = vsel %vm3554, %v3524, %v3166
      %v3558 = vsel %vm3554, %v3525, %v3168
      %v3559 = vsel %vm3554, %v3526, %v3170
      %v3560 = vsel %vm3554, %v3527, %v3172
      %v3561 = vsel %vm3554, %v3528, %v3174
      %v3562 = vsel %vm3554, %v3529, %v3176
      %v3563 = vsel %vm3554, %v3530, %v3178
      %v3564 = vsel %vm3554, %v3531, %v3180
      %v3565 = vsel %vm3554, %v3532, %v3182
      %v3566 = vsel %vm3554, %v3533, %v3184
      %v3567 = vsel %vm3554, %v3534, %v3186
      %v3568 = vsel %vm3554, %v3535, %v3188
      %v3569 = vsel %vm3554, %v3536, %v3190
      %v3570 = vsel %vm3554, %v3537, %v3192
      %v3571 = vsel %vm3554, %v3538, %v3194
      %v3572 = vsel %vm3554, %v3539, %v3196
      %v3573 = vsel %vm3554, %v3540, %v3198
      %v3574 = vsel %vm3554, %v3541, %v3200
      %v3575 = vsel %vm3554, %v3542, %v3202
      %v3576 = vsel %vm3554, %v3543, %v3204
      %v3577 = vsel %vm3554, %v3544, %v3206
      %v3578 = vsel %vm3554, %v3545, %v3208
      %v3579 = vsel %vm3554, %v3546, %v3210
      %v3580 = vsel %vm3554, %v3547, %v3212
      %v3581 = vsel %vm3554, %v3548, %v3214
      %v3582 = vsel %vm3554, %v3549, %v3216
      %v3583 = vsel %vm3554, %v3550, %v3218
      %v3584 = vsel %vm3554, %v3551, %v3220
      %v3585 = vsel %vm3554, %v3552, %v3222
      %v3586 = vsel %vm3554, %v3553, %v3224
      %vm3587 = vcmask 261120
      %v3588 = vsel %vm3587, %v3555, %v3263
      %v3589 = vsel %vm3587, %v3556, %v3265
      %v3590 = vsel %vm3587, %v3557, %v3267
      %v3591 = vsel %vm3587, %v3558, %v3269
      %v3592 = vsel %vm3587, %v3559, %v3271
      %v3593 = vsel %vm3587, %v3560, %v3273
      %v3594 = vsel %vm3587, %v3561, %v3275
      %v3595 = vsel %vm3587, %v3562, %v3277
      %v3596 = vsel %vm3587, %v3563, %v3279
      %v3597 = vsel %vm3587, %v3564, %v3281
      %v3598 = vsel %vm3587, %v3565, %v3283
      %v3599 = vsel %vm3587, %v3566, %v3285
      %v3600 = vsel %vm3587, %v3567, %v3287
      %v3601 = vsel %vm3587, %v3568, %v3289
      %v3602 = vsel %vm3587, %v3569, %v3291
      %v3603 = vsel %vm3587, %v3570, %v3293
      %v3604 = vsel %vm3587, %v3571, %v3295
      %v3605 = vsel %vm3587, %v3572, %v3297
      %v3606 = vsel %vm3587, %v3573, %v3299
      %v3607 = vsel %vm3587, %v3574, %v3301
      %v3608 = vsel %vm3587, %v3575, %v3303
      %v3609 = vsel %vm3587, %v3576, %v3305
      %v3610 = vsel %vm3587, %v3577, %v3307
      %v3611 = vsel %vm3587, %v3578, %v3309
      %v3612 = vsel %vm3587, %v3579, %v3311
      %v3613 = vsel %vm3587, %v3580, %v3313
      %v3614 = vsel %vm3587, %v3581, %v3315
      %v3615 = vsel %vm3587, %v3582, %v3317
      %v3616 = vsel %vm3587, %v3583, %v3319
      %v3617 = vsel %vm3587, %v3584, %v3321
      %v3618 = vsel %vm3587, %v3585, %v3323
      %v3619 = vsel %vm3587, %v3586, %v3325
      %v3620 = vld [vmem:[%s4] sm:$0xff]
      %v3621 = vld [vmem:[%s4 + $0x8] sm:$0xff]
      %v3622 = vld [vmem:[%s4 + $0x10] sm:$0xff]
      %v3623 = vld [vmem:[%s4 + $0x18] sm:$0xff]
      %v3624 = vld [vmem:[%s4 + $0x20] sm:$0xf]
      %vm3625 = vcmask 293888
      %v3627 = vsel %vm3625, %v3588, 0
      %v3630 = vsel %vm3625, %v3589, 0
      %v3633 = vsel %vm3625, %v3590, 0
      %v3636 = vsel %vm3625, %v3591, 0
      %v3639 = vsel %vm3625, %v3592, 0
      %v3642 = vsel %vm3625, %v3593, 0
      %v3645 = vsel %vm3625, %v3594, 0
      %v3648 = vsel %vm3625, %v3595, 0
      %v3651 = vsel %vm3625, %v3596, 0
      %v3654 = vsel %vm3625, %v3597, 0
      %v3657 = vsel %vm3625, %v3598, 0
      %v3660 = vsel %vm3625, %v3599, 0
      %v3663 = vsel %vm3625, %v3600, 0
      %v3666 = vsel %vm3625, %v3601, 0
      %v3669 = vsel %vm3625, %v3602, 0
      %v3672 = vsel %vm3625, %v3603, 0
      %v3675 = vsel %vm3625, %v3604, 0
      %v3678 = vsel %vm3625, %v3605, 0
      %v3681 = vsel %vm3625, %v3606, 0
      %v3684 = vsel %vm3625, %v3607, 0
      %v3687 = vsel %vm3625, %v3608, 0
      %v3690 = vsel %vm3625, %v3609, 0
      %v3693 = vsel %vm3625, %v3610, 0
      %v3696 = vsel %vm3625, %v3611, 0
      %v3699 = vsel %vm3625, %v3612, 0
      %v3702 = vsel %vm3625, %v3613, 0
      %v3705 = vsel %vm3625, %v3614, 0
      %v3708 = vsel %vm3625, %v3615, 0
      %v3711 = vsel %vm3625, %v3616, 0
      %v3714 = vsel %vm3625, %v3617, 0
      %v3717 = vsel %vm3625, %v3618, 0
      %v3720 = vsel %vm3625, %v3619, 0
      %vm3722 = vcmask 1043456
      %v3724 = vsel %vm3722, %v3624, 0
      %3726 = vmatprep.subr.mxu0 0.0
      %3727 = vmatpush1.msra.mxu0 %v3620
      %3728 = vmatprep.subr.mxu0 0.0
      %3729 = vmatpush1.msra.mxu0 %v3621
      %3730 = vmatprep.subr.mxu0 0.0
      %3731 = vmatpush1.msra.mxu0 %v3622
      %3732 = vmatprep.subr.mxu0 0.0
      %3733 = vmatpush1.msra.mxu0 %v3623
      %3734 = vmatprep.subr.mxu0 0.0
      %3735 = vmatpush1.msra.mxu0 %v3724
      %3736 = vmatprep.subr.mxu0 0.0
      %3737 = vmatpush1.msra.mxu0 0.0
      %3738 = vmatprep.subr.mxu0 0.0
      %3739 = vmatpush1.msra.mxu0 0.0
      %3740 = vmatprep.subr.mxu0 0.0
      %3741 = vmatpush1.msra.mxu0 0.0
      %3742 = vmatprep.subr.mxu0 0.0
      %3743 = vmatpush1.msra.mxu0 0.0
      %3744 = vmatprep.subr.mxu0 0.0
      %3745 = vmatpush1.msra.mxu0 0.0
      %3746 = vmatprep.subr.mxu0 0.0
      %3747 = vmatpush1.msra.mxu0 0.0
      %3748 = vmatprep.subr.mxu0 0.0
      %3749 = vmatpush1.msra.mxu0 0.0
      %3750 = vmatprep.subr.mxu0 0.0
      %3751 = vmatpush1.msra.mxu0 0.0
      %3752 = vmatprep.subr.mxu0 0.0
      %3753 = vmatpush1.msra.mxu0 0.0
      %3754 = vmatprep.subr.mxu0 0.0
      %3755 = vmatpush1.msra.mxu0 0.0
      %3756 = vmatprep.subr.mxu0 0.0
      %3757 = vmatpush1.msra.mxu0 0.0
      %3758 = vmatprep.subr.mxu0 0.0
      %3759 = vmatpush1.msra.mxu0 0.0
      %3760 = vmatprep.subr.mxu0 0.0
      %3761 = vmatpush1.msra.mxu0 0.0
      %3762 = vmatprep.subr.mxu0 0.0
      %3763 = vmatpush1.msra.mxu0 0.0
      %3764 = vmatprep.subr.mxu0 0.0
      %3765 = vmatpush1.msra.mxu0 0.0
      %3766 = vmatprep.subr.mxu0 0.0
      %3767 = vmatpush1.msra.mxu0 0.0
      %3768 = vmatprep.subr.mxu0 0.0
      %3769 = vmatpush1.msra.mxu0 0.0
      %3770 = vmatprep.subr.mxu0 0.0
      %3771 = vmatpush1.msra.mxu0 0.0
      %3772 = vmatprep.subr.mxu0 0.0
      %3773 = vmatpush1.msra.mxu0 0.0
      %3774 = vmatprep.subr.mxu0 0.0
      %3775 = vmatpush1.msra.mxu0 0.0
      %3776 = vmatprep.subr.mxu0 0.0
      %3777 = vmatpush1.msra.mxu0 0.0
      %3778 = vmatprep.subr.mxu0 0.0
      %3779 = vmatpush1.msra.mxu0 0.0
      %3780 = vmatprep.subr.mxu0 0.0
      %3781 = vmatpush1.msra.mxu0 0.0
      %3782 = vmatprep.subr.mxu0 0.0
      %3783 = vmatpush1.msra.mxu0 0.0
      %3784 = vmatprep.subr.mxu0 0.0
      %3785 = vmatpush1.msra.mxu0 0.0
      %3786 = vmatprep.subr.mxu0 0.0
      %3787 = vmatpush1.msra.mxu0 0.0
      %3788 = vmatprep.subr.mxu0 0.0
      %3789 = vmatpush1.msra.mxu0 0.0
      %3790 = vmatprep.mubr.f32.mxu0 0.0
      %3791 = vmatmul.mubr.f32.gmra.mrb[0].mxu0 %v3627
      %v3792 = vpop.f32.mrb[0].mxu0
      %v3793 = vadd.f32 0.0, %v3792
      %v3794 = vpop.f32.mrb[0].mxu0
      %3795 = vmatprep.mubr.f32.mxu0 0.0
      %3796 = vmatmul.mubr.f32.gmra.mrb[0].mxu0 %v3630
      %v3797 = vpop.f32.mrb[0].mxu0
      %v3798 = vadd.f32 0.0, %v3797
      %v3799 = vpop.f32.mrb[0].mxu0
      %3800 = vmatprep.mubr.f32.mxu0 0.0
      %3801 = vmatmul.mubr.f32.gmra.mrb[0].mxu0 %v3633
      %v3802 = vpop.f32.mrb[0].mxu0
      %v3803 = vadd.f32 0.0, %v3802
      %v3804 = vpop.f32.mrb[0].mxu0
      %3805 = vmatprep.mubr.f32.mxu0 0.0
      %3806 = vmatmul.mubr.f32.gmra.mrb[0].mxu0 %v3636
      %v3807 = vpop.f32.mrb[0].mxu0
      %v3808 = vadd.f32 0.0, %v3807
      %v3809 = vpop.f32.mrb[0].mxu0
      %3810 = vmatprep.mubr.f32.mxu0 0.0
      %3811 = vmatmul.mubr.f32.gmra.mrb[0].mxu0 %v3639
      %v3812 = vpop.f32.mrb[0].mxu0
      %v3813 = vadd.f32 0.0, %v3812
      %v3814 = vpop.f32.mrb[0].mxu0
      %3815 = vmatprep.mubr.f32.mxu0 0.0
      %3816 = vmatmul.mubr.f32.gmra.mrb[0].mxu0 %v3642
      %v3817 = vpop.f32.mrb[0].mxu0
      %v3818 = vadd.f32 0.0, %v3817
      %v3819 = vpop.f32.mrb[0].mxu0
      %3820 = vmatprep.mubr.f32.mxu0 0.0
      %3821 = vmatmul.mubr.f32.gmra.mrb[0].mxu0 %v3645
      %v3822 = vpop.f32.mrb[0].mxu0
      %v3823 = vadd.f32 0.0, %v3822
      %v3824 = vpop.f32.mrb[0].mxu0
      %3825 = vmatprep.mubr.f32.mxu0 0.0
      %3826 = vmatmul.mubr.f32.gmra.mrb[0].mxu0 %v3648
      %v3827 = vpop.f32.mrb[0].mxu0
      %v3828 = vadd.f32 0.0, %v3827
      %v3829 = vpop.f32.mrb[0].mxu0
      %3830 = vmatprep.mubr.f32.mxu0 0.0
      %3831 = vmatmul.mubr.f32.gmra.mrb[0].mxu0 %v3651
      %v3832 = vpop.f32.mrb[0].mxu0
      %v3833 = vadd.f32 0.0, %v3832
      %v3834 = vpop.f32.mrb[0].mxu0
      %3835 = vmatprep.mubr.f32.mxu0 0.0
      %3836 = vmatmul.mubr.f32.gmra.mrb[0].mxu0 %v3654
      %v3837 = vpop.f32.mrb[0].mxu0
      %v3838 = vadd.f32 0.0, %v3837
      %v3839 = vpop.f32.mrb[0].mxu0
      %3840 = vmatprep.mubr.f32.mxu0 0.0
      %3841 = vmatmul.mubr.f32.gmra.mrb[0].mxu0 %v3657
      %v3842 = vpop.f32.mrb[0].mxu0
      %v3843 = vadd.f32 0.0, %v3842
      %v3844 = vpop.f32.mrb[0].mxu0
      %3845 = vmatprep.mubr.f32.mxu0 0.0
      %3846 = vmatmul.mubr.f32.gmra.mrb[0].mxu0 %v3660
      %v3847 = vpop.f32.mrb[0].mxu0
      %v3848 = vadd.f32 0.0, %v3847
      %v3849 = vpop.f32.mrb[0].mxu0
      %3850 = vmatprep.mubr.f32.mxu0 0.0
      %3851 = vmatmul.mubr.f32.gmra.mrb[0].mxu0 %v3663
      %v3852 = vpop.f32.mrb[0].mxu0
      %v3853 = vadd.f32 0.0, %v3852
      %v3854 = vpop.f32.mrb[0].mxu0
      %3855 = vmatprep.mubr.f32.mxu0 0.0
      %3856 = vmatmul.mubr.f32.gmra.mrb[0].mxu0 %v3666
      %v3857 = vpop.f32.mrb[0].mxu0
      %v3858 = vadd.f32 0.0, %v3857
      %v3859 = vpop.f32.mrb[0].mxu0
      %3860 = vmatprep.mubr.f32.mxu0 0.0
      %3861 = vmatmul.mubr.f32.gmra.mrb[0].mxu0 %v3669
      %v3862 = vpop.f32.mrb[0].mxu0
      %v3863 = vadd.f32 0.0, %v3862
      %v3864 = vpop.f32.mrb[0].mxu0
      %3865 = vmatprep.mubr.f32.mxu0 0.0
      %3866 = vmatmul.mubr.f32.gmra.mrb[0].mxu0 %v3672
      %v3867 = vpop.f32.mrb[0].mxu0
      %v3868 = vadd.f32 0.0, %v3867
      %v3869 = vpop.f32.mrb[0].mxu0
      %3870 = vmatprep.mubr.f32.mxu0 0.0
      %3871 = vmatmul.mubr.f32.gmra.mrb[0].mxu0 %v3675
      %v3872 = vpop.f32.mrb[0].mxu0
      %v3873 = vadd.f32 0.0, %v3872
      %v3874 = vpop.f32.mrb[0].mxu0
      %3875 = vmatprep.mubr.f32.mxu0 0.0
      %3876 = vmatmul.mubr.f32.gmra.mrb[0].mxu0 %v3678
      %v3877 = vpop.f32.mrb[0].mxu0
      %v3878 = vadd.f32 0.0, %v3877
      %v3879 = vpop.f32.mrb[0].mxu0
      %3880 = vmatprep.mubr.f32.mxu0 0.0
      %3881 = vmatmul.mubr.f32.gmra.mrb[0].mxu0 %v3681
      %v3882 = vpop.f32.mrb[0].mxu0
      %v3883 = vadd.f32 0.0, %v3882
      %v3884 = vpop.f32.mrb[0].mxu0
      %3885 = vmatprep.mubr.f32.mxu0 0.0
      %3886 = vmatmul.mubr.f32.gmra.mrb[0].mxu0 %v3684
      %v3887 = vpop.f32.mrb[0].mxu0
      %v3888 = vadd.f32 0.0, %v3887
      %v3889 = vpop.f32.mrb[0].mxu0
      %3890 = vmatprep.mubr.f32.mxu0 0.0
      %3891 = vmatmul.mubr.f32.gmra.mrb[0].mxu0 %v3687
      %v3892 = vpop.f32.mrb[0].mxu0
      %v3893 = vadd.f32 0.0, %v3892
      %v3894 = vpop.f32.mrb[0].mxu0
      %3895 = vmatprep.mubr.f32.mxu0 0.0
      %3896 = vmatmul.mubr.f32.gmra.mrb[0].mxu0 %v3690
      %v3897 = vpop.f32.mrb[0].mxu0
      %v3898 = vadd.f32 0.0, %v3897
      %v3899 = vpop.f32.mrb[0].mxu0
      %3900 = vmatprep.mubr.f32.mxu0 0.0
      %3901 = vmatmul.mubr.f32.gmra.mrb[0].mxu0 %v3693
      %v3902 = vpop.f32.mrb[0].mxu0
      %v3903 = vadd.f32 0.0, %v3902
      %v3904 = vpop.f32.mrb[0].mxu0
      %3905 = vmatprep.mubr.f32.mxu0 0.0
      %3906 = vmatmul.mubr.f32.gmra.mrb[0].mxu0 %v3696
      %v3907 = vpop.f32.mrb[0].mxu0
      %v3908 = vadd.f32 0.0, %v3907
      %v3909 = vpop.f32.mrb[0].mxu0
      %3910 = vmatprep.mubr.f32.mxu0 0.0
      %3911 = vmatmul.mubr.f32.gmra.mrb[0].mxu0 %v3699
      %v3912 = vpop.f32.mrb[0].mxu0
      %v3913 = vadd.f32 0.0, %v3912
      %v3914 = vpop.f32.mrb[0].mxu0
      %3915 = vmatprep.mubr.f32.mxu0 0.0
      %3916 = vmatmul.mubr.f32.gmra.mrb[0].mxu0 %v3702
      %v3917 = vpop.f32.mrb[0].mxu0
      %v3918 = vadd.f32 0.0, %v3917
      %v3919 = vpop.f32.mrb[0].mxu0
      %3920 = vmatprep.mubr.f32.mxu0 0.0
      %3921 = vmatmul.mubr.f32.gmra.mrb[0].mxu0 %v3705
      %v3922 = vpop.f32.mrb[0].mxu0
      %v3923 = vadd.f32 0.0, %v3922
      %v3924 = vpop.f32.mrb[0].mxu0
      %3925 = vmatprep.mubr.f32.mxu0 0.0
      %3926 = vmatmul.mubr.f32.gmra.mrb[0].mxu0 %v3708
      %v3927 = vpop.f32.mrb[0].mxu0
      %v3928 = vadd.f32 0.0, %v3927
      %v3929 = vpop.f32.mrb[0].mxu0
      %3930 = vmatprep.mubr.f32.mxu0 0.0
      %3931 = vmatmul.mubr.f32.gmra.mrb[0].mxu0 %v3711
      %v3932 = vpop.f32.mrb[0].mxu0
      %v3933 = vadd.f32 0.0, %v3932
      %v3934 = vpop.f32.mrb[0].mxu0
      %3935 = vmatprep.mubr.f32.mxu0 0.0
      %3936 = vmatmul.mubr.f32.gmra.mrb[0].mxu0 %v3714
      %v3937 = vpop.f32.mrb[0].mxu0
      %v3938 = vadd.f32 0.0, %v3937
      %v3939 = vpop.f32.mrb[0].mxu0
      %3940 = vmatprep.mubr.f32.mxu0 0.0
      %3941 = vmatmul.mubr.f32.gmra.mrb[0].mxu0 %v3717
      %v3942 = vpop.f32.mrb[0].mxu0
      %v3943 = vadd.f32 0.0, %v3942
      %v3944 = vpop.f32.mrb[0].mxu0
      %3945 = vmatprep.mubr.f32.mxu0 0.0
      %3946 = vmatmul.mubr.f32.gmra.mrb[0].mxu0 %v3720
      %v3947 = vpop.f32.mrb[0].mxu0
      %v3948 = vadd.f32 0.0, %v3947
      %v3949 = vpop.f32.mrb[0].mxu0
      %3950 = vdwg.mxu0
      %v3951 = vld [vmem:[%s5] sm:$0x1]
      %v3953 = vlaneseq
      %v3954 = vshrl.u32 %v3953, 7
      %v3955 = vsub.s32 0, %v3954
      %v3956 = vrot.slane %v3951, %v3955
      %v3958 = vmul.f32 %v3793, %v3956
      %v3959 = vmul.f32 %v3798, %v3956
      %v3960 = vmul.f32 %v3803, %v3956
      %v3961 = vmul.f32 %v3808, %v3956
      %v3962 = vmul.f32 %v3813, %v3956
      %v3963 = vmul.f32 %v3818, %v3956
      %v3964 = vmul.f32 %v3823, %v3956
      %v3965 = vmul.f32 %v3828, %v3956
      %v3966 = vmul.f32 %v3833, %v3956
      %v3967 = vmul.f32 %v3838, %v3956
      %v3968 = vmul.f32 %v3843, %v3956
      %v3969 = vmul.f32 %v3848, %v3956
      %v3970 = vmul.f32 %v3853, %v3956
      %v3971 = vmul.f32 %v3858, %v3956
      %v3972 = vmul.f32 %v3863, %v3956
      %v3973 = vmul.f32 %v3868, %v3956
      %v3974 = vmul.f32 %v3873, %v3956
      %v3975 = vmul.f32 %v3878, %v3956
      %v3976 = vmul.f32 %v3883, %v3956
      %v3977 = vmul.f32 %v3888, %v3956
      %v3978 = vmul.f32 %v3893, %v3956
      %v3979 = vmul.f32 %v3898, %v3956
      %v3980 = vmul.f32 %v3903, %v3956
      %v3981 = vmul.f32 %v3908, %v3956
      %v3982 = vmul.f32 %v3913, %v3956
      %v3983 = vmul.f32 %v3918, %v3956
      %v3984 = vmul.f32 %v3923, %v3956
      %v3985 = vmul.f32 %v3928, %v3956
      %v3986 = vmul.f32 %v3933, %v3956
      %v3987 = vmul.f32 %v3938, %v3956
      %v3988 = vmul.f32 %v3943, %v3956
      %v3989 = vmul.f32 %v3948, %v3956
      %v3990 = vld [vmem:[%s6] sm:$0x1]
      %v3992 = vlaneseq
      %v3993 = vshrl.u32 %v3992, 7
      %v3994 = vsub.s32 0, %v3993
      %v3995 = vrot.slane %v3990, %v3994
      %v3997 = vadd.f32 %v3958, %v3995
      %v3998 = vadd.f32 %v3959, %v3995
      %v3999 = vadd.f32 %v3960, %v3995
      %v4000 = vadd.f32 %v3961, %v3995
      %v4001 = vadd.f32 %v3962, %v3995
      %v4002 = vadd.f32 %v3963, %v3995
      %v4003 = vadd.f32 %v3964, %v3995
      %v4004 = vadd.f32 %v3965, %v3995
      %v4005 = vadd.f32 %v3966, %v3995
      %v4006 = vadd.f32 %v3967, %v3995
      %v4007 = vadd.f32 %v3968, %v3995
      %v4008 = vadd.f32 %v3969, %v3995
      %v4009 = vadd.f32 %v3970, %v3995
      %v4010 = vadd.f32 %v3971, %v3995
      %v4011 = vadd.f32 %v3972, %v3995
      %v4012 = vadd.f32 %v3973, %v3995
      %v4013 = vadd.f32 %v3974, %v3995
      %v4014 = vadd.f32 %v3975, %v3995
      %v4015 = vadd.f32 %v3976, %v3995
      %v4016 = vadd.f32 %v3977, %v3995
      %v4017 = vadd.f32 %v3978, %v3995
      %v4018 = vadd.f32 %v3979, %v3995
      %v4019 = vadd.f32 %v3980, %v3995
      %v4020 = vadd.f32 %v3981, %v3995
      %v4021 = vadd.f32 %v3982, %v3995
      %v4022 = vadd.f32 %v3983, %v3995
      %v4023 = vadd.f32 %v3984, %v3995
      %v4024 = vadd.f32 %v3985, %v3995
      %v4025 = vadd.f32 %v3986, %v3995
      %v4026 = vadd.f32 %v3987, %v3995
      %v4027 = vadd.f32 %v3988, %v3995
      %v4028 = vadd.f32 %v3989, %v3995
      %v4029 = vmax.f32 %v3997, 0.0
      %v4030 = vmax.f32 %v3998, 0.0
      %v4031 = vmax.f32 %v3999, 0.0
      %v4032 = vmax.f32 %v4000, 0.0
      %v4033 = vmax.f32 %v4001, 0.0
      %v4034 = vmax.f32 %v4002, 0.0
      %v4035 = vmax.f32 %v4003, 0.0
      %v4036 = vmax.f32 %v4004, 0.0
      %v4037 = vmax.f32 %v4005, 0.0
      %v4038 = vmax.f32 %v4006, 0.0
      %v4039 = vmax.f32 %v4007, 0.0
      %v4040 = vmax.f32 %v4008, 0.0
      %v4041 = vmax.f32 %v4009, 0.0
      %v4042 = vmax.f32 %v4010, 0.0
      %v4043 = vmax.f32 %v4011, 0.0
      %v4044 = vmax.f32 %v4012, 0.0
      %v4045 = vmax.f32 %v4013, 0.0
      %v4046 = vmax.f32 %v4014, 0.0
      %v4047 = vmax.f32 %v4015, 0.0
      %v4048 = vmax.f32 %v4016, 0.0
      %v4049 = vmax.f32 %v4017, 0.0
      %v4050 = vmax.f32 %v4018, 0.0
      %v4051 = vmax.f32 %v4019, 0.0
      %v4052 = vmax.f32 %v4020, 0.0
      %v4053 = vmax.f32 %v4021, 0.0
      %v4054 = vmax.f32 %v4022, 0.0
      %v4055 = vmax.f32 %v4023, 0.0
      %v4056 = vmax.f32 %v4024, 0.0
      %v4057 = vmax.f32 %v4025, 0.0
      %v4058 = vmax.f32 %v4026, 0.0
      %v4059 = vmax.f32 %v4027, 0.0
      %v4060 = vmax.f32 %v4028, 0.0
      %4093 = vrot.lane.b32.xlu0 %v4029, 8
      %v4094 = vpop.permute.xlu0 %4093
      %4095 = vrot.lane.b32.xlu0 %v4030, 8
      %v4096 = vpop.permute.xlu0 %4095
      %4097 = vrot.lane.b32.xlu0 %v4031, 8
      %v4098 = vpop.permute.xlu0 %4097
      %4099 = vrot.lane.b32.xlu0 %v4032, 8
      %v4100 = vpop.permute.xlu0 %4099
      %4101 = vrot.lane.b32.xlu0 %v4033, 8
      %v4102 = vpop.permute.xlu0 %4101
      %4103 = vrot.lane.b32.xlu0 %v4034, 8
      %v4104 = vpop.permute.xlu0 %4103
      %4105 = vrot.lane.b32.xlu0 %v4035, 8
      %v4106 = vpop.permute.xlu0 %4105
      %4107 = vrot.lane.b32.xlu0 %v4036, 8
      %v4108 = vpop.permute.xlu0 %4107
      %4109 = vrot.lane.b32.xlu0 %v4037, 8
      %v4110 = vpop.permute.xlu0 %4109
      %4111 = vrot.lane.b32.xlu0 %v4038, 8
      %v4112 = vpop.permute.xlu0 %4111
      %4113 = vrot.lane.b32.xlu0 %v4039, 8
      %v4114 = vpop.permute.xlu0 %4113
      %4115 = vrot.lane.b32.xlu0 %v4040, 8
      %v4116 = vpop.permute.xlu0 %4115
      %4117 = vrot.lane.b32.xlu0 %v4041, 8
      %v4118 = vpop.permute.xlu0 %4117
      %4119 = vrot.lane.b32.xlu0 %v4042, 8
      %v4120 = vpop.permute.xlu0 %4119
      %4121 = vrot.lane.b32.xlu0 %v4043, 8
      %v4122 = vpop.permute.xlu0 %4121
      %4123 = vrot.lane.b32.xlu0 %v4044, 8
      %v4124 = vpop.permute.xlu0 %4123
      %4125 = vrot.lane.b32.xlu0 %v4045, 8
      %v4126 = vpop.permute.xlu0 %4125
      %4127 = vrot.lane.b32.xlu0 %v4046, 8
      %v4128 = vpop.permute.xlu0 %4127
      %4129 = vrot.lane.b32.xlu0 %v4047, 8
      %v4130 = vpop.permute.xlu0 %4129
      %4131 = vrot.lane.b32.xlu0 %v4048, 8
      %v4132 = vpop.permute.xlu0 %4131
      %4133 = vrot.lane.b32.xlu0 %v4049, 8
      %v4134 = vpop.permute.xlu0 %4133
      %4135 = vrot.lane.b32.xlu0 %v4050, 8
      %v4136 = vpop.permute.xlu0 %4135
      %4137 = vrot.lane.b32.xlu0 %v4051, 8
      %v4138 = vpop.permute.xlu0 %4137
      %4139 = vrot.lane.b32.xlu0 %v4052, 8
      %v4140 = vpop.permute.xlu0 %4139
      %4141 = vrot.lane.b32.xlu0 %v4053, 8
      %v4142 = vpop.permute.xlu0 %4141
      %4143 = vrot.lane.b32.xlu0 %v4054, 8
      %v4144 = vpop.permute.xlu0 %4143
      %4145 = vrot.lane.b32.xlu0 %v4055, 8
      %v4146 = vpop.permute.xlu0 %4145
      %4147 = vrot.lane.b32.xlu0 %v4056, 8
      %v4148 = vpop.permute.xlu0 %4147
      %4149 = vrot.lane.b32.xlu0 %v4057, 8
      %v4150 = vpop.permute.xlu0 %4149
      %4151 = vrot.lane.b32.xlu0 %v4058, 8
      %v4152 = vpop.permute.xlu0 %4151
      %4153 = vrot.lane.b32.xlu0 %v4059, 8
      %v4154 = vpop.permute.xlu0 %4153
      %4155 = vrot.lane.b32.xlu0 %v4060, 8
      %v4156 = vpop.permute.xlu0 %4155
      %vm4189 = vcmask 130112
      %4190 = vst.msk [vmem:[%s359] sm:$0xff] %vm4189, %v4094
      %4191 = vst.msk [vmem:[%s359 + $0x8] sm:$0xff] %vm4189, %v4096
      %4192 = vst.msk [vmem:[%s359 + $0x10] sm:$0xff] %vm4189, %v4098
      %4193 = vst.msk [vmem:[%s359 + $0x18] sm:$0xff] %vm4189, %v4100
      %4194 = vst.msk [vmem:[%s359 + $0x20] sm:$0xff] %vm4189, %v4102
      %4195 = vst.msk [vmem:[%s359 + $0x28] sm:$0xff] %vm4189, %v4104
      %4196 = vst.msk [vmem:[%s359 + $0x30] sm:$0xff] %vm4189, %v4106
      %4197 = vst.msk [vmem:[%s359 + $0x38] sm:$0xff] %vm4189, %v4108
      %4198 = vst.msk [vmem:[%s359 + $0x40] sm:$0xff] %vm4189, %v4110
      %4199 = vst.msk [vmem:[%s359 + $0x48] sm:$0xff] %vm4189, %v4112
      %4200 = vst.msk [vmem:[%s359 + $0x50] sm:$0xff] %vm4189, %v4114
      %4201 = vst.msk [vmem:[%s359 + $0x58] sm:$0xff] %vm4189, %v4116
      %4202 = vst.msk [vmem:[%s359 + $0x60] sm:$0xff] %vm4189, %v4118
      %4203 = vst.msk [vmem:[%s359 + $0x68] sm:$0xff] %vm4189, %v4120
      %4204 = vst.msk [vmem:[%s359 + $0x70] sm:$0xff] %vm4189, %v4122
      %4205 = vst.msk [vmem:[%s359 + $0x78] sm:$0xff] %vm4189, %v4124
      %4206 = vst.msk [vmem:[%s359 + $0x80] sm:$0xff] %vm4189, %v4126
      %4207 = vst.msk [vmem:[%s359 + $0x88] sm:$0xff] %vm4189, %v4128
      %4208 = vst.msk [vmem:[%s359 + $0x90] sm:$0xff] %vm4189, %v4130
      %4209 = vst.msk [vmem:[%s359 + $0x98] sm:$0xff] %vm4189, %v4132
      %4210 = vst.msk [vmem:[%s359 + $0xa0] sm:$0xff] %vm4189, %v4134
      %4211 = vst.msk [vmem:[%s359 + $0xa8] sm:$0xff] %vm4189, %v4136
      %4212 = vst.msk [vmem:[%s359 + $0xb0] sm:$0xff] %vm4189, %v4138
      %4213 = vst.msk [vmem:[%s359 + $0xb8] sm:$0xff] %vm4189, %v4140
      %4214 = vst.msk [vmem:[%s359 + $0xc0] sm:$0xff] %vm4189, %v4142
      %4215 = vst.msk [vmem:[%s359 + $0xc8] sm:$0xff] %vm4189, %v4144
      %4216 = vst.msk [vmem:[%s359 + $0xd0] sm:$0xff] %vm4189, %v4146
      %4217 = vst.msk [vmem:[%s359 + $0xd8] sm:$0xff] %vm4189, %v4148
      %4218 = vst.msk [vmem:[%s359 + $0xe0] sm:$0xff] %vm4189, %v4150
      %4219 = vst.msk [vmem:[%s359 + $0xe8] sm:$0xff] %vm4189, %v4152
      %4220 = vst.msk [vmem:[%s359 + $0xf0] sm:$0xff] %vm4189, %v4154
      %4221 = vst.msk [vmem:[%s359 + $0xf8] sm:$0xff] %vm4189, %v4156
      %4222 = vst.msk [vmem:[#allocation3] sm:$0xff] %vm1346, 0.0
      %4223 = vst.msk [vmem:[#allocation3 + $0x8] sm:$0xff] %vm1346, 0.0
      %vm4224 = vcmask 27648
      %4225 = vst.msk [vmem:[#allocation3 + $0x10] sm:$0xf] %vm4224, 0.0
      %4226 = vst.msk [vmem:[#allocation3 + $0x18] sm:$0xff] %vm1346, 0.0
      %4227 = vst.msk [vmem:[#allocation3 + $0x20] sm:$0xff] %vm1346, 0.0
      %4228 = vst.msk [vmem:[#allocation3 + $0x28] sm:$0xf] %vm4224, 0.0
      %4229 = vst.msk [vmem:[#allocation3 + $0x30] sm:$0xff] %vm1346, 0.0
      %4230 = vst.msk [vmem:[#allocation3 + $0x38] sm:$0xff] %vm1346, 0.0
      %4231 = vst.msk [vmem:[#allocation3 + $0x40] sm:$0xf] %vm4224, 0.0
      %4232 = vst.msk [vmem:[#allocation3 + $0x48] sm:$0xff] %vm1346, 0.0
      %4233 = vst.msk [vmem:[#allocation3 + $0x50] sm:$0xff] %vm1346, 0.0
      %4234 = vst.msk [vmem:[#allocation3 + $0x58] sm:$0xf] %vm4224, 0.0
      %4235 = vst.msk [vmem:[#allocation3 + $0x60] sm:$0xff] %vm1346, 0.0
      %4236 = vst.msk [vmem:[#allocation3 + $0x68] sm:$0xff] %vm1346, 0.0
      %4237 = vst.msk [vmem:[#allocation3 + $0x70] sm:$0xf] %vm4224, 0.0
      %4238 = vst.msk [vmem:[#allocation3 + $0x78] sm:$0xff] %vm1346, 0.0
      %4239 = vst.msk [vmem:[#allocation3 + $0x80] sm:$0xff] %vm1346, 0.0
      %4240 = vst.msk [vmem:[#allocation3 + $0x88] sm:$0xf] %vm4224, 0.0
      %4241 = vst.msk [vmem:[#allocation3 + $0x90] sm:$0xff] %vm1346, 0.0
      %4242 = vst.msk [vmem:[#allocation3 + $0x98] sm:$0xff] %vm1346, 0.0
      %4243 = vst.msk [vmem:[#allocation3 + $0xa0] sm:$0xf] %vm4224, 0.0
      %4244 = vst.msk [vmem:[#allocation3 + $0xa8] sm:$0xff] %vm1346, 0.0
      %4245 = vst.msk [vmem:[#allocation3 + $0xb0] sm:$0xff] %vm1346, 0.0
      %4246 = vst.msk [vmem:[#allocation3 + $0xb8] sm:$0xf] %vm4224, 0.0
      %4247 = vst.msk [vmem:[#allocation3 + $0xc0] sm:$0xff] %vm1346, 0.0
      %4248 = vst.msk [vmem:[#allocation3 + $0xc8] sm:$0xff] %vm1346, 0.0
      %4249 = vst.msk [vmem:[#allocation3 + $0xd0] sm:$0xf] %vm4224, 0.0
      %4250 = vst.msk [vmem:[#allocation3 + $0xd8] sm:$0xff] %vm1346, 0.0
      %4251 = vst.msk [vmem:[#allocation3 + $0xe0] sm:$0xff] %vm1346, 0.0
      %4252 = vst.msk [vmem:[#allocation3 + $0xe8] sm:$0xf] %vm4224, 0.0
      %4253 = vst.msk [vmem:[#allocation3 + $0xf0] sm:$0xff] %vm1346, 0.0
      %4254 = vst.msk [vmem:[#allocation3 + $0xf8] sm:$0xff] %vm1346, 0.0
      %4255 = vst.msk [vmem:[#allocation3 + $0x100] sm:$0xf] %vm4224, 0.0
      %4256 = vst.msk [vmem:[#allocation3 + $0x108] sm:$0xff] %vm1346, 0.0
      %4257 = vst.msk [vmem:[#allocation3 + $0x110] sm:$0xff] %vm1346, 0.0
      %4258 = vst.msk [vmem:[#allocation3 + $0x118] sm:$0xf] %vm4224, 0.0
      %4259 = vst.msk [vmem:[#allocation3 + $0x120] sm:$0xff] %vm1346, 0.0
      %4260 = vst.msk [vmem:[#allocation3 + $0x128] sm:$0xff] %vm1346, 0.0
      %4261 = vst.msk [vmem:[#allocation3 + $0x130] sm:$0xf] %vm4224, 0.0
      %4262 = vst.msk [vmem:[#allocation3 + $0x138] sm:$0xff] %vm1346, 0.0
      %4263 = vst.msk [vmem:[#allocation3 + $0x140] sm:$0xff] %vm1346, 0.0
      %4264 = vst.msk [vmem:[#allocation3 + $0x148] sm:$0xf] %vm4224, 0.0
      %4265 = vst.msk [vmem:[#allocation3 + $0x150] sm:$0xff] %vm1346, 0.0
      %4266 = vst.msk [vmem:[#allocation3 + $0x158] sm:$0xff] %vm1346, 0.0
      %4267 = vst.msk [vmem:[#allocation3 + $0x160] sm:$0xf] %vm4224, 0.0
      %4268 = vst.msk [vmem:[#allocation3 + $0x168] sm:$0xff] %vm1346, 0.0
      %4269 = vst.msk [vmem:[#allocation3 + $0x170] sm:$0xff] %vm1346, 0.0
      %4270 = vst.msk [vmem:[#allocation3 + $0x178] sm:$0xf] %vm4224, 0.0
      %4271 = vst.msk [vmem:[#allocation3 + $0x180] sm:$0xff] %vm1346, 0.0
      %4272 = vst.msk [vmem:[#allocation3 + $0x188] sm:$0xff] %vm1346, 0.0
      %4273 = vst.msk [vmem:[#allocation3 + $0x190] sm:$0xf] %vm4224, 0.0
      %4274 = vst.msk [vmem:[#allocation3 + $0x198] sm:$0xff] %vm1346, 0.0
      %4275 = vst.msk [vmem:[#allocation3 + $0x1a0] sm:$0xff] %vm1346, 0.0
      %4276 = vst.msk [vmem:[#allocation3 + $0x1a8] sm:$0xf] %vm4224, 0.0
      %4277 = vst.msk [vmem:[#allocation3 + $0x1b0] sm:$0xff] %vm1346, 0.0
      %4278 = vst.msk [vmem:[#allocation3 + $0x1b8] sm:$0xff] %vm1346, 0.0
      %4279 = vst.msk [vmem:[#allocation3 + $0x1c0] sm:$0xf] %vm4224, 0.0
      %4280 = vst.msk [vmem:[#allocation3 + $0x1c8] sm:$0xff] %vm1346, 0.0
      %4281 = vst.msk [vmem:[#allocation3 + $0x1d0] sm:$0xff] %vm1346, 0.0
      %4282 = vst.msk [vmem:[#allocation3 + $0x1d8] sm:$0xf] %vm4224, 0.0
      %4283 = vrot.lane.b32.xlu0 %v1892, 116
      %v4284 = vpop.permute.xlu0 %4283
      %4285 = vrot.lane.b32.xlu0 %v1893, 116
      %v4286 = vpop.permute.xlu0 %4285
      %4287 = vrot.lane.b32.xlu0 %v1894, 116
      %v4288 = vpop.permute.xlu0 %4287
      %4289 = vrot.lane.b32.xlu0 %v1895, 116
      %v4290 = vpop.permute.xlu0 %4289
      %4291 = vrot.lane.b32.xlu0 %v1896, 116
      %v4292 = vpop.permute.xlu0 %4291
      %4293 = vrot.lane.b32.xlu0 %v1897, 116
      %v4294 = vpop.permute.xlu0 %4293
      %4295 = vrot.lane.b32.xlu0 %v1898, 116
      %v4296 = vpop.permute.xlu0 %4295
      %4297 = vrot.lane.b32.xlu0 %v1899, 116
      %v4298 = vpop.permute.xlu0 %4297
      %4299 = vrot.lane.b32.xlu0 %v1900, 116
      %v4300 = vpop.permute.xlu0 %4299
      %4301 = vrot.lane.b32.xlu0 %v1901, 116
      %v4302 = vpop.permute.xlu0 %4301
      %4303 = vrot.lane.b32.xlu0 %v1902, 116
      %v4304 = vpop.permute.xlu0 %4303
      %4305 = vrot.lane.b32.xlu0 %v1903, 116
      %v4306 = vpop.permute.xlu0 %4305
      %4307 = vrot.lane.b32.xlu0 %v1904, 116
      %v4308 = vpop.permute.xlu0 %4307
      %4309 = vrot.lane.b32.xlu0 %v1905, 116
      %v4310 = vpop.permute.xlu0 %4309
      %4311 = vrot.lane.b32.xlu0 %v1906, 116
      %v4312 = vpop.permute.xlu0 %4311
      %4313 = vrot.lane.b32.xlu0 %v1907, 116
      %v4314 = vpop.permute.xlu0 %4313
      %4315 = vrot.lane.b32.xlu0 %v1908, 116
      %v4316 = vpop.permute.xlu0 %4315
      %4317 = vrot.lane.b32.xlu0 %v1909, 116
      %v4318 = vpop.permute.xlu0 %4317
      %4319 = vrot.lane.b32.xlu0 %v1910, 116
      %v4320 = vpop.permute.xlu0 %4319
      %4321 = vrot.lane.b32.xlu0 %v1911, 116
      %v4322 = vpop.permute.xlu0 %4321
      %4323 = vrot.lane.b32.xlu0 %v1912, 116
      %v4324 = vpop.permute.xlu0 %4323
      %4325 = vrot.lane.b32.xlu0 %v1913, 116
      %v4326 = vpop.permute.xlu0 %4325
      %4327 = vrot.lane.b32.xlu0 %v1914, 116
      %v4328 = vpop.permute.xlu0 %4327
      %4329 = vrot.lane.b32.xlu0 %v1915, 116
      %v4330 = vpop.permute.xlu0 %4329
      %4331 = vrot.lane.b32.xlu0 %v1916, 116
      %v4332 = vpop.permute.xlu0 %4331
      %4333 = vrot.lane.b32.xlu0 %v1917, 116
      %v4334 = vpop.permute.xlu0 %4333
      %4335 = vrot.lane.b32.xlu0 %v1918, 116
      %v4336 = vpop.permute.xlu0 %4335
      %4337 = vrot.lane.b32.xlu0 %v1919, 116
      %v4338 = vpop.permute.xlu0 %4337
      %4339 = vrot.lane.b32.xlu0 %v1920, 116
      %v4340 = vpop.permute.xlu0 %4339
      %4341 = vrot.lane.b32.xlu0 %v1921, 116
      %v4342 = vpop.permute.xlu0 %4341
      %4343 = vrot.lane.b32.xlu0 %v1922, 116
      %v4344 = vpop.permute.xlu0 %4343
      %4345 = vrot.lane.b32.xlu0 %v1923, 116
      %v4346 = vpop.permute.xlu0 %4345
      %s4379 = scalar_lea.vmem [#allocation3], 48
      %4380 = vst.msk [vmem:[%s4379 + $0x2] sm:$0xff] %vm1346, %v4284
      %4381 = vst.msk [vmem:[%s4379 + $0xa] sm:$0xff] %vm1346, %v4286
      %4382 = vst.msk [vmem:[%s4379 + $0x1a] sm:$0xff] %vm1346, %v4288
      %4383 = vst.msk [vmem:[%s4379 + $0x22] sm:$0xff] %vm1346, %v4290
      %4384 = vst.msk [vmem:[%s4379 + $0x32] sm:$0xff] %vm1346, %v4292
      %4385 = vst.msk [vmem:[%s4379 + $0x3a] sm:$0xff] %vm1346, %v4294
      %4386 = vst.msk [vmem:[%s4379 + $0x4a] sm:$0xff] %vm1346, %v4296
      %4387 = vst.msk [vmem:[%s4379 + $0x52] sm:$0xff] %vm1346, %v4298
      %4388 = vst.msk [vmem:[%s4379 + $0x62] sm:$0xff] %vm1346, %v4300
      %4389 = vst.msk [vmem:[%s4379 + $0x6a] sm:$0xff] %vm1346, %v4302
      %4390 = vst.msk [vmem:[%s4379 + $0x7a] sm:$0xff] %vm1346, %v4304
      %4391 = vst.msk [vmem:[%s4379 + $0x82] sm:$0xff] %vm1346, %v4306
      %4392 = vst.msk [vmem:[%s4379 + $0x92] sm:$0xff] %vm1346, %v4308
      %4393 = vst.msk [vmem:[%s4379 + $0x9a] sm:$0xff] %vm1346, %v4310
      %4394 = vst.msk [vmem:[%s4379 + $0xaa] sm:$0xff] %vm1346, %v4312
      %4395 = vst.msk [vmem:[%s4379 + $0xb2] sm:$0xff] %vm1346, %v4314
      %4396 = vst.msk [vmem:[%s4379 + $0xc2] sm:$0xff] %vm1346, %v4316
      %4397 = vst.msk [vmem:[%s4379 + $0xca] sm:$0xff] %vm1346, %v4318
      %4398 = vst.msk [vmem:[%s4379 + $0xda] sm:$0xff] %vm1346, %v4320
      %4399 = vst.msk [vmem:[%s4379 + $0xe2] sm:$0xff] %vm1346, %v4322
      %4400 = vst.msk [vmem:[%s4379 + $0xf2] sm:$0xff] %vm1346, %v4324
      %4401 = vst.msk [vmem:[%s4379 + $0xfa] sm:$0xff] %vm1346, %v4326
      %4402 = vst.msk [vmem:[%s4379 + $0x10a] sm:$0xff] %vm1346, %v4328
      %4403 = vst.msk [vmem:[%s4379 + $0x112] sm:$0xff] %vm1346, %v4330
      %4404 = vst.msk [vmem:[%s4379 + $0x122] sm:$0xff] %vm1346, %v4332
      %4405 = vst.msk [vmem:[%s4379 + $0x12a] sm:$0xff] %vm1346, %v4334
      %4406 = vst.msk [vmem:[%s4379 + $0x13a] sm:$0xff] %vm1346, %v4336
      %4407 = vst.msk [vmem:[%s4379 + $0x142] sm:$0xff] %vm1346, %v4338
      %4408 = vst.msk [vmem:[%s4379 + $0x152] sm:$0xff] %vm1346, %v4340
      %4409 = vst.msk [vmem:[%s4379 + $0x15a] sm:$0xff] %vm1346, %v4342
      %4410 = vst.msk [vmem:[%s4379 + $0x16a] sm:$0xff] %vm1346, %v4344
      %4411 = vst.msk [vmem:[%s4379 + $0x172] sm:$0xff] %vm1346, %v4346
      %v4412 = vld [vmem:[#allocation3] sm:$0xff]
      %v4413 = vld [vmem:[#allocation3 + $0x8] sm:$0xff]
      %v4414 = vld [vmem:[#allocation3 + $0x10] sm:$0xf]
      %v4415 = vld [vmem:[#allocation3 + $0x18] sm:$0xff]
      %v4416 = vld [vmem:[#allocation3 + $0x20] sm:$0xff]
      %v4417 = vld [vmem:[#allocation3 + $0x28] sm:$0xf]
      %v4418 = vld [vmem:[#allocation3 + $0x30] sm:$0xff]
      %v4419 = vld [vmem:[#allocation3 + $0x38] sm:$0xff]
      %v4420 = vld [vmem:[#allocation3 + $0x40] sm:$0xf]
      %v4421 = vld [vmem:[#allocation3 + $0x48] sm:$0xff]
      %v4422 = vld [vmem:[#allocation3 + $0x50] sm:$0xff]
      %v4423 = vld [vmem:[#allocation3 + $0x58] sm:$0xf]
      %v4424 = vld [vmem:[#allocation3 + $0x60] sm:$0xff]
      %v4425 = vld [vmem:[#allocation3 + $0x68] sm:$0xff]
      %v4426 = vld [vmem:[#allocation3 + $0x70] sm:$0xf]
      %v4427 = vld [vmem:[#allocation3 + $0x78] sm:$0xff]
      %v4428 = vld [vmem:[#allocation3 + $0x80] sm:$0xff]
      %v4429 = vld [vmem:[#allocation3 + $0x88] sm:$0xf]
      %v4430 = vld [vmem:[#allocation3 + $0x90] sm:$0xff]
      %v4431 = vld [vmem:[#allocation3 + $0x98] sm:$0xff]
      %v4432 = vld [vmem:[#allocation3 + $0xa0] sm:$0xf]
      %v4433 = vld [vmem:[#allocation3 + $0xa8] sm:$0xff]
      %v4434 = vld [vmem:[#allocation3 + $0xb0] sm:$0xff]
      %v4435 = vld [vmem:[#allocation3 + $0xb8] sm:$0xf]
      %v4436 = vld [vmem:[#allocation3 + $0xc0] sm:$0xff]
      %v4437 = vld [vmem:[#allocation3 + $0xc8] sm:$0xff]
      %v4438 = vld [vmem:[#allocation3 + $0xd0] sm:$0xf]
      %v4439 = vld [vmem:[#allocation3 + $0xd8] sm:$0xff]
      %v4440 = vld [vmem:[#allocation3 + $0xe0] sm:$0xff]
      %v4441 = vld [vmem:[#allocation3 + $0xe8] sm:$0xf]
      %v4442 = vld [vmem:[#allocation3 + $0xf0] sm:$0xff]
      %v4443 = vld [vmem:[#allocation3 + $0xf8] sm:$0xff]
      %v4444 = vld [vmem:[#allocation3 + $0x100] sm:$0xf]
      %v4445 = vld [vmem:[#allocation3 + $0x108] sm:$0xff]
      %v4446 = vld [vmem:[#allocation3 + $0x110] sm:$0xff]
      %v4447 = vld [vmem:[#allocation3 + $0x118] sm:$0xf]
      %v4448 = vld [vmem:[#allocation3 + $0x120] sm:$0xff]
      %v4449 = vld [vmem:[#allocation3 + $0x128] sm:$0xff]
      %v4450 = vld [vmem:[#allocation3 + $0x130] sm:$0xf]
      %v4451 = vld [vmem:[#allocation3 + $0x138] sm:$0xff]
      %v4452 = vld [vmem:[#allocation3 + $0x140] sm:$0xff]
      %v4453 = vld [vmem:[#allocation3 + $0x148] sm:$0xf]
      %v4454 = vld [vmem:[#allocation3 + $0x150] sm:$0xff]
      %v4455 = vld [vmem:[#allocation3 + $0x158] sm:$0xff]
      %v4456 = vld [vmem:[#allocation3 + $0x160] sm:$0xf]
      %v4457 = vld [vmem:[#allocation3 + $0x168] sm:$0xff]
      %v4458 = vld [vmem:[#allocation3 + $0x170] sm:$0xff]
      %v4459 = vld [vmem:[#allocation3 + $0x178] sm:$0xf]
      %v4460 = vld [vmem:[#allocation3 + $0x180] sm:$0xff]
      %v4461 = vld [vmem:[#allocation3 + $0x188] sm:$0xff]
      %v4462 = vld [vmem:[#allocation3 + $0x190] sm:$0xf]
      %v4463 = vld [vmem:[#allocation3 + $0x198] sm:$0xff]
      %v4464 = vld [vmem:[#allocation3 + $0x1a0] sm:$0xff]
      %v4465 = vld [vmem:[#allocation3 + $0x1a8] sm:$0xf]
      %v4466 = vld [vmem:[#allocation3 + $0x1b0] sm:$0xff]
      %v4467 = vld [vmem:[#allocation3 + $0x1b8] sm:$0xff]
      %v4468 = vld [vmem:[#allocation3 + $0x1c0] sm:$0xf]
      %v4469 = vld [vmem:[#allocation3 + $0x1c8] sm:$0xff]
      %v4470 = vld [vmem:[#allocation3 + $0x1d0] sm:$0xff]
      %v4471 = vld [vmem:[#allocation3 + $0x1d8] sm:$0xf]
      %v4520 = vrot.slane %v4412, 1
      %v4521 = vrot.slane %v4413, 1
      %v4522 = vsel %vm655, %v4520, %v4521
      %v4523 = vrot.slane %v4414, 1
      %v4524 = vsel %vm655, %v4521, %v4523
      %v4525 = vrot.slane %v4415, 1
      %v4526 = vrot.slane %v4416, 1
      %v4527 = vsel %vm655, %v4525, %v4526
      %v4528 = vrot.slane %v4417, 1
      %v4529 = vsel %vm655, %v4526, %v4528
      %v4530 = vrot.slane %v4418, 1
      %v4531 = vrot.slane %v4419, 1
      %v4532 = vsel %vm655, %v4530, %v4531
      %v4533 = vrot.slane %v4420, 1
      %v4534 = vsel %vm655, %v4531, %v4533
      %v4535 = vrot.slane %v4421, 1
      %v4536 = vrot.slane %v4422, 1
      %v4537 = vsel %vm655, %v4535, %v4536
      %v4538 = vrot.slane %v4423, 1
      %v4539 = vsel %vm655, %v4536, %v4538
      %v4540 = vrot.slane %v4424, 1
      %v4541 = vrot.slane %v4425, 1
      %v4542 = vsel %vm655, %v4540, %v4541
      %v4543 = vrot.slane %v4426, 1
      %v4544 = vsel %vm655, %v4541, %v4543
      %v4545 = vrot.slane %v4427, 1
      %v4546 = vrot.slane %v4428, 1
      %v4547 = vsel %vm655, %v4545, %v4546
      %v4548 = vrot.slane %v4429, 1
      %v4549 = vsel %vm655, %v4546, %v4548
      %v4550 = vrot.slane %v4430, 1
      %v4551 = vrot.slane %v4431, 1
      %v4552 = vsel %vm655, %v4550, %v4551
      %v4553 = vrot.slane %v4432, 1
      %v4554 = vsel %vm655, %v4551, %v4553
      %v4555 = vrot.slane %v4433, 1
      %v4556 = vrot.slane %v4434, 1
      %v4557 = vsel %vm655, %v4555, %v4556
      %v4558 = vrot.slane %v4435, 1
      %v4559 = vsel %vm655, %v4556, %v4558
      %v4560 = vrot.slane %v4436, 1
      %v4561 = vrot.slane %v4437, 1
      %v4562 = vsel %vm655, %v4560, %v4561
      %v4563 = vrot.slane %v4438, 1
      %v4564 = vsel %vm655, %v4561, %v4563
      %v4565 = vrot.slane %v4439, 1
      %v4566 = vrot.slane %v4440, 1
      %v4567 = vsel %vm655, %v4565, %v4566
      %v4568 = vrot.slane %v4441, 1
      %v4569 = vsel %vm655, %v4566, %v4568
      %v4570 = vrot.slane %v4442, 1
      %v4571 = vrot.slane %v4443, 1
      %v4572 = vsel %vm655, %v4570, %v4571
      %v4573 = vrot.slane %v4444, 1
      %v4574 = vsel %vm655, %v4571, %v4573
      %v4575 = vrot.slane %v4445, 1
      %v4576 = vrot.slane %v4446, 1
      %v4577 = vsel %vm655, %v4575, %v4576
      %v4578 = vrot.slane %v4447, 1
      %v4579 = vsel %vm655, %v4576, %v4578
      %v4580 = vrot.slane %v4448, 1
      %v4581 = vrot.slane %v4449, 1
      %v4582 = vsel %vm655, %v4580, %v4581
      %v4583 = vrot.slane %v4450, 1
      %v4584 = vsel %vm655, %v4581, %v4583
      %v4585 = vrot.slane %v4451, 1
      %v4586 = vrot.slane %v4452, 1
      %v4587 = vsel %vm655, %v4585, %v4586
      %v4588 = vrot.slane %v4453, 1
      %v4589 = vsel %vm655, %v4586, %v4588
      %v4590 = vrot.slane %v4454, 1
      %v4591 = vrot.slane %v4455, 1
      %v4592 = vsel %vm655, %v4590, %v4591
      %v4593 = vrot.slane %v4456, 1
      %v4594 = vsel %vm655, %v4591, %v4593
      %v4595 = vrot.slane %v4457, 1
      %v4596 = vrot.slane %v4458, 1
      %v4597 = vsel %vm655, %v4595, %v4596
      %v4598 = vrot.slane %v4459, 1
      %v4599 = vsel %vm655, %v4596, %v4598
      %4600 = vrot.lane.b32.xlu0 %v4522, 4
      %v4601 = vpop.permute.xlu0 %4600
      %4602 = vrot.lane.b32.xlu0 %v4524, 4
      %v4603 = vpop.permute.xlu0 %4602
      %4604 = vrot.lane.b32.xlu0 %v4527, 4
      %v4605 = vpop.permute.xlu0 %4604
      %4606 = vrot.lane.b32.xlu0 %v4529, 4
      %v4607 = vpop.permute.xlu0 %4606
      %4608 = vrot.lane.b32.xlu0 %v4532, 4
      %v4609 = vpop.permute.xlu0 %4608
      %4610 = vrot.lane.b32.xlu0 %v4534, 4
      %v4611 = vpop.permute.xlu0 %4610
      %4612 = vrot.lane.b32.xlu0 %v4537, 4
      %v4613 = vpop.permute.xlu0 %4612
      %4614 = vrot.lane.b32.xlu0 %v4539, 4
      %v4615 = vpop.permute.xlu0 %4614
      %4616 = vrot.lane.b32.xlu0 %v4542, 4
      %v4617 = vpop.permute.xlu0 %4616
      %4618 = vrot.lane.b32.xlu0 %v4544, 4
      %v4619 = vpop.permute.xlu0 %4618
      %4620 = vrot.lane.b32.xlu0 %v4547, 4
      %v4621 = vpop.permute.xlu0 %4620
      %4622 = vrot.lane.b32.xlu0 %v4549, 4
      %v4623 = vpop.permute.xlu0 %4622
      %4624 = vrot.lane.b32.xlu0 %v4552, 4
      %v4625 = vpop.permute.xlu0 %4624
      %4626 = vrot.lane.b32.xlu0 %v4554, 4
      %v4627 = vpop.permute.xlu0 %4626
      %4628 = vrot.lane.b32.xlu0 %v4557, 4
      %v4629 = vpop.permute.xlu0 %4628
      %4630 = vrot.lane.b32.xlu0 %v4559, 4
      %v4631 = vpop.permute.xlu0 %4630
      %4632 = vrot.lane.b32.xlu0 %v4562, 4
      %v4633 = vpop.permute.xlu0 %4632
      %4634 = vrot.lane.b32.xlu0 %v4564, 4
      %v4635 = vpop.permute.xlu0 %4634
      %4636 = vrot.lane.b32.xlu0 %v4567, 4
      %v4637 = vpop.permute.xlu0 %4636
      %4638 = vrot.lane.b32.xlu0 %v4569, 4
      %v4639 = vpop.permute.xlu0 %4638
      %4640 = vrot.lane.b32.xlu0 %v4572, 4
      %v4641 = vpop.permute.xlu0 %4640
      %4642 = vrot.lane.b32.xlu0 %v4574, 4
      %v4643 = vpop.permute.xlu0 %4642
      %4644 = vrot.lane.b32.xlu0 %v4577, 4
      %v4645 = vpop.permute.xlu0 %4644
      %4646 = vrot.lane.b32.xlu0 %v4579, 4
      %v4647 = vpop.permute.xlu0 %4646
      %4648 = vrot.lane.b32.xlu0 %v4582, 4
      %v4649 = vpop.permute.xlu0 %4648
      %4650 = vrot.lane.b32.xlu0 %v4584, 4
      %v4651 = vpop.permute.xlu0 %4650
      %4652 = vrot.lane.b32.xlu0 %v4587, 4
      %v4653 = vpop.permute.xlu0 %4652
      %4654 = vrot.lane.b32.xlu0 %v4589, 4
      %v4655 = vpop.permute.xlu0 %4654
      %4656 = vrot.lane.b32.xlu0 %v4592, 4
      %v4657 = vpop.permute.xlu0 %4656
      %4658 = vrot.lane.b32.xlu0 %v4594, 4
      %v4659 = vpop.permute.xlu0 %4658
      %4660 = vrot.lane.b32.xlu0 %v4597, 4
      %v4661 = vpop.permute.xlu0 %4660
      %4662 = vrot.lane.b32.xlu0 %v4599, 4
      %v4663 = vpop.permute.xlu0 %4662
      %v4696 = vrot.slane %v4412, 2
      %v4697 = vrot.slane %v4413, 2
      %v4698 = vsel %vm2579, %v4696, %v4697
      %v4699 = vrot.slane %v4414, 2
      %v4700 = vsel %vm2579, %v4697, %v4699
      %v4701 = vrot.slane %v4415, 2
      %v4702 = vrot.slane %v4416, 2
      %v4703 = vsel %vm2579, %v4701, %v4702
      %v4704 = vrot.slane %v4417, 2
      %v4705 = vsel %vm2579, %v4702, %v4704
      %v4706 = vrot.slane %v4418, 2
      %v4707 = vrot.slane %v4419, 2
      %v4708 = vsel %vm2579, %v4706, %v4707
      %v4709 = vrot.slane %v4420, 2
      %v4710 = vsel %vm2579, %v4707, %v4709
      %v4711 = vrot.slane %v4421, 2
      %v4712 = vrot.slane %v4422, 2
      %v4713 = vsel %vm2579, %v4711, %v4712
      %v4714 = vrot.slane %v4423, 2
      %v4715 = vsel %vm2579, %v4712, %v4714
      %v4716 = vrot.slane %v4424, 2
      %v4717 = vrot.slane %v4425, 2
      %v4718 = vsel %vm2579, %v4716, %v4717
      %v4719 = vrot.slane %v4426, 2
      %v4720 = vsel %vm2579, %v4717, %v4719
      %v4721 = vrot.slane %v4427, 2
      %v4722 = vrot.slane %v4428, 2
      %v4723 = vsel %vm2579, %v4721, %v4722
      %v4724 = vrot.slane %v4429, 2
      %v4725 = vsel %vm2579, %v4722, %v4724
      %v4726 = vrot.slane %v4430, 2
      %v4727 = vrot.slane %v4431, 2
      %v4728 = vsel %vm2579, %v4726, %v4727
      %v4729 = vrot.slane %v4432, 2
      %v4730 = vsel %vm2579, %v4727, %v4729
      %v4731 = vrot.slane %v4433, 2
      %v4732 = vrot.slane %v4434, 2
      %v4733 = vsel %vm2579, %v4731, %v4732
      %v4734 = vrot.slane %v4435, 2
      %v4735 = vsel %vm2579, %v4732, %v4734
      %v4736 = vrot.slane %v4436, 2
      %v4737 = vrot.slane %v4437, 2
      %v4738 = vsel %vm2579, %v4736, %v4737
      %v4739 = vrot.slane %v4438, 2
      %v4740 = vsel %vm2579, %v4737, %v4739
      %v4741 = vrot.slane %v4439, 2
      %v4742 = vrot.slane %v4440, 2
      %v4743 = vsel %vm2579, %v4741, %v4742
      %v4744 = vrot.slane %v4441, 2
      %v4745 = vsel %vm2579, %v4742, %v4744
      %v4746 = vrot.slane %v4442, 2
      %v4747 = vrot.slane %v4443, 2
      %v4748 = vsel %vm2579, %v4746, %v4747
      %v4749 = vrot.slane %v4444, 2
      %v4750 = vsel %vm2579, %v4747, %v4749
      %v4751 = vrot.slane %v4445, 2
      %v4752 = vrot.slane %v4446, 2
      %v4753 = vsel %vm2579, %v4751, %v4752
      %v4754 = vrot.slane %v4447, 2
      %v4755 = vsel %vm2579, %v4752, %v4754
      %v4756 = vrot.slane %v4448, 2
      %v4757 = vrot.slane %v4449, 2
      %v4758 = vsel %vm2579, %v4756, %v4757
      %v4759 = vrot.slane %v4450, 2
      %v4760 = vsel %vm2579, %v4757, %v4759
      %v4761 = vrot.slane %v4451, 2
      %v4762 = vrot.slane %v4452, 2
      %v4763 = vsel %vm2579, %v4761, %v4762
      %v4764 = vrot.slane %v4453, 2
      %v4765 = vsel %vm2579, %v4762, %v4764
      %v4766 = vrot.slane %v4454, 2
      %v4767 = vrot.slane %v4455, 2
      %v4768 = vsel %vm2579, %v4766, %v4767
      %v4769 = vrot.slane %v4456, 2
      %v4770 = vsel %vm2579, %v4767, %v4769
      %v4771 = vrot.slane %v4457, 2
      %v4772 = vrot.slane %v4458, 2
      %v4773 = vsel %vm2579, %v4771, %v4772
      %v4774 = vrot.slane %v4459, 2
      %v4775 = vsel %vm2579, %v4772, %v4774
      %4776 = vrot.lane.b32.xlu0 %v4698, 8
      %v4777 = vpop.permute.xlu0 %4776
      %4778 = vrot.lane.b32.xlu0 %v4700, 8
      %v4779 = vpop.permute.xlu0 %4778
      %4780 = vrot.lane.b32.xlu0 %v4703, 8
      %v4781 = vpop.permute.xlu0 %4780
      %4782 = vrot.lane.b32.xlu0 %v4705, 8
      %v4783 = vpop.permute.xlu0 %4782
      %4784 = vrot.lane.b32.xlu0 %v4708, 8
      %v4785 = vpop.permute.xlu0 %4784
      %4786 = vrot.lane.b32.xlu0 %v4710, 8
      %v4787 = vpop.permute.xlu0 %4786
      %4788 = vrot.lane.b32.xlu0 %v4713, 8
      %v4789 = vpop.permute.xlu0 %4788
      %4790 = vrot.lane.b32.xlu0 %v4715, 8
      %v4791 = vpop.permute.xlu0 %4790
      %4792 = vrot.lane.b32.xlu0 %v4718, 8
      %v4793 = vpop.permute.xlu0 %4792
      %4794 = vrot.lane.b32.xlu0 %v4720, 8
      %v4795 = vpop.permute.xlu0 %4794
      %4796 = vrot.lane.b32.xlu0 %v4723, 8
      %v4797 = vpop.permute.xlu0 %4796
      %4798 = vrot.lane.b32.xlu0 %v4725, 8
      %v4799 = vpop.permute.xlu0 %4798
      %4800 = vrot.lane.b32.xlu0 %v4728, 8
      %v4801 = vpop.permute.xlu0 %4800
      %4802 = vrot.lane.b32.xlu0 %v4730, 8
      %v4803 = vpop.permute.xlu0 %4802
      %4804 = vrot.lane.b32.xlu0 %v4733, 8
      %v4805 = vpop.permute.xlu0 %4804
      %4806 = vrot.lane.b32.xlu0 %v4735, 8
      %v4807 = vpop.permute.xlu0 %4806
      %4808 = vrot.lane.b32.xlu0 %v4738, 8
      %v4809 = vpop.permute.xlu0 %4808
      %4810 = vrot.lane.b32.xlu0 %v4740, 8
      %v4811 = vpop.permute.xlu0 %4810
      %4812 = vrot.lane.b32.xlu0 %v4743, 8
      %v4813 = vpop.permute.xlu0 %4812
      %4814 = vrot.lane.b32.xlu0 %v4745, 8
      %v4815 = vpop.permute.xlu0 %4814
      %4816 = vrot.lane.b32.xlu0 %v4748, 8
      %v4817 = vpop.permute.xlu0 %4816
      %4818 = vrot.lane.b32.xlu0 %v4750, 8
      %v4819 = vpop.permute.xlu0 %4818
      %4820 = vrot.lane.b32.xlu0 %v4753, 8
      %v4821 = vpop.permute.xlu0 %4820
      %4822 = vrot.lane.b32.xlu0 %v4755, 8
      %v4823 = vpop.permute.xlu0 %4822
      %4824 = vrot.lane.b32.xlu0 %v4758, 8
      %v4825 = vpop.permute.xlu0 %4824
      %4826 = vrot.lane.b32.xlu0 %v4760, 8
      %v4827 = vpop.permute.xlu0 %4826
      %4828 = vrot.lane.b32.xlu0 %v4763, 8
      %v4829 = vpop.permute.xlu0 %4828
      %4830 = vrot.lane.b32.xlu0 %v4765, 8
      %v4831 = vpop.permute.xlu0 %4830
      %4832 = vrot.lane.b32.xlu0 %v4768, 8
      %v4833 = vpop.permute.xlu0 %4832
      %4834 = vrot.lane.b32.xlu0 %v4770, 8
      %v4835 = vpop.permute.xlu0 %4834
      %4836 = vrot.lane.b32.xlu0 %v4773, 8
      %v4837 = vpop.permute.xlu0 %4836
      %4838 = vrot.lane.b32.xlu0 %v4775, 8
      %v4839 = vpop.permute.xlu0 %4838
      %vm4872 = vcmask 1044480
      %v4873 = vrot.slane %v4412, 3
      %v4874 = vrot.slane %v4413, 3
      %v4875 = vsel %vm4872, %v4873, %v4874
      %v4876 = vrot.slane %v4414, 3
      %v4877 = vsel %vm4872, %v4874, %v4876
      %v4878 = vrot.slane %v4415, 3
      %v4879 = vrot.slane %v4416, 3
      %v4880 = vsel %vm4872, %v4878, %v4879
      %v4881 = vrot.slane %v4417, 3
      %v4882 = vsel %vm4872, %v4879, %v4881
      %v4883 = vrot.slane %v4418, 3
      %v4884 = vrot.slane %v4419, 3
      %v4885 = vsel %vm4872, %v4883, %v4884
      %v4886 = vrot.slane %v4420, 3
      %v4887 = vsel %vm4872, %v4884, %v4886
      %v4888 = vrot.slane %v4421, 3
      %v4889 = vrot.slane %v4422, 3
      %v4890 = vsel %vm4872, %v4888, %v4889
      %v4891 = vrot.slane %v4423, 3
      %v4892 = vsel %vm4872, %v4889, %v4891
      %v4893 = vrot.slane %v4424, 3
      %v4894 = vrot.slane %v4425, 3
      %v4895 = vsel %vm4872, %v4893, %v4894
      %v4896 = vrot.slane %v4426, 3
      %v4897 = vsel %vm4872, %v4894, %v4896
      %v4898 = vrot.slane %v4427, 3
      %v4899 = vrot.slane %v4428, 3
      %v4900 = vsel %vm4872, %v4898, %v4899
      %v4901 = vrot.slane %v4429, 3
      %v4902 = vsel %vm4872, %v4899, %v4901
      %v4903 = vrot.slane %v4430, 3
      %v4904 = vrot.slane %v4431, 3
      %v4905 = vsel %vm4872, %v4903, %v4904
      %v4906 = vrot.slane %v4432, 3
      %v4907 = vsel %vm4872, %v4904, %v4906
      %v4908 = vrot.slane %v4433, 3
      %v4909 = vrot.slane %v4434, 3
      %v4910 = vsel %vm4872, %v4908, %v4909
      %v4911 = vrot.slane %v4435, 3
      %v4912 = vsel %vm4872, %v4909, %v4911
      %v4913 = vrot.slane %v4436, 3
      %v4914 = vrot.slane %v4437, 3
      %v4915 = vsel %vm4872, %v4913, %v4914
      %v4916 = vrot.slane %v4438, 3
      %v4917 = vsel %vm4872, %v4914, %v4916
      %v4918 = vrot.slane %v4439, 3
      %v4919 = vrot.slane %v4440, 3
      %v4920 = vsel %vm4872, %v4918, %v4919
      %v4921 = vrot.slane %v4441, 3
      %v4922 = vsel %vm4872, %v4919, %v4921
      %v4923 = vrot.slane %v4442, 3
      %v4924 = vrot.slane %v4443, 3
      %v4925 = vsel %vm4872, %v4923, %v4924
      %v4926 = vrot.slane %v4444, 3
      %v4927 = vsel %vm4872, %v4924, %v4926
      %v4928 = vrot.slane %v4445, 3
      %v4929 = vrot.slane %v4446, 3
      %v4930 = vsel %vm4872, %v4928, %v4929
      %v4931 = vrot.slane %v4447, 3
      %v4932 = vsel %vm4872, %v4929, %v4931
      %v4933 = vrot.slane %v4448, 3
      %v4934 = vrot.slane %v4449, 3
      %v4935 = vsel %vm4872, %v4933, %v4934
      %v4936 = vrot.slane %v4450, 3
      %v4937 = vsel %vm4872, %v4934, %v4936
      %v4938 = vrot.slane %v4451, 3
      %v4939 = vrot.slane %v4452, 3
      %v4940 = vsel %vm4872, %v4938, %v4939
      %v4941 = vrot.slane %v4453, 3
      %v4942 = vsel %vm4872, %v4939, %v4941
      %v4943 = vrot.slane %v4454, 3
      %v4944 = vrot.slane %v4455, 3
      %v4945 = vsel %vm4872, %v4943, %v4944
      %v4946 = vrot.slane %v4456, 3
      %v4947 = vsel %vm4872, %v4944, %v4946
      %v4948 = vrot.slane %v4457, 3
      %v4949 = vrot.slane %v4458, 3
      %v4950 = vsel %vm4872, %v4948, %v4949
      %v4951 = vrot.slane %v4459, 3
      %v4952 = vsel %vm4872, %v4949, %v4951
      %4953 = vrot.lane.b32.xlu0 %v4875, 12
      %v4954 = vpop.permute.xlu0 %4953
      %4955 = vrot.lane.b32.xlu0 %v4877, 12
      %v4956 = vpop.permute.xlu0 %4955
      %4957 = vrot.lane.b32.xlu0 %v4880, 12
      %v4958 = vpop.permute.xlu0 %4957
      %4959 = vrot.lane.b32.xlu0 %v4882, 12
      %v4960 = vpop.permute.xlu0 %4959
      %4961 = vrot.lane.b32.xlu0 %v4885, 12
      %v4962 = vpop.permute.xlu0 %4961
      %4963 = vrot.lane.b32.xlu0 %v4887, 12
      %v4964 = vpop.permute.xlu0 %4963
      %4965 = vrot.lane.b32.xlu0 %v4890, 12
      %v4966 = vpop.permute.xlu0 %4965
      %4967 = vrot.lane.b32.xlu0 %v4892, 12
      %v4968 = vpop.permute.xlu0 %4967
      %4969 = vrot.lane.b32.xlu0 %v4895, 12
      %v4970 = vpop.permute.xlu0 %4969
      %4971 = vrot.lane.b32.xlu0 %v4897, 12
      %v4972 = vpop.permute.xlu0 %4971
      %4973 = vrot.lane.b32.xlu0 %v4900, 12
      %v4974 = vpop.permute.xlu0 %4973
      %4975 = vrot.lane.b32.xlu0 %v4902, 12
      %v4976 = vpop.permute.xlu0 %4975
      %4977 = vrot.lane.b32.xlu0 %v4905, 12
      %v4978 = vpop.permute.xlu0 %4977
      %4979 = vrot.lane.b32.xlu0 %v4907, 12
      %v4980 = vpop.permute.xlu0 %4979
      %4981 = vrot.lane.b32.xlu0 %v4910, 12
      %v4982 = vpop.permute.xlu0 %4981
      %4983 = vrot.lane.b32.xlu0 %v4912, 12
      %v4984 = vpop.permute.xlu0 %4983
      %4985 = vrot.lane.b32.xlu0 %v4915, 12
      %v4986 = vpop.permute.xlu0 %4985
      %4987 = vrot.lane.b32.xlu0 %v4917, 12
      %v4988 = vpop.permute.xlu0 %4987
      %4989 = vrot.lane.b32.xlu0 %v4920, 12
      %v4990 = vpop.permute.xlu0 %4989
      %4991 = vrot.lane.b32.xlu0 %v4922, 12
      %v4992 = vpop.permute.xlu0 %4991
      %4993 = vrot.lane.b32.xlu0 %v4925, 12
      %v4994 = vpop.permute.xlu0 %4993
      %4995 = vrot.lane.b32.xlu0 %v4927, 12
      %v4996 = vpop.permute.xlu0 %4995
      %4997 = vrot.lane.b32.xlu0 %v4930, 12
      %v4998 = vpop.permute.xlu0 %4997
      %4999 = vrot.lane.b32.xlu0 %v4932, 12
      %v5000 = vpop.permute.xlu0 %4999
      %5001 = vrot.lane.b32.xlu0 %v4935, 12
      %v5002 = vpop.permute.xlu0 %5001
      %5003 = vrot.lane.b32.xlu0 %v4937, 12
      %v5004 = vpop.permute.xlu0 %5003
      %5005 = vrot.lane.b32.xlu0 %v4940, 12
      %v5006 = vpop.permute.xlu0 %5005
      %5007 = vrot.lane.b32.xlu0 %v4942, 12
      %v5008 = vpop.permute.xlu0 %5007
      %5009 = vrot.lane.b32.xlu0 %v4945, 12
      %v5010 = vpop.permute.xlu0 %5009
      %5011 = vrot.lane.b32.xlu0 %v4947, 12
      %v5012 = vpop.permute.xlu0 %5011
      %5013 = vrot.lane.b32.xlu0 %v4950, 12
      %v5014 = vpop.permute.xlu0 %5013
      %5015 = vrot.lane.b32.xlu0 %v4952, 12
      %v5016 = vpop.permute.xlu0 %5015
      %v5049 = vrot.slane %v4412, 4
      %v5050 = vrot.slane %v4413, 4
      %v5051 = vsel %vm3722, %v5049, %v5050
      %v5052 = vrot.slane %v4414, 4
      %v5053 = vsel %vm3722, %v5050, %v5052
      %v5054 = vrot.slane %v4415, 4
      %v5055 = vrot.slane %v4416, 4
      %v5056 = vsel %vm3722, %v5054, %v5055
      %v5057 = vrot.slane %v4417, 4
      %v5058 = vsel %vm3722, %v5055, %v5057
      %v5059 = vrot.slane %v4418, 4
      %v5060 = vrot.slane %v4419, 4
      %v5061 = vsel %vm3722, %v5059, %v5060
      %v5062 = vrot.slane %v4420, 4
      %v5063 = vsel %vm3722, %v5060, %v5062
      %v5064 = vrot.slane %v4421, 4
      %v5065 = vrot.slane %v4422, 4
      %v5066 = vsel %vm3722, %v5064, %v5065
      %v5067 = vrot.slane %v4423, 4
      %v5068 = vsel %vm3722, %v5065, %v5067
      %v5069 = vrot.slane %v4424, 4
      %v5070 = vrot.slane %v4425, 4
      %v5071 = vsel %vm3722, %v5069, %v5070
      %v5072 = vrot.slane %v4426, 4
      %v5073 = vsel %vm3722, %v5070, %v5072
      %v5074 = vrot.slane %v4427, 4
      %v5075 = vrot.slane %v4428, 4
      %v5076 = vsel %vm3722, %v5074, %v5075
      %v5077 = vrot.slane %v4429, 4
      %v5078 = vsel %vm3722, %v5075, %v5077
      %v5079 = vrot.slane %v4430, 4
      %v5080 = vrot.slane %v4431, 4
      %v5081 = vsel %vm3722, %v5079, %v5080
      %v5082 = vrot.slane %v4432, 4
      %v5083 = vsel %vm3722, %v5080, %v5082
      %v5084 = vrot.slane %v4433, 4
      %v5085 = vrot.slane %v4434, 4
      %v5086 = vsel %vm3722, %v5084, %v5085
      %v5087 = vrot.slane %v4435, 4
      %v5088 = vsel %vm3722, %v5085, %v5087
      %v5089 = vrot.slane %v4436, 4
      %v5090 = vrot.slane %v4437, 4
      %v5091 = vsel %vm3722, %v5089, %v5090
      %v5092 = vrot.slane %v4438, 4
      %v5093 = vsel %vm3722, %v5090, %v5092
      %v5094 = vrot.slane %v4439, 4
      %v5095 = vrot.slane %v4440, 4
      %v5096 = vsel %vm3722, %v5094, %v5095
      %v5097 = vrot.slane %v4441, 4
      %v5098 = vsel %vm3722, %v5095, %v5097
      %v5099 = vrot.slane %v4442, 4
      %v5100 = vrot.slane %v4443, 4
      %v5101 = vsel %vm3722, %v5099, %v5100
      %v5102 = vrot.slane %v4444, 4
      %v5103 = vsel %vm3722, %v5100, %v5102
      %v5104 = vrot.slane %v4445, 4
      %v5105 = vrot.slane %v4446, 4
      %v5106 = vsel %vm3722, %v5104, %v5105
      %v5107 = vrot.slane %v4447, 4
      %v5108 = vsel %vm3722, %v5105, %v5107
      %v5109 = vrot.slane %v4448, 4
      %v5110 = vrot.slane %v4449, 4
      %v5111 = vsel %vm3722, %v5109, %v5110
      %v5112 = vrot.slane %v4450, 4
      %v5113 = vsel %vm3722, %v5110, %v5112
      %v5114 = vrot.slane %v4451, 4
      %v5115 = vrot.slane %v4452, 4
      %v5116 = vsel %vm3722, %v5114, %v5115
      %v5117 = vrot.slane %v4453, 4
      %v5118 = vsel %vm3722, %v5115, %v5117
      %v5119 = vrot.slane %v4454, 4
      %v5120 = vrot.slane %v4455, 4
      %v5121 = vsel %vm3722, %v5119, %v5120
      %v5122 = vrot.slane %v4456, 4
      %v5123 = vsel %vm3722, %v5120, %v5122
      %v5124 = vrot.slane %v4457, 4
      %v5125 = vrot.slane %v4458, 4
      %v5126 = vsel %vm3722, %v5124, %v5125
      %v5127 = vrot.slane %v4459, 4
      %v5128 = vsel %vm3722, %v5125, %v5127
      %5129 = vrot.lane.b32.xlu0 %v5051, 16
      %v5130 = vpop.permute.xlu0 %5129
      %5131 = vrot.lane.b32.xlu0 %v5053, 16
      %v5132 = vpop.permute.xlu0 %5131
      %5133 = vrot.lane.b32.xlu0 %v5056, 16
      %v5134 = vpop.permute.xlu0 %5133
      %5135 = vrot.lane.b32.xlu0 %v5058, 16
      %v5136 = vpop.permute.xlu0 %5135
      %5137 = vrot.lane.b32.xlu0 %v5061, 16
      %v5138 = vpop.permute.xlu0 %5137
      %5139 = vrot.lane.b32.xlu0 %v5063, 16
      %v5140 = vpop.permute.xlu0 %5139
      %5141 = vrot.lane.b32.xlu0 %v5066, 16
      %v5142 = vpop.permute.xlu0 %5141
      %5143 = vrot.lane.b32.xlu0 %v5068, 16
      %v5144 = vpop.permute.xlu0 %5143
      %5145 = vrot.lane.b32.xlu0 %v5071, 16
      %v5146 = vpop.permute.xlu0 %5145
      %5147 = vrot.lane.b32.xlu0 %v5073, 16
      %v5148 = vpop.permute.xlu0 %5147
      %5149 = vrot.lane.b32.xlu0 %v5076, 16
      %v5150 = vpop.permute.xlu0 %5149
      %5151 = vrot.lane.b32.xlu0 %v5078, 16
      %v5152 = vpop.permute.xlu0 %5151
      %5153 = vrot.lane.b32.xlu0 %v5081, 16
      %v5154 = vpop.permute.xlu0 %5153
      %5155 = vrot.lane.b32.xlu0 %v5083, 16
      %v5156 = vpop.permute.xlu0 %5155
      %5157 = vrot.lane.b32.xlu0 %v5086, 16
      %v5158 = vpop.permute.xlu0 %5157
      %5159 = vrot.lane.b32.xlu0 %v5088, 16
      %v5160 = vpop.permute.xlu0 %5159
      %5161 = vrot.lane.b32.xlu0 %v5091, 16
      %v5162 = vpop.permute.xlu0 %5161
      %5163 = vrot.lane.b32.xlu0 %v5093, 16
      %v5164 = vpop.permute.xlu0 %5163
      %5165 = vrot.lane.b32.xlu0 %v5096, 16
      %v5166 = vpop.permute.xlu0 %5165
      %5167 = vrot.lane.b32.xlu0 %v5098, 16
      %v5168 = vpop.permute.xlu0 %5167
      %5169 = vrot.lane.b32.xlu0 %v5101, 16
      %v5170 = vpop.permute.xlu0 %5169
      %5171 = vrot.lane.b32.xlu0 %v5103, 16
      %v5172 = vpop.permute.xlu0 %5171
      %5173 = vrot.lane.b32.xlu0 %v5106, 16
      %v5174 = vpop.permute.xlu0 %5173
      %5175 = vrot.lane.b32.xlu0 %v5108, 16
      %v5176 = vpop.permute.xlu0 %5175
      %5177 = vrot.lane.b32.xlu0 %v5111, 16
      %v5178 = vpop.permute.xlu0 %5177
      %5179 = vrot.lane.b32.xlu0 %v5113, 16
      %v5180 = vpop.permute.xlu0 %5179
      %5181 = vrot.lane.b32.xlu0 %v5116, 16
      %v5182 = vpop.permute.xlu0 %5181
      %5183 = vrot.lane.b32.xlu0 %v5118, 16
      %v5184 = vpop.permute.xlu0 %5183
      %5185 = vrot.lane.b32.xlu0 %v5121, 16
      %v5186 = vpop.permute.xlu0 %5185
      %5187 = vrot.lane.b32.xlu0 %v5123, 16
      %v5188 = vpop.permute.xlu0 %5187
      %5189 = vrot.lane.b32.xlu0 %v5126, 16
      %v5190 = vpop.permute.xlu0 %5189
      %5191 = vrot.lane.b32.xlu0 %v5128, 16
      %v5192 = vpop.permute.xlu0 %5191
      %5227 = vrot.lane.b32.xlu0 %v4415, 20
      %v5228 = vpop.permute.xlu0 %5227
      %5229 = vrot.lane.b32.xlu0 %v4416, 20
      %v5230 = vpop.permute.xlu0 %5229
      %5231 = vrot.lane.b32.xlu0 %v4418, 20
      %v5232 = vpop.permute.xlu0 %5231
      %5233 = vrot.lane.b32.xlu0 %v4419, 20
      %v5234 = vpop.permute.xlu0 %5233
      %5235 = vrot.lane.b32.xlu0 %v4421, 20
      %v5236 = vpop.permute.xlu0 %5235
      %5237 = vrot.lane.b32.xlu0 %v4422, 20
      %v5238 = vpop.permute.xlu0 %5237
      %5239 = vrot.lane.b32.xlu0 %v4424, 20
      %v5240 = vpop.permute.xlu0 %5239
      %5241 = vrot.lane.b32.xlu0 %v4425, 20
      %v5242 = vpop.permute.xlu0 %5241
      %5243 = vrot.lane.b32.xlu0 %v4427, 20
      %v5244 = vpop.permute.xlu0 %5243
      %5245 = vrot.lane.b32.xlu0 %v4428, 20
      %v5246 = vpop.permute.xlu0 %5245
      %5247 = vrot.lane.b32.xlu0 %v4430, 20
      %v5248 = vpop.permute.xlu0 %5247
      %5249 = vrot.lane.b32.xlu0 %v4431, 20
      %v5250 = vpop.permute.xlu0 %5249
      %5251 = vrot.lane.b32.xlu0 %v4433, 20
      %v5252 = vpop.permute.xlu0 %5251
      %5253 = vrot.lane.b32.xlu0 %v4434, 20
      %v5254 = vpop.permute.xlu0 %5253
      %5255 = vrot.lane.b32.xlu0 %v4436, 20
      %v5256 = vpop.permute.xlu0 %5255
      %5257 = vrot.lane.b32.xlu0 %v4437, 20
      %v5258 = vpop.permute.xlu0 %5257
      %5259 = vrot.lane.b32.xlu0 %v4439, 20
      %v5260 = vpop.permute.xlu0 %5259
      %5261 = vrot.lane.b32.xlu0 %v4440, 20
      %v5262 = vpop.permute.xlu0 %5261
      %5263 = vrot.lane.b32.xlu0 %v4442, 20
      %v5264 = vpop.permute.xlu0 %5263
      %5265 = vrot.lane.b32.xlu0 %v4443, 20
      %v5266 = vpop.permute.xlu0 %5265
      %5267 = vrot.lane.b32.xlu0 %v4445, 20
      %v5268 = vpop.permute.xlu0 %5267
      %5269 = vrot.lane.b32.xlu0 %v4446, 20
      %v5270 = vpop.permute.xlu0 %5269
      %5271 = vrot.lane.b32.xlu0 %v4448, 20
      %v5272 = vpop.permute.xlu0 %5271
      %5273 = vrot.lane.b32.xlu0 %v4449, 20
      %v5274 = vpop.permute.xlu0 %5273
      %5275 = vrot.lane.b32.xlu0 %v4451, 20
      %v5276 = vpop.permute.xlu0 %5275
      %5277 = vrot.lane.b32.xlu0 %v4452, 20
      %v5278 = vpop.permute.xlu0 %5277
      %5279 = vrot.lane.b32.xlu0 %v4454, 20
      %v5280 = vpop.permute.xlu0 %5279
      %5281 = vrot.lane.b32.xlu0 %v4455, 20
      %v5282 = vpop.permute.xlu0 %5281
      %5283 = vrot.lane.b32.xlu0 %v4457, 20
      %v5284 = vpop.permute.xlu0 %5283
      %5285 = vrot.lane.b32.xlu0 %v4458, 20
      %v5286 = vpop.permute.xlu0 %5285
      %5287 = vrot.lane.b32.xlu0 %v4460, 20
      %v5288 = vpop.permute.xlu0 %5287
      %5289 = vrot.lane.b32.xlu0 %v4461, 20
      %v5290 = vpop.permute.xlu0 %5289
      %v5324 = vrot.slane %v4460, 1
      %v5325 = vrot.slane %v4461, 1
      %v5326 = vsel %vm655, %v5324, %v5325
      %v5327 = vrot.slane %v4462, 1
      %v5328 = vsel %vm655, %v5325, %v5327
      %5329 = vrot.lane.b32.xlu0 %v4527, 24
      %v5330 = vpop.permute.xlu0 %5329
      %5331 = vrot.lane.b32.xlu0 %v4529, 24
      %v5332 = vpop.permute.xlu0 %5331
      %5333 = vrot.lane.b32.xlu0 %v4532, 24
      %v5334 = vpop.permute.xlu0 %5333
      %5335 = vrot.lane.b32.xlu0 %v4534, 24
      %v5336 = vpop.permute.xlu0 %5335
      %5337 = vrot.lane.b32.xlu0 %v4537, 24
      %v5338 = vpop.permute.xlu0 %5337
      %5339 = vrot.lane.b32.xlu0 %v4539, 24
      %v5340 = vpop.permute.xlu0 %5339
      %5341 = vrot.lane.b32.xlu0 %v4542, 24
      %v5342 = vpop.permute.xlu0 %5341
      %5343 = vrot.lane.b32.xlu0 %v4544, 24
      %v5344 = vpop.permute.xlu0 %5343
      %5345 = vrot.lane.b32.xlu0 %v4547, 24
      %v5346 = vpop.permute.xlu0 %5345
      %5347 = vrot.lane.b32.xlu0 %v4549, 24
      %v5348 = vpop.permute.xlu0 %5347
      %5349 = vrot.lane.b32.xlu0 %v4552, 24
      %v5350 = vpop.permute.xlu0 %5349
      %5351 = vrot.lane.b32.xlu0 %v4554, 24
      %v5352 = vpop.permute.xlu0 %5351
      %5353 = vrot.lane.b32.xlu0 %v4557, 24
      %v5354 = vpop.permute.xlu0 %5353
      %5355 = vrot.lane.b32.xlu0 %v4559, 24
      %v5356 = vpop.permute.xlu0 %5355
      %5357 = vrot.lane.b32.xlu0 %v4562, 24
      %v5358 = vpop.permute.xlu0 %5357
      %5359 = vrot.lane.b32.xlu0 %v4564, 24
      %v5360 = vpop.permute.xlu0 %5359
      %5361 = vrot.lane.b32.xlu0 %v4567, 24
      %v5362 = vpop.permute.xlu0 %5361
      %5363 = vrot.lane.b32.xlu0 %v4569, 24
      %v5364 = vpop.permute.xlu0 %5363
      %5365 = vrot.lane.b32.xlu0 %v4572, 24
      %v5366 = vpop.permute.xlu0 %5365
      %5367 = vrot.lane.b32.xlu0 %v4574, 24
      %v5368 = vpop.permute.xlu0 %5367
      %5369 = vrot.lane.b32.xlu0 %v4577, 24
      %v5370 = vpop.permute.xlu0 %5369
      %5371 = vrot.lane.b32.xlu0 %v4579, 24
      %v5372 = vpop.permute.xlu0 %5371
      %5373 = vrot.lane.b32.xlu0 %v4582, 24
      %v5374 = vpop.permute.xlu0 %5373
      %5375 = vrot.lane.b32.xlu0 %v4584, 24
      %v5376 = vpop.permute.xlu0 %5375
      %5377 = vrot.lane.b32.xlu0 %v4587, 24
      %v5378 = vpop.permute.xlu0 %5377
      %5379 = vrot.lane.b32.xlu0 %v4589, 24
      %v5380 = vpop.permute.xlu0 %5379
      %5381 = vrot.lane.b32.xlu0 %v4592, 24
      %v5382 = vpop.permute.xlu0 %5381
      %5383 = vrot.lane.b32.xlu0 %v4594, 24
      %v5384 = vpop.permute.xlu0 %5383
      %5385 = vrot.lane.b32.xlu0 %v4597, 24
      %v5386 = vpop.permute.xlu0 %5385
      %5387 = vrot.lane.b32.xlu0 %v4599, 24
      %v5388 = vpop.permute.xlu0 %5387
      %5389 = vrot.lane.b32.xlu0 %v5326, 24
      %v5390 = vpop.permute.xlu0 %5389
      %5391 = vrot.lane.b32.xlu0 %v5328, 24
      %v5392 = vpop.permute.xlu0 %5391
      %v5425 = vrot.slane %v4460, 2
      %v5426 = vrot.slane %v4461, 2
      %v5427 = vsel %vm2579, %v5425, %v5426
      %v5428 = vrot.slane %v4462, 2
      %v5429 = vsel %vm2579, %v5426, %v5428
      %5430 = vrot.lane.b32.xlu0 %v4703, 28
      %v5431 = vpop.permute.xlu0 %5430
      %5432 = vrot.lane.b32.xlu0 %v4705, 28
      %v5433 = vpop.permute.xlu0 %5432
      %5434 = vrot.lane.b32.xlu0 %v4708, 28
      %v5435 = vpop.permute.xlu0 %5434
      %5436 = vrot.lane.b32.xlu0 %v4710, 28
      %v5437 = vpop.permute.xlu0 %5436
      %5438 = vrot.lane.b32.xlu0 %v4713, 28
      %v5439 = vpop.permute.xlu0 %5438
      %5440 = vrot.lane.b32.xlu0 %v4715, 28
      %v5441 = vpop.permute.xlu0 %5440
      %5442 = vrot.lane.b32.xlu0 %v4718, 28
      %v5443 = vpop.permute.xlu0 %5442
      %5444 = vrot.lane.b32.xlu0 %v4720, 28
      %v5445 = vpop.permute.xlu0 %5444
      %5446 = vrot.lane.b32.xlu0 %v4723, 28
      %v5447 = vpop.permute.xlu0 %5446
      %5448 = vrot.lane.b32.xlu0 %v4725, 28
      %v5449 = vpop.permute.xlu0 %5448
      %5450 = vrot.lane.b32.xlu0 %v4728, 28
      %v5451 = vpop.permute.xlu0 %5450
      %5452 = vrot.lane.b32.xlu0 %v4730, 28
      %v5453 = vpop.permute.xlu0 %5452
      %5454 = vrot.lane.b32.xlu0 %v4733, 28
      %v5455 = vpop.permute.xlu0 %5454
      %5456 = vrot.lane.b32.xlu0 %v4735, 28
      %v5457 = vpop.permute.xlu0 %5456
      %5458 = vrot.lane.b32.xlu0 %v4738, 28
      %v5459 = vpop.permute.xlu0 %5458
      %5460 = vrot.lane.b32.xlu0 %v4740, 28
      %v5461 = vpop.permute.xlu0 %5460
      %5462 = vrot.lane.b32.xlu0 %v4743, 28
      %v5463 = vpop.permute.xlu0 %5462
      %5464 = vrot.lane.b32.xlu0 %v4745, 28
      %v5465 = vpop.permute.xlu0 %5464
      %5466 = vrot.lane.b32.xlu0 %v4748, 28
      %v5467 = vpop.permute.xlu0 %5466
      %5468 = vrot.lane.b32.xlu0 %v4750, 28
      %v5469 = vpop.permute.xlu0 %5468
      %5470 = vrot.lane.b32.xlu0 %v4753, 28
      %v5471 = vpop.permute.xlu0 %5470
      %5472 = vrot.lane.b32.xlu0 %v4755, 28
      %v5473 = vpop.permute.xlu0 %5472
      %5474 = vrot.lane.b32.xlu0 %v4758, 28
      %v5475 = vpop.permute.xlu0 %5474
      %5476 = vrot.lane.b32.xlu0 %v4760, 28
      %v5477 = vpop.permute.xlu0 %5476
      %5478 = vrot.lane.b32.xlu0 %v4763, 28
      %v5479 = vpop.permute.xlu0 %5478
      %5480 = vrot.lane.b32.xlu0 %v4765, 28
      %v5481 = vpop.permute.xlu0 %5480
      %5482 = vrot.lane.b32.xlu0 %v4768, 28
      %v5483 = vpop.permute.xlu0 %5482
      %5484 = vrot.lane.b32.xlu0 %v4770, 28
      %v5485 = vpop.permute.xlu0 %5484
      %5486 = vrot.lane.b32.xlu0 %v4773, 28
      %v5487 = vpop.permute.xlu0 %5486
      %5488 = vrot.lane.b32.xlu0 %v4775, 28
      %v5489 = vpop.permute.xlu0 %5488
      %5490 = vrot.lane.b32.xlu0 %v5427, 28
      %v5491 = vpop.permute.xlu0 %5490
      %5492 = vrot.lane.b32.xlu0 %v5429, 28
      %v5493 = vpop.permute.xlu0 %5492
      %v5526 = vrot.slane %v4460, 3
      %v5527 = vrot.slane %v4461, 3
      %v5528 = vsel %vm4872, %v5526, %v5527
      %v5529 = vrot.slane %v4462, 3
      %v5530 = vsel %vm4872, %v5527, %v5529
      %5531 = vrot.lane.b32.xlu0 %v4880, 32
      %v5532 = vpop.permute.xlu0 %5531
      %5533 = vrot.lane.b32.xlu0 %v4882, 32
      %v5534 = vpop.permute.xlu0 %5533
      %5535 = vrot.lane.b32.xlu0 %v4885, 32
      %v5536 = vpop.permute.xlu0 %5535
      %5537 = vrot.lane.b32.xlu0 %v4887, 32
      %v5538 = vpop.permute.xlu0 %5537
      %5539 = vrot.lane.b32.xlu0 %v4890, 32
      %v5540 = vpop.permute.xlu0 %5539
      %5541 = vrot.lane.b32.xlu0 %v4892, 32
      %v5542 = vpop.permute.xlu0 %5541
      %5543 = vrot.lane.b32.xlu0 %v4895, 32
      %v5544 = vpop.permute.xlu0 %5543
      %5545 = vrot.lane.b32.xlu0 %v4897, 32
      %v5546 = vpop.permute.xlu0 %5545
      %5547 = vrot.lane.b32.xlu0 %v4900, 32
      %v5548 = vpop.permute.xlu0 %5547
      %5549 = vrot.lane.b32.xlu0 %v4902, 32
      %v5550 = vpop.permute.xlu0 %5549
      %5551 = vrot.lane.b32.xlu0 %v4905, 32
      %v5552 = vpop.permute.xlu0 %5551
      %5553 = vrot.lane.b32.xlu0 %v4907, 32
      %v5554 = vpop.permute.xlu0 %5553
      %5555 = vrot.lane.b32.xlu0 %v4910, 32
      %v5556 = vpop.permute.xlu0 %5555
      %5557 = vrot.lane.b32.xlu0 %v4912, 32
      %v5558 = vpop.permute.xlu0 %5557
      %5559 = vrot.lane.b32.xlu0 %v4915, 32
      %v5560 = vpop.permute.xlu0 %5559
      %5561 = vrot.lane.b32.xlu0 %v4917, 32
      %v5562 = vpop.permute.xlu0 %5561
      %5563 = vrot.lane.b32.xlu0 %v4920, 32
      %v5564 = vpop.permute.xlu0 %5563
      %5565 = vrot.lane.b32.xlu0 %v4922, 32
      %v5566 = vpop.permute.xlu0 %5565
      %5567 = vrot.lane.b32.xlu0 %v4925, 32
      %v5568 = vpop.permute.xlu0 %5567
      %5569 = vrot.lane.b32.xlu0 %v4927, 32
      %v5570 = vpop.permute.xlu0 %5569
      %5571 = vrot.lane.b32.xlu0 %v4930, 32
      %v5572 = vpop.permute.xlu0 %5571
      %5573 = vrot.lane.b32.xlu0 %v4932, 32
      %v5574 = vpop.permute.xlu0 %5573
      %5575 = vrot.lane.b32.xlu0 %v4935, 32
      %v5576 = vpop.permute.xlu0 %5575
      %5577 = vrot.lane.b32.xlu0 %v4937, 32
      %v5578 = vpop.permute.xlu0 %5577
      %5579 = vrot.lane.b32.xlu0 %v4940, 32
      %v5580 = vpop.permute.xlu0 %5579
      %5581 = vrot.lane.b32.xlu0 %v4942, 32
      %v5582 = vpop.permute.xlu0 %5581
      %5583 = vrot.lane.b32.xlu0 %v4945, 32
      %v5584 = vpop.permute.xlu0 %5583
      %5585 = vrot.lane.b32.xlu0 %v4947, 32
      %v5586 = vpop.permute.xlu0 %5585
      %5587 = vrot.lane.b32.xlu0 %v4950, 32
      %v5588 = vpop.permute.xlu0 %5587
      %5589 = vrot.lane.b32.xlu0 %v4952, 32
      %v5590 = vpop.permute.xlu0 %5589
      %5591 = vrot.lane.b32.xlu0 %v5528, 32
      %v5592 = vpop.permute.xlu0 %5591
      %5593 = vrot.lane.b32.xlu0 %v5530, 32
      %v5594 = vpop.permute.xlu0 %5593
      %v5627 = vrot.slane %v4460, 4
      %v5628 = vrot.slane %v4461, 4
      %v5629 = vsel %vm3722, %v5627, %v5628
      %v5630 = vrot.slane %v4462, 4
      %v5631 = vsel %vm3722, %v5628, %v5630
      %5632 = vrot.lane.b32.xlu0 %v5056, 36
      %v5633 = vpop.permute.xlu0 %5632
      %5634 = vrot.lane.b32.xlu0 %v5058, 36
      %v5635 = vpop.permute.xlu0 %5634
      %5636 = vrot.lane.b32.xlu0 %v5061, 36
      %v5637 = vpop.permute.xlu0 %5636
      %5638 = vrot.lane.b32.xlu0 %v5063, 36
      %v5639 = vpop.permute.xlu0 %5638
      %5640 = vrot.lane.b32.xlu0 %v5066, 36
      %v5641 = vpop.permute.xlu0 %5640
      %5642 = vrot.lane.b32.xlu0 %v5068, 36
      %v5643 = vpop.permute.xlu0 %5642
      %5644 = vrot.lane.b32.xlu0 %v5071, 36
      %v5645 = vpop.permute.xlu0 %5644
      %5646 = vrot.lane.b32.xlu0 %v5073, 36
      %v5647 = vpop.permute.xlu0 %5646
      %5648 = vrot.lane.b32.xlu0 %v5076, 36
      %v5649 = vpop.permute.xlu0 %5648
      %5650 = vrot.lane.b32.xlu0 %v5078, 36
      %v5651 = vpop.permute.xlu0 %5650
      %5652 = vrot.lane.b32.xlu0 %v5081, 36
      %v5653 = vpop.permute.xlu0 %5652
      %5654 = vrot.lane.b32.xlu0 %v5083, 36
      %v5655 = vpop.permute.xlu0 %5654
      %5656 = vrot.lane.b32.xlu0 %v5086, 36
      %v5657 = vpop.permute.xlu0 %5656
      %5658 = vrot.lane.b32.xlu0 %v5088, 36
      %v5659 = vpop.permute.xlu0 %5658
      %5660 = vrot.lane.b32.xlu0 %v5091, 36
      %v5661 = vpop.permute.xlu0 %5660
      %5662 = vrot.lane.b32.xlu0 %v5093, 36
      %v5663 = vpop.permute.xlu0 %5662
      %5664 = vrot.lane.b32.xlu0 %v5096, 36
      %v5665 = vpop.permute.xlu0 %5664
      %5666 = vrot.lane.b32.xlu0 %v5098, 36
      %v5667 = vpop.permute.xlu0 %5666
      %5668 = vrot.lane.b32.xlu0 %v5101, 36
      %v5669 = vpop.permute.xlu0 %5668
      %5670 = vrot.lane.b32.xlu0 %v5103, 36
      %v5671 = vpop.permute.xlu0 %5670
      %5672 = vrot.lane.b32.xlu0 %v5106, 36
      %v5673 = vpop.permute.xlu0 %5672
      %5674 = vrot.lane.b32.xlu0 %v5108, 36
      %v5675 = vpop.permute.xlu0 %5674
      %5676 = vrot.lane.b32.xlu0 %v5111, 36
      %v5677 = vpop.permute.xlu0 %5676
      %5678 = vrot.lane.b32.xlu0 %v5113, 36
      %v5679 = vpop.permute.xlu0 %5678
      %5680 = vrot.lane.b32.xlu0 %v5116, 36
      %v5681 = vpop.permute.xlu0 %5680
      %5682 = vrot.lane.b32.xlu0 %v5118, 36
      %v5683 = vpop.permute.xlu0 %5682
      %5684 = vrot.lane.b32.xlu0 %v5121, 36
      %v5685 = vpop.permute.xlu0 %5684
      %5686 = vrot.lane.b32.xlu0 %v5123, 36
      %v5687 = vpop.permute.xlu0 %5686
      %5688 = vrot.lane.b32.xlu0 %v5126, 36
      %v5689 = vpop.permute.xlu0 %5688
      %5690 = vrot.lane.b32.xlu0 %v5128, 36
      %v5691 = vpop.permute.xlu0 %5690
      %5692 = vrot.lane.b32.xlu0 %v5629, 36
      %v5693 = vpop.permute.xlu0 %5692
      %5694 = vrot.lane.b32.xlu0 %v5631, 36
      %v5695 = vpop.permute.xlu0 %5694
      %5730 = vrot.lane.b32.xlu0 %v4418, 40
      %v5731 = vpop.permute.xlu0 %5730
      %5732 = vrot.lane.b32.xlu0 %v4419, 40
      %v5733 = vpop.permute.xlu0 %5732
      %5734 = vrot.lane.b32.xlu0 %v4421, 40
      %v5735 = vpop.permute.xlu0 %5734
      %5736 = vrot.lane.b32.xlu0 %v4422, 40
      %v5737 = vpop.permute.xlu0 %5736
      %5738 = vrot.lane.b32.xlu0 %v4424, 40
      %v5739 = vpop.permute.xlu0 %5738
      %5740 = vrot.lane.b32.xlu0 %v4425, 40
      %v5741 = vpop.permute.xlu0 %5740
      %5742 = vrot.lane.b32.xlu0 %v4427, 40
      %v5743 = vpop.permute.xlu0 %5742
      %5744 = vrot.lane.b32.xlu0 %v4428, 40
      %v5745 = vpop.permute.xlu0 %5744
      %5746 = vrot.lane.b32.xlu0 %v4430, 40
      %v5747 = vpop.permute.xlu0 %5746
      %5748 = vrot.lane.b32.xlu0 %v4431, 40
      %v5749 = vpop.permute.xlu0 %5748
      %5750 = vrot.lane.b32.xlu0 %v4433, 40
      %v5751 = vpop.permute.xlu0 %5750
      %5752 = vrot.lane.b32.xlu0 %v4434, 40
      %v5753 = vpop.permute.xlu0 %5752
      %5754 = vrot.lane.b32.xlu0 %v4436, 40
      %v5755 = vpop.permute.xlu0 %5754
      %5756 = vrot.lane.b32.xlu0 %v4437, 40
      %v5757 = vpop.permute.xlu0 %5756
      %5758 = vrot.lane.b32.xlu0 %v4439, 40
      %v5759 = vpop.permute.xlu0 %5758
      %5760 = vrot.lane.b32.xlu0 %v4440, 40
      %v5761 = vpop.permute.xlu0 %5760
      %5762 = vrot.lane.b32.xlu0 %v4442, 40
      %v5763 = vpop.permute.xlu0 %5762
      %5764 = vrot.lane.b32.xlu0 %v4443, 40
      %v5765 = vpop.permute.xlu0 %5764
      %5766 = vrot.lane.b32.xlu0 %v4445, 40
      %v5767 = vpop.permute.xlu0 %5766
      %5768 = vrot.lane.b32.xlu0 %v4446, 40
      %v5769 = vpop.permute.xlu0 %5768
      %5770 = vrot.lane.b32.xlu0 %v4448, 40
      %v5771 = vpop.permute.xlu0 %5770
      %5772 = vrot.lane.b32.xlu0 %v4449, 40
      %v5773 = vpop.permute.xlu0 %5772
      %5774 = vrot.lane.b32.xlu0 %v4451, 40
      %v5775 = vpop.permute.xlu0 %5774
      %5776 = vrot.lane.b32.xlu0 %v4452, 40
      %v5777 = vpop.permute.xlu0 %5776
      %5778 = vrot.lane.b32.xlu0 %v4454, 40
      %v5779 = vpop.permute.xlu0 %5778
      %5780 = vrot.lane.b32.xlu0 %v4455, 40
      %v5781 = vpop.permute.xlu0 %5780
      %5782 = vrot.lane.b32.xlu0 %v4457, 40
      %v5783 = vpop.permute.xlu0 %5782
      %5784 = vrot.lane.b32.xlu0 %v4458, 40
      %v5785 = vpop.permute.xlu0 %5784
      %5786 = vrot.lane.b32.xlu0 %v4460, 40
      %v5787 = vpop.permute.xlu0 %5786
      %5788 = vrot.lane.b32.xlu0 %v4461, 40
      %v5789 = vpop.permute.xlu0 %5788
      %5790 = vrot.lane.b32.xlu0 %v4463, 40
      %v5791 = vpop.permute.xlu0 %5790
      %5792 = vrot.lane.b32.xlu0 %v4464, 40
      %v5793 = vpop.permute.xlu0 %5792
      %v5827 = vrot.slane %v4463, 1
      %v5828 = vrot.slane %v4464, 1
      %v5829 = vsel %vm655, %v5827, %v5828
      %v5830 = vrot.slane %v4465, 1
      %v5831 = vsel %vm655, %v5828, %v5830
      %5832 = vrot.lane.b32.xlu0 %v4532, 44
      %v5833 = vpop.permute.xlu0 %5832
      %5834 = vrot.lane.b32.xlu0 %v4534, 44
      %v5835 = vpop.permute.xlu0 %5834
      %5836 = vrot.lane.b32.xlu0 %v4537, 44
      %v5837 = vpop.permute.xlu0 %5836
      %5838 = vrot.lane.b32.xlu0 %v4539, 44
      %v5839 = vpop.permute.xlu0 %5838
      %5840 = vrot.lane.b32.xlu0 %v4542, 44
      %v5841 = vpop.permute.xlu0 %5840
      %5842 = vrot.lane.b32.xlu0 %v4544, 44
      %v5843 = vpop.permute.xlu0 %5842
      %5844 = vrot.lane.b32.xlu0 %v4547, 44
      %v5845 = vpop.permute.xlu0 %5844
      %5846 = vrot.lane.b32.xlu0 %v4549, 44
      %v5847 = vpop.permute.xlu0 %5846
      %5848 = vrot.lane.b32.xlu0 %v4552, 44
      %v5849 = vpop.permute.xlu0 %5848
      %5850 = vrot.lane.b32.xlu0 %v4554, 44
      %v5851 = vpop.permute.xlu0 %5850
      %5852 = vrot.lane.b32.xlu0 %v4557, 44
      %v5853 = vpop.permute.xlu0 %5852
      %5854 = vrot.lane.b32.xlu0 %v4559, 44
      %v5855 = vpop.permute.xlu0 %5854
      %5856 = vrot.lane.b32.xlu0 %v4562, 44
      %v5857 = vpop.permute.xlu0 %5856
      %5858 = vrot.lane.b32.xlu0 %v4564, 44
      %v5859 = vpop.permute.xlu0 %5858
      %5860 = vrot.lane.b32.xlu0 %v4567, 44
      %v5861 = vpop.permute.xlu0 %5860
      %5862 = vrot.lane.b32.xlu0 %v4569, 44
      %v5863 = vpop.permute.xlu0 %5862
      %5864 = vrot.lane.b32.xlu0 %v4572, 44
      %v5865 = vpop.permute.xlu0 %5864
      %5866 = vrot.lane.b32.xlu0 %v4574, 44
      %v5867 = vpop.permute.xlu0 %5866
      %5868 = vrot.lane.b32.xlu0 %v4577, 44
      %v5869 = vpop.permute.xlu0 %5868
      %5870 = vrot.lane.b32.xlu0 %v4579, 44
      %v5871 = vpop.permute.xlu0 %5870
      %5872 = vrot.lane.b32.xlu0 %v4582, 44
      %v5873 = vpop.permute.xlu0 %5872
      %5874 = vrot.lane.b32.xlu0 %v4584, 44
      %v5875 = vpop.permute.xlu0 %5874
      %5876 = vrot.lane.b32.xlu0 %v4587, 44
      %v5877 = vpop.permute.xlu0 %5876
      %5878 = vrot.lane.b32.xlu0 %v4589, 44
      %v5879 = vpop.permute.xlu0 %5878
      %5880 = vrot.lane.b32.xlu0 %v4592, 44
      %v5881 = vpop.permute.xlu0 %5880
      %5882 = vrot.lane.b32.xlu0 %v4594, 44
      %v5883 = vpop.permute.xlu0 %5882
      %5884 = vrot.lane.b32.xlu0 %v4597, 44
      %v5885 = vpop.permute.xlu0 %5884
      %5886 = vrot.lane.b32.xlu0 %v4599, 44
      %v5887 = vpop.permute.xlu0 %5886
      %5888 = vrot.lane.b32.xlu0 %v5326, 44
      %v5889 = vpop.permute.xlu0 %5888
      %5890 = vrot.lane.b32.xlu0 %v5328, 44
      %v5891 = vpop.permute.xlu0 %5890
      %5892 = vrot.lane.b32.xlu0 %v5829, 44
      %v5893 = vpop.permute.xlu0 %5892
      %5894 = vrot.lane.b32.xlu0 %v5831, 44
      %v5895 = vpop.permute.xlu0 %5894
      %v5928 = vrot.slane %v4463, 2
      %v5929 = vrot.slane %v4464, 2
      %v5930 = vsel %vm2579, %v5928, %v5929
      %v5931 = vrot.slane %v4465, 2
      %v5932 = vsel %vm2579, %v5929, %v5931
      %5933 = vrot.lane.b32.xlu0 %v4708, 48
      %v5934 = vpop.permute.xlu0 %5933
      %5935 = vrot.lane.b32.xlu0 %v4710, 48
      %v5936 = vpop.permute.xlu0 %5935
      %5937 = vrot.lane.b32.xlu0 %v4713, 48
      %v5938 = vpop.permute.xlu0 %5937
      %5939 = vrot.lane.b32.xlu0 %v4715, 48
      %v5940 = vpop.permute.xlu0 %5939
      %5941 = vrot.lane.b32.xlu0 %v4718, 48
      %v5942 = vpop.permute.xlu0 %5941
      %5943 = vrot.lane.b32.xlu0 %v4720, 48
      %v5944 = vpop.permute.xlu0 %5943
      %5945 = vrot.lane.b32.xlu0 %v4723, 48
      %v5946 = vpop.permute.xlu0 %5945
      %5947 = vrot.lane.b32.xlu0 %v4725, 48
      %v5948 = vpop.permute.xlu0 %5947
      %5949 = vrot.lane.b32.xlu0 %v4728, 48
      %v5950 = vpop.permute.xlu0 %5949
      %5951 = vrot.lane.b32.xlu0 %v4730, 48
      %v5952 = vpop.permute.xlu0 %5951
      %5953 = vrot.lane.b32.xlu0 %v4733, 48
      %v5954 = vpop.permute.xlu0 %5953
      %5955 = vrot.lane.b32.xlu0 %v4735, 48
      %v5956 = vpop.permute.xlu0 %5955
      %5957 = vrot.lane.b32.xlu0 %v4738, 48
      %v5958 = vpop.permute.xlu0 %5957
      %5959 = vrot.lane.b32.xlu0 %v4740, 48
      %v5960 = vpop.permute.xlu0 %5959
      %5961 = vrot.lane.b32.xlu0 %v4743, 48
      %v5962 = vpop.permute.xlu0 %5961
      %5963 = vrot.lane.b32.xlu0 %v4745, 48
      %v5964 = vpop.permute.xlu0 %5963
      %5965 = vrot.lane.b32.xlu0 %v4748, 48
      %v5966 = vpop.permute.xlu0 %5965
      %5967 = vrot.lane.b32.xlu0 %v4750, 48
      %v5968 = vpop.permute.xlu0 %5967
      %5969 = vrot.lane.b32.xlu0 %v4753, 48
      %v5970 = vpop.permute.xlu0 %5969
      %5971 = vrot.lane.b32.xlu0 %v4755, 48
      %v5972 = vpop.permute.xlu0 %5971
      %5973 = vrot.lane.b32.xlu0 %v4758, 48
      %v5974 = vpop.permute.xlu0 %5973
      %5975 = vrot.lane.b32.xlu0 %v4760, 48
      %v5976 = vpop.permute.xlu0 %5975
      %5977 = vrot.lane.b32.xlu0 %v4763, 48
      %v5978 = vpop.permute.xlu0 %5977
      %5979 = vrot.lane.b32.xlu0 %v4765, 48
      %v5980 = vpop.permute.xlu0 %5979
      %5981 = vrot.lane.b32.xlu0 %v4768, 48
      %v5982 = vpop.permute.xlu0 %5981
      %5983 = vrot.lane.b32.xlu0 %v4770, 48
      %v5984 = vpop.permute.xlu0 %5983
      %5985 = vrot.lane.b32.xlu0 %v4773, 48
      %v5986 = vpop.permute.xlu0 %5985
      %5987 = vrot.lane.b32.xlu0 %v4775, 48
      %v5988 = vpop.permute.xlu0 %5987
      %5989 = vrot.lane.b32.xlu0 %v5427, 48
      %v5990 = vpop.permute.xlu0 %5989
      %5991 = vrot.lane.b32.xlu0 %v5429, 48
      %v5992 = vpop.permute.xlu0 %5991
      %5993 = vrot.lane.b32.xlu0 %v5930, 48
      %v5994 = vpop.permute.xlu0 %5993
      %5995 = vrot.lane.b32.xlu0 %v5932, 48
      %v5996 = vpop.permute.xlu0 %5995
      %v6029 = vrot.slane %v4463, 3
      %v6030 = vrot.slane %v4464, 3
      %v6031 = vsel %vm4872, %v6029, %v6030
      %v6032 = vrot.slane %v4465, 3
      %v6033 = vsel %vm4872, %v6030, %v6032
      %6034 = vrot.lane.b32.xlu0 %v4885, 52
      %v6035 = vpop.permute.xlu0 %6034
      %6036 = vrot.lane.b32.xlu0 %v4887, 52
      %v6037 = vpop.permute.xlu0 %6036
      %6038 = vrot.lane.b32.xlu0 %v4890, 52
      %v6039 = vpop.permute.xlu0 %6038
      %6040 = vrot.lane.b32.xlu0 %v4892, 52
      %v6041 = vpop.permute.xlu0 %6040
      %6042 = vrot.lane.b32.xlu0 %v4895, 52
      %v6043 = vpop.permute.xlu0 %6042
      %6044 = vrot.lane.b32.xlu0 %v4897, 52
      %v6045 = vpop.permute.xlu0 %6044
      %6046 = vrot.lane.b32.xlu0 %v4900, 52
      %v6047 = vpop.permute.xlu0 %6046
      %6048 = vrot.lane.b32.xlu0 %v4902, 52
      %v6049 = vpop.permute.xlu0 %6048
      %6050 = vrot.lane.b32.xlu0 %v4905, 52
      %v6051 = vpop.permute.xlu0 %6050
      %6052 = vrot.lane.b32.xlu0 %v4907, 52
      %v6053 = vpop.permute.xlu0 %6052
      %6054 = vrot.lane.b32.xlu0 %v4910, 52
      %v6055 = vpop.permute.xlu0 %6054
      %6056 = vrot.lane.b32.xlu0 %v4912, 52
      %v6057 = vpop.permute.xlu0 %6056
      %6058 = vrot.lane.b32.xlu0 %v4915, 52
      %v6059 = vpop.permute.xlu0 %6058
      %6060 = vrot.lane.b32.xlu0 %v4917, 52
      %v6061 = vpop.permute.xlu0 %6060
      %6062 = vrot.lane.b32.xlu0 %v4920, 52
      %v6063 = vpop.permute.xlu0 %6062
      %6064 = vrot.lane.b32.xlu0 %v4922, 52
      %v6065 = vpop.permute.xlu0 %6064
      %6066 = vrot.lane.b32.xlu0 %v4925, 52
      %v6067 = vpop.permute.xlu0 %6066
      %6068 = vrot.lane.b32.xlu0 %v4927, 52
      %v6069 = vpop.permute.xlu0 %6068
      %6070 = vrot.lane.b32.xlu0 %v4930, 52
      %v6071 = vpop.permute.xlu0 %6070
      %6072 = vrot.lane.b32.xlu0 %v4932, 52
      %v6073 = vpop.permute.xlu0 %6072
      %6074 = vrot.lane.b32.xlu0 %v4935, 52
      %v6075 = vpop.permute.xlu0 %6074
      %6076 = vrot.lane.b32.xlu0 %v4937, 52
      %v6077 = vpop.permute.xlu0 %6076
      %6078 = vrot.lane.b32.xlu0 %v4940, 52
      %v6079 = vpop.permute.xlu0 %6078
      %6080 = vrot.lane.b32.xlu0 %v4942, 52
      %v6081 = vpop.permute.xlu0 %6080
      %6082 = vrot.lane.b32.xlu0 %v4945, 52
      %v6083 = vpop.permute.xlu0 %6082
      %6084 = vrot.lane.b32.xlu0 %v4947, 52
      %v6085 = vpop.permute.xlu0 %6084
      %6086 = vrot.lane.b32.xlu0 %v4950, 52
      %v6087 = vpop.permute.xlu0 %6086
      %6088 = vrot.lane.b32.xlu0 %v4952, 52
      %v6089 = vpop.permute.xlu0 %6088
      %6090 = vrot.lane.b32.xlu0 %v5528, 52
      %v6091 = vpop.permute.xlu0 %6090
      %6092 = vrot.lane.b32.xlu0 %v5530, 52
      %v6093 = vpop.permute.xlu0 %6092
      %6094 = vrot.lane.b32.xlu0 %v6031, 52
      %v6095 = vpop.permute.xlu0 %6094
      %6096 = vrot.lane.b32.xlu0 %v6033, 52
      %v6097 = vpop.permute.xlu0 %6096
      %v6130 = vrot.slane %v4463, 4
      %v6131 = vrot.slane %v4464, 4
      %v6132 = vsel %vm3722, %v6130, %v6131
      %v6133 = vrot.slane %v4465, 4
      %v6134 = vsel %vm3722, %v6131, %v6133
      %6135 = vrot.lane.b32.xlu0 %v5061, 56
      %v6136 = vpop.permute.xlu0 %6135
      %6137 = vrot.lane.b32.xlu0 %v5063, 56
      %v6138 = vpop.permute.xlu0 %6137
      %6139 = vrot.lane.b32.xlu0 %v5066, 56
      %v6140 = vpop.permute.xlu0 %6139
      %6141 = vrot.lane.b32.xlu0 %v5068, 56
      %v6142 = vpop.permute.xlu0 %6141
      %6143 = vrot.lane.b32.xlu0 %v5071, 56
      %v6144 = vpop.permute.xlu0 %6143
      %6145 = vrot.lane.b32.xlu0 %v5073, 56
      %v6146 = vpop.permute.xlu0 %6145
      %6147 = vrot.lane.b32.xlu0 %v5076, 56
      %v6148 = vpop.permute.xlu0 %6147
      %6149 = vrot.lane.b32.xlu0 %v5078, 56
      %v6150 = vpop.permute.xlu0 %6149
      %6151 = vrot.lane.b32.xlu0 %v5081, 56
      %v6152 = vpop.permute.xlu0 %6151
      %6153 = vrot.lane.b32.xlu0 %v5083, 56
      %v6154 = vpop.permute.xlu0 %6153
      %6155 = vrot.lane.b32.xlu0 %v5086, 56
      %v6156 = vpop.permute.xlu0 %6155
      %6157 = vrot.lane.b32.xlu0 %v5088, 56
      %v6158 = vpop.permute.xlu0 %6157
      %6159 = vrot.lane.b32.xlu0 %v5091, 56
      %v6160 = vpop.permute.xlu0 %6159
      %6161 = vrot.lane.b32.xlu0 %v5093, 56
      %v6162 = vpop.permute.xlu0 %6161
      %6163 = vrot.lane.b32.xlu0 %v5096, 56
      %v6164 = vpop.permute.xlu0 %6163
      %6165 = vrot.lane.b32.xlu0 %v5098, 56
      %v6166 = vpop.permute.xlu0 %6165
      %6167 = vrot.lane.b32.xlu0 %v5101, 56
      %v6168 = vpop.permute.xlu0 %6167
      %6169 = vrot.lane.b32.xlu0 %v5103, 56
      %v6170 = vpop.permute.xlu0 %6169
      %6171 = vrot.lane.b32.xlu0 %v5106, 56
      %v6172 = vpop.permute.xlu0 %6171
      %6173 = vrot.lane.b32.xlu0 %v5108, 56
      %v6174 = vpop.permute.xlu0 %6173
      %6175 = vrot.lane.b32.xlu0 %v5111, 56
      %v6176 = vpop.permute.xlu0 %6175
      %6177 = vrot.lane.b32.xlu0 %v5113, 56
      %v6178 = vpop.permute.xlu0 %6177
      %6179 = vrot.lane.b32.xlu0 %v5116, 56
      %v6180 = vpop.permute.xlu0 %6179
      %6181 = vrot.lane.b32.xlu0 %v5118, 56
      %v6182 = vpop.permute.xlu0 %6181
      %6183 = vrot.lane.b32.xlu0 %v5121, 56
      %v6184 = vpop.permute.xlu0 %6183
      %6185 = vrot.lane.b32.xlu0 %v5123, 56
      %v6186 = vpop.permute.xlu0 %6185
      %6187 = vrot.lane.b32.xlu0 %v5126, 56
      %v6188 = vpop.permute.xlu0 %6187
      %6189 = vrot.lane.b32.xlu0 %v5128, 56
      %v6190 = vpop.permute.xlu0 %6189
      %6191 = vrot.lane.b32.xlu0 %v5629, 56
      %v6192 = vpop.permute.xlu0 %6191
      %6193 = vrot.lane.b32.xlu0 %v5631, 56
      %v6194 = vpop.permute.xlu0 %6193
      %6195 = vrot.lane.b32.xlu0 %v6132, 56
      %v6196 = vpop.permute.xlu0 %6195
      %6197 = vrot.lane.b32.xlu0 %v6134, 56
      %v6198 = vpop.permute.xlu0 %6197
      %6233 = vrot.lane.b32.xlu0 %v4421, 60
      %v6234 = vpop.permute.xlu0 %6233
      %6235 = vrot.lane.b32.xlu0 %v4422, 60
      %v6236 = vpop.permute.xlu0 %6235
      %6237 = vrot.lane.b32.xlu0 %v4424, 60
      %v6238 = vpop.permute.xlu0 %6237
      %6239 = vrot.lane.b32.xlu0 %v4425, 60
      %v6240 = vpop.permute.xlu0 %6239
      %6241 = vrot.lane.b32.xlu0 %v4427, 60
      %v6242 = vpop.permute.xlu0 %6241
      %6243 = vrot.lane.b32.xlu0 %v4428, 60
      %v6244 = vpop.permute.xlu0 %6243
      %6245 = vrot.lane.b32.xlu0 %v4430, 60
      %v6246 = vpop.permute.xlu0 %6245
      %6247 = vrot.lane.b32.xlu0 %v4431, 60
      %v6248 = vpop.permute.xlu0 %6247
      %6249 = vrot.lane.b32.xlu0 %v4433, 60
      %v6250 = vpop.permute.xlu0 %6249
      %6251 = vrot.lane.b32.xlu0 %v4434, 60
      %v6252 = vpop.permute.xlu0 %6251
      %6253 = vrot.lane.b32.xlu0 %v4436, 60
      %v6254 = vpop.permute.xlu0 %6253
      %6255 = vrot.lane.b32.xlu0 %v4437, 60
      %v6256 = vpop.permute.xlu0 %6255
      %6257 = vrot.lane.b32.xlu0 %v4439, 60
      %v6258 = vpop.permute.xlu0 %6257
      %6259 = vrot.lane.b32.xlu0 %v4440, 60
      %v6260 = vpop.permute.xlu0 %6259
      %6261 = vrot.lane.b32.xlu0 %v4442, 60
      %v6262 = vpop.permute.xlu0 %6261
      %6263 = vrot.lane.b32.xlu0 %v4443, 60
      %v6264 = vpop.permute.xlu0 %6263
      %6265 = vrot.lane.b32.xlu0 %v4445, 60
      %v6266 = vpop.permute.xlu0 %6265
      %6267 = vrot.lane.b32.xlu0 %v4446, 60
      %v6268 = vpop.permute.xlu0 %6267
      %6269 = vrot.lane.b32.xlu0 %v4448, 60
      %v6270 = vpop.permute.xlu0 %6269
      %6271 = vrot.lane.b32.xlu0 %v4449, 60
      %v6272 = vpop.permute.xlu0 %6271
      %6273 = vrot.lane.b32.xlu0 %v4451, 60
      %v6274 = vpop.permute.xlu0 %6273
      %6275 = vrot.lane.b32.xlu0 %v4452, 60
      %v6276 = vpop.permute.xlu0 %6275
      %6277 = vrot.lane.b32.xlu0 %v4454, 60
      %v6278 = vpop.permute.xlu0 %6277
      %6279 = vrot.lane.b32.xlu0 %v4455, 60
      %v6280 = vpop.permute.xlu0 %6279
      %6281 = vrot.lane.b32.xlu0 %v4457, 60
      %v6282 = vpop.permute.xlu0 %6281
      %6283 = vrot.lane.b32.xlu0 %v4458, 60
      %v6284 = vpop.permute.xlu0 %6283
      %6285 = vrot.lane.b32.xlu0 %v4460, 60
      %v6286 = vpop.permute.xlu0 %6285
      %6287 = vrot.lane.b32.xlu0 %v4461, 60
      %v6288 = vpop.permute.xlu0 %6287
      %6289 = vrot.lane.b32.xlu0 %v4463, 60
      %v6290 = vpop.permute.xlu0 %6289
      %6291 = vrot.lane.b32.xlu0 %v4464, 60
      %v6292 = vpop.permute.xlu0 %6291
      %6293 = vrot.lane.b32.xlu0 %v4466, 60
      %v6294 = vpop.permute.xlu0 %6293
      %6295 = vrot.lane.b32.xlu0 %v4467, 60
      %v6296 = vpop.permute.xlu0 %6295
      %v6329 = vsel %vm1346, %v4412, %v4601
      %v6330 = vsel %vm1346, %v4413, %v4603
      %v6331 = vsel %vm1346, %v4415, %v4605
      %v6332 = vsel %vm1346, %v4416, %v4607
      %v6333 = vsel %vm1346, %v4418, %v4609
      %v6334 = vsel %vm1346, %v4419, %v4611
      %v6335 = vsel %vm1346, %v4421, %v4613
      %v6336 = vsel %vm1346, %v4422, %v4615
      %v6337 = vsel %vm1346, %v4424, %v4617
      %v6338 = vsel %vm1346, %v4425, %v4619
      %v6339 = vsel %vm1346, %v4427, %v4621
      %v6340 = vsel %vm1346, %v4428, %v4623
      %v6341 = vsel %vm1346, %v4430, %v4625
      %v6342 = vsel %vm1346, %v4431, %v4627
      %v6343 = vsel %vm1346, %v4433, %v4629
      %v6344 = vsel %vm1346, %v4434, %v4631
      %v6345 = vsel %vm1346, %v4436, %v4633
      %v6346 = vsel %vm1346, %v4437, %v4635
      %v6347 = vsel %vm1346, %v4439, %v4637
      %v6348 = vsel %vm1346, %v4440, %v4639
      %v6349 = vsel %vm1346, %v4442, %v4641
      %v6350 = vsel %vm1346, %v4443, %v4643
      %v6351 = vsel %vm1346, %v4445, %v4645
      %v6352 = vsel %vm1346, %v4446, %v4647
      %v6353 = vsel %vm1346, %v4448, %v4649
      %v6354 = vsel %vm1346, %v4449, %v4651
      %v6355 = vsel %vm1346, %v4451, %v4653
      %v6356 = vsel %vm1346, %v4452, %v4655
      %v6357 = vsel %vm1346, %v4454, %v4657
      %v6358 = vsel %vm1346, %v4455, %v4659
      %v6359 = vsel %vm1346, %v4457, %v4661
      %v6360 = vsel %vm1346, %v4458, %v4663
      %v6361 = vsel %vm1524, %v6329, %v4777
      %v6362 = vsel %vm1524, %v6330, %v4779
      %v6363 = vsel %vm1524, %v6331, %v4781
      %v6364 = vsel %vm1524, %v6332, %v4783
      %v6365 = vsel %vm1524, %v6333, %v4785
      %v6366 = vsel %vm1524, %v6334, %v4787
      %v6367 = vsel %vm1524, %v6335, %v4789
      %v6368 = vsel %vm1524, %v6336, %v4791
      %v6369 = vsel %vm1524, %v6337, %v4793
      %v6370 = vsel %vm1524, %v6338, %v4795
      %v6371 = vsel %vm1524, %v6339, %v4797
      %v6372 = vsel %vm1524, %v6340, %v4799
      %v6373 = vsel %vm1524, %v6341, %v4801
      %v6374 = vsel %vm1524, %v6342, %v4803
      %v6375 = vsel %vm1524, %v6343, %v4805
      %v6376 = vsel %vm1524, %v6344, %v4807
      %v6377 = vsel %vm1524, %v6345, %v4809
      %v6378 = vsel %vm1524, %v6346, %v4811
      %v6379 = vsel %vm1524, %v6347, %v4813
      %v6380 = vsel %vm1524, %v6348, %v4815
      %v6381 = vsel %vm1524, %v6349, %v4817
      %v6382 = vsel %vm1524, %v6350, %v4819
      %v6383 = vsel %vm1524, %v6351, %v4821
      %v6384 = vsel %vm1524, %v6352, %v4823
      %v6385 = vsel %vm1524, %v6353, %v4825
      %v6386 = vsel %vm1524, %v6354, %v4827
      %v6387 = vsel %vm1524, %v6355, %v4829
      %v6388 = vsel %vm1524, %v6356, %v4831
      %v6389 = vsel %vm1524, %v6357, %v4833
      %v6390 = vsel %vm1524, %v6358, %v4835
      %v6391 = vsel %vm1524, %v6359, %v4837
      %v6392 = vsel %vm1524, %v6360, %v4839
      %v6393 = vsel %vm3422, %v6361, %v4954
      %v6394 = vsel %vm3422, %v6362, %v4956
      %v6395 = vsel %vm3422, %v6363, %v4958
      %v6396 = vsel %vm3422, %v6364, %v4960
      %v6397 = vsel %vm3422, %v6365, %v4962
      %v6398 = vsel %vm3422, %v6366, %v4964
      %v6399 = vsel %vm3422, %v6367, %v4966
      %v6400 = vsel %vm3422, %v6368, %v4968
      %v6401 = vsel %vm3422, %v6369, %v4970
      %v6402 = vsel %vm3422, %v6370, %v4972
      %v6403 = vsel %vm3422, %v6371, %v4974
      %v6404 = vsel %vm3422, %v6372, %v4976
      %v6405 = vsel %vm3422, %v6373, %v4978
      %v6406 = vsel %vm3422, %v6374, %v4980
      %v6407 = vsel %vm3422, %v6375, %v4982
      %v6408 = vsel %vm3422, %v6376, %v4984
      %v6409 = vsel %vm3422, %v6377, %v4986
      %v6410 = vsel %vm3422, %v6378, %v4988
      %v6411 = vsel %vm3422, %v6379, %v4990
      %v6412 = vsel %vm3422, %v6380, %v4992
      %v6413 = vsel %vm3422, %v6381, %v4994
      %v6414 = vsel %vm3422, %v6382, %v4996
      %v6415 = vsel %vm3422, %v6383, %v4998
      %v6416 = vsel %vm3422, %v6384, %v5000
      %v6417 = vsel %vm3422, %v6385, %v5002
      %v6418 = vsel %vm3422, %v6386, %v5004
      %v6419 = vsel %vm3422, %v6387, %v5006
      %v6420 = vsel %vm3422, %v6388, %v5008
      %v6421 = vsel %vm3422, %v6389, %v5010
      %v6422 = vsel %vm3422, %v6390, %v5012
      %v6423 = vsel %vm3422, %v6391, %v5014
      %v6424 = vsel %vm3422, %v6392, %v5016
      %v6425 = vsel %vm3455, %v6393, %v5130
      %v6426 = vsel %vm3455, %v6394, %v5132
      %v6427 = vsel %vm3455, %v6395, %v5134
      %v6428 = vsel %vm3455, %v6396, %v5136
      %v6429 = vsel %vm3455, %v6397, %v5138
      %v6430 = vsel %vm3455, %v6398, %v5140
      %v6431 = vsel %vm3455, %v6399, %v5142
      %v6432 = vsel %vm3455, %v6400, %v5144
      %v6433 = vsel %vm3455, %v6401, %v5146
      %v6434 = vsel %vm3455, %v6402, %v5148
      %v6435 = vsel %vm3455, %v6403, %v5150
      %v6436 = vsel %vm3455, %v6404, %v5152
      %v6437 = vsel %vm3455, %v6405, %v5154
      %v6438 = vsel %vm3455, %v6406, %v5156
      %v6439 = vsel %vm3455, %v6407, %v5158
      %v6440 = vsel %vm3455, %v6408, %v5160
      %v6441 = vsel %vm3455, %v6409, %v5162
      %v6442 = vsel %vm3455, %v6410, %v5164
      %v6443 = vsel %vm3455, %v6411, %v5166
      %v6444 = vsel %vm3455, %v6412, %v5168
      %v6445 = vsel %vm3455, %v6413, %v5170
      %v6446 = vsel %vm3455, %v6414, %v5172
      %v6447 = vsel %vm3455, %v6415, %v5174
      %v6448 = vsel %vm3455, %v6416, %v5176
      %v6449 = vsel %vm3455, %v6417, %v5178
      %v6450 = vsel %vm3455, %v6418, %v5180
      %v6451 = vsel %vm3455, %v6419, %v5182
      %v6452 = vsel %vm3455, %v6420, %v5184
      %v6453 = vsel %vm3455, %v6421, %v5186
      %v6454 = vsel %vm3455, %v6422, %v5188
      %v6455 = vsel %vm3455, %v6423, %v5190
      %v6456 = vsel %vm3455, %v6424, %v5192
      %v6457 = vsel %vm3488, %v6425, %v5228
      %v6458 = vsel %vm3488, %v6426, %v5230
      %v6459 = vsel %vm3488, %v6427, %v5232
      %v6460 = vsel %vm3488, %v6428, %v5234
      %v6461 = vsel %vm3488, %v6429, %v5236
      %v6462 = vsel %vm3488, %v6430, %v5238
      %v6463 = vsel %vm3488, %v6431, %v5240
      %v6464 = vsel %vm3488, %v6432, %v5242
      %v6465 = vsel %vm3488, %v6433, %v5244
      %v6466 = vsel %vm3488, %v6434, %v5246
      %v6467 = vsel %vm3488, %v6435, %v5248
      %v6468 = vsel %vm3488, %v6436, %v5250
      %v6469 = vsel %vm3488, %v6437, %v5252
      %v6470 = vsel %vm3488, %v6438, %v5254
      %v6471 = vsel %vm3488, %v6439, %v5256
      %v6472 = vsel %vm3488, %v6440, %v5258
      %v6473 = vsel %vm3488, %v6441, %v5260
      %v6474 = vsel %vm3488, %v6442, %v5262
      %v6475 = vsel %vm3488, %v6443, %v5264
      %v6476 = vsel %vm3488, %v6444, %v5266
      %v6477 = vsel %vm3488, %v6445, %v5268
      %v6478 = vsel %vm3488, %v6446, %v5270
      %v6479 = vsel %vm3488, %v6447, %v5272
      %v6480 = vsel %vm3488, %v6448, %v5274
      %v6481 = vsel %vm3488, %v6449, %v5276
      %v6482 = vsel %vm3488, %v6450, %v5278
      %v6483 = vsel %vm3488, %v6451, %v5280
      %v6484 = vsel %vm3488, %v6452, %v5282
      %v6485 = vsel %vm3488, %v6453, %v5284
      %v6486 = vsel %vm3488, %v6454, %v5286
      %v6487 = vsel %vm3488, %v6455, %v5288
      %v6488 = vsel %vm3488, %v6456, %v5290
      %v6489 = vsel %vm3521, %v6457, %v5330
      %v6490 = vsel %vm3521, %v6458, %v5332
      %v6491 = vsel %vm3521, %v6459, %v5334
      %v6492 = vsel %vm3521, %v6460, %v5336
      %v6493 = vsel %vm3521, %v6461, %v5338
      %v6494 = vsel %vm3521, %v6462, %v5340
      %v6495 = vsel %vm3521, %v6463, %v5342
      %v6496 = vsel %vm3521, %v6464, %v5344
      %v6497 = vsel %vm3521, %v6465, %v5346
      %v6498 = vsel %vm3521, %v6466, %v5348
      %v6499 = vsel %vm3521, %v6467, %v5350
      %v6500 = vsel %vm3521, %v6468, %v5352
      %v6501 = vsel %vm3521, %v6469, %v5354
      %v6502 = vsel %vm3521, %v6470, %v5356
      %v6503 = vsel %vm3521, %v6471, %v5358
      %v6504 = vsel %vm3521, %v6472, %v5360
      %v6505 = vsel %vm3521, %v6473, %v5362
      %v6506 = vsel %vm3521, %v6474, %v5364
      %v6507 = vsel %vm3521, %v6475, %v5366
      %v6508 = vsel %vm3521, %v6476, %v5368
      %v6509 = vsel %vm3521, %v6477, %v5370
      %v6510 = vsel %vm3521, %v6478, %v5372
      %v6511 = vsel %vm3521, %v6479, %v5374
      %v6512 = vsel %vm3521, %v6480, %v5376
      %v6513 = vsel %vm3521, %v6481, %v5378
      %v6514 = vsel %vm3521, %v6482, %v5380
      %v6515 = vsel %vm3521, %v6483, %v5382
      %v6516 = vsel %vm3521, %v6484, %v5384
      %v6517 = vsel %vm3521, %v6485, %v5386
      %v6518 = vsel %vm3521, %v6486, %v5388
      %v6519 = vsel %vm3521, %v6487, %v5390
      %v6520 = vsel %vm3521, %v6488, %v5392
      %v6521 = vsel %vm3554, %v6489, %v5431
      %v6522 = vsel %vm3554, %v6490, %v5433
      %v6523 = vsel %vm3554, %v6491, %v5435
      %v6524 = vsel %vm3554, %v6492, %v5437
      %v6525 = vsel %vm3554, %v6493, %v5439
      %v6526 = vsel %vm3554, %v6494, %v5441
      %v6527 = vsel %vm3554, %v6495, %v5443
      %v6528 = vsel %vm3554, %v6496, %v5445
      %v6529 = vsel %vm3554, %v6497, %v5447
      %v6530 = vsel %vm3554, %v6498, %v5449
      %v6531 = vsel %vm3554, %v6499, %v5451
      %v6532 = vsel %vm3554, %v6500, %v5453
      %v6533 = vsel %vm3554, %v6501, %v5455
      %v6534 = vsel %vm3554, %v6502, %v5457
      %v6535 = vsel %vm3554, %v6503, %v5459
      %v6536 = vsel %vm3554, %v6504, %v5461
      %v6537 = vsel %vm3554, %v6505, %v5463
      %v6538 = vsel %vm3554, %v6506, %v5465
      %v6539 = vsel %vm3554, %v6507, %v5467
      %v6540 = vsel %vm3554, %v6508, %v5469
      %v6541 = vsel %vm3554, %v6509, %v5471
      %v6542 = vsel %vm3554, %v6510, %v5473
      %v6543 = vsel %vm3554, %v6511, %v5475
      %v6544 = vsel %vm3554, %v6512, %v5477
      %v6545 = vsel %vm3554, %v6513, %v5479
      %v6546 = vsel %vm3554, %v6514, %v5481
      %v6547 = vsel %vm3554, %v6515, %v5483
      %v6548 = vsel %vm3554, %v6516, %v5485
      %v6549 = vsel %vm3554, %v6517, %v5487
      %v6550 = vsel %vm3554, %v6518, %v5489
      %v6551 = vsel %vm3554, %v6519, %v5491
      %v6552 = vsel %vm3554, %v6520, %v5493
      %v6553 = vsel %vm3587, %v6521, %v5532
      %v6554 = vsel %vm3587, %v6522, %v5534
      %v6555 = vsel %vm3587, %v6523, %v5536
      %v6556 = vsel %vm3587, %v6524, %v5538
      %v6557 = vsel %vm3587, %v6525, %v5540
      %v6558 = vsel %vm3587, %v6526, %v5542
      %v6559 = vsel %vm3587, %v6527, %v5544
      %v6560 = vsel %vm3587, %v6528, %v5546
      %v6561 = vsel %vm3587, %v6529, %v5548
      %v6562 = vsel %vm3587, %v6530, %v5550
      %v6563 = vsel %vm3587, %v6531, %v5552
      %v6564 = vsel %vm3587, %v6532, %v5554
      %v6565 = vsel %vm3587, %v6533, %v5556
      %v6566 = vsel %vm3587, %v6534, %v5558
      %v6567 = vsel %vm3587, %v6535, %v5560
      %v6568 = vsel %vm3587, %v6536, %v5562
      %v6569 = vsel %vm3587, %v6537, %v5564
      %v6570 = vsel %vm3587, %v6538, %v5566
      %v6571 = vsel %vm3587, %v6539, %v5568
      %v6572 = vsel %vm3587, %v6540, %v5570
      %v6573 = vsel %vm3587, %v6541, %v5572
      %v6574 = vsel %vm3587, %v6542, %v5574
      %v6575 = vsel %vm3587, %v6543, %v5576
      %v6576 = vsel %vm3587, %v6544, %v5578
      %v6577 = vsel %vm3587, %v6545, %v5580
      %v6578 = vsel %vm3587, %v6546, %v5582
      %v6579 = vsel %vm3587, %v6547, %v5584
      %v6580 = vsel %vm3587, %v6548, %v5586
      %v6581 = vsel %vm3587, %v6549, %v5588
      %v6582 = vsel %vm3587, %v6550, %v5590
      %v6583 = vsel %vm3587, %v6551, %v5592
      %v6584 = vsel %vm3587, %v6552, %v5594
      %v6585 = vsel %vm3625, %v6553, %v5633
      %v6586 = vsel %vm3625, %v6554, %v5635
      %v6587 = vsel %vm3625, %v6555, %v5637
      %v6588 = vsel %vm3625, %v6556, %v5639
      %v6589 = vsel %vm3625, %v6557, %v5641
      %v6590 = vsel %vm3625, %v6558, %v5643
      %v6591 = vsel %vm3625, %v6559, %v5645
      %v6592 = vsel %vm3625, %v6560, %v5647
      %v6593 = vsel %vm3625, %v6561, %v5649
      %v6594 = vsel %vm3625, %v6562, %v5651
      %v6595 = vsel %vm3625, %v6563, %v5653
      %v6596 = vsel %vm3625, %v6564, %v5655
      %v6597 = vsel %vm3625, %v6565, %v5657
      %v6598 = vsel %vm3625, %v6566, %v5659
      %v6599 = vsel %vm3625, %v6567, %v5661
      %v6600 = vsel %vm3625, %v6568, %v5663
      %v6601 = vsel %vm3625, %v6569, %v5665
      %v6602 = vsel %vm3625, %v6570, %v5667
      %v6603 = vsel %vm3625, %v6571, %v5669
      %v6604 = vsel %vm3625, %v6572, %v5671
      %v6605 = vsel %vm3625, %v6573, %v5673
      %v6606 = vsel %vm3625, %v6574, %v5675
      %v6607 = vsel %vm3625, %v6575, %v5677
      %v6608 = vsel %vm3625, %v6576, %v5679
      %v6609 = vsel %vm3625, %v6577, %v5681
      %v6610 = vsel %vm3625, %v6578, %v5683
      %v6611 = vsel %vm3625, %v6579, %v5685
      %v6612 = vsel %vm3625, %v6580, %v5687
      %v6613 = vsel %vm3625, %v6581, %v5689
      %v6614 = vsel %vm3625, %v6582, %v5691
      %v6615 = vsel %vm3625, %v6583, %v5693
      %v6616 = vsel %vm3625, %v6584, %v5695
      %vm6617 = vcmask 326656
      %v6618 = vsel %vm6617, %v6585, %v5731
      %v6619 = vsel %vm6617, %v6586, %v5733
      %v6620 = vsel %vm6617, %v6587, %v5735
      %v6621 = vsel %vm6617, %v6588, %v5737
      %v6622 = vsel %vm6617, %v6589, %v5739
      %v6623 = vsel %vm6617, %v6590, %v5741
      %v6624 = vsel %vm6617, %v6591, %v5743
      %v6625 = vsel %vm6617, %v6592, %v5745
      %v6626 = vsel %vm6617, %v6593, %v5747
      %v6627 = vsel %vm6617, %v6594, %v5749
      %v6628 = vsel %vm6617, %v6595, %v5751
      %v6629 = vsel %vm6617, %v6596, %v5753
      %v6630 = vsel %vm6617, %v6597, %v5755
      %v6631 = vsel %vm6617, %v6598, %v5757
      %v6632 = vsel %vm6617, %v6599, %v5759
      %v6633 = vsel %vm6617, %v6600, %v5761
      %v6634 = vsel %vm6617, %v6601, %v5763
      %v6635 = vsel %vm6617, %v6602, %v5765
      %v6636 = vsel %vm6617, %v6603, %v5767
      %v6637 = vsel %vm6617, %v6604, %v5769
      %v6638 = vsel %vm6617, %v6605, %v5771
      %v6639 = vsel %vm6617, %v6606, %v5773
      %v6640 = vsel %vm6617, %v6607, %v5775
      %v6641 = vsel %vm6617, %v6608, %v5777
      %v6642 = vsel %vm6617, %v6609, %v5779
      %v6643 = vsel %vm6617, %v6610, %v5781
      %v6644 = vsel %vm6617, %v6611, %v5783
      %v6645 = vsel %vm6617, %v6612, %v5785
      %v6646 = vsel %vm6617, %v6613, %v5787
      %v6647 = vsel %vm6617, %v6614, %v5789
      %v6648 = vsel %vm6617, %v6615, %v5791
      %v6649 = vsel %vm6617, %v6616, %v5793
      %vm6650 = vcmask 359424
      %v6651 = vsel %vm6650, %v6618, %v5833
      %v6652 = vsel %vm6650, %v6619, %v5835
      %v6653 = vsel %vm6650, %v6620, %v5837
      %v6654 = vsel %vm6650, %v6621, %v5839
      %v6655 = vsel %vm6650, %v6622, %v5841
      %v6656 = vsel %vm6650, %v6623, %v5843
      %v6657 = vsel %vm6650, %v6624, %v5845
      %v6658 = vsel %vm6650, %v6625, %v5847
      %v6659 = vsel %vm6650, %v6626, %v5849
      %v6660 = vsel %vm6650, %v6627, %v5851
      %v6661 = vsel %vm6650, %v6628, %v5853
      %v6662 = vsel %vm6650, %v6629, %v5855
      %v6663 = vsel %vm6650, %v6630, %v5857
      %v6664 = vsel %vm6650, %v6631, %v5859
      %v6665 = vsel %vm6650, %v6632, %v5861
      %v6666 = vsel %vm6650, %v6633, %v5863
      %v6667 = vsel %vm6650, %v6634, %v5865
      %v6668 = vsel %vm6650, %v6635, %v5867
      %v6669 = vsel %vm6650, %v6636, %v5869
      %v6670 = vsel %vm6650, %v6637, %v5871
      %v6671 = vsel %vm6650, %v6638, %v5873
      %v6672 = vsel %vm6650, %v6639, %v5875
      %v6673 = vsel %vm6650, %v6640, %v5877
      %v6674 = vsel %vm6650, %v6641, %v5879
      %v6675 = vsel %vm6650, %v6642, %v5881
      %v6676 = vsel %vm6650, %v6643, %v5883
      %v6677 = vsel %vm6650, %v6644, %v5885
      %v6678 = vsel %vm6650, %v6645, %v5887
      %v6679 = vsel %vm6650, %v6646, %v5889
      %v6680 = vsel %vm6650, %v6647, %v5891
      %v6681 = vsel %vm6650, %v6648, %v5893
      %v6682 = vsel %vm6650, %v6649, %v5895
      %vm6683 = vcmask 392192
      %v6684 = vsel %vm6683, %v6651, %v5934
      %v6685 = vsel %vm6683, %v6652, %v5936
      %v6686 = vsel %vm6683, %v6653, %v5938
      %v6687 = vsel %vm6683, %v6654, %v5940
      %v6688 = vsel %vm6683, %v6655, %v5942
      %v6689 = vsel %vm6683, %v6656, %v5944
      %v6690 = vsel %vm6683, %v6657, %v5946
      %v6691 = vsel %vm6683, %v6658, %v5948
      %v6692 = vsel %vm6683, %v6659, %v5950
      %v6693 = vsel %vm6683, %v6660, %v5952
      %v6694 = vsel %vm6683, %v6661, %v5954
      %v6695 = vsel %vm6683, %v6662, %v5956
      %v6696 = vsel %vm6683, %v6663, %v5958
      %v6697 = vsel %vm6683, %v6664, %v5960
      %v6698 = vsel %vm6683, %v6665, %v5962
      %v6699 = vsel %vm6683, %v6666, %v5964
      %v6700 = vsel %vm6683, %v6667, %v5966
      %v6701 = vsel %vm6683, %v6668, %v5968
      %v6702 = vsel %vm6683, %v6669, %v5970
      %v6703 = vsel %vm6683, %v6670, %v5972
      %v6704 = vsel %vm6683, %v6671, %v5974
      %v6705 = vsel %vm6683, %v6672, %v5976
      %v6706 = vsel %vm6683, %v6673, %v5978
      %v6707 = vsel %vm6683, %v6674, %v5980
      %v6708 = vsel %vm6683, %v6675, %v5982
      %v6709 = vsel %vm6683, %v6676, %v5984
      %v6710 = vsel %vm6683, %v6677, %v5986
      %v6711 = vsel %vm6683, %v6678, %v5988
      %v6712 = vsel %vm6683, %v6679, %v5990
      %v6713 = vsel %vm6683, %v6680, %v5992
      %v6714 = vsel %vm6683, %v6681, %v5994
      %v6715 = vsel %vm6683, %v6682, %v5996
      %vm6716 = vcmask 424960
      %v6717 = vsel %vm6716, %v6684, %v6035
      %v6718 = vsel %vm6716, %v6685, %v6037
      %v6719 = vsel %vm6716, %v6686, %v6039
      %v6720 = vsel %vm6716, %v6687, %v6041
      %v6721 = vsel %vm6716, %v6688, %v6043
      %v6722 = vsel %vm6716, %v6689, %v6045
      %v6723 = vsel %vm6716, %v6690, %v6047
      %v6724 = vsel %vm6716, %v6691, %v6049
      %v6725 = vsel %vm6716, %v6692, %v6051
      %v6726 = vsel %vm6716, %v6693, %v6053
      %v6727 = vsel %vm6716, %v6694, %v6055
      %v6728 = vsel %vm6716, %v6695, %v6057
      %v6729 = vsel %vm6716, %v6696, %v6059
      %v6730 = vsel %vm6716, %v6697, %v6061
      %v6731 = vsel %vm6716, %v6698, %v6063
      %v6732 = vsel %vm6716, %v6699, %v6065
      %v6733 = vsel %vm6716, %v6700, %v6067
      %v6734 = vsel %vm6716, %v6701, %v6069
      %v6735 = vsel %vm6716, %v6702, %v6071
      %v6736 = vsel %vm6716, %v6703, %v6073
      %v6737 = vsel %vm6716, %v6704, %v6075
      %v6738 = vsel %vm6716, %v6705, %v6077
      %v6739 = vsel %vm6716, %v6706, %v6079
      %v6740 = vsel %vm6716, %v6707, %v6081
      %v6741 = vsel %vm6716, %v6708, %v6083
      %v6742 = vsel %vm6716, %v6709, %v6085
      %v6743 = vsel %vm6716, %v6710, %v6087
      %v6744 = vsel %vm6716, %v6711, %v6089
      %v6745 = vsel %vm6716, %v6712, %v6091
      %v6746 = vsel %vm6716, %v6713, %v6093
      %v6747 = vsel %vm6716, %v6714, %v6095
      %v6748 = vsel %vm6716, %v6715, %v6097
      %vm6749 = vcmask 457728
      %v6750 = vsel %vm6749, %v6717, %v6136
      %v6751 = vsel %vm6749, %v6718, %v6138
      %v6752 = vsel %vm6749, %v6719, %v6140
      %v6753 = vsel %vm6749, %v6720, %v6142
      %v6754 = vsel %vm6749, %v6721, %v6144
      %v6755 = vsel %vm6749, %v6722, %v6146
      %v6756 = vsel %vm6749, %v6723, %v6148
      %v6757 = vsel %vm6749, %v6724, %v6150
      %v6758 = vsel %vm6749, %v6725, %v6152
      %v6759 = vsel %vm6749, %v6726, %v6154
      %v6760 = vsel %vm6749, %v6727, %v6156
      %v6761 = vsel %vm6749, %v6728, %v6158
      %v6762 = vsel %vm6749, %v6729, %v6160
      %v6763 = vsel %vm6749, %v6730, %v6162
      %v6764 = vsel %vm6749, %v6731, %v6164
      %v6765 = vsel %vm6749, %v6732, %v6166
      %v6766 = vsel %vm6749, %v6733, %v6168
      %v6767 = vsel %vm6749, %v6734, %v6170
      %v6768 = vsel %vm6749, %v6735, %v6172
      %v6769 = vsel %vm6749, %v6736, %v6174
      %v6770 = vsel %vm6749, %v6737, %v6176
      %v6771 = vsel %vm6749, %v6738, %v6178
      %v6772 = vsel %vm6749, %v6739, %v6180
      %v6773 = vsel %vm6749, %v6740, %v6182
      %v6774 = vsel %vm6749, %v6741, %v6184
      %v6775 = vsel %vm6749, %v6742, %v6186
      %v6776 = vsel %vm6749, %v6743, %v6188
      %v6777 = vsel %vm6749, %v6744, %v6190
      %v6778 = vsel %vm6749, %v6745, %v6192
      %v6779 = vsel %vm6749, %v6746, %v6194
      %v6780 = vsel %vm6749, %v6747, %v6196
      %v6781 = vsel %vm6749, %v6748, %v6198
      %vm6782 = vcmask 490496
      %v6783 = vsel %vm6782, %v6750, %v6234
      %v6784 = vsel %vm6782, %v6751, %v6236
      %v6785 = vsel %vm6782, %v6752, %v6238
      %v6786 = vsel %vm6782, %v6753, %v6240
      %v6787 = vsel %vm6782, %v6754, %v6242
      %v6788 = vsel %vm6782, %v6755, %v6244
      %v6789 = vsel %vm6782, %v6756, %v6246
      %v6790 = vsel %vm6782, %v6757, %v6248
      %v6791 = vsel %vm6782, %v6758, %v6250
      %v6792 = vsel %vm6782, %v6759, %v6252
      %v6793 = vsel %vm6782, %v6760, %v6254
      %v6794 = vsel %vm6782, %v6761, %v6256
      %v6795 = vsel %vm6782, %v6762, %v6258
      %v6796 = vsel %vm6782, %v6763, %v6260
      %v6797 = vsel %vm6782, %v6764, %v6262
      %v6798 = vsel %vm6782, %v6765, %v6264
      %v6799 = vsel %vm6782, %v6766, %v6266
      %v6800 = vsel %vm6782, %v6767, %v6268
      %v6801 = vsel %vm6782, %v6768, %v6270
      %v6802 = vsel %vm6782, %v6769, %v6272
      %v6803 = vsel %vm6782, %v6770, %v6274
      %v6804 = vsel %vm6782, %v6771, %v6276
      %v6805 = vsel %vm6782, %v6772, %v6278
      %v6806 = vsel %vm6782, %v6773, %v6280
      %v6807 = vsel %vm6782, %v6774, %v6282
      %v6808 = vsel %vm6782, %v6775, %v6284
      %v6809 = vsel %vm6782, %v6776, %v6286
      %v6810 = vsel %vm6782, %v6777, %v6288
      %v6811 = vsel %vm6782, %v6778, %v6290
      %v6812 = vsel %vm6782, %v6779, %v6292
      %v6813 = vsel %vm6782, %v6780, %v6294
      %v6814 = vsel %vm6782, %v6781, %v6296
      %v6816 = vrot.slane %v4466, 1
      %v6817 = vrot.slane %v4467, 1
      %v6818 = vsel %vm655, %v6816, %v6817
      %v6819 = vrot.slane %v4468, 1
      %v6820 = vsel %vm655, %v6817, %v6819
      %6821 = vrot.lane.b32.xlu0 %v4538, 4
      %v6822 = vpop.permute.xlu0 %6821
      %6823 = vrot.lane.b32.xlu0 %v4543, 4
      %v6824 = vpop.permute.xlu0 %6823
      %6825 = vrot.lane.b32.xlu0 %v4548, 4
      %v6826 = vpop.permute.xlu0 %6825
      %6827 = vrot.lane.b32.xlu0 %v4553, 4
      %v6828 = vpop.permute.xlu0 %6827
      %6829 = vrot.lane.b32.xlu0 %v4558, 4
      %v6830 = vpop.permute.xlu0 %6829
      %6831 = vrot.lane.b32.xlu0 %v4563, 4
      %v6832 = vpop.permute.xlu0 %6831
      %6833 = vrot.lane.b32.xlu0 %v4568, 4
      %v6834 = vpop.permute.xlu0 %6833
      %6835 = vrot.lane.b32.xlu0 %v4573, 4
      %v6836 = vpop.permute.xlu0 %6835
      %6837 = vrot.lane.b32.xlu0 %v4578, 4
      %v6838 = vpop.permute.xlu0 %6837
      %6839 = vrot.lane.b32.xlu0 %v4583, 4
      %v6840 = vpop.permute.xlu0 %6839
      %6841 = vrot.lane.b32.xlu0 %v4588, 4
      %v6842 = vpop.permute.xlu0 %6841
      %6843 = vrot.lane.b32.xlu0 %v4593, 4
      %v6844 = vpop.permute.xlu0 %6843
      %6845 = vrot.lane.b32.xlu0 %v4598, 4
      %v6846 = vpop.permute.xlu0 %6845
      %6847 = vrot.lane.b32.xlu0 %v5326, 4
      %v6848 = vpop.permute.xlu0 %6847
      %6849 = vrot.lane.b32.xlu0 %v5328, 4
      %v6850 = vpop.permute.xlu0 %6849
      %6851 = vrot.lane.b32.xlu0 %v5327, 4
      %v6852 = vpop.permute.xlu0 %6851
      %6853 = vrot.lane.b32.xlu0 %v5829, 4
      %v6854 = vpop.permute.xlu0 %6853
      %6855 = vrot.lane.b32.xlu0 %v5831, 4
      %v6856 = vpop.permute.xlu0 %6855
      %6857 = vrot.lane.b32.xlu0 %v5830, 4
      %v6858 = vpop.permute.xlu0 %6857
      %6859 = vrot.lane.b32.xlu0 %v6818, 4
      %v6860 = vpop.permute.xlu0 %6859
      %6861 = vrot.lane.b32.xlu0 %v6820, 4
      %v6862 = vpop.permute.xlu0 %6861
      %6863 = vrot.lane.b32.xlu0 %v6819, 4
      %v6864 = vpop.permute.xlu0 %6863
      %v6887 = vrot.slane %v4466, 2
      %v6888 = vrot.slane %v4467, 2
      %v6889 = vsel %vm2579, %v6887, %v6888
      %v6890 = vrot.slane %v4468, 2
      %v6891 = vsel %vm2579, %v6888, %v6890
      %6892 = vrot.lane.b32.xlu0 %v4714, 8
      %v6893 = vpop.permute.xlu0 %6892
      %6894 = vrot.lane.b32.xlu0 %v4719, 8
      %v6895 = vpop.permute.xlu0 %6894
      %6896 = vrot.lane.b32.xlu0 %v4724, 8
      %v6897 = vpop.permute.xlu0 %6896
      %6898 = vrot.lane.b32.xlu0 %v4729, 8
      %v6899 = vpop.permute.xlu0 %6898
      %6900 = vrot.lane.b32.xlu0 %v4734, 8
      %v6901 = vpop.permute.xlu0 %6900
      %6902 = vrot.lane.b32.xlu0 %v4739, 8
      %v6903 = vpop.permute.xlu0 %6902
      %6904 = vrot.lane.b32.xlu0 %v4744, 8
      %v6905 = vpop.permute.xlu0 %6904
      %6906 = vrot.lane.b32.xlu0 %v4749, 8
      %v6907 = vpop.permute.xlu0 %6906
      %6908 = vrot.lane.b32.xlu0 %v4754, 8
      %v6909 = vpop.permute.xlu0 %6908
      %6910 = vrot.lane.b32.xlu0 %v4759, 8
      %v6911 = vpop.permute.xlu0 %6910
      %6912 = vrot.lane.b32.xlu0 %v4764, 8
      %v6913 = vpop.permute.xlu0 %6912
      %6914 = vrot.lane.b32.xlu0 %v4769, 8
      %v6915 = vpop.permute.xlu0 %6914
      %6916 = vrot.lane.b32.xlu0 %v4774, 8
      %v6917 = vpop.permute.xlu0 %6916
      %6918 = vrot.lane.b32.xlu0 %v5427, 8
      %v6919 = vpop.permute.xlu0 %6918
      %6920 = vrot.lane.b32.xlu0 %v5429, 8
      %v6921 = vpop.permute.xlu0 %6920
      %6922 = vrot.lane.b32.xlu0 %v5428, 8
      %v6923 = vpop.permute.xlu0 %6922
      %6924 = vrot.lane.b32.xlu0 %v5930, 8
      %v6925 = vpop.permute.xlu0 %6924
      %6926 = vrot.lane.b32.xlu0 %v5932, 8
      %v6927 = vpop.permute.xlu0 %6926
      %6928 = vrot.lane.b32.xlu0 %v5931, 8
      %v6929 = vpop.permute.xlu0 %6928
      %6930 = vrot.lane.b32.xlu0 %v6889, 8
      %v6931 = vpop.permute.xlu0 %6930
      %6932 = vrot.lane.b32.xlu0 %v6891, 8
      %v6933 = vpop.permute.xlu0 %6932
      %6934 = vrot.lane.b32.xlu0 %v6890, 8
      %v6935 = vpop.permute.xlu0 %6934
      %v6958 = vrot.slane %v4466, 3
      %v6959 = vrot.slane %v4467, 3
      %v6960 = vsel %vm4872, %v6958, %v6959
      %v6961 = vrot.slane %v4468, 3
      %v6962 = vsel %vm4872, %v6959, %v6961
      %6963 = vrot.lane.b32.xlu0 %v4891, 12
      %v6964 = vpop.permute.xlu0 %6963
      %6965 = vrot.lane.b32.xlu0 %v4896, 12
      %v6966 = vpop.permute.xlu0 %6965
      %6967 = vrot.lane.b32.xlu0 %v4901, 12
      %v6968 = vpop.permute.xlu0 %6967
      %6969 = vrot.lane.b32.xlu0 %v4906, 12
      %v6970 = vpop.permute.xlu0 %6969
      %6971 = vrot.lane.b32.xlu0 %v4911, 12
      %v6972 = vpop.permute.xlu0 %6971
      %6973 = vrot.lane.b32.xlu0 %v4916, 12
      %v6974 = vpop.permute.xlu0 %6973
      %6975 = vrot.lane.b32.xlu0 %v4921, 12
      %v6976 = vpop.permute.xlu0 %6975
      %6977 = vrot.lane.b32.xlu0 %v4926, 12
      %v6978 = vpop.permute.xlu0 %6977
      %6979 = vrot.lane.b32.xlu0 %v4931, 12
      %v6980 = vpop.permute.xlu0 %6979
      %6981 = vrot.lane.b32.xlu0 %v4936, 12
      %v6982 = vpop.permute.xlu0 %6981
      %6983 = vrot.lane.b32.xlu0 %v4941, 12
      %v6984 = vpop.permute.xlu0 %6983
      %6985 = vrot.lane.b32.xlu0 %v4946, 12
      %v6986 = vpop.permute.xlu0 %6985
      %6987 = vrot.lane.b32.xlu0 %v4951, 12
      %v6988 = vpop.permute.xlu0 %6987
      %6989 = vrot.lane.b32.xlu0 %v5528, 12
      %v6990 = vpop.permute.xlu0 %6989
      %6991 = vrot.lane.b32.xlu0 %v5530, 12
      %v6992 = vpop.permute.xlu0 %6991
      %6993 = vrot.lane.b32.xlu0 %v5529, 12
      %v6994 = vpop.permute.xlu0 %6993
      %6995 = vrot.lane.b32.xlu0 %v6031, 12
      %v6996 = vpop.permute.xlu0 %6995
      %6997 = vrot.lane.b32.xlu0 %v6033, 12
      %v6998 = vpop.permute.xlu0 %6997
      %6999 = vrot.lane.b32.xlu0 %v6032, 12
      %v7000 = vpop.permute.xlu0 %6999
      %7001 = vrot.lane.b32.xlu0 %v6960, 12
      %v7002 = vpop.permute.xlu0 %7001
      %7003 = vrot.lane.b32.xlu0 %v6962, 12
      %v7004 = vpop.permute.xlu0 %7003
      %7005 = vrot.lane.b32.xlu0 %v6961, 12
      %v7006 = vpop.permute.xlu0 %7005
      %v7031 = vrot.slane %v4424, 7
      %v7032 = vrot.slane %v4425, 7
      %v7033 = vsel %vm446, %v7031, %v7032
      %v7034 = vrot.slane %v4427, 7
      %v7035 = vrot.slane %v4428, 7
      %v7036 = vsel %vm446, %v7034, %v7035
      %v7037 = vrot.slane %v4430, 7
      %v7038 = vrot.slane %v4431, 7
      %v7039 = vsel %vm446, %v7037, %v7038
      %v7040 = vrot.slane %v4433, 7
      %v7041 = vrot.slane %v4434, 7
      %v7042 = vsel %vm446, %v7040, %v7041
      %v7043 = vrot.slane %v4436, 7
      %v7044 = vrot.slane %v4437, 7
      %v7045 = vsel %vm446, %v7043, %v7044
      %v7046 = vrot.slane %v4439, 7
      %v7047 = vrot.slane %v4440, 7
      %v7048 = vsel %vm446, %v7046, %v7047
      %v7049 = vrot.slane %v4442, 7
      %v7050 = vrot.slane %v4443, 7
      %v7051 = vsel %vm446, %v7049, %v7050
      %v7052 = vrot.slane %v4445, 7
      %v7053 = vrot.slane %v4446, 7
      %v7054 = vsel %vm446, %v7052, %v7053
      %v7055 = vrot.slane %v4448, 7
      %v7056 = vrot.slane %v4449, 7
      %v7057 = vsel %vm446, %v7055, %v7056
      %v7058 = vrot.slane %v4451, 7
      %v7059 = vrot.slane %v4452, 7
      %v7060 = vsel %vm446, %v7058, %v7059
      %v7061 = vrot.slane %v4454, 7
      %v7062 = vrot.slane %v4455, 7
      %v7063 = vsel %vm446, %v7061, %v7062
      %v7064 = vrot.slane %v4457, 7
      %v7065 = vrot.slane %v4458, 7
      %v7066 = vsel %vm446, %v7064, %v7065
      %v7067 = vrot.slane %v4460, 7
      %v7068 = vrot.slane %v4461, 7
      %v7069 = vsel %vm446, %v7067, %v7068
      %v7070 = vrot.slane %v4463, 7
      %v7071 = vrot.slane %v4464, 7
      %v7072 = vsel %vm446, %v7070, %v7071
      %v7073 = vrot.slane %v4466, 7
      %v7074 = vrot.slane %v4467, 7
      %v7075 = vsel %vm446, %v7073, %v7074
      %v7076 = vrot.slane %v4469, 7
      %v7077 = vrot.slane %v4470, 7
      %v7078 = vsel %vm446, %v7076, %v7077
      %7079 = vrot.lane.b32.xlu0 %v7031, 16
      %v7080 = vpop.permute.xlu0 %7079
      %7081 = vrot.lane.b32.xlu0 %v7033, 16
      %v7082 = vpop.permute.xlu0 %7081
      %7083 = vrot.lane.b32.xlu0 %v7032, 16
      %v7084 = vpop.permute.xlu0 %7083
      %7085 = vrot.lane.b32.xlu0 %v7034, 16
      %v7086 = vpop.permute.xlu0 %7085
      %7087 = vrot.lane.b32.xlu0 %v7036, 16
      %v7088 = vpop.permute.xlu0 %7087
      %7089 = vrot.lane.b32.xlu0 %v7035, 16
      %v7090 = vpop.permute.xlu0 %7089
      %7091 = vrot.lane.b32.xlu0 %v7037, 16
      %v7092 = vpop.permute.xlu0 %7091
      %7093 = vrot.lane.b32.xlu0 %v7039, 16
      %v7094 = vpop.permute.xlu0 %7093
      %7095 = vrot.lane.b32.xlu0 %v7038, 16
      %v7096 = vpop.permute.xlu0 %7095
      %7097 = vrot.lane.b32.xlu0 %v7040, 16
      %v7098 = vpop.permute.xlu0 %7097
      %7099 = vrot.lane.b32.xlu0 %v7042, 16
      %v7100 = vpop.permute.xlu0 %7099
      %7101 = vrot.lane.b32.xlu0 %v7041, 16
      %v7102 = vpop.permute.xlu0 %7101
      %7103 = vrot.lane.b32.xlu0 %v7043, 16
      %v7104 = vpop.permute.xlu0 %7103
      %7105 = vrot.lane.b32.xlu0 %v7045, 16
      %v7106 = vpop.permute.xlu0 %7105
      %7107 = vrot.lane.b32.xlu0 %v7044, 16
      %v7108 = vpop.permute.xlu0 %7107
      %7109 = vrot.lane.b32.xlu0 %v7046, 16
      %v7110 = vpop.permute.xlu0 %7109
      %7111 = vrot.lane.b32.xlu0 %v7048, 16
      %v7112 = vpop.permute.xlu0 %7111
      %7113 = vrot.lane.b32.xlu0 %v7047, 16
      %v7114 = vpop.permute.xlu0 %7113
      %7115 = vrot.lane.b32.xlu0 %v7049, 16
      %v7116 = vpop.permute.xlu0 %7115
      %7117 = vrot.lane.b32.xlu0 %v7051, 16
      %v7118 = vpop.permute.xlu0 %7117
      %7119 = vrot.lane.b32.xlu0 %v7050, 16
      %v7120 = vpop.permute.xlu0 %7119
      %7121 = vrot.lane.b32.xlu0 %v7052, 16
      %v7122 = vpop.permute.xlu0 %7121
      %7123 = vrot.lane.b32.xlu0 %v7054, 16
      %v7124 = vpop.permute.xlu0 %7123
      %7125 = vrot.lane.b32.xlu0 %v7053, 16
      %v7126 = vpop.permute.xlu0 %7125
      %7127 = vrot.lane.b32.xlu0 %v7055, 16
      %v7128 = vpop.permute.xlu0 %7127
      %7129 = vrot.lane.b32.xlu0 %v7057, 16
      %v7130 = vpop.permute.xlu0 %7129
      %7131 = vrot.lane.b32.xlu0 %v7056, 16
      %v7132 = vpop.permute.xlu0 %7131
      %7133 = vrot.lane.b32.xlu0 %v7058, 16
      %v7134 = vpop.permute.xlu0 %7133
      %7135 = vrot.lane.b32.xlu0 %v7060, 16
      %v7136 = vpop.permute.xlu0 %7135
      %7137 = vrot.lane.b32.xlu0 %v7059, 16
      %v7138 = vpop.permute.xlu0 %7137
      %7139 = vrot.lane.b32.xlu0 %v7061, 16
      %v7140 = vpop.permute.xlu0 %7139
      %7141 = vrot.lane.b32.xlu0 %v7063, 16
      %v7142 = vpop.permute.xlu0 %7141
      %7143 = vrot.lane.b32.xlu0 %v7062, 16
      %v7144 = vpop.permute.xlu0 %7143
      %7145 = vrot.lane.b32.xlu0 %v7064, 16
      %v7146 = vpop.permute.xlu0 %7145
      %7147 = vrot.lane.b32.xlu0 %v7066, 16
      %v7148 = vpop.permute.xlu0 %7147
      %7149 = vrot.lane.b32.xlu0 %v7065, 16
      %v7150 = vpop.permute.xlu0 %7149
      %7151 = vrot.lane.b32.xlu0 %v7067, 16
      %v7152 = vpop.permute.xlu0 %7151
      %7153 = vrot.lane.b32.xlu0 %v7069, 16
      %v7154 = vpop.permute.xlu0 %7153
      %7155 = vrot.lane.b32.xlu0 %v7068, 16
      %v7156 = vpop.permute.xlu0 %7155
      %7157 = vrot.lane.b32.xlu0 %v7070, 16
      %v7158 = vpop.permute.xlu0 %7157
      %7159 = vrot.lane.b32.xlu0 %v7072, 16
      %v7160 = vpop.permute.xlu0 %7159
      %7161 = vrot.lane.b32.xlu0 %v7071, 16
      %v7162 = vpop.permute.xlu0 %7161
      %7163 = vrot.lane.b32.xlu0 %v7073, 16
      %v7164 = vpop.permute.xlu0 %7163
      %7165 = vrot.lane.b32.xlu0 %v7075, 16
      %v7166 = vpop.permute.xlu0 %7165
      %7167 = vrot.lane.b32.xlu0 %v7074, 16
      %v7168 = vpop.permute.xlu0 %7167
      %7169 = vrot.lane.b32.xlu0 %v7076, 16
      %v7170 = vpop.permute.xlu0 %7169
      %7171 = vrot.lane.b32.xlu0 %v7078, 16
      %v7172 = vpop.permute.xlu0 %7171
      %7173 = vrot.lane.b32.xlu0 %v7077, 16
      %v7174 = vpop.permute.xlu0 %7173
      %7224 = vrot.lane.b32.xlu0 %v4426, 20
      %v7225 = vpop.permute.xlu0 %7224
      %7226 = vrot.lane.b32.xlu0 %v4429, 20
      %v7227 = vpop.permute.xlu0 %7226
      %7228 = vrot.lane.b32.xlu0 %v4432, 20
      %v7229 = vpop.permute.xlu0 %7228
      %7230 = vrot.lane.b32.xlu0 %v4435, 20
      %v7231 = vpop.permute.xlu0 %7230
      %7232 = vrot.lane.b32.xlu0 %v4438, 20
      %v7233 = vpop.permute.xlu0 %7232
      %7234 = vrot.lane.b32.xlu0 %v4441, 20
      %v7235 = vpop.permute.xlu0 %7234
      %7236 = vrot.lane.b32.xlu0 %v4444, 20
      %v7237 = vpop.permute.xlu0 %7236
      %7238 = vrot.lane.b32.xlu0 %v4447, 20
      %v7239 = vpop.permute.xlu0 %7238
      %7240 = vrot.lane.b32.xlu0 %v4450, 20
      %v7241 = vpop.permute.xlu0 %7240
      %7242 = vrot.lane.b32.xlu0 %v4453, 20
      %v7243 = vpop.permute.xlu0 %7242
      %7244 = vrot.lane.b32.xlu0 %v4456, 20
      %v7245 = vpop.permute.xlu0 %7244
      %7246 = vrot.lane.b32.xlu0 %v4459, 20
      %v7247 = vpop.permute.xlu0 %7246
      %7248 = vrot.lane.b32.xlu0 %v4462, 20
      %v7249 = vpop.permute.xlu0 %7248
      %7250 = vrot.lane.b32.xlu0 %v4463, 20
      %v7251 = vpop.permute.xlu0 %7250
      %7252 = vrot.lane.b32.xlu0 %v4464, 20
      %v7253 = vpop.permute.xlu0 %7252
      %7254 = vrot.lane.b32.xlu0 %v4465, 20
      %v7255 = vpop.permute.xlu0 %7254
      %7256 = vrot.lane.b32.xlu0 %v4466, 20
      %v7257 = vpop.permute.xlu0 %7256
      %7258 = vrot.lane.b32.xlu0 %v4467, 20
      %v7259 = vpop.permute.xlu0 %7258
      %7260 = vrot.lane.b32.xlu0 %v4468, 20
      %v7261 = vpop.permute.xlu0 %7260
      %7262 = vrot.lane.b32.xlu0 %v4469, 20
      %v7263 = vpop.permute.xlu0 %7262
      %7264 = vrot.lane.b32.xlu0 %v4470, 20
      %v7265 = vpop.permute.xlu0 %7264
      %7266 = vrot.lane.b32.xlu0 %v4471, 20
      %v7267 = vpop.permute.xlu0 %7266
      %v7290 = vrot.slane %v4469, 1
      %v7291 = vrot.slane %v4470, 1
      %v7292 = vsel %vm655, %v7290, %v7291
      %v7293 = vrot.slane %v4471, 1
      %v7294 = vsel %vm655, %v7291, %v7293
      %7295 = vrot.lane.b32.xlu0 %v4543, 24
      %v7296 = vpop.permute.xlu0 %7295
      %7297 = vrot.lane.b32.xlu0 %v4548, 24
      %v7298 = vpop.permute.xlu0 %7297
      %7299 = vrot.lane.b32.xlu0 %v4553, 24
      %v7300 = vpop.permute.xlu0 %7299
      %7301 = vrot.lane.b32.xlu0 %v4558, 24
      %v7302 = vpop.permute.xlu0 %7301
      %7303 = vrot.lane.b32.xlu0 %v4563, 24
      %v7304 = vpop.permute.xlu0 %7303
      %7305 = vrot.lane.b32.xlu0 %v4568, 24
      %v7306 = vpop.permute.xlu0 %7305
      %7307 = vrot.lane.b32.xlu0 %v4573, 24
      %v7308 = vpop.permute.xlu0 %7307
      %7309 = vrot.lane.b32.xlu0 %v4578, 24
      %v7310 = vpop.permute.xlu0 %7309
      %7311 = vrot.lane.b32.xlu0 %v4583, 24
      %v7312 = vpop.permute.xlu0 %7311
      %7313 = vrot.lane.b32.xlu0 %v4588, 24
      %v7314 = vpop.permute.xlu0 %7313
      %7315 = vrot.lane.b32.xlu0 %v4593, 24
      %v7316 = vpop.permute.xlu0 %7315
      %7317 = vrot.lane.b32.xlu0 %v4598, 24
      %v7318 = vpop.permute.xlu0 %7317
      %7319 = vrot.lane.b32.xlu0 %v5327, 24
      %v7320 = vpop.permute.xlu0 %7319
      %7321 = vrot.lane.b32.xlu0 %v5829, 24
      %v7322 = vpop.permute.xlu0 %7321
      %7323 = vrot.lane.b32.xlu0 %v5831, 24
      %v7324 = vpop.permute.xlu0 %7323
      %7325 = vrot.lane.b32.xlu0 %v5830, 24
      %v7326 = vpop.permute.xlu0 %7325
      %7327 = vrot.lane.b32.xlu0 %v6818, 24
      %v7328 = vpop.permute.xlu0 %7327
      %7329 = vrot.lane.b32.xlu0 %v6820, 24
      %v7330 = vpop.permute.xlu0 %7329
      %7331 = vrot.lane.b32.xlu0 %v6819, 24
      %v7332 = vpop.permute.xlu0 %7331
      %7333 = vrot.lane.b32.xlu0 %v7292, 24
      %v7334 = vpop.permute.xlu0 %7333
      %7335 = vrot.lane.b32.xlu0 %v7294, 24
      %v7336 = vpop.permute.xlu0 %7335
      %7337 = vrot.lane.b32.xlu0 %v7293, 24
      %v7338 = vpop.permute.xlu0 %7337
      %v7361 = vrot.slane %v4469, 2
      %v7362 = vrot.slane %v4470, 2
      %v7363 = vsel %vm2579, %v7361, %v7362
      %v7364 = vrot.slane %v4471, 2
      %v7365 = vsel %vm2579, %v7362, %v7364
      %7366 = vrot.lane.b32.xlu0 %v4719, 28
      %v7367 = vpop.permute.xlu0 %7366
      %7368 = vrot.lane.b32.xlu0 %v4724, 28
      %v7369 = vpop.permute.xlu0 %7368
      %7370 = vrot.lane.b32.xlu0 %v4729, 28
      %v7371 = vpop.permute.xlu0 %7370
      %7372 = vrot.lane.b32.xlu0 %v4734, 28
      %v7373 = vpop.permute.xlu0 %7372
      %7374 = vrot.lane.b32.xlu0 %v4739, 28
      %v7375 = vpop.permute.xlu0 %7374
      %7376 = vrot.lane.b32.xlu0 %v4744, 28
      %v7377 = vpop.permute.xlu0 %7376
      %7378 = vrot.lane.b32.xlu0 %v4749, 28
      %v7379 = vpop.permute.xlu0 %7378
      %7380 = vrot.lane.b32.xlu0 %v4754, 28
      %v7381 = vpop.permute.xlu0 %7380
      %7382 = vrot.lane.b32.xlu0 %v4759, 28
      %v7383 = vpop.permute.xlu0 %7382
      %7384 = vrot.lane.b32.xlu0 %v4764, 28
      %v7385 = vpop.permute.xlu0 %7384
      %7386 = vrot.lane.b32.xlu0 %v4769, 28
      %v7387 = vpop.permute.xlu0 %7386
      %7388 = vrot.lane.b32.xlu0 %v4774, 28
      %v7389 = vpop.permute.xlu0 %7388
      %7390 = vrot.lane.b32.xlu0 %v5428, 28
      %v7391 = vpop.permute.xlu0 %7390
      %7392 = vrot.lane.b32.xlu0 %v5930, 28
      %v7393 = vpop.permute.xlu0 %7392
      %7394 = vrot.lane.b32.xlu0 %v5932, 28
      %v7395 = vpop.permute.xlu0 %7394
      %7396 = vrot.lane.b32.xlu0 %v5931, 28
      %v7397 = vpop.permute.xlu0 %7396
      %7398 = vrot.lane.b32.xlu0 %v6889, 28
      %v7399 = vpop.permute.xlu0 %7398
      %7400 = vrot.lane.b32.xlu0 %v6891, 28
      %v7401 = vpop.permute.xlu0 %7400
      %7402 = vrot.lane.b32.xlu0 %v6890, 28
      %v7403 = vpop.permute.xlu0 %7402
      %7404 = vrot.lane.b32.xlu0 %v7363, 28
      %v7405 = vpop.permute.xlu0 %7404
      %7406 = vrot.lane.b32.xlu0 %v7365, 28
      %v7407 = vpop.permute.xlu0 %7406
      %7408 = vrot.lane.b32.xlu0 %v7364, 28
      %v7409 = vpop.permute.xlu0 %7408
      %v7432 = vrot.slane %v4469, 3
      %v7433 = vrot.slane %v4470, 3
      %v7434 = vsel %vm4872, %v7432, %v7433
      %v7435 = vrot.slane %v4471, 3
      %v7436 = vsel %vm4872, %v7433, %v7435
      %7437 = vrot.lane.b32.xlu0 %v4896, 32
      %v7438 = vpop.permute.xlu0 %7437
      %7439 = vrot.lane.b32.xlu0 %v4901, 32
      %v7440 = vpop.permute.xlu0 %7439
      %7441 = vrot.lane.b32.xlu0 %v4906, 32
      %v7442 = vpop.permute.xlu0 %7441
      %7443 = vrot.lane.b32.xlu0 %v4911, 32
      %v7444 = vpop.permute.xlu0 %7443
      %7445 = vrot.lane.b32.xlu0 %v4916, 32
      %v7446 = vpop.permute.xlu0 %7445
      %7447 = vrot.lane.b32.xlu0 %v4921, 32
      %v7448 = vpop.permute.xlu0 %7447
      %7449 = vrot.lane.b32.xlu0 %v4926, 32
      %v7450 = vpop.permute.xlu0 %7449
      %7451 = vrot.lane.b32.xlu0 %v4931, 32
      %v7452 = vpop.permute.xlu0 %7451
      %7453 = vrot.lane.b32.xlu0 %v4936, 32
      %v7454 = vpop.permute.xlu0 %7453
      %7455 = vrot.lane.b32.xlu0 %v4941, 32
      %v7456 = vpop.permute.xlu0 %7455
      %7457 = vrot.lane.b32.xlu0 %v4946, 32
      %v7458 = vpop.permute.xlu0 %7457
      %7459 = vrot.lane.b32.xlu0 %v4951, 32
      %v7460 = vpop.permute.xlu0 %7459
      %7461 = vrot.lane.b32.xlu0 %v5529, 32
      %v7462 = vpop.permute.xlu0 %7461
      %7463 = vrot.lane.b32.xlu0 %v6031, 32
      %v7464 = vpop.permute.xlu0 %7463
      %7465 = vrot.lane.b32.xlu0 %v6033, 32
      %v7466 = vpop.permute.xlu0 %7465
      %7467 = vrot.lane.b32.xlu0 %v6032, 32
      %v7468 = vpop.permute.xlu0 %7467
      %7469 = vrot.lane.b32.xlu0 %v6960, 32
      %v7470 = vpop.permute.xlu0 %7469
      %7471 = vrot.lane.b32.xlu0 %v6962, 32
      %v7472 = vpop.permute.xlu0 %7471
      %7473 = vrot.lane.b32.xlu0 %v6961, 32
      %v7474 = vpop.permute.xlu0 %7473
      %7475 = vrot.lane.b32.xlu0 %v7434, 32
      %v7476 = vpop.permute.xlu0 %7475
      %7477 = vrot.lane.b32.xlu0 %v7436, 32
      %v7478 = vpop.permute.xlu0 %7477
      %7479 = vrot.lane.b32.xlu0 %v7435, 32
      %v7480 = vpop.permute.xlu0 %7479
      %v7503 = vsel %vm1346, %v4423, %v6822
      %v7504 = vsel %vm1346, %v4426, %v6824
      %v7505 = vsel %vm1346, %v4429, %v6826
      %v7506 = vsel %vm1346, %v4432, %v6828
      %v7507 = vsel %vm1346, %v4435, %v6830
      %v7508 = vsel %vm1346, %v4438, %v6832
      %v7509 = vsel %vm1346, %v4441, %v6834
      %v7510 = vsel %vm1346, %v4444, %v6836
      %v7511 = vsel %vm1346, %v4447, %v6838
      %v7512 = vsel %vm1346, %v4450, %v6840
      %v7513 = vsel %vm1346, %v4453, %v6842
      %v7514 = vsel %vm1346, %v4456, %v6844
      %v7515 = vsel %vm1346, %v4459, %v6846
      %v7516 = vsel %vm1346, %v4460, %v6848
      %v7517 = vsel %vm1346, %v4461, %v6850
      %v7518 = vsel %vm1346, %v4462, %v6852
      %v7519 = vsel %vm1346, %v4463, %v6854
      %v7520 = vsel %vm1346, %v4464, %v6856
      %v7521 = vsel %vm1346, %v4465, %v6858
      %v7522 = vsel %vm1346, %v4466, %v6860
      %v7523 = vsel %vm1346, %v4467, %v6862
      %v7524 = vsel %vm1346, %v4468, %v6864
      %v7525 = vsel %vm1524, %v7503, %v6893
      %v7526 = vsel %vm1524, %v7504, %v6895
      %v7527 = vsel %vm1524, %v7505, %v6897
      %v7528 = vsel %vm1524, %v7506, %v6899
      %v7529 = vsel %vm1524, %v7507, %v6901
      %v7530 = vsel %vm1524, %v7508, %v6903
      %v7531 = vsel %vm1524, %v7509, %v6905
      %v7532 = vsel %vm1524, %v7510, %v6907
      %v7533 = vsel %vm1524, %v7511, %v6909
      %v7534 = vsel %vm1524, %v7512, %v6911
      %v7535 = vsel %vm1524, %v7513, %v6913
      %v7536 = vsel %vm1524, %v7514, %v6915
      %v7537 = vsel %vm1524, %v7515, %v6917
      %v7538 = vsel %vm1524, %v7516, %v6919
      %v7539 = vsel %vm1524, %v7517, %v6921
      %v7540 = vsel %vm1524, %v7518, %v6923
      %v7541 = vsel %vm1524, %v7519, %v6925
      %v7542 = vsel %vm1524, %v7520, %v6927
      %v7543 = vsel %vm1524, %v7521, %v6929
      %v7544 = vsel %vm1524, %v7522, %v6931
      %v7545 = vsel %vm1524, %v7523, %v6933
      %v7546 = vsel %vm1524, %v7524, %v6935
      %v7547 = vsel %vm3422, %v7525, %v6964
      %v7548 = vsel %vm3422, %v7526, %v6966
      %v7549 = vsel %vm3422, %v7527, %v6968
      %v7550 = vsel %vm3422, %v7528, %v6970
      %v7551 = vsel %vm3422, %v7529, %v6972
      %v7552 = vsel %vm3422, %v7530, %v6974
      %v7553 = vsel %vm3422, %v7531, %v6976
      %v7554 = vsel %vm3422, %v7532, %v6978
      %v7555 = vsel %vm3422, %v7533, %v6980
      %v7556 = vsel %vm3422, %v7534, %v6982
      %v7557 = vsel %vm3422, %v7535, %v6984
      %v7558 = vsel %vm3422, %v7536, %v6986
      %v7559 = vsel %vm3422, %v7537, %v6988
      %v7560 = vsel %vm3422, %v7538, %v6990
      %v7561 = vsel %vm3422, %v7539, %v6992
      %v7562 = vsel %vm3422, %v7540, %v6994
      %v7563 = vsel %vm3422, %v7541, %v6996
      %v7564 = vsel %vm3422, %v7542, %v6998
      %v7565 = vsel %vm3422, %v7543, %v7000
      %v7566 = vsel %vm3422, %v7544, %v7002
      %v7567 = vsel %vm3422, %v7545, %v7004
      %v7568 = vsel %vm3422, %v7546, %v7006
      %v7569 = vsel %vm3455, %v6399, %v7080
      %v7570 = vsel %vm3455, %v6400, %v7082
      %v7571 = vsel %vm3455, %v7547, %v7084
      %v7572 = vsel %vm3455, %v6401, %v7086
      %v7573 = vsel %vm3455, %v6402, %v7088
      %v7574 = vsel %vm3455, %v7548, %v7090
      %v7575 = vsel %vm3455, %v6403, %v7092
      %v7576 = vsel %vm3455, %v6404, %v7094
      %v7577 = vsel %vm3455, %v7549, %v7096
      %v7578 = vsel %vm3455, %v6405, %v7098
      %v7579 = vsel %vm3455, %v6406, %v7100
      %v7580 = vsel %vm3455, %v7550, %v7102
      %v7581 = vsel %vm3455, %v6407, %v7104
      %v7582 = vsel %vm3455, %v6408, %v7106
      %v7583 = vsel %vm3455, %v7551, %v7108
      %v7584 = vsel %vm3455, %v6409, %v7110
      %v7585 = vsel %vm3455, %v6410, %v7112
      %v7586 = vsel %vm3455, %v7552, %v7114
      %v7587 = vsel %vm3455, %v6411, %v7116
      %v7588 = vsel %vm3455, %v6412, %v7118
      %v7589 = vsel %vm3455, %v7553, %v7120
      %v7590 = vsel %vm3455, %v6413, %v7122
      %v7591 = vsel %vm3455, %v6414, %v7124
      %v7592 = vsel %vm3455, %v7554, %v7126
      %v7593 = vsel %vm3455, %v6415, %v7128
      %v7594 = vsel %vm3455, %v6416, %v7130
      %v7595 = vsel %vm3455, %v7555, %v7132
      %v7596 = vsel %vm3455, %v6417, %v7134
      %v7597 = vsel %vm3455, %v6418, %v7136
      %v7598 = vsel %vm3455, %v7556, %v7138
      %v7599 = vsel %vm3455, %v6419, %v7140
      %v7600 = vsel %vm3455, %v6420, %v7142
      %v7601 = vsel %vm3455, %v7557, %v7144
      %v7602 = vsel %vm3455, %v6421, %v7146
      %v7603 = vsel %vm3455, %v6422, %v7148
      %v7604 = vsel %vm3455, %v7558, %v7150
      %v7605 = vsel %vm3455, %v6423, %v7152
      %v7606 = vsel %vm3455, %v6424, %v7154
      %v7607 = vsel %vm3455, %v7559, %v7156
      %v7608 = vsel %vm3455, %v7560, %v7158
      %v7609 = vsel %vm3455, %v7561, %v7160
      %v7610 = vsel %vm3455, %v7562, %v7162
      %v7611 = vsel %vm3455, %v7563, %v7164
      %v7612 = vsel %vm3455, %v7564, %v7166
      %v7613 = vsel %vm3455, %v7565, %v7168
      %v7614 = vsel %vm3455, %v7566, %v7170
      %v7615 = vsel %vm3455, %v7567, %v7172
      %v7616 = vsel %vm3455, %v7568, %v7174
      %v7617 = vsel %vm3488, %v7569, %v5240
      %v7618 = vsel %vm3488, %v7570, %v5242
      %v7619 = vsel %vm3488, %v7571, %v7225
      %v7620 = vsel %vm3488, %v7572, %v5244
      %v7621 = vsel %vm3488, %v7573, %v5246
      %v7622 = vsel %vm3488, %v7574, %v7227
      %v7623 = vsel %vm3488, %v7575, %v5248
      %v7624 = vsel %vm3488, %v7576, %v5250
      %v7625 = vsel %vm3488, %v7577, %v7229
      %v7626 = vsel %vm3488, %v7578, %v5252
      %v7627 = vsel %vm3488, %v7579, %v5254
      %v7628 = vsel %vm3488, %v7580, %v7231
      %v7629 = vsel %vm3488, %v7581, %v5256
      %v7630 = vsel %vm3488, %v7582, %v5258
      %v7631 = vsel %vm3488, %v7583, %v7233
      %v7632 = vsel %vm3488, %v7584, %v5260
      %v7633 = vsel %vm3488, %v7585, %v5262
      %v7634 = vsel %vm3488, %v7586, %v7235
      %v7635 = vsel %vm3488, %v7587, %v5264
      %v7636 = vsel %vm3488, %v7588, %v5266
      %v7637 = vsel %vm3488, %v7589, %v7237
      %v7638 = vsel %vm3488, %v7590, %v5268
      %v7639 = vsel %vm3488, %v7591, %v5270
      %v7640 = vsel %vm3488, %v7592, %v7239
      %v7641 = vsel %vm3488, %v7593, %v5272
      %v7642 = vsel %vm3488, %v7594, %v5274
      %v7643 = vsel %vm3488, %v7595, %v7241
      %v7644 = vsel %vm3488, %v7596, %v5276
      %v7645 = vsel %vm3488, %v7597, %v5278
      %v7646 = vsel %vm3488, %v7598, %v7243
      %v7647 = vsel %vm3488, %v7599, %v5280
      %v7648 = vsel %vm3488, %v7600, %v5282
      %v7649 = vsel %vm3488, %v7601, %v7245
      %v7650 = vsel %vm3488, %v7602, %v5284
      %v7651 = vsel %vm3488, %v7603, %v5286
      %v7652 = vsel %vm3488, %v7604, %v7247
      %v7653 = vsel %vm3488, %v7605, %v5288
      %v7654 = vsel %vm3488, %v7606, %v5290
      %v7655 = vsel %vm3488, %v7607, %v7249
      %v7656 = vsel %vm3488, %v7608, %v7251
      %v7657 = vsel %vm3488, %v7609, %v7253
      %v7658 = vsel %vm3488, %v7610, %v7255
      %v7659 = vsel %vm3488, %v7611, %v7257
      %v7660 = vsel %vm3488, %v7612, %v7259
      %v7661 = vsel %vm3488, %v7613, %v7261
      %v7662 = vsel %vm3488, %v7614, %v7263
      %v7663 = vsel %vm3488, %v7615, %v7265
      %v7664 = vsel %vm3488, %v7616, %v7267
      %v7665 = vsel %vm3521, %v7617, %v5342
      %v7666 = vsel %vm3521, %v7618, %v5344
      %v7667 = vsel %vm3521, %v7619, %v7296
      %v7668 = vsel %vm3521, %v7620, %v5346
      %v7669 = vsel %vm3521, %v7621, %v5348
      %v7670 = vsel %vm3521, %v7622, %v7298
      %v7671 = vsel %vm3521, %v7623, %v5350
      %v7672 = vsel %vm3521, %v7624, %v5352
      %v7673 = vsel %vm3521, %v7625, %v7300
      %v7674 = vsel %vm3521, %v7626, %v5354
      %v7675 = vsel %vm3521, %v7627, %v5356
      %v7676 = vsel %vm3521, %v7628, %v7302
      %v7677 = vsel %vm3521, %v7629, %v5358
      %v7678 = vsel %vm3521, %v7630, %v5360
      %v7679 = vsel %vm3521, %v7631, %v7304
      %v7680 = vsel %vm3521, %v7632, %v5362
      %v7681 = vsel %vm3521, %v7633, %v5364
      %v7682 = vsel %vm3521, %v7634, %v7306
      %v7683 = vsel %vm3521, %v7635, %v5366
      %v7684 = vsel %vm3521, %v7636, %v5368
      %v7685 = vsel %vm3521, %v7637, %v7308
      %v7686 = vsel %vm3521, %v7638, %v5370
      %v7687 = vsel %vm3521, %v7639, %v5372
      %v7688 = vsel %vm3521, %v7640, %v7310
      %v7689 = vsel %vm3521, %v7641, %v5374
      %v7690 = vsel %vm3521, %v7642, %v5376
      %v7691 = vsel %vm3521, %v7643, %v7312
      %v7692 = vsel %vm3521, %v7644, %v5378
      %v7693 = vsel %vm3521, %v7645, %v5380
      %v7694 = vsel %vm3521, %v7646, %v7314
      %v7695 = vsel %vm3521, %v7647, %v5382
      %v7696 = vsel %vm3521, %v7648, %v5384
      %v7697 = vsel %vm3521, %v7649, %v7316
      %v7698 = vsel %vm3521, %v7650, %v5386
      %v7699 = vsel %vm3521, %v7651, %v5388
      %v7700 = vsel %vm3521, %v7652, %v7318
      %v7701 = vsel %vm3521, %v7653, %v5390
      %v7702 = vsel %vm3521, %v7654, %v5392
      %v7703 = vsel %vm3521, %v7655, %v7320
      %v7704 = vsel %vm3521, %v7656, %v7322
      %v7705 = vsel %vm3521, %v7657, %v7324
      %v7706 = vsel %vm3521, %v7658, %v7326
      %v7707 = vsel %vm3521, %v7659, %v7328
      %v7708 = vsel %vm3521, %v7660, %v7330
      %v7709 = vsel %vm3521, %v7661, %v7332
      %v7710 = vsel %vm3521, %v7662, %v7334
      %v7711 = vsel %vm3521, %v7663, %v7336
      %v7712 = vsel %vm3521, %v7664, %v7338
      %v7713 = vsel %vm3554, %v7665, %v5443
      %v7714 = vsel %vm3554, %v7666, %v5445
      %v7715 = vsel %vm3554, %v7667, %v7367
      %v7716 = vsel %vm3554, %v7668, %v5447
      %v7717 = vsel %vm3554, %v7669, %v5449
      %v7718 = vsel %vm3554, %v7670, %v7369
      %v7719 = vsel %vm3554, %v7671, %v5451
      %v7720 = vsel %vm3554, %v7672, %v5453
      %v7721 = vsel %vm3554, %v7673, %v7371
      %v7722 = vsel %vm3554, %v7674, %v5455
      %v7723 = vsel %vm3554, %v7675, %v5457
      %v7724 = vsel %vm3554, %v7676, %v7373
      %v7725 = vsel %vm3554, %v7677, %v5459
      %v7726 = vsel %vm3554, %v7678, %v5461
      %v7727 = vsel %vm3554, %v7679, %v7375
      %v7728 = vsel %vm3554, %v7680, %v5463
      %v7729 = vsel %vm3554, %v7681, %v5465
      %v7730 = vsel %vm3554, %v7682, %v7377
      %v7731 = vsel %vm3554, %v7683, %v5467
      %v7732 = vsel %vm3554, %v7684, %v5469
      %v7733 = vsel %vm3554, %v7685, %v7379
      %v7734 = vsel %vm3554, %v7686, %v5471
      %v7735 = vsel %vm3554, %v7687, %v5473
      %v7736 = vsel %vm3554, %v7688, %v7381
      %v7737 = vsel %vm3554, %v7689, %v5475
      %v7738 = vsel %vm3554, %v7690, %v5477
      %v7739 = vsel %vm3554, %v7691, %v7383
      %v7740 = vsel %vm3554, %v7692, %v5479
      %v7741 = vsel %vm3554, %v7693, %v5481
      %v7742 = vsel %vm3554, %v7694, %v7385
      %v7743 = vsel %vm3554, %v7695, %v5483
      %v7744 = vsel %vm3554, %v7696, %v5485
      %v7745 = vsel %vm3554, %v7697, %v7387
      %v7746 = vsel %vm3554, %v7698, %v5487
      %v7747 = vsel %vm3554, %v7699, %v5489
      %v7748 = vsel %vm3554, %v7700, %v7389
      %v7749 = vsel %vm3554, %v7701, %v5491
      %v7750 = vsel %vm3554, %v7702, %v5493
      %v7751 = vsel %vm3554, %v7703, %v7391
      %v7752 = vsel %vm3554, %v7704, %v7393
      %v7753 = vsel %vm3554, %v7705, %v7395
      %v7754 = vsel %vm3554, %v7706, %v7397
      %v7755 = vsel %vm3554, %v7707, %v7399
      %v7756 = vsel %vm3554, %v7708, %v7401
      %v7757 = vsel %vm3554, %v7709, %v7403
      %v7758 = vsel %vm3554, %v7710, %v7405
      %v7759 = vsel %vm3554, %v7711, %v7407
      %v7760 = vsel %vm3554, %v7712, %v7409
      %v7761 = vsel %vm3587, %v7713, %v5544
      %v7762 = vsel %vm3587, %v7714, %v5546
      %v7763 = vsel %vm3587, %v7715, %v7438
      %v7764 = vsel %vm3587, %v7716, %v5548
      %v7765 = vsel %vm3587, %v7717, %v5550
      %v7766 = vsel %vm3587, %v7718, %v7440
      %v7767 = vsel %vm3587, %v7719, %v5552
      %v7768 = vsel %vm3587, %v7720, %v5554
      %v7769 = vsel %vm3587, %v7721, %v7442
      %v7770 = vsel %vm3587, %v7722, %v5556
      %v7771 = vsel %vm3587, %v7723, %v5558
      %v7772 = vsel %vm3587, %v7724, %v7444
      %v7773 = vsel %vm3587, %v7725, %v5560
      %v7774 = vsel %vm3587, %v7726, %v5562
      %v7775 = vsel %vm3587, %v7727, %v7446
      %v7776 = vsel %vm3587, %v7728, %v5564
      %v7777 = vsel %vm3587, %v7729, %v5566
      %v7778 = vsel %vm3587, %v7730, %v7448
      %v7779 = vsel %vm3587, %v7731, %v5568
      %v7780 = vsel %vm3587, %v7732, %v5570
      %v7781 = vsel %vm3587, %v7733, %v7450
      %v7782 = vsel %vm3587, %v7734, %v5572
      %v7783 = vsel %vm3587, %v7735, %v5574
      %v7784 = vsel %vm3587, %v7736, %v7452
      %v7785 = vsel %vm3587, %v7737, %v5576
      %v7786 = vsel %vm3587, %v7738, %v5578
      %v7787 = vsel %vm3587, %v7739, %v7454
      %v7788 = vsel %vm3587, %v7740, %v5580
      %v7789 = vsel %vm3587, %v7741, %v5582
      %v7790 = vsel %vm3587, %v7742, %v7456
      %v7791 = vsel %vm3587, %v7743, %v5584
      %v7792 = vsel %vm3587, %v7744, %v5586
      %v7793 = vsel %vm3587, %v7745, %v7458
      %v7794 = vsel %vm3587, %v7746, %v5588
      %v7795 = vsel %vm3587, %v7747, %v5590
      %v7796 = vsel %vm3587, %v7748, %v7460
      %v7797 = vsel %vm3587, %v7749, %v5592
      %v7798 = vsel %vm3587, %v7750, %v5594
      %v7799 = vsel %vm3587, %v7751, %v7462
      %v7800 = vsel %vm3587, %v7752, %v7464
      %v7801 = vsel %vm3587, %v7753, %v7466
      %v7802 = vsel %vm3587, %v7754, %v7468
      %v7803 = vsel %vm3587, %v7755, %v7470
      %v7804 = vsel %vm3587, %v7756, %v7472
      %v7805 = vsel %vm3587, %v7757, %v7474
      %v7806 = vsel %vm3587, %v7758, %v7476
      %v7807 = vsel %vm3587, %v7759, %v7478
      %v7808 = vsel %vm3587, %v7760, %v7480
      %v7857 = vrot.slane %v7761, 1
      %v7858 = vrot.slane %v7762, 1
      %v7859 = vsel %vm655, %v7857, %v7858
      %v7860 = vrot.slane %v7763, 1
      %v7861 = vsel %vm655, %v7858, %v7860
      %v7862 = vrot.slane %v7764, 1
      %v7863 = vrot.slane %v7765, 1
      %v7864 = vsel %vm655, %v7862, %v7863
      %v7865 = vrot.slane %v7766, 1
      %v7866 = vsel %vm655, %v7863, %v7865
      %v7867 = vrot.slane %v7767, 1
      %v7868 = vrot.slane %v7768, 1
      %v7869 = vsel %vm655, %v7867, %v7868
      %v7870 = vrot.slane %v7769, 1
      %v7871 = vsel %vm655, %v7868, %v7870
      %v7872 = vrot.slane %v7770, 1
      %v7873 = vrot.slane %v7771, 1
      %v7874 = vsel %vm655, %v7872, %v7873
      %v7875 = vrot.slane %v7772, 1
      %v7876 = vsel %vm655, %v7873, %v7875
      %v7877 = vrot.slane %v7773, 1
      %v7878 = vrot.slane %v7774, 1
      %v7879 = vsel %vm655, %v7877, %v7878
      %v7880 = vrot.slane %v7775, 1
      %v7881 = vsel %vm655, %v7878, %v7880
      %v7882 = vrot.slane %v7776, 1
      %v7883 = vrot.slane %v7777, 1
      %v7884 = vsel %vm655, %v7882, %v7883
      %v7885 = vrot.slane %v7778, 1
      %v7886 = vsel %vm655, %v7883, %v7885
      %v7887 = vrot.slane %v7779, 1
      %v7888 = vrot.slane %v7780, 1
      %v7889 = vsel %vm655, %v7887, %v7888
      %v7890 = vrot.slane %v7781, 1
      %v7891 = vsel %vm655, %v7888, %v7890
      %v7892 = vrot.slane %v7782, 1
      %v7893 = vrot.slane %v7783, 1
      %v7894 = vsel %vm655, %v7892, %v7893
      %v7895 = vrot.slane %v7784, 1
      %v7896 = vsel %vm655, %v7893, %v7895
      %v7897 = vrot.slane %v7785, 1
      %v7898 = vrot.slane %v7786, 1
      %v7899 = vsel %vm655, %v7897, %v7898
      %v7900 = vrot.slane %v7787, 1
      %v7901 = vsel %vm655, %v7898, %v7900
      %v7902 = vrot.slane %v7788, 1
      %v7903 = vrot.slane %v7789, 1
      %v7904 = vsel %vm655, %v7902, %v7903
      %v7905 = vrot.slane %v7790, 1
      %v7906 = vsel %vm655, %v7903, %v7905
      %v7907 = vrot.slane %v7791, 1
      %v7908 = vrot.slane %v7792, 1
      %v7909 = vsel %vm655, %v7907, %v7908
      %v7910 = vrot.slane %v7793, 1
      %v7911 = vsel %vm655, %v7908, %v7910
      %v7912 = vrot.slane %v7794, 1
      %v7913 = vrot.slane %v7795, 1
      %v7914 = vsel %vm655, %v7912, %v7913
      %v7915 = vrot.slane %v7796, 1
      %v7916 = vsel %vm655, %v7913, %v7915
      %v7917 = vrot.slane %v7797, 1
      %v7918 = vrot.slane %v7798, 1
      %v7919 = vsel %vm655, %v7917, %v7918
      %v7920 = vrot.slane %v7799, 1
      %v7921 = vsel %vm655, %v7918, %v7920
      %v7922 = vrot.slane %v7800, 1
      %v7923 = vrot.slane %v7801, 1
      %v7924 = vsel %vm655, %v7922, %v7923
      %v7925 = vrot.slane %v7802, 1
      %v7926 = vsel %vm655, %v7923, %v7925
      %v7927 = vrot.slane %v7803, 1
      %v7928 = vrot.slane %v7804, 1
      %v7929 = vsel %vm655, %v7927, %v7928
      %v7930 = vrot.slane %v7805, 1
      %v7931 = vsel %vm655, %v7928, %v7930
      %v7932 = vrot.slane %v7806, 1
      %v7933 = vrot.slane %v7807, 1
      %v7934 = vsel %vm655, %v7932, %v7933
      %v7935 = vrot.slane %v7808, 1
      %v7936 = vsel %vm655, %v7933, %v7935
      %7937 = vrot.lane.b32.xlu0 %v7859, 64
      %v7938 = vpop.permute.xlu0 %7937
      %7939 = vrot.lane.b32.xlu0 %v7861, 64
      %v7940 = vpop.permute.xlu0 %7939
      %7941 = vrot.lane.b32.xlu0 %v7864, 64
      %v7942 = vpop.permute.xlu0 %7941
      %7943 = vrot.lane.b32.xlu0 %v7866, 64
      %v7944 = vpop.permute.xlu0 %7943
      %7945 = vrot.lane.b32.xlu0 %v7869, 64
      %v7946 = vpop.permute.xlu0 %7945
      %7947 = vrot.lane.b32.xlu0 %v7871, 64
      %v7948 = vpop.permute.xlu0 %7947
      %7949 = vrot.lane.b32.xlu0 %v7874, 64
      %v7950 = vpop.permute.xlu0 %7949
      %7951 = vrot.lane.b32.xlu0 %v7876, 64
      %v7952 = vpop.permute.xlu0 %7951
      %7953 = vrot.lane.b32.xlu0 %v7879, 64
      %v7954 = vpop.permute.xlu0 %7953
      %7955 = vrot.lane.b32.xlu0 %v7881, 64
      %v7956 = vpop.permute.xlu0 %7955
      %7957 = vrot.lane.b32.xlu0 %v7884, 64
      %v7958 = vpop.permute.xlu0 %7957
      %7959 = vrot.lane.b32.xlu0 %v7886, 64
      %v7960 = vpop.permute.xlu0 %7959
      %7961 = vrot.lane.b32.xlu0 %v7889, 64
      %v7962 = vpop.permute.xlu0 %7961
      %7963 = vrot.lane.b32.xlu0 %v7891, 64
      %v7964 = vpop.permute.xlu0 %7963
      %7965 = vrot.lane.b32.xlu0 %v7894, 64
      %v7966 = vpop.permute.xlu0 %7965
      %7967 = vrot.lane.b32.xlu0 %v7896, 64
      %v7968 = vpop.permute.xlu0 %7967
      %7969 = vrot.lane.b32.xlu0 %v7899, 64
      %v7970 = vpop.permute.xlu0 %7969
      %7971 = vrot.lane.b32.xlu0 %v7901, 64
      %v7972 = vpop.permute.xlu0 %7971
      %7973 = vrot.lane.b32.xlu0 %v7904, 64
      %v7974 = vpop.permute.xlu0 %7973
      %7975 = vrot.lane.b32.xlu0 %v7906, 64
      %v7976 = vpop.permute.xlu0 %7975
      %7977 = vrot.lane.b32.xlu0 %v7909, 64
      %v7978 = vpop.permute.xlu0 %7977
      %7979 = vrot.lane.b32.xlu0 %v7911, 64
      %v7980 = vpop.permute.xlu0 %7979
      %7981 = vrot.lane.b32.xlu0 %v7914, 64
      %v7982 = vpop.permute.xlu0 %7981
      %7983 = vrot.lane.b32.xlu0 %v7916, 64
      %v7984 = vpop.permute.xlu0 %7983
      %7985 = vrot.lane.b32.xlu0 %v7919, 64
      %v7986 = vpop.permute.xlu0 %7985
      %7987 = vrot.lane.b32.xlu0 %v7921, 64
      %v7988 = vpop.permute.xlu0 %7987
      %7989 = vrot.lane.b32.xlu0 %v7924, 64
      %v7990 = vpop.permute.xlu0 %7989
      %7991 = vrot.lane.b32.xlu0 %v7926, 64
      %v7992 = vpop.permute.xlu0 %7991
      %7993 = vrot.lane.b32.xlu0 %v7929, 64
      %v7994 = vpop.permute.xlu0 %7993
      %7995 = vrot.lane.b32.xlu0 %v7931, 64
      %v7996 = vpop.permute.xlu0 %7995
      %7997 = vrot.lane.b32.xlu0 %v7934, 64
      %v7998 = vpop.permute.xlu0 %7997
      %7999 = vrot.lane.b32.xlu0 %v7936, 64
      %v8000 = vpop.permute.xlu0 %7999
      %vm8033 = vcmask 523264
      %v8034 = vsel %vm8033, %v6783, %v7938
      %v8035 = vsel %vm8033, %v6784, %v7940
      %v8036 = vsel %vm8033, %v6785, %v7942
      %v8037 = vsel %vm8033, %v6786, %v7944
      %v8038 = vsel %vm8033, %v6787, %v7946
      %v8039 = vsel %vm8033, %v6788, %v7948
      %v8040 = vsel %vm8033, %v6789, %v7950
      %v8041 = vsel %vm8033, %v6790, %v7952
      %v8042 = vsel %vm8033, %v6791, %v7954
      %v8043 = vsel %vm8033, %v6792, %v7956
      %v8044 = vsel %vm8033, %v6793, %v7958
      %v8045 = vsel %vm8033, %v6794, %v7960
      %v8046 = vsel %vm8033, %v6795, %v7962
      %v8047 = vsel %vm8033, %v6796, %v7964
      %v8048 = vsel %vm8033, %v6797, %v7966
      %v8049 = vsel %vm8033, %v6798, %v7968
      %v8050 = vsel %vm8033, %v6799, %v7970
      %v8051 = vsel %vm8033, %v6800, %v7972
      %v8052 = vsel %vm8033, %v6801, %v7974
      %v8053 = vsel %vm8033, %v6802, %v7976
      %v8054 = vsel %vm8033, %v6803, %v7978
      %v8055 = vsel %vm8033, %v6804, %v7980
      %v8056 = vsel %vm8033, %v6805, %v7982
      %v8057 = vsel %vm8033, %v6806, %v7984
      %v8058 = vsel %vm8033, %v6807, %v7986
      %v8059 = vsel %vm8033, %v6808, %v7988
      %v8060 = vsel %vm8033, %v6809, %v7990
      %v8061 = vsel %vm8033, %v6810, %v7992
      %v8062 = vsel %vm8033, %v6811, %v7994
      %v8063 = vsel %vm8033, %v6812, %v7996
      %v8064 = vsel %vm8033, %v6813, %v7998
      %v8065 = vsel %vm8033, %v6814, %v8000
      %v8066 = vld [vmem:[%s7] sm:$0xff]
      %v8067 = vld [vmem:[%s7 + $0x8] sm:$0xff]
      %v8068 = vld [vmem:[%s7 + $0x10] sm:$0xff]
      %v8069 = vld [vmem:[%s7 + $0x18] sm:$0xff]
      %v8070 = vld [vmem:[%s7 + $0x20] sm:$0xff]
      %v8071 = vld [vmem:[%s7 + $0x28] sm:$0xff]
      %v8072 = vld [vmem:[%s7 + $0x30] sm:$0xff]
      %v8073 = vld [vmem:[%s7 + $0x38] sm:$0xff]
      %v8074 = vld [vmem:[%s7 + $0x40] sm:$0xff]
      %v8075 = vld [vmem:[%s7 + $0x48] sm:$0xff]
      %v8076 = vld [vmem:[%s7 + $0x50] sm:$0xff]
      %v8077 = vld [vmem:[%s7 + $0x58] sm:$0xff]
      %v8078 = vld [vmem:[%s7 + $0x60] sm:$0xf]
      %vm8079 = vcmask 818176
      %v8081 = vsel %vm8079, %v8034, 0
      %v8084 = vsel %vm8079, %v8035, 0
      %v8087 = vsel %vm8079, %v8036, 0
      %v8090 = vsel %vm8079, %v8037, 0
      %v8093 = vsel %vm8079, %v8038, 0
      %v8096 = vsel %vm8079, %v8039, 0
      %v8099 = vsel %vm8079, %v8040, 0
      %v8102 = vsel %vm8079, %v8041, 0
      %v8105 = vsel %vm8079, %v8042, 0
      %v8108 = vsel %vm8079, %v8043, 0
      %v8111 = vsel %vm8079, %v8044, 0
      %v8114 = vsel %vm8079, %v8045, 0
      %v8117 = vsel %vm8079, %v8046, 0
      %v8120 = vsel %vm8079, %v8047, 0
      %v8123 = vsel %vm8079, %v8048, 0
      %v8126 = vsel %vm8079, %v8049, 0
      %v8129 = vsel %vm8079, %v8050, 0
      %v8132 = vsel %vm8079, %v8051, 0
      %v8135 = vsel %vm8079, %v8052, 0
      %v8138 = vsel %vm8079, %v8053, 0
      %v8141 = vsel %vm8079, %v8054, 0
      %v8144 = vsel %vm8079, %v8055, 0
      %v8147 = vsel %vm8079, %v8056, 0
      %v8150 = vsel %vm8079, %v8057, 0
      %v8153 = vsel %vm8079, %v8058, 0
      %v8156 = vsel %vm8079, %v8059, 0
      %v8159 = vsel %vm8079, %v8060, 0
      %v8162 = vsel %vm8079, %v8061, 0
      %v8165 = vsel %vm8079, %v8062, 0
      %v8168 = vsel %vm8079, %v8063, 0
      %v8171 = vsel %vm8079, %v8064, 0
      %v8174 = vsel %vm8079, %v8065, 0
      %v8177 = vsel %vm3722, %v8078, 0
      %8179 = vmatprep.subr.mxu0 0.0
      %8180 = vmatpush1.msra.mxu0 %v8066
      %8181 = vmatprep.subr.mxu0 0.0
      %8182 = vmatpush1.msra.mxu0 %v8067
      %8183 = vmatprep.subr.mxu0 0.0
      %8184 = vmatpush1.msra.mxu0 %v8068
      %8185 = vmatprep.subr.mxu0 0.0
      %8186 = vmatpush1.msra.mxu0 %v8069
      %8187 = vmatprep.subr.mxu0 0.0
      %8188 = vmatpush1.msra.mxu0 %v8070
      %8189 = vmatprep.subr.mxu0 0.0
      %8190 = vmatpush1.msra.mxu0 %v8071
      %8191 = vmatprep.subr.mxu0 0.0
      %8192 = vmatpush1.msra.mxu0 %v8072
      %8193 = vmatprep.subr.mxu0 0.0
      %8194 = vmatpush1.msra.mxu0 %v8073
      %8195 = vmatprep.subr.mxu0 0.0
      %8196 = vmatpush1.msra.mxu0 %v8074
      %8197 = vmatprep.subr.mxu0 0.0
      %8198 = vmatpush1.msra.mxu0 %v8075
      %8199 = vmatprep.subr.mxu0 0.0
      %8200 = vmatpush1.msra.mxu0 %v8076
      %8201 = vmatprep.subr.mxu0 0.0
      %8202 = vmatpush1.msra.mxu0 %v8077
      %8203 = vmatprep.subr.mxu0 0.0
      %8204 = vmatpush1.msra.mxu0 %v8177
      %8205 = vmatprep.subr.mxu0 0.0
      %8206 = vmatpush1.msra.mxu0 0.0
      %8207 = vmatprep.subr.mxu0 0.0
      %8208 = vmatpush1.msra.mxu0 0.0
      %8209 = vmatprep.subr.mxu0 0.0
      %8210 = vmatpush1.msra.mxu0 0.0
      %8211 = vmatprep.subr.mxu0 0.0
      %8212 = vmatpush1.msra.mxu0 0.0
      %8213 = vmatprep.subr.mxu0 0.0
      %8214 = vmatpush1.msra.mxu0 0.0
      %8215 = vmatprep.subr.mxu0 0.0
      %8216 = vmatpush1.msra.mxu0 0.0
      %8217 = vmatprep.subr.mxu0 0.0
      %8218 = vmatpush1.msra.mxu0 0.0
      %8219 = vmatprep.subr.mxu0 0.0
      %8220 = vmatpush1.msra.mxu0 0.0
      %8221 = vmatprep.subr.mxu0 0.0
      %8222 = vmatpush1.msra.mxu0 0.0
      %8223 = vmatprep.subr.mxu0 0.0
      %8224 = vmatpush1.msra.mxu0 0.0
      %8225 = vmatprep.subr.mxu0 0.0
      %8226 = vmatpush1.msra.mxu0 0.0
      %8227 = vmatprep.subr.mxu0 0.0
      %8228 = vmatpush1.msra.mxu0 0.0
      %8229 = vmatprep.subr.mxu0 0.0
      %8230 = vmatpush1.msra.mxu0 0.0
      %8231 = vmatprep.subr.mxu0 0.0
      %8232 = vmatpush1.msra.mxu0 0.0
      %8233 = vmatprep.subr.mxu0 0.0
      %8234 = vmatpush1.msra.mxu0 0.0
      %8235 = vmatprep.subr.mxu0 0.0
      %8236 = vmatpush1.msra.mxu0 0.0
      %8237 = vmatprep.subr.mxu0 0.0
      %8238 = vmatpush1.msra.mxu0 0.0
      %8239 = vmatprep.subr.mxu0 0.0
      %8240 = vmatpush1.msra.mxu0 0.0
      %8241 = vmatprep.subr.mxu0 0.0
      %8242 = vmatpush1.msra.mxu0 0.0
      %8243 = vmatprep.mubr.f32.mxu0 0.0
      %8244 = vmatmul.mubr.f32.gmra.mrb[0].mxu0 %v8081
      %v8245 = vpop.f32.mrb[0].mxu0
      %v8246 = vadd.f32 0.0, %v8245
      %v8247 = vpop.f32.mrb[0].mxu0
      %8248 = vmatprep.mubr.f32.mxu0 0.0
      %8249 = vmatmul.mubr.f32.gmra.mrb[0].mxu0 %v8084
      %v8250 = vpop.f32.mrb[0].mxu0
      %v8251 = vadd.f32 0.0, %v8250
      %v8252 = vpop.f32.mrb[0].mxu0
      %8253 = vmatprep.mubr.f32.mxu0 0.0
      %8254 = vmatmul.mubr.f32.gmra.mrb[0].mxu0 %v8087
      %v8255 = vpop.f32.mrb[0].mxu0
      %v8256 = vadd.f32 0.0, %v8255
      %v8257 = vpop.f32.mrb[0].mxu0
      %8258 = vmatprep.mubr.f32.mxu0 0.0
      %8259 = vmatmul.mubr.f32.gmra.mrb[0].mxu0 %v8090
      %v8260 = vpop.f32.mrb[0].mxu0
      %v8261 = vadd.f32 0.0, %v8260
      %v8262 = vpop.f32.mrb[0].mxu0
      %8263 = vmatprep.mubr.f32.mxu0 0.0
      %8264 = vmatmul.mubr.f32.gmra.mrb[0].mxu0 %v8093
      %v8265 = vpop.f32.mrb[0].mxu0
      %v8266 = vadd.f32 0.0, %v8265
      %v8267 = vpop.f32.mrb[0].mxu0
      %8268 = vmatprep.mubr.f32.mxu0 0.0
      %8269 = vmatmul.mubr.f32.gmra.mrb[0].mxu0 %v8096
      %v8270 = vpop.f32.mrb[0].mxu0
      %v8271 = vadd.f32 0.0, %v8270
      %v8272 = vpop.f32.mrb[0].mxu0
      %8273 = vmatprep.mubr.f32.mxu0 0.0
      %8274 = vmatmul.mubr.f32.gmra.mrb[0].mxu0 %v8099
      %v8275 = vpop.f32.mrb[0].mxu0
      %v8276 = vadd.f32 0.0, %v8275
      %v8277 = vpop.f32.mrb[0].mxu0
      %8278 = vmatprep.mubr.f32.mxu0 0.0
      %8279 = vmatmul.mubr.f32.gmra.mrb[0].mxu0 %v8102
      %v8280 = vpop.f32.mrb[0].mxu0
      %v8281 = vadd.f32 0.0, %v8280
      %v8282 = vpop.f32.mrb[0].mxu0
      %8283 = vmatprep.mubr.f32.mxu0 0.0
      %8284 = vmatmul.mubr.f32.gmra.mrb[0].mxu0 %v8105
      %v8285 = vpop.f32.mrb[0].mxu0
      %v8286 = vadd.f32 0.0, %v8285
      %v8287 = vpop.f32.mrb[0].mxu0
      %8288 = vmatprep.mubr.f32.mxu0 0.0
      %8289 = vmatmul.mubr.f32.gmra.mrb[0].mxu0 %v8108
      %v8290 = vpop.f32.mrb[0].mxu0
      %v8291 = vadd.f32 0.0, %v8290
      %v8292 = vpop.f32.mrb[0].mxu0
      %8293 = vmatprep.mubr.f32.mxu0 0.0
      %8294 = vmatmul.mubr.f32.gmra.mrb[0].mxu0 %v8111
      %v8295 = vpop.f32.mrb[0].mxu0
      %v8296 = vadd.f32 0.0, %v8295
      %v8297 = vpop.f32.mrb[0].mxu0
      %8298 = vmatprep.mubr.f32.mxu0 0.0
      %8299 = vmatmul.mubr.f32.gmra.mrb[0].mxu0 %v8114
      %v8300 = vpop.f32.mrb[0].mxu0
      %v8301 = vadd.f32 0.0, %v8300
      %v8302 = vpop.f32.mrb[0].mxu0
      %8303 = vmatprep.mubr.f32.mxu0 0.0
      %8304 = vmatmul.mubr.f32.gmra.mrb[0].mxu0 %v8117
      %v8305 = vpop.f32.mrb[0].mxu0
      %v8306 = vadd.f32 0.0, %v8305
      %v8307 = vpop.f32.mrb[0].mxu0
      %8308 = vmatprep.mubr.f32.mxu0 0.0
      %8309 = vmatmul.mubr.f32.gmra.mrb[0].mxu0 %v8120
      %v8310 = vpop.f32.mrb[0].mxu0
      %v8311 = vadd.f32 0.0, %v8310
      %v8312 = vpop.f32.mrb[0].mxu0
      %8313 = vmatprep.mubr.f32.mxu0 0.0
      %8314 = vmatmul.mubr.f32.gmra.mrb[0].mxu0 %v8123
      %v8315 = vpop.f32.mrb[0].mxu0
      %v8316 = vadd.f32 0.0, %v8315
      %v8317 = vpop.f32.mrb[0].mxu0
      %8318 = vmatprep.mubr.f32.mxu0 0.0
      %8319 = vmatmul.mubr.f32.gmra.mrb[0].mxu0 %v8126
      %v8320 = vpop.f32.mrb[0].mxu0
      %v8321 = vadd.f32 0.0, %v8320
      %v8322 = vpop.f32.mrb[0].mxu0
      %8323 = vmatprep.mubr.f32.mxu0 0.0
      %8324 = vmatmul.mubr.f32.gmra.mrb[0].mxu0 %v8129
      %v8325 = vpop.f32.mrb[0].mxu0
      %v8326 = vadd.f32 0.0, %v8325
      %v8327 = vpop.f32.mrb[0].mxu0
      %8328 = vmatprep.mubr.f32.mxu0 0.0
      %8329 = vmatmul.mubr.f32.gmra.mrb[0].mxu0 %v8132
      %v8330 = vpop.f32.mrb[0].mxu0
      %v8331 = vadd.f32 0.0, %v8330
      %v8332 = vpop.f32.mrb[0].mxu0
      %8333 = vmatprep.mubr.f32.mxu0 0.0
      %8334 = vmatmul.mubr.f32.gmra.mrb[0].mxu0 %v8135
      %v8335 = vpop.f32.mrb[0].mxu0
      %v8336 = vadd.f32 0.0, %v8335
      %v8337 = vpop.f32.mrb[0].mxu0
      %8338 = vmatprep.mubr.f32.mxu0 0.0
      %8339 = vmatmul.mubr.f32.gmra.mrb[0].mxu0 %v8138
      %v8340 = vpop.f32.mrb[0].mxu0
      %v8341 = vadd.f32 0.0, %v8340
      %v8342 = vpop.f32.mrb[0].mxu0
      %8343 = vmatprep.mubr.f32.mxu0 0.0
      %8344 = vmatmul.mubr.f32.gmra.mrb[0].mxu0 %v8141
      %v8345 = vpop.f32.mrb[0].mxu0
      %v8346 = vadd.f32 0.0, %v8345
      %v8347 = vpop.f32.mrb[0].mxu0
      %8348 = vmatprep.mubr.f32.mxu0 0.0
      %8349 = vmatmul.mubr.f32.gmra.mrb[0].mxu0 %v8144
      %v8350 = vpop.f32.mrb[0].mxu0
      %v8351 = vadd.f32 0.0, %v8350
      %v8352 = vpop.f32.mrb[0].mxu0
      %8353 = vmatprep.mubr.f32.mxu0 0.0
      %8354 = vmatmul.mubr.f32.gmra.mrb[0].mxu0 %v8147
      %v8355 = vpop.f32.mrb[0].mxu0
      %v8356 = vadd.f32 0.0, %v8355
      %v8357 = vpop.f32.mrb[0].mxu0
      %8358 = vmatprep.mubr.f32.mxu0 0.0
      %8359 = vmatmul.mubr.f32.gmra.mrb[0].mxu0 %v8150
      %v8360 = vpop.f32.mrb[0].mxu0
      %v8361 = vadd.f32 0.0, %v8360
      %v8362 = vpop.f32.mrb[0].mxu0
      %8363 = vmatprep.mubr.f32.mxu0 0.0
      %8364 = vmatmul.mubr.f32.gmra.mrb[0].mxu0 %v8153
      %v8365 = vpop.f32.mrb[0].mxu0
      %v8366 = vadd.f32 0.0, %v8365
      %v8367 = vpop.f32.mrb[0].mxu0
      %8368 = vmatprep.mubr.f32.mxu0 0.0
      %8369 = vmatmul.mubr.f32.gmra.mrb[0].mxu0 %v8156
      %v8370 = vpop.f32.mrb[0].mxu0
      %v8371 = vadd.f32 0.0, %v8370
      %v8372 = vpop.f32.mrb[0].mxu0
      %8373 = vmatprep.mubr.f32.mxu0 0.0
      %8374 = vmatmul.mubr.f32.gmra.mrb[0].mxu0 %v8159
      %v8375 = vpop.f32.mrb[0].mxu0
      %v8376 = vadd.f32 0.0, %v8375
      %v8377 = vpop.f32.mrb[0].mxu0
      %8378 = vmatprep.mubr.f32.mxu0 0.0
      %8379 = vmatmul.mubr.f32.gmra.mrb[0].mxu0 %v8162
      %v8380 = vpop.f32.mrb[0].mxu0
      %v8381 = vadd.f32 0.0, %v8380
      %v8382 = vpop.f32.mrb[0].mxu0
      %8383 = vmatprep.mubr.f32.mxu0 0.0
      %8384 = vmatmul.mubr.f32.gmra.mrb[0].mxu0 %v8165
      %v8385 = vpop.f32.mrb[0].mxu0
      %v8386 = vadd.f32 0.0, %v8385
      %v8387 = vpop.f32.mrb[0].mxu0
      %8388 = vmatprep.mubr.f32.mxu0 0.0
      %8389 = vmatmul.mubr.f32.gmra.mrb[0].mxu0 %v8168
      %v8390 = vpop.f32.mrb[0].mxu0
      %v8391 = vadd.f32 0.0, %v8390
      %v8392 = vpop.f32.mrb[0].mxu0
      %8393 = vmatprep.mubr.f32.mxu0 0.0
      %8394 = vmatmul.mubr.f32.gmra.mrb[0].mxu0 %v8171
      %v8395 = vpop.f32.mrb[0].mxu0
      %v8396 = vadd.f32 0.0, %v8395
      %v8397 = vpop.f32.mrb[0].mxu0
      %8398 = vmatprep.mubr.f32.mxu0 0.0
      %8399 = vmatmul.mubr.f32.gmra.mrb[0].mxu0 %v8174
      %v8400 = vpop.f32.mrb[0].mxu0
      %v8401 = vadd.f32 0.0, %v8400
      %v8402 = vpop.f32.mrb[0].mxu0
      %8403 = vdwg.mxu0
      %v8404 = vld [vmem:[%s8] sm:$0x1]
      %v8406 = vlaneseq
      %v8407 = vshrl.u32 %v8406, 7
      %v8408 = vsub.s32 0, %v8407
      %v8409 = vrot.slane %v8404, %v8408
      %v8411 = vmul.f32 %v8246, %v8409
      %v8412 = vmul.f32 %v8251, %v8409
      %v8413 = vmul.f32 %v8256, %v8409
      %v8414 = vmul.f32 %v8261, %v8409
      %v8415 = vmul.f32 %v8266, %v8409
      %v8416 = vmul.f32 %v8271, %v8409
      %v8417 = vmul.f32 %v8276, %v8409
      %v8418 = vmul.f32 %v8281, %v8409
      %v8419 = vmul.f32 %v8286, %v8409
      %v8420 = vmul.f32 %v8291, %v8409
      %v8421 = vmul.f32 %v8296, %v8409
      %v8422 = vmul.f32 %v8301, %v8409
      %v8423 = vmul.f32 %v8306, %v8409
      %v8424 = vmul.f32 %v8311, %v8409
      %v8425 = vmul.f32 %v8316, %v8409
      %v8426 = vmul.f32 %v8321, %v8409
      %v8427 = vmul.f32 %v8326, %v8409
      %v8428 = vmul.f32 %v8331, %v8409
      %v8429 = vmul.f32 %v8336, %v8409
      %v8430 = vmul.f32 %v8341, %v8409
      %v8431 = vmul.f32 %v8346, %v8409
      %v8432 = vmul.f32 %v8351, %v8409
      %v8433 = vmul.f32 %v8356, %v8409
      %v8434 = vmul.f32 %v8361, %v8409
      %v8435 = vmul.f32 %v8366, %v8409
      %v8436 = vmul.f32 %v8371, %v8409
      %v8437 = vmul.f32 %v8376, %v8409
      %v8438 = vmul.f32 %v8381, %v8409
      %v8439 = vmul.f32 %v8386, %v8409
      %v8440 = vmul.f32 %v8391, %v8409
      %v8441 = vmul.f32 %v8396, %v8409
      %v8442 = vmul.f32 %v8401, %v8409
      %v8443 = vld [vmem:[%s9] sm:$0x1]
      %v8445 = vlaneseq
      %v8446 = vshrl.u32 %v8445, 7
      %v8447 = vsub.s32 0, %v8446
      %v8448 = vrot.slane %v8443, %v8447
      %v8450 = vadd.f32 %v8411, %v8448
      %v8451 = vadd.f32 %v8412, %v8448
      %v8452 = vadd.f32 %v8413, %v8448
      %v8453 = vadd.f32 %v8414, %v8448
      %v8454 = vadd.f32 %v8415, %v8448
      %v8455 = vadd.f32 %v8416, %v8448
      %v8456 = vadd.f32 %v8417, %v8448
      %v8457 = vadd.f32 %v8418, %v8448
      %v8458 = vadd.f32 %v8419, %v8448
      %v8459 = vadd.f32 %v8420, %v8448
      %v8460 = vadd.f32 %v8421, %v8448
      %v8461 = vadd.f32 %v8422, %v8448
      %v8462 = vadd.f32 %v8423, %v8448
      %v8463 = vadd.f32 %v8424, %v8448
      %v8464 = vadd.f32 %v8425, %v8448
      %v8465 = vadd.f32 %v8426, %v8448
      %v8466 = vadd.f32 %v8427, %v8448
      %v8467 = vadd.f32 %v8428, %v8448
      %v8468 = vadd.f32 %v8429, %v8448
      %v8469 = vadd.f32 %v8430, %v8448
      %v8470 = vadd.f32 %v8431, %v8448
      %v8471 = vadd.f32 %v8432, %v8448
      %v8472 = vadd.f32 %v8433, %v8448
      %v8473 = vadd.f32 %v8434, %v8448
      %v8474 = vadd.f32 %v8435, %v8448
      %v8475 = vadd.f32 %v8436, %v8448
      %v8476 = vadd.f32 %v8437, %v8448
      %v8477 = vadd.f32 %v8438, %v8448
      %v8478 = vadd.f32 %v8439, %v8448
      %v8479 = vadd.f32 %v8440, %v8448
      %v8480 = vadd.f32 %v8441, %v8448
      %v8481 = vadd.f32 %v8442, %v8448
      %v8482 = vmax.f32 %v8450, 0.0
      %v8483 = vmax.f32 %v8451, 0.0
      %v8484 = vmax.f32 %v8452, 0.0
      %v8485 = vmax.f32 %v8453, 0.0
      %v8486 = vmax.f32 %v8454, 0.0
      %v8487 = vmax.f32 %v8455, 0.0
      %v8488 = vmax.f32 %v8456, 0.0
      %v8489 = vmax.f32 %v8457, 0.0
      %v8490 = vmax.f32 %v8458, 0.0
      %v8491 = vmax.f32 %v8459, 0.0
      %v8492 = vmax.f32 %v8460, 0.0
      %v8493 = vmax.f32 %v8461, 0.0
      %v8494 = vmax.f32 %v8462, 0.0
      %v8495 = vmax.f32 %v8463, 0.0
      %v8496 = vmax.f32 %v8464, 0.0
      %v8497 = vmax.f32 %v8465, 0.0
      %v8498 = vmax.f32 %v8466, 0.0
      %v8499 = vmax.f32 %v8467, 0.0
      %v8500 = vmax.f32 %v8468, 0.0
      %v8501 = vmax.f32 %v8469, 0.0
      %v8502 = vmax.f32 %v8470, 0.0
      %v8503 = vmax.f32 %v8471, 0.0
      %v8504 = vmax.f32 %v8472, 0.0
      %v8505 = vmax.f32 %v8473, 0.0
      %v8506 = vmax.f32 %v8474, 0.0
      %v8507 = vmax.f32 %v8475, 0.0
      %v8508 = vmax.f32 %v8476, 0.0
      %v8509 = vmax.f32 %v8477, 0.0
      %v8510 = vmax.f32 %v8478, 0.0
      %v8511 = vmax.f32 %v8479, 0.0
      %v8512 = vmax.f32 %v8480, 0.0
      %v8513 = vmax.f32 %v8481, 0.0
      %8546 = vrot.lane.b32.xlu0 %v8482, 16
      %v8547 = vpop.permute.xlu0 %8546
      %8548 = vrot.lane.b32.xlu0 %v8483, 16
      %v8549 = vpop.permute.xlu0 %8548
      %8550 = vrot.lane.b32.xlu0 %v8484, 16
      %v8551 = vpop.permute.xlu0 %8550
      %8552 = vrot.lane.b32.xlu0 %v8485, 16
      %v8553 = vpop.permute.xlu0 %8552
      %8554 = vrot.lane.b32.xlu0 %v8486, 16
      %v8555 = vpop.permute.xlu0 %8554
      %8556 = vrot.lane.b32.xlu0 %v8487, 16
      %v8557 = vpop.permute.xlu0 %8556
      %8558 = vrot.lane.b32.xlu0 %v8488, 16
      %v8559 = vpop.permute.xlu0 %8558
      %8560 = vrot.lane.b32.xlu0 %v8489, 16
      %v8561 = vpop.permute.xlu0 %8560
      %8562 = vrot.lane.b32.xlu0 %v8490, 16
      %v8563 = vpop.permute.xlu0 %8562
      %8564 = vrot.lane.b32.xlu0 %v8491, 16
      %v8565 = vpop.permute.xlu0 %8564
      %8566 = vrot.lane.b32.xlu0 %v8492, 16
      %v8567 = vpop.permute.xlu0 %8566
      %8568 = vrot.lane.b32.xlu0 %v8493, 16
      %v8569 = vpop.permute.xlu0 %8568
      %8570 = vrot.lane.b32.xlu0 %v8494, 16
      %v8571 = vpop.permute.xlu0 %8570
      %8572 = vrot.lane.b32.xlu0 %v8495, 16
      %v8573 = vpop.permute.xlu0 %8572
      %8574 = vrot.lane.b32.xlu0 %v8496, 16
      %v8575 = vpop.permute.xlu0 %8574
      %8576 = vrot.lane.b32.xlu0 %v8497, 16
      %v8577 = vpop.permute.xlu0 %8576
      %8578 = vrot.lane.b32.xlu0 %v8498, 16
      %v8579 = vpop.permute.xlu0 %8578
      %8580 = vrot.lane.b32.xlu0 %v8499, 16
      %v8581 = vpop.permute.xlu0 %8580
      %8582 = vrot.lane.b32.xlu0 %v8500, 16
      %v8583 = vpop.permute.xlu0 %8582
      %8584 = vrot.lane.b32.xlu0 %v8501, 16
      %v8585 = vpop.permute.xlu0 %8584
      %8586 = vrot.lane.b32.xlu0 %v8502, 16
      %v8587 = vpop.permute.xlu0 %8586
      %8588 = vrot.lane.b32.xlu0 %v8503, 16
      %v8589 = vpop.permute.xlu0 %8588
      %8590 = vrot.lane.b32.xlu0 %v8504, 16
      %v8591 = vpop.permute.xlu0 %8590
      %8592 = vrot.lane.b32.xlu0 %v8505, 16
      %v8593 = vpop.permute.xlu0 %8592
      %8594 = vrot.lane.b32.xlu0 %v8506, 16
      %v8595 = vpop.permute.xlu0 %8594
      %8596 = vrot.lane.b32.xlu0 %v8507, 16
      %v8597 = vpop.permute.xlu0 %8596
      %8598 = vrot.lane.b32.xlu0 %v8508, 16
      %v8599 = vpop.permute.xlu0 %8598
      %8600 = vrot.lane.b32.xlu0 %v8509, 16
      %v8601 = vpop.permute.xlu0 %8600
      %8602 = vrot.lane.b32.xlu0 %v8510, 16
      %v8603 = vpop.permute.xlu0 %8602
      %8604 = vrot.lane.b32.xlu0 %v8511, 16
      %v8605 = vpop.permute.xlu0 %8604
      %8606 = vrot.lane.b32.xlu0 %v8512, 16
      %v8607 = vpop.permute.xlu0 %8606
      %8608 = vrot.lane.b32.xlu0 %v8513, 16
      %v8609 = vpop.permute.xlu0 %8608
      %vm8642 = vcmask 195712
      %8643 = vst.msk [vmem:[%s359] sm:$0xff] %vm8642, %v8547
      %8644 = vst.msk [vmem:[%s359 + $0x8] sm:$0xff] %vm8642, %v8549
      %8645 = vst.msk [vmem:[%s359 + $0x10] sm:$0xff] %vm8642, %v8551
      %8646 = vst.msk [vmem:[%s359 + $0x18] sm:$0xff] %vm8642, %v8553
      %8647 = vst.msk [vmem:[%s359 + $0x20] sm:$0xff] %vm8642, %v8555
      %8648 = vst.msk [vmem:[%s359 + $0x28] sm:$0xff] %vm8642, %v8557
      %8649 = vst.msk [vmem:[%s359 + $0x30] sm:$0xff] %vm8642, %v8559
      %8650 = vst.msk [vmem:[%s359 + $0x38] sm:$0xff] %vm8642, %v8561
      %8651 = vst.msk [vmem:[%s359 + $0x40] sm:$0xff] %vm8642, %v8563
      %8652 = vst.msk [vmem:[%s359 + $0x48] sm:$0xff] %vm8642, %v8565
      %8653 = vst.msk [vmem:[%s359 + $0x50] sm:$0xff] %vm8642, %v8567
      %8654 = vst.msk [vmem:[%s359 + $0x58] sm:$0xff] %vm8642, %v8569
      %8655 = vst.msk [vmem:[%s359 + $0x60] sm:$0xff] %vm8642, %v8571
      %8656 = vst.msk [vmem:[%s359 + $0x68] sm:$0xff] %vm8642, %v8573
      %8657 = vst.msk [vmem:[%s359 + $0x70] sm:$0xff] %vm8642, %v8575
      %8658 = vst.msk [vmem:[%s359 + $0x78] sm:$0xff] %vm8642, %v8577
      %8659 = vst.msk [vmem:[%s359 + $0x80] sm:$0xff] %vm8642, %v8579
      %8660 = vst.msk [vmem:[%s359 + $0x88] sm:$0xff] %vm8642, %v8581
      %8661 = vst.msk [vmem:[%s359 + $0x90] sm:$0xff] %vm8642, %v8583
      %8662 = vst.msk [vmem:[%s359 + $0x98] sm:$0xff] %vm8642, %v8585
      %8663 = vst.msk [vmem:[%s359 + $0xa0] sm:$0xff] %vm8642, %v8587
      %8664 = vst.msk [vmem:[%s359 + $0xa8] sm:$0xff] %vm8642, %v8589
      %8665 = vst.msk [vmem:[%s359 + $0xb0] sm:$0xff] %vm8642, %v8591
      %8666 = vst.msk [vmem:[%s359 + $0xb8] sm:$0xff] %vm8642, %v8593
      %8667 = vst.msk [vmem:[%s359 + $0xc0] sm:$0xff] %vm8642, %v8595
      %8668 = vst.msk [vmem:[%s359 + $0xc8] sm:$0xff] %vm8642, %v8597
      %8669 = vst.msk [vmem:[%s359 + $0xd0] sm:$0xff] %vm8642, %v8599
      %8670 = vst.msk [vmem:[%s359 + $0xd8] sm:$0xff] %vm8642, %v8601
      %8671 = vst.msk [vmem:[%s359 + $0xe0] sm:$0xff] %vm8642, %v8603
      %8672 = vst.msk [vmem:[%s359 + $0xe8] sm:$0xff] %vm8642, %v8605
      %8673 = vst.msk [vmem:[%s359 + $0xf0] sm:$0xff] %vm8642, %v8607
      %8674 = vst.msk [vmem:[%s359 + $0xf8] sm:$0xff] %vm8642, %v8609
      %p8675 = scmp.lt.s32.totalorder %s21, 1
      %s8676 = scalar_select %p8675, %s21, 1
      %s8677 = smul.addr %s8676, 32
      %s8678 = smul.addr %s8677, 8
      %s8679 = scalar_lea.vmem %s10, %s8678
      // Predicated region
      $region61: #{tpu_custom_call.1} parent=59 // pred_check
        %p8680 = pneg %p254
      $region62: #{tpu_custom_call.1} parent=59 // pred_check_branch
        %8682 = sbr.rel (%p8680) target = $region64
      $region63: #{tpu_custom_call.1} parent=59 // pred_region
        _
      $region64: #{tpu_custom_call.1} parent=59 // pred_fallthru
        _
    $region60: #{tpu_custom_call.1} parent=5 // pred_fallthru
      _
    %p8683 = scmp.le.s32.totalorder 2, %s16
    // Predicated region
    $region65: #{tpu_custom_call.1} parent=5 // pred_check
      %p8684 = pneg %p8683
    $region66: #{tpu_custom_call.1} parent=5 // pred_check_branch
      %8686 = sbr.rel (%p8684) target = $region68
    $region67: #{tpu_custom_call.1} parent=5 // pred_region
      %s8687 = ssub.s32 %s16, 2
      // Predicated region
      $region69: #{tpu_custom_call.1} parent=67 // pred_check
        %p8688 = pneg %p260
      $region70: #{tpu_custom_call.1} parent=67 // pred_check_branch
        %8690 = sbr.rel (%p8688) target = $region72
      $region71: #{tpu_custom_call.1} parent=67 // pred_region
        %p8691 = scmp.lt.s32.totalorder %s22, 1
        %s8692 = scalar_select %p8691, %s22, 1
        %s8693 = smul.addr %s8692, 32
        %s8694 = smul.addr %s8693, 8
        %s8695 = scalar_lea.vmem %s10, %s8694
      $region72: #{tpu_custom_call.1} parent=67 // pred_fallthru
        _
    $region68: #{tpu_custom_call.1} parent=5 // pred_fallthru
      _
  $region6: #{tpu_custom_call.1} parent=0 // loop_footer
    %s20 = sadd.s32 1, %s16
  $region7: #{tpu_custom_call.1} parent=0 // loop_footer_branch
    %15 = sbr.rel target = $region3
  $region8: #{tpu_custom_call.1} parent=0 // loop_exit
    _

</llo_original>
